<compile_context>
chip_gen: v7x
topology: tpu7x:2x2x1
jax: 0.10.0
libtpu: 0.0.40
codegen_flags: <defaults>
</compile_context>

<pallas_src>
import functools

import jax
import jax.numpy as jnp
from jax.experimental import pallas as pl
from jax.experimental.pallas import tpu as pltpu

_BN_EPS = 1e-5


def _mm(a, b, use_bf16):
    if use_bf16:
        a = a.astype(jnp.bfloat16)
        b = b.astype(jnp.bfloat16)
    return jnp.dot(a, b, preferred_element_type=jnp.float32)


def _erf(z):
    # Abramowitz & Stegun 7.1.26, |error| < 1.5e-7.
    a1, a2, a3, a4, a5 = 0.254829592, -0.284496736, 1.421413741, -1.453152027, 1.061405429
    p = 0.3275911
    za = jnp.abs(z)
    t = pl.reciprocal(1.0 + p * za)
    poly = ((((a5 * t + a4) * t + a3) * t + a2) * t + a1) * t
    y = 1.0 - poly * jnp.exp(-za * za)
    return jnp.where(z >= 0, y, -y)


def _gelu(x):
    # exact GELU (matches nn.GELU() default)
    return 0.5 * x * (1.0 + _erf(x * 0.7071067811865476))


# --------------------------- pass A: conv branches ---------------------------


def _branch_kernel(x_ref, mask_ref, wf_ref, bf_ref, w1_ref, w2_ref, w3_ref, w4_ref,
                   ybr_ref, bstat_ref, gap_ref, *, H, W, D, rates, use_bf16):
    L = H * W

    # to_feature_map: Linear(Cin -> D) for this image
    feat = _mm(x_ref[0], wf_ref[...], use_bf16) + bf_ref[...]          # (L, D) f32

    # aspp1: 1x1 conv
    y1 = _mm(feat, w1_ref[...], use_bf16)                              # (L, D)

    def dilated(w_ref, ridx, d):
        # 3x3 conv, dilation d, padding d ("same").  Each shifted tap is one
        # wrap-around sublane roll of feat times its precomputed boundary
        # mask; per kernel-row the three taps are lane-concatenated into a
        # (L, 3D) group and contracted with the matching (3D, D) weight block.
        acc = None
        for ky in range(3):
            dy = d * (ky - 1)
            taps = []
            for kx in range(3):
                dx = d * (kx - 1)
                if dy == 0 and dx == 0:
                    taps.append(feat)                                  # center tap
                else:
                    shift = (-(dy * W + dx)) % L
                    col = ridx * 9 + ky * 3 + kx
                    tap = pltpu.roll(feat, shift, 0) * mask_ref[:, col:col + 1]
                    taps.append(tap)
            grp = jnp.concatenate(taps, axis=1)                        # (L, 3D)
            part = _mm(grp, w_ref[ky * 3 * D:(ky + 1) * 3 * D, :], use_bf16)
            acc = part if acc is None else acc + part
        return acc                                                     # (L, D)

    y2 = dilated(w2_ref, 0, rates[0])
    y3 = dilated(w3_ref, 1, rates[1])
    y4 = dilated(w4_ref, 2, rates[2])

    # single lane-dense (L, 4D) bf16 slab for pass B
    ybr_ref[0] = jnp.concatenate([y1, y2, y3, y4], axis=1).astype(ybr_ref.dtype)

    # per-image BatchNorm partial stats in f32 (VPU/XLU row reductions)
    def rsum(v):
        return jnp.sum(v, axis=0, keepdims=True)                       # (1, D)

    bstat_ref[0] = jnp.concatenate(
        [rsum(y1), rsum(y2), rsum(y3), rsum(y4),
         rsum(y1 * y1), rsum(y2 * y2), rsum(y3 * y3), rsum(y4 * y4)],
        axis=0)                                                        # (8, D)

    # per-image global average pool of feat (global branch finishes in XLA)
    gap_ref[0] = rsum(feat) * (1.0 / L)                                # (1, D)


# ---------------------- pass B: BN + GELU + projection -----------------------


def _project_kernel(ybr_ref, a_ref, c_ref, x5p_ref, wp4_ref,
                    yproj_ref, pstat_ref, *, use_bf16):
    # folded branch BatchNorm (scale/shift precomputed in XLA) + exact GELU
    xb = _gelu(ybr_ref[0].astype(jnp.float32) * a_ref[...] + c_ref[...])   # (L, 4D)

    # 5-way 1x1 projection: one K=4D MXU matmul for the conv branches plus the
    # per-image constant global-branch row (align_corners bilinear 1x1 -> HxW
    # upsample is an exact broadcast, precomputed in XLA).
    acc = _mm(xb, wp4_ref[...], use_bf16) + x5p_ref[0]                     # (L, D) f32

    yproj_ref[0] = acc.astype(yproj_ref.dtype)

    # per-image partial statistics of the pre-BN projection (f32)
    pstat_ref[0] = jnp.concatenate(
        [jnp.sum(acc, axis=0, keepdims=True),
         jnp.sum(acc * acc, axis=0, keepdims=True)], axis=0)               # (2, D)


# --------------------- pass C: proj BN + GELU + Linear -----------------------


def _output_kernel(yproj_ref, a_ref, c_ref, ws_ref, bs_ref, out_ref, *, use_bf16):
    xp = _gelu(yproj_ref[0].astype(jnp.float32) * a_ref[...] + c_ref[...])  # (L, D)
    out_ref[0] = _mm(xp, ws_ref[...], use_bf16) + bs_ref[...]               # (L, Cin)


# --------------------------------- wrapper -----------------------------------


def _full_spec(shape):
    nd = len(shape)
    return pl.BlockSpec(tuple(shape), lambda b: (0,) * nd)


def _vmem_limit_bytes():
    # generation-aware: ~70% of physical per-core VMEM, capped below the
    # 128 MiB of v5e/v6e and well below v7x's 64 MiB.
    cap = 128 * 1024 * 1024
    try:
        info = pltpu.get_tpu_info()
        got = getattr(info, "vmem_capacity_bytes", None)
        if got:
            cap = int(got)
    except Exception:
        pass
    return max(32 * 1024 * 1024, min(int(cap * 0.7), 96 * 1024 * 1024))


def _compiler_params():
    return pltpu.CompilerParams(
        dimension_semantics=("parallel",),          # one image per grid step
        vmem_limit_bytes=_vmem_limit_bytes(),
    )


def aspp_forward(x, params, input_resolution, rates=(3, 6, 9),
                 use_bf16_matmul=True):
    B, L, Cin = x.shape
    H, W = input_resolution
    assert L == H * W, f"Input feature size {L} doesn't match resolution {H}x{W}"
    D = params['w1'].shape[0]
    rates = tuple(int(r) for r in rates)
    f32 = jnp.float32
    inter_dt = jnp.bfloat16            # A->B and B->C intermediates in bf16
    gamma, beta = params['gamma'], params['beta']

    # boundary-validity masks for the 3x9 dilated-conv taps: depend only on
    # (H, W, rates); computed once here, not per grid step.
    pos = jnp.arange(L, dtype=jnp.int32)
    hh, ww = pos // W, pos % W
    cols = []
    for d in rates:
        for ky in range(3):
            for kx in range(3):
                dy, dx = d * (ky - 1), d * (kx - 1)
                valid = ((hh + dy >= 0) & (hh + dy < H) &
                         (ww + dx >= 0) & (ww + dx < W))
                cols.append(valid.astype(f32))
    masks = jnp.stack(cols, axis=1)                                    # (L, 27)

    def row_spec(last):
        return pl.BlockSpec((1, L, last), lambda b: (b, 0, 0))

    # ---- pass A: feature map + conv branches + BN partial stats + GAP ----
    kern_a = functools.partial(_branch_kernel, H=H, W=W, D=D, rates=rates,
                               use_bf16=use_bf16_matmul)
    grid_a = pltpu.PrefetchScalarGridSpec(
        num_scalar_prefetch=0, grid=(B,),
        in_specs=[
            row_spec(Cin),
            _full_spec(masks.shape),
            _full_spec(params['wf'].shape), _full_spec(params['bf'].shape),
            _full_spec(params['w1'].shape), _full_spec(params['w2'].shape),
            _full_spec(params['w3'].shape), _full_spec(params['w4'].shape),
        ],
        out_specs=[
            row_spec(4 * D),
            pl.BlockSpec((1, 8, D), lambda b: (b, 0, 0)),
            pl.BlockSpec((1, 1, D), lambda b: (b, 0, 0)),
        ],
    )
    ce_a = pl.CostEstimate(
        flops=2 * B * L * D * (Cin + D + 27 * D) + 16 * B * L * D,
        transcendentals=0,
        bytes_accessed=(4 * B * L * Cin + 4 * (Cin * D + 28 * D * D + L * 27 + D)
                        + 2 * B * L * 4 * D + 4 * B * 9 * D),
    )
    ybr, bstat, gap = pl.pallas_call(
        kern_a,
        out_shape=(
            jax.ShapeDtypeStruct((B, L, 4 * D), inter_dt),
            jax.ShapeDtypeStruct((B, 8, D), f32),
            jax.ShapeDtypeStruct((B, 1, D), f32),
        ),
        grid_spec=grid_a,
        compiler_params=_compiler_params(),
        cost_estimate=ce_a,
    )(x, masks, params['wf'], params['bf'], params['w1'],
      params['w2'], params['w3'], params['w4'])

    # ---- batch-wide finalization in plain XLA (tiny arrays, done once) ----
    inv_n = 1.0 / (B * L)
    st = jnp.sum(bstat, axis=0)                                        # (8, D)
    mean_br = st[0:4] * inv_n
    # E[x^2]-E[x]^2 in f32, clamped; acceptable for activation-scale stats.
    var_br = jnp.maximum(st[4:8] * inv_n - mean_br * mean_br, 0.0)
    a_br = gamma[0:4] * jax.lax.rsqrt(var_br + _BN_EPS)                # (4, D)
    c_br = beta[0:4] - mean_br * a_br
    a_cat = a_br.reshape(1, 4 * D)
    c_cat = c_br.reshape(1, 4 * D)

    # global branch: GAP -> 1x1 conv -> BN over batch -> exact GELU -> its
    # rank-1 contribution to the 5-way projection (constant row per image).
    g = gap[:, 0, :] @ params['wg']                                    # (B, D)
    gm = jnp.mean(g, axis=0)
    gv = jnp.maximum(jnp.mean(g * g, axis=0) - gm * gm, 0.0)
    x5 = jax.nn.gelu((g - gm) * jax.lax.rsqrt(gv + _BN_EPS) * gamma[4] + beta[4],
                     approximate=False)                                # (B, D)
    x5proj = (x5 @ params['wp'][4 * D:5 * D, :]).reshape(B, 1, D).astype(f32)
    wp4 = params['wp'][0:4 * D, :]                                     # (4D, D)

    # ---- pass B: folded branch BN + GELU + K=4D projection matmul ----
    kern_b = functools.partial(_project_kernel, use_bf16=use_bf16_matmul)
    grid_b = pltpu.PrefetchScalarGridSpec(
        num_scalar_prefetch=0, grid=(B,),
        in_specs=[
            row_spec(4 * D),
            _full_spec((1, 4 * D)), _full_spec((1, 4 * D)),
            pl.BlockSpec((1, 1, D), lambda b: (b, 0, 0)),
            _full_spec((4 * D, D)),
        ],
        out_specs=[
            row_spec(D),
            pl.BlockSpec((1, 2, D), lambda b: (b, 0, 0)),
        ],
    )
    ce_b = pl.CostEstimate(
        flops=2 * B * L * 4 * D * D + 6 * B * L * D,
        transcendentals=B * L * 4 * D,
        bytes_accessed=(2 * B * L * 4 * D + 2 * B * L * D
                        + 4 * (8 * D + 4 * D * D + B * D + 2 * B * D)),
    )
    yproj, pstat = pl.pallas_call(
        kern_b,
        out_shape=(
            jax.ShapeDtypeStruct((B, L, D), inter_dt),
            jax.ShapeDtypeStruct((B, 2, D), f32),
        ),
        grid_spec=grid_b,
        compiler_params=_compiler_params(),
        cost_estimate=ce_b,
    )(ybr, a_cat, c_cat, x5proj, wp4)

    # projection BN finalize (XLA, tiny)
    stp = jnp.sum(pstat, axis=0)                                       # (2, D)
    mean_p = stp[0] * inv_n
    var_p = jnp.maximum(stp[1] * inv_n - mean_p * mean_p, 0.0)
    a_pv = gamma[5] * jax.lax.rsqrt(var_p + _BN_EPS)
    c_pv = beta[5] - mean_p * a_pv
    a_p = a_pv.reshape(1, D)
    c_p = c_pv.reshape(1, D)

    # ---- pass C: projection BN + GELU + to_sequence Linear ----
    kern_c = functools.partial(_output_kernel, use_bf16=use_bf16_matmul)
    grid_c = pltpu.PrefetchScalarGridSpec(
        num_scalar_prefetch=0, grid=(B,),
        in_specs=[
            row_spec(D),
            _full_spec((1, D)), _full_spec((1, D)),
            _full_spec(params['ws'].shape), _full_spec(params['bs'].shape),
        ],
        out_specs=row_spec(Cin),
    )
    ce_c = pl.CostEstimate(
        flops=2 * B * L * D * Cin,
        transcendentals=B * L * D,
        bytes_accessed=(2 * B * L * D + 4 * B * L * Cin
                        + 4 * (D * Cin + 2 * D + Cin)),
    )
    out = pl.pallas_call(
        kern_c,
        out_shape=jax.ShapeDtypeStruct((B, L, Cin), f32),
        grid_spec=grid_c,
        compiler_params=_compiler_params(),
        cost_estimate=ce_c,
    )(yproj, a_p, c_p, params['ws'], params['bs'])

    return out


def init_params(key, input_dim, output_dim):
    Cin, D = input_dim, output_dim
    ks = jax.random.split(key, 12)
    s = 0.1
    return {
        # Linear(Cin -> D): stored as (in, out); bias as (1, out)
        'wf': s * jax.random.normal(ks[0], (Cin, D), jnp.float32),
        'bf': s * jax.random.normal(ks[1], (1, D), jnp.float32),
        # aspp1: 1x1 conv weight stored transposed as (in, out)
        'w1': s * jax.random.normal(ks[2], (D, D), jnp.float32),
        # aspp2/3/4: 3x3 dilated conv weights flattened per-tap to (9*D_in, D_out)
        # (row block t = ky*3+kx equals torch_weight[:, :, ky, kx].T)
        'w2': s * jax.random.normal(ks[3], (9 * D, D), jnp.float32),
        'w3': s * jax.random.normal(ks[4], (9 * D, D), jnp.float32),
        'w4': s * jax.random.normal(ks[5], (9 * D, D), jnp.float32),
        # global 1x1 conv
        'wg': s * jax.random.normal(ks[6], (D, D), jnp.float32),
        # projection 1x1 conv: (5D in, D out), row blocks in concat order x1..x5
        'wp': s * jax.random.normal(ks[7], (5 * D, D), jnp.float32),
        # to_sequence Linear(D -> Cin)
        'ws': s * jax.random.normal(ks[8], (D, Cin), jnp.float32),
        'bs': s * jax.random.normal(ks[9], (1, Cin), jnp.float32),
        # BatchNorm affine params, rows: norm1..norm4, global_norm, proj_norm
        'gamma': 1.0 + 0.1 * jax.random.normal(ks[10], (6, D), jnp.float32),
        'beta': 0.1 * jax.random.normal(ks[11], (6, D), jnp.float32),
    }


if __name__ == "__main__":
    B, H, W = 2, 16, 16
    input_dim, output_dim = 128, 128          # lane-dense channel dims
    rates = (3, 6, 9)
    L = H * W

    key = jax.random.PRNGKey(0)
    pkey, xkey = jax.random.split(key)
    params = init_params(pkey, input_dim, output_dim)
    x = jax.random.normal(xkey, (B, L, input_dim), jnp.float32)

    out = aspp_forward(x, params, (H, W), rates)
    out = jax.block_until_ready(out)

    assert out.shape == (B, L, input_dim), out.shape
    assert bool(jnp.all(jnp.isfinite(out)))
    print("KERNEL_OK")
</pallas_src>

<mosaic_0001>
module attributes {stable_mosaic.version = 11 : i64} {
  func.func @_branch_kernel(%arg0: i32, %arg1: memref<1x256x128xf32, #tpu.memory_space<vmem>>, %arg2: memref<256x27xf32, #tpu.memory_space<vmem>>, %arg3: memref<128x128xf32, #tpu.memory_space<vmem>>, %arg4: memref<1x128xf32, #tpu.memory_space<vmem>>, %arg5: memref<128x128xf32, #tpu.memory_space<vmem>>, %arg6: memref<1152x128xf32, #tpu.memory_space<vmem>>, %arg7: memref<1152x128xf32, #tpu.memory_space<vmem>>, %arg8: memref<1152x128xf32, #tpu.memory_space<vmem>>, %arg9: memref<1x256x512xbf16, #tpu.memory_space<vmem>>, %arg10: memref<1x8x128xf32, #tpu.memory_space<vmem>>, %arg11: memref<1x1x128xf32, #tpu.memory_space<vmem>>) attributes {dimension_semantics = [#tpu.dimension_semantics<parallel>], iteration_bounds = array<i64: 2>, scalar_prefetch = 0 : i64, scratch_operands = 0 : i64, tpu.core_type = #tpu.core_type<tc>, window_params = [{transform_indices = @transform_0, window_bounds = array<i64: 1, 256, 128>}, {pipeline_mode = #tpu.pipeline_mode<synchronous>, transform_indices = @transform_1, window_bounds = array<i64: 256, 27>}, {pipeline_mode = #tpu.pipeline_mode<synchronous>, transform_indices = @transform_2, window_bounds = array<i64: 128, 128>}, {pipeline_mode = #tpu.pipeline_mode<synchronous>, transform_indices = @transform_3, window_bounds = array<i64: 1, 128>}, {pipeline_mode = #tpu.pipeline_mode<synchronous>, transform_indices = @transform_4, window_bounds = array<i64: 128, 128>}, {pipeline_mode = #tpu.pipeline_mode<synchronous>, transform_indices = @transform_5, window_bounds = array<i64: 1152, 128>}, {pipeline_mode = #tpu.pipeline_mode<synchronous>, transform_indices = @transform_6, window_bounds = array<i64: 1152, 128>}, {pipeline_mode = #tpu.pipeline_mode<synchronous>, transform_indices = @transform_7, window_bounds = array<i64: 1152, 128>}, {transform_indices = @transform_8, window_bounds = array<i64: 1, 256, 512>}, {transform_indices = @transform_9, window_bounds = array<i64: 1, 8, 128>}, {transform_indices = @transform_10, window_bounds = array<i64: 1, 1, 128>}]} {
    %c0 = arith.constant 0 : index
    %c0_0 = arith.constant 0 : index
    %c0_1 = arith.constant 0 : index
    %0 = vector.load %arg1[%c0, %c0_0, %c0_1] : memref<1x256x128xf32, #tpu.memory_space<vmem>>, vector<1x256x128xf32>
    %1 = vector.shape_cast %0 : vector<1x256x128xf32> to vector<256x128xf32>
    %c0_2 = arith.constant 0 : index
    %c0_3 = arith.constant 0 : index
    %2 = vector.load %arg3[%c0_2, %c0_3] : memref<128x128xf32, #tpu.memory_space<vmem>>, vector<128x128xf32>
    %3 = arith.truncf %1 : vector<256x128xf32> to vector<256x128xbf16>
    %4 = arith.truncf %2 : vector<128x128xf32> to vector<128x128xbf16>
    %cst = arith.constant dense<0.000000e+00> : vector<256x128xf32>
    %5 = tpu.matmul %3, %4, %cst {dimension_numbers = #tpu.dot_dimension_numbers<[1], [0], [0], [1], [0, 0, 1, 1], [], []>} : vector<256x128xbf16>, vector<128x128xbf16>, vector<256x128xf32> -> vector<256x128xf32>
    %c0_4 = arith.constant 0 : index
    %c0_5 = arith.constant 0 : index
    %6 = vector.load %arg4[%c0_4, %c0_5] : memref<1x128xf32, #tpu.memory_space<vmem>>, vector<1x128xf32>
    %7 = vector.broadcast %6 : vector<1x128xf32> to vector<256x128xf32>
    %8 = arith.addf %5, %7 : vector<256x128xf32>
    %c0_6 = arith.constant 0 : index
    %c0_7 = arith.constant 0 : index
    %9 = vector.load %arg5[%c0_6, %c0_7] : memref<128x128xf32, #tpu.memory_space<vmem>>, vector<128x128xf32>
    %10 = arith.truncf %8 : vector<256x128xf32> to vector<256x128xbf16>
    %11 = arith.truncf %9 : vector<128x128xf32> to vector<128x128xbf16>
    %cst_8 = arith.constant dense<0.000000e+00> : vector<256x128xf32>
    %12 = tpu.matmul %10, %11, %cst_8 {dimension_numbers = #tpu.dot_dimension_numbers<[1], [0], [0], [1], [0, 0, 1, 1], [], []>} : vector<256x128xbf16>, vector<128x128xbf16>, vector<256x128xf32> -> vector<256x128xf32>
    %c51_i32 = arith.constant 51 : i32
    %13 = tpu.dynamic_rotate %8 by %c51_i32 dim 0 : vector<256x128xf32>, i32 -> vector<256x128xf32>
    %c0_9 = arith.constant 0 : index
    %c0_10 = arith.constant 0 : index
    %14 = vector.load %arg2[%c0_9, %c0_10] : memref<256x27xf32, #tpu.memory_space<vmem>>, vector<256x1xf32>
    %15 = vector.broadcast %14 : vector<256x1xf32> to vector<256x128xf32>
    %16 = arith.mulf %13, %15 : vector<256x128xf32>
    %c48_i32 = arith.constant 48 : i32
    %17 = tpu.dynamic_rotate %8 by %c48_i32 dim 0 : vector<256x128xf32>, i32 -> vector<256x128xf32>
    %c0_11 = arith.constant 0 : index
    %c1 = arith.constant 1 : index
    %18 = vector.load %arg2[%c0_11, %c1] : memref<256x27xf32, #tpu.memory_space<vmem>>, vector<256x1xf32>
    %19 = vector.broadcast %18 : vector<256x1xf32> to vector<256x128xf32>
    %20 = arith.mulf %17, %19 : vector<256x128xf32>
    %c45_i32 = arith.constant 45 : i32
    %21 = tpu.dynamic_rotate %8 by %c45_i32 dim 0 : vector<256x128xf32>, i32 -> vector<256x128xf32>
    %c0_12 = arith.constant 0 : index
    %c2 = arith.constant 2 : index
    %22 = vector.load %arg2[%c0_12, %c2] : memref<256x27xf32, #tpu.memory_space<vmem>>, vector<256x1xf32>
    %23 = vector.broadcast %22 : vector<256x1xf32> to vector<256x128xf32>
    %24 = arith.mulf %21, %23 : vector<256x128xf32>
    %25 = tpu.concatenate %16, %20, %24 in 1 : vector<256x128xf32>, vector<256x128xf32>, vector<256x128xf32> -> vector<256x384xf32>
    %c0_13 = arith.constant 0 : index
    %c0_14 = arith.constant 0 : index
    %26 = vector.load %arg6[%c0_13, %c0_14] : memref<1152x128xf32, #tpu.memory_space<vmem>>, vector<384x128xf32>
    %27 = arith.truncf %25 : vector<256x384xf32> to vector<256x384xbf16>
    %28 = arith.truncf %26 : vector<384x128xf32> to vector<384x128xbf16>
    %cst_15 = arith.constant dense<0.000000e+00> : vector<256x128xf32>
    %29 = tpu.matmul %27, %28, %cst_15 {dimension_numbers = #tpu.dot_dimension_numbers<[1], [0], [0], [1], [0, 0, 1, 1], [], []>} : vector<256x384xbf16>, vector<384x128xbf16>, vector<256x128xf32> -> vector<256x128xf32>
    %c3_i32 = arith.constant 3 : i32
    %30 = tpu.dynamic_rotate %8 by %c3_i32 dim 0 : vector<256x128xf32>, i32 -> vector<256x128xf32>
    %c0_16 = arith.constant 0 : index
    %c3 = arith.constant 3 : index
    %31 = vector.load %arg2[%c0_16, %c3] : memref<256x27xf32, #tpu.memory_space<vmem>>, vector<256x1xf32>
    %32 = vector.broadcast %31 : vector<256x1xf32> to vector<256x128xf32>
    %33 = arith.mulf %30, %32 : vector<256x128xf32>
    %c253_i32 = arith.constant 253 : i32
    %34 = tpu.dynamic_rotate %8 by %c253_i32 dim 0 : vector<256x128xf32>, i32 -> vector<256x128xf32>
    %c0_17 = arith.constant 0 : index
    %c5 = arith.constant 5 : index
    %35 = vector.load %arg2[%c0_17, %c5] : memref<256x27xf32, #tpu.memory_space<vmem>>, vector<256x1xf32>
    %36 = vector.broadcast %35 : vector<256x1xf32> to vector<256x128xf32>
    %37 = arith.mulf %34, %36 : vector<256x128xf32>
    %38 = tpu.concatenate %33, %8, %37 in 1 : vector<256x128xf32>, vector<256x128xf32>, vector<256x128xf32> -> vector<256x384xf32>
    %c384 = arith.constant 384 : index
    %c0_18 = arith.constant 0 : index
    %39 = vector.load %arg6[%c384, %c0_18] : memref<1152x128xf32, #tpu.memory_space<vmem>>, vector<384x128xf32>
    %40 = arith.truncf %38 : vector<256x384xf32> to vector<256x384xbf16>
    %41 = arith.truncf %39 : vector<384x128xf32> to vector<384x128xbf16>
    %cst_19 = arith.constant dense<0.000000e+00> : vector<256x128xf32>
    %42 = tpu.matmul %40, %41, %cst_19 {dimension_numbers = #tpu.dot_dimension_numbers<[1], [0], [0], [1], [0, 0, 1, 1], [], []>} : vector<256x384xbf16>, vector<384x128xbf16>, vector<256x128xf32> -> vector<256x128xf32>
    %43 = arith.addf %29, %42 : vector<256x128xf32>
    %c211_i32 = arith.constant 211 : i32
    %44 = tpu.dynamic_rotate %8 by %c211_i32 dim 0 : vector<256x128xf32>, i32 -> vector<256x128xf32>
    %c0_20 = arith.constant 0 : index
    %c6 = arith.constant 6 : index
    %45 = vector.load %arg2[%c0_20, %c6] : memref<256x27xf32, #tpu.memory_space<vmem>>, vector<256x1xf32>
    %46 = vector.broadcast %45 : vector<256x1xf32> to vector<256x128xf32>
    %47 = arith.mulf %44, %46 : vector<256x128xf32>
    %c208_i32 = arith.constant 208 : i32
    %48 = tpu.dynamic_rotate %8 by %c208_i32 dim 0 : vector<256x128xf32>, i32 -> vector<256x128xf32>
    %c0_21 = arith.constant 0 : index
    %c7 = arith.constant 7 : index
    %49 = vector.load %arg2[%c0_21, %c7] : memref<256x27xf32, #tpu.memory_space<vmem>>, vector<256x1xf32>
    %50 = vector.broadcast %49 : vector<256x1xf32> to vector<256x128xf32>
    %51 = arith.mulf %48, %50 : vector<256x128xf32>
    %c205_i32 = arith.constant 205 : i32
    %52 = tpu.dynamic_rotate %8 by %c205_i32 dim 0 : vector<256x128xf32>, i32 -> vector<256x128xf32>
    %c0_22 = arith.constant 0 : index
    %c8 = arith.constant 8 : index
    %53 = vector.load %arg2[%c0_22, %c8] : memref<256x27xf32, #tpu.memory_space<vmem>>, vector<256x1xf32>
    %54 = vector.broadcast %53 : vector<256x1xf32> to vector<256x128xf32>
    %55 = arith.mulf %52, %54 : vector<256x128xf32>
    %56 = tpu.concatenate %47, %51, %55 in 1 : vector<256x128xf32>, vector<256x128xf32>, vector<256x128xf32> -> vector<256x384xf32>
    %c768 = arith.constant 768 : index
    %c0_23 = arith.constant 0 : index
    %57 = vector.load %arg6[%c768, %c0_23] : memref<1152x128xf32, #tpu.memory_space<vmem>>, vector<384x128xf32>
    %58 = arith.truncf %56 : vector<256x384xf32> to vector<256x384xbf16>
    %59 = arith.truncf %57 : vector<384x128xf32> to vector<384x128xbf16>
    %cst_24 = arith.constant dense<0.000000e+00> : vector<256x128xf32>
    %60 = tpu.matmul %58, %59, %cst_24 {dimension_numbers = #tpu.dot_dimension_numbers<[1], [0], [0], [1], [0, 0, 1, 1], [], []>} : vector<256x384xbf16>, vector<384x128xbf16>, vector<256x128xf32> -> vector<256x128xf32>
    %61 = arith.addf %43, %60 : vector<256x128xf32>
    %c102_i32 = arith.constant 102 : i32
    %62 = tpu.dynamic_rotate %8 by %c102_i32 dim 0 : vector<256x128xf32>, i32 -> vector<256x128xf32>
    %c0_25 = arith.constant 0 : index
    %c9 = arith.constant 9 : index
    %63 = vector.load %arg2[%c0_25, %c9] : memref<256x27xf32, #tpu.memory_space<vmem>>, vector<256x1xf32>
    %64 = vector.broadcast %63 : vector<256x1xf32> to vector<256x128xf32>
    %65 = arith.mulf %62, %64 : vector<256x128xf32>
    %c96_i32 = arith.constant 96 : i32
    %66 = tpu.dynamic_rotate %8 by %c96_i32 dim 0 : vector<256x128xf32>, i32 -> vector<256x128xf32>
    %c0_26 = arith.constant 0 : index
    %c10 = arith.constant 10 : index
    %67 = vector.load %arg2[%c0_26, %c10] : memref<256x27xf32, #tpu.memory_space<vmem>>, vector<256x1xf32>
    %68 = vector.broadcast %67 : vector<256x1xf32> to vector<256x128xf32>
    %69 = arith.mulf %66, %68 : vector<256x128xf32>
    %c90_i32 = arith.constant 90 : i32
    %70 = tpu.dynamic_rotate %8 by %c90_i32 dim 0 : vector<256x128xf32>, i32 -> vector<256x128xf32>
    %c0_27 = arith.constant 0 : index
    %c11 = arith.constant 11 : index
    %71 = vector.load %arg2[%c0_27, %c11] : memref<256x27xf32, #tpu.memory_space<vmem>>, vector<256x1xf32>
    %72 = vector.broadcast %71 : vector<256x1xf32> to vector<256x128xf32>
    %73 = arith.mulf %70, %72 : vector<256x128xf32>
    %74 = tpu.concatenate %65, %69, %73 in 1 : vector<256x128xf32>, vector<256x128xf32>, vector<256x128xf32> -> vector<256x384xf32>
    %c0_28 = arith.constant 0 : index
    %c0_29 = arith.constant 0 : index
    %75 = vector.load %arg7[%c0_28, %c0_29] : memref<1152x128xf32, #tpu.memory_space<vmem>>, vector<384x128xf32>
    %76 = arith.truncf %74 : vector<256x384xf32> to vector<256x384xbf16>
    %77 = arith.truncf %75 : vector<384x128xf32> to vector<384x128xbf16>
    %cst_30 = arith.constant dense<0.000000e+00> : vector<256x128xf32>
    %78 = tpu.matmul %76, %77, %cst_30 {dimension_numbers = #tpu.dot_dimension_numbers<[1], [0], [0], [1], [0, 0, 1, 1], [], []>} : vector<256x384xbf16>, vector<384x128xbf16>, vector<256x128xf32> -> vector<256x128xf32>
    %c6_i32 = arith.constant 6 : i32
    %79 = tpu.dynamic_rotate %8 by %c6_i32 dim 0 : vector<256x128xf32>, i32 -> vector<256x128xf32>
    %c0_31 = arith.constant 0 : index
    %c12 = arith.constant 12 : index
    %80 = vector.load %arg2[%c0_31, %c12] : memref<256x27xf32, #tpu.memory_space<vmem>>, vector<256x1xf32>
    %81 = vector.broadcast %80 : vector<256x1xf32> to vector<256x128xf32>
    %82 = arith.mulf %79, %81 : vector<256x128xf32>
    %c250_i32 = arith.constant 250 : i32
    %83 = tpu.dynamic_rotate %8 by %c250_i32 dim 0 : vector<256x128xf32>, i32 -> vector<256x128xf32>
    %c0_32 = arith.constant 0 : index
    %c14 = arith.constant 14 : index
    %84 = vector.load %arg2[%c0_32, %c14] : memref<256x27xf32, #tpu.memory_space<vmem>>, vector<256x1xf32>
    %85 = vector.broadcast %84 : vector<256x1xf32> to vector<256x128xf32>
    %86 = arith.mulf %83, %85 : vector<256x128xf32>
    %87 = tpu.concatenate %82, %8, %86 in 1 : vector<256x128xf32>, vector<256x128xf32>, vector<256x128xf32> -> vector<256x384xf32>
    %c384_33 = arith.constant 384 : index
    %c0_34 = arith.constant 0 : index
    %88 = vector.load %arg7[%c384_33, %c0_34] : memref<1152x128xf32, #tpu.memory_space<vmem>>, vector<384x128xf32>
    %89 = arith.truncf %87 : vector<256x384xf32> to vector<256x384xbf16>
    %90 = arith.truncf %88 : vector<384x128xf32> to vector<384x128xbf16>
    %cst_35 = arith.constant dense<0.000000e+00> : vector<256x128xf32>
    %91 = tpu.matmul %89, %90, %cst_35 {dimension_numbers = #tpu.dot_dimension_numbers<[1], [0], [0], [1], [0, 0, 1, 1], [], []>} : vector<256x384xbf16>, vector<384x128xbf16>, vector<256x128xf32> -> vector<256x128xf32>
    %92 = arith.addf %78, %91 : vector<256x128xf32>
    %c166_i32 = arith.constant 166 : i32
    %93 = tpu.dynamic_rotate %8 by %c166_i32 dim 0 : vector<256x128xf32>, i32 -> vector<256x128xf32>
    %c0_36 = arith.constant 0 : index
    %c15 = arith.constant 15 : index
    %94 = vector.load %arg2[%c0_36, %c15] : memref<256x27xf32, #tpu.memory_space<vmem>>, vector<256x1xf32>
    %95 = vector.broadcast %94 : vector<256x1xf32> to vector<256x128xf32>
    %96 = arith.mulf %93, %95 : vector<256x128xf32>
    %c160_i32 = arith.constant 160 : i32
    %97 = tpu.dynamic_rotate %8 by %c160_i32 dim 0 : vector<256x128xf32>, i32 -> vector<256x128xf32>
    %c0_37 = arith.constant 0 : index
    %c16 = arith.constant 16 : index
    %98 = vector.load %arg2[%c0_37, %c16] : memref<256x27xf32, #tpu.memory_space<vmem>>, vector<256x1xf32>
    %99 = vector.broadcast %98 : vector<256x1xf32> to vector<256x128xf32>
    %100 = arith.mulf %97, %99 : vector<256x128xf32>
    %c154_i32 = arith.constant 154 : i32
    %101 = tpu.dynamic_rotate %8 by %c154_i32 dim 0 : vector<256x128xf32>, i32 -> vector<256x128xf32>
    %c0_38 = arith.constant 0 : index
    %c17 = arith.constant 17 : index
    %102 = vector.load %arg2[%c0_38, %c17] : memref<256x27xf32, #tpu.memory_space<vmem>>, vector<256x1xf32>
    %103 = vector.broadcast %102 : vector<256x1xf32> to vector<256x128xf32>
    %104 = arith.mulf %101, %103 : vector<256x128xf32>
    %105 = tpu.concatenate %96, %100, %104 in 1 : vector<256x128xf32>, vector<256x128xf32>, vector<256x128xf32> -> vector<256x384xf32>
    %c768_39 = arith.constant 768 : index
    %c0_40 = arith.constant 0 : index
    %106 = vector.load %arg7[%c768_39, %c0_40] : memref<1152x128xf32, #tpu.memory_space<vmem>>, vector<384x128xf32>
    %107 = arith.truncf %105 : vector<256x384xf32> to vector<256x384xbf16>
    %108 = arith.truncf %106 : vector<384x128xf32> to vector<384x128xbf16>
    %cst_41 = arith.constant dense<0.000000e+00> : vector<256x128xf32>
    %109 = tpu.matmul %107, %108, %cst_41 {dimension_numbers = #tpu.dot_dimension_numbers<[1], [0], [0], [1], [0, 0, 1, 1], [], []>} : vector<256x384xbf16>, vector<384x128xbf16>, vector<256x128xf32> -> vector<256x128xf32>
    %110 = arith.addf %92, %109 : vector<256x128xf32>
    %c153_i32 = arith.constant 153 : i32
    %111 = tpu.dynamic_rotate %8 by %c153_i32 dim 0 : vector<256x128xf32>, i32 -> vector<256x128xf32>
    %c0_42 = arith.constant 0 : index
    %c18 = arith.constant 18 : index
    %112 = vector.load %arg2[%c0_42, %c18] : memref<256x27xf32, #tpu.memory_space<vmem>>, vector<256x1xf32>
    %113 = vector.broadcast %112 : vector<256x1xf32> to vector<256x128xf32>
    %114 = arith.mulf %111, %113 : vector<256x128xf32>
    %c144_i32 = arith.constant 144 : i32
    %115 = tpu.dynamic_rotate %8 by %c144_i32 dim 0 : vector<256x128xf32>, i32 -> vector<256x128xf32>
    %c0_43 = arith.constant 0 : index
    %c19 = arith.constant 19 : index
    %116 = vector.load %arg2[%c0_43, %c19] : memref<256x27xf32, #tpu.memory_space<vmem>>, vector<256x1xf32>
    %117 = vector.broadcast %116 : vector<256x1xf32> to vector<256x128xf32>
    %118 = arith.mulf %115, %117 : vector<256x128xf32>
    %c135_i32 = arith.constant 135 : i32
    %119 = tpu.dynamic_rotate %8 by %c135_i32 dim 0 : vector<256x128xf32>, i32 -> vector<256x128xf32>
    %c0_44 = arith.constant 0 : index
    %c20 = arith.constant 20 : index
    %120 = vector.load %arg2[%c0_44, %c20] : memref<256x27xf32, #tpu.memory_space<vmem>>, vector<256x1xf32>
    %121 = vector.broadcast %120 : vector<256x1xf32> to vector<256x128xf32>
    %122 = arith.mulf %119, %121 : vector<256x128xf32>
    %123 = tpu.concatenate %114, %118, %122 in 1 : vector<256x128xf32>, vector<256x128xf32>, vector<256x128xf32> -> vector<256x384xf32>
    %c0_45 = arith.constant 0 : index
    %c0_46 = arith.constant 0 : index
    %124 = vector.load %arg8[%c0_45, %c0_46] : memref<1152x128xf32, #tpu.memory_space<vmem>>, vector<384x128xf32>
    %125 = arith.truncf %123 : vector<256x384xf32> to vector<256x384xbf16>
    %126 = arith.truncf %124 : vector<384x128xf32> to vector<384x128xbf16>
    %cst_47 = arith.constant dense<0.000000e+00> : vector<256x128xf32>
    %127 = tpu.matmul %125, %126, %cst_47 {dimension_numbers = #tpu.dot_dimension_numbers<[1], [0], [0], [1], [0, 0, 1, 1], [], []>} : vector<256x384xbf16>, vector<384x128xbf16>, vector<256x128xf32> -> vector<256x128xf32>
    %c9_i32 = arith.constant 9 : i32
    %128 = tpu.dynamic_rotate %8 by %c9_i32 dim 0 : vector<256x128xf32>, i32 -> vector<256x128xf32>
    %c0_48 = arith.constant 0 : index
    %c21 = arith.constant 21 : index
    %129 = vector.load %arg2[%c0_48, %c21] : memref<256x27xf32, #tpu.memory_space<vmem>>, vector<256x1xf32>
    %130 = vector.broadcast %129 : vector<256x1xf32> to vector<256x128xf32>
    %131 = arith.mulf %128, %130 : vector<256x128xf32>
    %c247_i32 = arith.constant 247 : i32
    %132 = tpu.dynamic_rotate %8 by %c247_i32 dim 0 : vector<256x128xf32>, i32 -> vector<256x128xf32>
    %c0_49 = arith.constant 0 : index
    %c23 = arith.constant 23 : index
    %133 = vector.load %arg2[%c0_49, %c23] : memref<256x27xf32, #tpu.memory_space<vmem>>, vector<256x1xf32>
    %134 = vector.broadcast %133 : vector<256x1xf32> to vector<256x128xf32>
    %135 = arith.mulf %132, %134 : vector<256x128xf32>
    %136 = tpu.concatenate %131, %8, %135 in 1 : vector<256x128xf32>, vector<256x128xf32>, vector<256x128xf32> -> vector<256x384xf32>
    %c384_50 = arith.constant 384 : index
    %c0_51 = arith.constant 0 : index
    %137 = vector.load %arg8[%c384_50, %c0_51] : memref<1152x128xf32, #tpu.memory_space<vmem>>, vector<384x128xf32>
    %138 = arith.truncf %136 : vector<256x384xf32> to vector<256x384xbf16>
    %139 = arith.truncf %137 : vector<384x128xf32> to vector<384x128xbf16>
    %cst_52 = arith.constant dense<0.000000e+00> : vector<256x128xf32>
    %140 = tpu.matmul %138, %139, %cst_52 {dimension_numbers = #tpu.dot_dimension_numbers<[1], [0], [0], [1], [0, 0, 1, 1], [], []>} : vector<256x384xbf16>, vector<384x128xbf16>, vector<256x128xf32> -> vector<256x128xf32>
    %141 = arith.addf %127, %140 : vector<256x128xf32>
    %c121_i32 = arith.constant 121 : i32
    %142 = tpu.dynamic_rotate %8 by %c121_i32 dim 0 : vector<256x128xf32>, i32 -> vector<256x128xf32>
    %c0_53 = arith.constant 0 : index
    %c24 = arith.constant 24 : index
    %143 = vector.load %arg2[%c0_53, %c24] : memref<256x27xf32, #tpu.memory_space<vmem>>, vector<256x1xf32>
    %144 = vector.broadcast %143 : vector<256x1xf32> to vector<256x128xf32>
    %145 = arith.mulf %142, %144 : vector<256x128xf32>
    %c112_i32 = arith.constant 112 : i32
    %146 = tpu.dynamic_rotate %8 by %c112_i32 dim 0 : vector<256x128xf32>, i32 -> vector<256x128xf32>
    %c0_54 = arith.constant 0 : index
    %c25 = arith.constant 25 : index
    %147 = vector.load %arg2[%c0_54, %c25] : memref<256x27xf32, #tpu.memory_space<vmem>>, vector<256x1xf32>
    %148 = vector.broadcast %147 : vector<256x1xf32> to vector<256x128xf32>
    %149 = arith.mulf %146, %148 : vector<256x128xf32>
    %c103_i32 = arith.constant 103 : i32
    %150 = tpu.dynamic_rotate %8 by %c103_i32 dim 0 : vector<256x128xf32>, i32 -> vector<256x128xf32>
    %c0_55 = arith.constant 0 : index
    %c26 = arith.constant 26 : index
    %151 = vector.load %arg2[%c0_55, %c26] : memref<256x27xf32, #tpu.memory_space<vmem>>, vector<256x1xf32>
    %152 = vector.broadcast %151 : vector<256x1xf32> to vector<256x128xf32>
    %153 = arith.mulf %150, %152 : vector<256x128xf32>
    %154 = tpu.concatenate %145, %149, %153 in 1 : vector<256x128xf32>, vector<256x128xf32>, vector<256x128xf32> -> vector<256x384xf32>
    %c768_56 = arith.constant 768 : index
    %c0_57 = arith.constant 0 : index
    %155 = vector.load %arg8[%c768_56, %c0_57] : memref<1152x128xf32, #tpu.memory_space<vmem>>, vector<384x128xf32>
    %156 = arith.truncf %154 : vector<256x384xf32> to vector<256x384xbf16>
    %157 = arith.truncf %155 : vector<384x128xf32> to vector<384x128xbf16>
    %cst_58 = arith.constant dense<0.000000e+00> : vector<256x128xf32>
    %158 = tpu.matmul %156, %157, %cst_58 {dimension_numbers = #tpu.dot_dimension_numbers<[1], [0], [0], [1], [0, 0, 1, 1], [], []>} : vector<256x384xbf16>, vector<384x128xbf16>, vector<256x128xf32> -> vector<256x128xf32>
    %159 = arith.addf %141, %158 : vector<256x128xf32>
    %160 = tpu.concatenate %12, %61, %110, %159 in 1 : vector<256x128xf32>, vector<256x128xf32>, vector<256x128xf32>, vector<256x128xf32> -> vector<256x512xf32>
    %161 = arith.truncf %160 : vector<256x512xf32> to vector<256x512xbf16>
    %c0_59 = arith.constant 0 : index
    %c0_60 = arith.constant 0 : index
    %c0_61 = arith.constant 0 : index
    %162 = vector.load %arg9[%c0_59, %c0_60, %c0_61] : memref<1x256x512xbf16, #tpu.memory_space<vmem>>, vector<1x256x512xbf16>
    %163 = vector.shape_cast %162 : vector<1x256x512xbf16> to vector<256x512xbf16>
    %164 = vector.shape_cast %161 : vector<256x512xbf16> to vector<1x256x512xbf16>
    tpu.vector_store %arg9[%c0_59, %c0_60, %c0_61], %164 {strides = array<i32>} : memref<1x256x512xbf16, #tpu.memory_space<vmem>>, vector<1x256x512xbf16>,
    %cst_62 = arith.constant dense<0.000000e+00> : vector<128xf32>
    %165 = vector.multi_reduction <add>, %12, %cst_62 [0] : vector<256x128xf32> to vector<128xf32>
    %166 = vector.shape_cast %165 : vector<128xf32> to vector<1x128xf32>
    %cst_63 = arith.constant dense<0.000000e+00> : vector<128xf32>
    %167 = vector.multi_reduction <add>, %61, %cst_63 [0] : vector<256x128xf32> to vector<128xf32>
    %168 = vector.shape_cast %167 : vector<128xf32> to vector<1x128xf32>
    %cst_64 = arith.constant dense<0.000000e+00> : vector<128xf32>
    %169 = vector.multi_reduction <add>, %110, %cst_64 [0] : vector<256x128xf32> to vector<128xf32>
    %170 = vector.shape_cast %169 : vector<128xf32> to vector<1x128xf32>
    %cst_65 = arith.constant dense<0.000000e+00> : vector<128xf32>
    %171 = vector.multi_reduction <add>, %159, %cst_65 [0] : vector<256x128xf32> to vector<128xf32>
    %172 = vector.shape_cast %171 : vector<128xf32> to vector<1x128xf32>
    %173 = arith.mulf %12, %12 : vector<256x128xf32>
    %cst_66 = arith.constant dense<0.000000e+00> : vector<128xf32>
    %174 = vector.multi_reduction <add>, %173, %cst_66 [0] : vector<256x128xf32> to vector<128xf32>
    %175 = vector.shape_cast %174 : vector<128xf32> to vector<1x128xf32>
    %176 = arith.mulf %61, %61 : vector<256x128xf32>
    %cst_67 = arith.constant dense<0.000000e+00> : vector<128xf32>
    %177 = vector.multi_reduction <add>, %176, %cst_67 [0] : vector<256x128xf32> to vector<128xf32>
    %178 = vector.shape_cast %177 : vector<128xf32> to vector<1x128xf32>
    %179 = arith.mulf %110, %110 : vector<256x128xf32>
    %cst_68 = arith.constant dense<0.000000e+00> : vector<128xf32>
    %180 = vector.multi_reduction <add>, %179, %cst_68 [0] : vector<256x128xf32> to vector<128xf32>
    %181 = vector.shape_cast %180 : vector<128xf32> to vector<1x128xf32>
    %182 = arith.mulf %159, %159 : vector<256x128xf32>
    %cst_69 = arith.constant dense<0.000000e+00> : vector<128xf32>
    %183 = vector.multi_reduction <add>, %182, %cst_69 [0] : vector<256x128xf32> to vector<128xf32>
    %184 = vector.shape_cast %183 : vector<128xf32> to vector<1x128xf32>
    %185 = tpu.concatenate %166, %168, %170, %172, %175, %178, %181, %184 in 0 : vector<1x128xf32>, vector<1x128xf32>, vector<1x128xf32>, vector<1x128xf32>, vector<1x128xf32>, vector<1x128xf32>, vector<1x128xf32>, vector<1x128xf32> -> vector<8x128xf32>
    %c0_70 = arith.constant 0 : index
    %c0_71 = arith.constant 0 : index
    %c0_72 = arith.constant 0 : index
    %186 = vector.load %arg10[%c0_70, %c0_71, %c0_72] : memref<1x8x128xf32, #tpu.memory_space<vmem>>, vector<1x8x128xf32>
    %187 = vector.shape_cast %186 : vector<1x8x128xf32> to vector<8x128xf32>
    %188 = vector.shape_cast %185 : vector<8x128xf32> to vector<1x8x128xf32>
    tpu.vector_store %arg10[%c0_70, %c0_71, %c0_72], %188 {strides = array<i32>} : memref<1x8x128xf32, #tpu.memory_space<vmem>>, vector<1x8x128xf32>,
    %cst_73 = arith.constant dense<0.000000e+00> : vector<128xf32>
    %189 = vector.multi_reduction <add>, %8, %cst_73 [0] : vector<256x128xf32> to vector<128xf32>
    %190 = vector.shape_cast %189 : vector<128xf32> to vector<1x128xf32>
    %cst_74 = arith.constant 3.906250e-03 : f32
    %191 = vector.broadcast %cst_74 : f32 to vector<1x128xf32>
    %192 = arith.mulf %190, %191 : vector<1x128xf32>
    %c0_75 = arith.constant 0 : index
    %c0_76 = arith.constant 0 : index
    %c0_77 = arith.constant 0 : index
    %193 = vector.load %arg11[%c0_75, %c0_76, %c0_77] : memref<1x1x128xf32, #tpu.memory_space<vmem>>, vector<1x1x128xf32>
    %194 = vector.shape_cast %193 : vector<1x1x128xf32> to vector<1x128xf32>
    %195 = vector.shape_cast %192 : vector<1x128xf32> to vector<1x1x128xf32>
    tpu.vector_store %arg11[%c0_75, %c0_76, %c0_77], %195 {strides = array<i32>} : memref<1x1x128xf32, #tpu.memory_space<vmem>>, vector<1x1x128xf32>,
    return
  }
  func.func @transform_0(%arg0: i32) -> (i32, i32, i32) {
    %c0_i32 = arith.constant 0 : i32
    %c0_i32_0 = arith.constant 0 : i32
    %c0_i32_1 = arith.constant 0 : i32
    return %arg0, %c0_i32, %c0_i32_0 : i32, i32, i32
  }
  func.func @transform_1(%arg0: i32) -> (i32, i32) {
    %c0_i32 = arith.constant 0 : i32
    %c0_i32_0 = arith.constant 0 : i32
    %c0_i32_1 = arith.constant 0 : i32
    return %c0_i32, %c0_i32_0 : i32, i32
  }
  func.func @transform_2(%arg0: i32) -> (i32, i32) {
    %c0_i32 = arith.constant 0 : i32
    %c0_i32_0 = arith.constant 0 : i32
    %c0_i32_1 = arith.constant 0 : i32
    return %c0_i32, %c0_i32_0 : i32, i32
  }
  func.func @transform_3(%arg0: i32) -> (i32, i32) {
    %c0_i32 = arith.constant 0 : i32
    %c0_i32_0 = arith.constant 0 : i32
    %c0_i32_1 = arith.constant 0 : i32
    return %c0_i32, %c0_i32_0 : i32, i32
  }
  func.func @transform_4(%arg0: i32) -> (i32, i32) {
    %c0_i32 = arith.constant 0 : i32
    %c0_i32_0 = arith.constant 0 : i32
    %c0_i32_1 = arith.constant 0 : i32
    return %c0_i32, %c0_i32_0 : i32, i32
  }
  func.func @transform_5(%arg0: i32) -> (i32, i32) {
    %c0_i32 = arith.constant 0 : i32
    %c0_i32_0 = arith.constant 0 : i32
    %c0_i32_1 = arith.constant 0 : i32
    return %c0_i32, %c0_i32_0 : i32, i32
  }
  func.func @transform_6(%arg0: i32) -> (i32, i32) {
    %c0_i32 = arith.constant 0 : i32
    %c0_i32_0 = arith.constant 0 : i32
    %c0_i32_1 = arith.constant 0 : i32
    return %c0_i32, %c0_i32_0 : i32, i32
  }
  func.func @transform_7(%arg0: i32) -> (i32, i32) {
    %c0_i32 = arith.constant 0 : i32
    %c0_i32_0 = arith.constant 0 : i32
    %c0_i32_1 = arith.constant 0 : i32
    return %c0_i32, %c0_i32_0 : i32, i32
  }
  func.func @transform_8(%arg0: i32) -> (i32, i32, i32) {
    %c0_i32 = arith.constant 0 : i32
    %c0_i32_0 = arith.constant 0 : i32
    %c0_i32_1 = arith.constant 0 : i32
    return %arg0, %c0_i32, %c0_i32_0 : i32, i32, i32
  }
  func.func @transform_9(%arg0: i32) -> (i32, i32, i32) {
    %c0_i32 = arith.constant 0 : i32
    %c0_i32_0 = arith.constant 0 : i32
    %c0_i32_1 = arith.constant 0 : i32
    return %arg0, %c0_i32, %c0_i32_0 : i32, i32, i32
  }
  func.func @transform_10(%arg0: i32) -> (i32, i32, i32) {
    %c0_i32 = arith.constant 0 : i32
    %c0_i32_0 = arith.constant 0 : i32
    %c0_i32_1 = arith.constant 0 : i32
    return %arg0, %c0_i32, %c0_i32_0 : i32, i32, i32
  }
}

</mosaic_0001>

<llo_original>
// kernel: tpu_custom_call.1
$region0: #{tpu_custom_call.1}
  #allocation0 [shape = 'u32[]', space=smem, size = 0x4, offset = 0x4, fixed_abs, tag = 'smem constant byte address 0x4 - core index']
  #allocation1 [shape = 'u32[144,128]{1,0:T(1,128)}', space=vmem, size = 0x12000, scoped, tag = 'internal scratch']
  %s0 = inlined_call_operand.hbm [shape: f32[2,256,128], index: 0, kind: input, shape index: {}]
  %s1 = inlined_call_operand.hbm [shape: f32[256,27], index: 1, kind: input, shape index: {}]
  %s2 = inlined_call_operand.hbm [shape: f32[128,128], index: 2, kind: input, shape index: {}]
  %s3 = inlined_call_operand.hbm [shape: f32[1,128], index: 3, kind: input, shape index: {}]
  %s4 = inlined_call_operand.hbm [shape: f32[128,128], index: 4, kind: input, shape index: {}]
  %s5 = inlined_call_operand.hbm [shape: f32[1152,128], index: 5, kind: input, shape index: {}]
  %s6 = inlined_call_operand.hbm [shape: f32[1152,128], index: 6, kind: input, shape index: {}]
  %s7 = inlined_call_operand.hbm [shape: f32[1152,128], index: 7, kind: input, shape index: {}]
  %s8 = inlined_call_operand.hbm [shape: bf16[2,256,512], index: 8, kind: output, shape index: {0}]
  %s9 = inlined_call_operand.hbm [shape: f32[2,8,128], index: 9, kind: output, shape index: {1}]
  %s10 = inlined_call_operand.hbm [shape: f32[2,1,128], index: 10, kind: output, shape index: {2}]
  %11 = xla_tuple %s8, %s9, %s10
  %s12 = sld [smem:[#allocation0]]
  $region113: #{tpu_custom_call.1} parent=0
    _
  %s14 = ssub.s32 1, %s12
  %s15 = scalar_select 0, %s14, %s12
  $region1: #{tpu_custom_call.1} parent=0
    #allocation2 [shape = 'u8[262144]{0}', space=vmem, size = 0x40000, scoped, tag = 'input window, operand 0']
    #allocation3 [shape = 's32[2]{0}', space=sflag, size = 0x8, scoped, tag = 'scoped memory for tpu_custom_call.1']
    #allocation4 [shape = 's32[2]{0}', space=sflag, size = 0x8, scoped, tag = 'scoped memory for tpu_custom_call.1']
    #allocation5 [shape = 'u8[131072]{0}', space=vmem, size = 0x20000, scoped, tag = 'input window, operand 1, single buffered']
    #allocation6 [shape = 's32[1]{0}', space=sflag, size = 0x4, scoped, tag = 'scoped memory for tpu_custom_call.1']
    #allocation7 [shape = 'u8[65536]{0}', space=vmem, size = 0x10000, scoped, tag = 'input window, operand 2, single buffered']
    #allocation8 [shape = 'u8[512]{0}', space=vmem, size = 0x400, scoped, tag = 'input window, operand 3, single buffered']
    #allocation9 [shape = 's32[1]{0}', space=sflag, size = 0x4, scoped, tag = 'scoped memory for tpu_custom_call.1']
    #allocation10 [shape = 'u8[65536]{0}', space=vmem, size = 0x10000, scoped, tag = 'input window, operand 4, single buffered']
    #allocation11 [shape = 'u8[589824]{0}', space=vmem, size = 0x90000, scoped, tag = 'input window, operand 5, single buffered']
    #allocation12 [shape = 's32[1]{0}', space=sflag, size = 0x4, scoped, tag = 'scoped memory for tpu_custom_call.1']
    #allocation13 [shape = 'u8[589824]{0}', space=vmem, size = 0x90000, scoped, tag = 'input window, operand 6, single buffered']
    #allocation14 [shape = 'u8[589824]{0}', space=vmem, size = 0x90000, scoped, tag = 'input window, operand 7, single buffered']
    #allocation15 [shape = 's32[1]{0}', space=sflag, size = 0x4, scoped, tag = 'scoped memory for tpu_custom_call.1']
    #allocation16 [shape = 'u8[524288]{0}', space=vmem, size = 0x80000, scoped, tag = 'output window, operand 0']
    #allocation17 [shape = 'u8[8192]{0}', space=vmem, size = 0x2000, scoped, tag = 'output window, operand 1']
    #allocation18 [shape = 's32[2]{0}', space=sflag, size = 0x8, scoped, tag = 'scoped memory for tpu_custom_call.1']
    #allocation19 [shape = 'u8[1024]{0}', space=vmem, size = 0x400, scoped, tag = 'output window, operand 2']
    %16 = vsyncpa [#allocation3], 0
    %s17 = scalar_lea.sflag [#allocation3], 1
    %18 = vsyncpa %s17, 0
    %19 = vsyncpa [#allocation6], 0
    %20 = vsyncpa [#allocation9], 0
    %21 = vsyncpa [#allocation12], 0
    %22 = vsyncpa [#allocation15], 0
    %23 = vsyncpa [#allocation4], 0
    %s24 = scalar_lea.sflag [#allocation4], 1
    %25 = vsyncpa %s24, 0
    %26 = vsyncpa [#allocation18], 0
    %s27 = scalar_lea.sflag [#allocation18], 1
    %28 = vsyncpa %s27, 0
    loop: start=0, step=1, limit=4
    $region2: #{tpu_custom_call.1} parent=1 // loop_pre_header
      _
    $region3: #{tpu_custom_call.1} parent=1 // loop_header
      %s30 = sphi 0, %s34
      %p31 = scmp.ge.s32.totalorder %s30, 4
      %s40 = sphi 0, %s42
      %s43 = sphi 0, %s40
      %s44 = sphi 0, %s43
      %s60 = sphi 0, %s44
      %s64 = sphi 0, %s64
      %s66 = sphi 0, %s64
      %s67 = sphi 0, %s66
      %s81 = sphi 0, %s67
      %s85 = sphi 0, %s85
      %s87 = sphi 0, %s85
      %s88 = sphi 0, %s87
      %s102 = sphi 0, %s88
      %s106 = sphi 0, %s106
      %s108 = sphi 0, %s106
      %s109 = sphi 0, %s108
      %s123 = sphi 0, %s109
      %s127 = sphi 0, %s127
      %s129 = sphi 0, %s127
      %s130 = sphi 0, %s129
      %s144 = sphi 0, %s130
      %s148 = sphi 0, %s148
      %s150 = sphi 0, %s148
      %s151 = sphi 0, %s150
      %s165 = sphi 0, %s151
      %s169 = sphi 0, %s169
      %s171 = sphi 0, %s169
      %s172 = sphi 0, %s171
      %s186 = sphi 0, %s172
      %s190 = sphi 0, %s190
      %s192 = sphi 0, %s190
      %s193 = sphi 0, %s192
      %s207 = sphi 0, %s193
      %s213 = sphi 0, %s215
      %s216 = sphi 0, %s213
      %s217 = sphi 0, %s216
      %s233 = sphi 0, %s217
      %s239 = sphi 0, %s241
      %s242 = sphi 0, %s239
      %s243 = sphi 0, %s242
      %s259 = sphi 0, %s243
      %s265 = sphi 0, %s267
      %s268 = sphi 0, %s265
      %s269 = sphi 0, %s268
      %s285 = sphi 0, %s269
    $region4: #{tpu_custom_call.1} parent=1 // loop_header_branch
      %33 = sbr.rel (%p31) target = $region8
    $region5: #{tpu_custom_call.1} parent=1 // loop_body
      %s35 = ssub.s32 %s30, 1
      %s36 = ssub.s32 %s30, 2
      %s37 = sadd.s32 %s30, 1
      %s38 = ssub.s32 %s30, %s37
      %p39 = scmp.eq.s32.totalorder %s38, 0
      %s41 = sadd.s32 %s40, 1
      %s42 = scalar_select %p39, %s40, %s41
      %p45 = pneg %p39
      %p46 = scmp.eq.s32.totalorder %s30, 1
      %p47 = por %p45, %p46
      %p48 = scmp.ne.s32.totalorder %s40, %s43
      %p49 = scmp.eq.s32.totalorder %s30, 0
      %p50 = por %p48, %p49
      %p51 = scmp.ne.s32.totalorder %s40, %s43
      %p52 = scmp.eq.s32.totalorder %s35, 1
      %p53 = por %p51, %p52
      %p54 = scmp.ne.s32.totalorder %s43, %s44
      %p55 = scmp.eq.s32.totalorder %s35, 0
      %p56 = por %p54, %p55
      %p57 = scmp.ne.s32.totalorder %s43, %s44
      %p58 = scmp.eq.s32.totalorder %s36, 1
      %p59 = por %p57, %p58
      %p61 = scmp.ne.s32.totalorder %s44, %s60
      %p62 = scmp.eq.s32.totalorder %s36, 0
      %p63 = por %p61, %p62
      %s65 = sadd.s32 %s64, 1
      %p68 = scmp.eq.s32.totalorder %s30, 1
      %p69 = scmp.ne.s32.totalorder %s64, %s66
      %p70 = scmp.eq.s32.totalorder %s30, 0
      %p71 = por %p69, %p70
      %p72 = scmp.ne.s32.totalorder %s64, %s66
      %p73 = scmp.eq.s32.totalorder %s35, 1
      %p74 = por %p72, %p73
      %p75 = scmp.ne.s32.totalorder %s66, %s67
      %p76 = scmp.eq.s32.totalorder %s35, 0
      %p77 = por %p75, %p76
      %p78 = scmp.ne.s32.totalorder %s66, %s67
      %p79 = scmp.eq.s32.totalorder %s36, 1
      %p80 = por %p78, %p79
      %p82 = scmp.ne.s32.totalorder %s67, %s81
      %p83 = scmp.eq.s32.totalorder %s36, 0
      %p84 = por %p82, %p83
      %s86 = sadd.s32 %s85, 1
      %p89 = scmp.eq.s32.totalorder %s30, 1
      %p90 = scmp.ne.s32.totalorder %s85, %s87
      %p91 = scmp.eq.s32.totalorder %s30, 0
      %p92 = por %p90, %p91
      %p93 = scmp.ne.s32.totalorder %s85, %s87
      %p94 = scmp.eq.s32.totalorder %s35, 1
      %p95 = por %p93, %p94
      %p96 = scmp.ne.s32.totalorder %s87, %s88
      %p97 = scmp.eq.s32.totalorder %s35, 0
      %p98 = por %p96, %p97
      %p99 = scmp.ne.s32.totalorder %s87, %s88
      %p100 = scmp.eq.s32.totalorder %s36, 1
      %p101 = por %p99, %p100
      %p103 = scmp.ne.s32.totalorder %s88, %s102
      %p104 = scmp.eq.s32.totalorder %s36, 0
      %p105 = por %p103, %p104
      %s107 = sadd.s32 %s106, 1
      %p110 = scmp.eq.s32.totalorder %s30, 1
      %p111 = scmp.ne.s32.totalorder %s106, %s108
      %p112 = scmp.eq.s32.totalorder %s30, 0
      %p113 = por %p111, %p112
      %p114 = scmp.ne.s32.totalorder %s106, %s108
      %p115 = scmp.eq.s32.totalorder %s35, 1
      %p116 = por %p114, %p115
      %p117 = scmp.ne.s32.totalorder %s108, %s109
      %p118 = scmp.eq.s32.totalorder %s35, 0
      %p119 = por %p117, %p118
      %p120 = scmp.ne.s32.totalorder %s108, %s109
      %p121 = scmp.eq.s32.totalorder %s36, 1
      %p122 = por %p120, %p121
      %p124 = scmp.ne.s32.totalorder %s109, %s123
      %p125 = scmp.eq.s32.totalorder %s36, 0
      %p126 = por %p124, %p125
      %s128 = sadd.s32 %s127, 1
      %p131 = scmp.eq.s32.totalorder %s30, 1
      %p132 = scmp.ne.s32.totalorder %s127, %s129
      %p133 = scmp.eq.s32.totalorder %s30, 0
      %p134 = por %p132, %p133
      %p135 = scmp.ne.s32.totalorder %s127, %s129
      %p136 = scmp.eq.s32.totalorder %s35, 1
      %p137 = por %p135, %p136
      %p138 = scmp.ne.s32.totalorder %s129, %s130
      %p139 = scmp.eq.s32.totalorder %s35, 0
      %p140 = por %p138, %p139
      %p141 = scmp.ne.s32.totalorder %s129, %s130
      %p142 = scmp.eq.s32.totalorder %s36, 1
      %p143 = por %p141, %p142
      %p145 = scmp.ne.s32.totalorder %s130, %s144
      %p146 = scmp.eq.s32.totalorder %s36, 0
      %p147 = por %p145, %p146
      %s149 = sadd.s32 %s148, 1
      %p152 = scmp.eq.s32.totalorder %s30, 1
      %p153 = scmp.ne.s32.totalorder %s148, %s150
      %p154 = scmp.eq.s32.totalorder %s30, 0
      %p155 = por %p153, %p154
      %p156 = scmp.ne.s32.totalorder %s148, %s150
      %p157 = scmp.eq.s32.totalorder %s35, 1
      %p158 = por %p156, %p157
      %p159 = scmp.ne.s32.totalorder %s150, %s151
      %p160 = scmp.eq.s32.totalorder %s35, 0
      %p161 = por %p159, %p160
      %p162 = scmp.ne.s32.totalorder %s150, %s151
      %p163 = scmp.eq.s32.totalorder %s36, 1
      %p164 = por %p162, %p163
      %p166 = scmp.ne.s32.totalorder %s151, %s165
      %p167 = scmp.eq.s32.totalorder %s36, 0
      %p168 = por %p166, %p167
      %s170 = sadd.s32 %s169, 1
      %p173 = scmp.eq.s32.totalorder %s30, 1
      %p174 = scmp.ne.s32.totalorder %s169, %s171
      %p175 = scmp.eq.s32.totalorder %s30, 0
      %p176 = por %p174, %p175
      %p177 = scmp.ne.s32.totalorder %s169, %s171
      %p178 = scmp.eq.s32.totalorder %s35, 1
      %p179 = por %p177, %p178
      %p180 = scmp.ne.s32.totalorder %s171, %s172
      %p181 = scmp.eq.s32.totalorder %s35, 0
      %p182 = por %p180, %p181
      %p183 = scmp.ne.s32.totalorder %s171, %s172
      %p184 = scmp.eq.s32.totalorder %s36, 1
      %p185 = por %p183, %p184
      %p187 = scmp.ne.s32.totalorder %s172, %s186
      %p188 = scmp.eq.s32.totalorder %s36, 0
      %p189 = por %p187, %p188
      %s191 = sadd.s32 %s190, 1
      %p194 = scmp.eq.s32.totalorder %s30, 1
      %p195 = scmp.ne.s32.totalorder %s190, %s192
      %p196 = scmp.eq.s32.totalorder %s30, 0
      %p197 = por %p195, %p196
      %p198 = scmp.ne.s32.totalorder %s190, %s192
      %p199 = scmp.eq.s32.totalorder %s35, 1
      %p200 = por %p198, %p199
      %p201 = scmp.ne.s32.totalorder %s192, %s193
      %p202 = scmp.eq.s32.totalorder %s35, 0
      %p203 = por %p201, %p202
      %p204 = scmp.ne.s32.totalorder %s192, %s193
      %p205 = scmp.eq.s32.totalorder %s36, 1
      %p206 = por %p204, %p205
      %p208 = scmp.ne.s32.totalorder %s193, %s207
      %p209 = scmp.eq.s32.totalorder %s36, 0
      %p210 = por %p208, %p209
      %s211 = ssub.s32 %s30, %s37
      %p212 = scmp.eq.s32.totalorder %s211, 0
      %s214 = sadd.s32 %s213, 1
      %s215 = scalar_select %p212, %s213, %s214
      %p218 = pneg %p212
      %p219 = scmp.eq.s32.totalorder %s30, 1
      %p220 = por %p218, %p219
      %p221 = scmp.ne.s32.totalorder %s213, %s216
      %p222 = scmp.eq.s32.totalorder %s30, 0
      %p223 = por %p221, %p222
      %p224 = scmp.ne.s32.totalorder %s213, %s216
      %p225 = scmp.eq.s32.totalorder %s35, 1
      %p226 = por %p224, %p225
      %p227 = scmp.ne.s32.totalorder %s216, %s217
      %p228 = scmp.eq.s32.totalorder %s35, 0
      %p229 = por %p227, %p228
      %p230 = scmp.ne.s32.totalorder %s216, %s217
      %p231 = scmp.eq.s32.totalorder %s36, 1
      %p232 = por %p230, %p231
      %p234 = scmp.ne.s32.totalorder %s217, %s233
      %p235 = scmp.eq.s32.totalorder %s36, 0
      %p236 = por %p234, %p235
      %s237 = ssub.s32 %s30, %s37
      %p238 = scmp.eq.s32.totalorder %s237, 0
      %s240 = sadd.s32 %s239, 1
      %s241 = scalar_select %p238, %s239, %s240
      %p244 = pneg %p238
      %p245 = scmp.eq.s32.totalorder %s30, 1
      %p246 = por %p244, %p245
      %p247 = scmp.ne.s32.totalorder %s239, %s242
      %p248 = scmp.eq.s32.totalorder %s30, 0
      %p249 = por %p247, %p248
      %p250 = scmp.ne.s32.totalorder %s239, %s242
      %p251 = scmp.eq.s32.totalorder %s35, 1
      %p252 = por %p250, %p251
      %p253 = scmp.ne.s32.totalorder %s242, %s243
      %p254 = scmp.eq.s32.totalorder %s35, 0
      %p255 = por %p253, %p254
      %p256 = scmp.ne.s32.totalorder %s242, %s243
      %p257 = scmp.eq.s32.totalorder %s36, 1
      %p258 = por %p256, %p257
      %p260 = scmp.ne.s32.totalorder %s243, %s259
      %p261 = scmp.eq.s32.totalorder %s36, 0
      %p262 = por %p260, %p261
      %s263 = ssub.s32 %s30, %s37
      %p264 = scmp.eq.s32.totalorder %s263, 0
      %s266 = sadd.s32 %s265, 1
      %s267 = scalar_select %p264, %s265, %s266
      %p270 = pneg %p264
      %p271 = scmp.eq.s32.totalorder %s30, 1
      %p272 = por %p270, %p271
      %p273 = scmp.ne.s32.totalorder %s265, %s268
      %p274 = scmp.eq.s32.totalorder %s30, 0
      %p275 = por %p273, %p274
      %p276 = scmp.ne.s32.totalorder %s265, %s268
      %p277 = scmp.eq.s32.totalorder %s35, 1
      %p278 = por %p276, %p277
      %p279 = scmp.ne.s32.totalorder %s268, %s269
      %p280 = scmp.eq.s32.totalorder %s35, 0
      %p281 = por %p279, %p280
      %p282 = scmp.ne.s32.totalorder %s268, %s269
      %p283 = scmp.eq.s32.totalorder %s36, 1
      %p284 = por %p282, %p283
      %p286 = scmp.ne.s32.totalorder %s269, %s285
      %p287 = scmp.eq.s32.totalorder %s36, 0
      %p288 = por %p286, %p287
      %p289 = scmp.le.s32.totalorder 1, %s30
      %p290 = scmp.lt.s32.totalorder %s30, 3
      %p291 = pnand %p289, %p290
      %p292 = pneg %p291
      // Predicated region
      $region9: #{tpu_custom_call.1} parent=5 // pred_check
        _
      $region10: #{tpu_custom_call.1} parent=5 // pred_check_branch
        %294 = sbr.rel (%p291) target = $region12
      $region11: #{tpu_custom_call.1} parent=5 // pred_region
        %s295 = ssub.s32 %s30, 1
        // Predicated region
        $region13: #{tpu_custom_call.1} parent=11 // pred_check
          %p296 = pneg %p77
        $region14: #{tpu_custom_call.1} parent=11 // pred_check_branch
          %298 = sbr.rel (%p296) target = $region16
        $region15: #{tpu_custom_call.1} parent=11 // pred_region
          %s300 = ssub.s32 4096, 4096
          %301 = vsyncadd [#allocation6], %s300
          %s302 = sshll.u32 [#allocation5], 4
          %s303 = int_to_ptr.vmem [resolvable:$true] %s302
          %308 = dma.hbm_to_vmem [thread:$0]  %s1, 4096, %s303, [#allocation6], 128, 128, 8
        $region16: #{tpu_custom_call.1} parent=11 // pred_fallthru
          _
        // Predicated region
        $region17: #{tpu_custom_call.1} parent=11 // pred_check
          %p309 = pneg %p98
        $region18: #{tpu_custom_call.1} parent=11 // pred_check_branch
          %311 = sbr.rel (%p309) target = $region20
        $region19: #{tpu_custom_call.1} parent=11 // pred_region
          %s313 = ssub.s32 2048, 2048
          %314 = vsyncadd [#allocation6], %s313
          %s315 = sshll.u32 [#allocation7], 4
          %s316 = int_to_ptr.vmem [resolvable:$true] %s315
          %321 = dma.hbm_to_vmem [thread:$0]  %s2, 2048, %s316, [#allocation6], 128, 128, 8
        $region20: #{tpu_custom_call.1} parent=11 // pred_fallthru
          _
        // Predicated region
        $region21: #{tpu_custom_call.1} parent=11 // pred_check
          %p322 = pneg %p119
        $region22: #{tpu_custom_call.1} parent=11 // pred_check_branch
          %324 = sbr.rel (%p322) target = $region24
        $region23: #{tpu_custom_call.1} parent=11 // pred_region
          %s326 = ssub.s32 16, 16
          %327 = vsyncadd [#allocation9], %s326
          %s329 = sshll.u32 [#allocation8], 4
          %s330 = int_to_ptr.vmem [resolvable:$true] %s329
          %332 = dma.hbm_to_vmem [thread:$0]  %s3, 16, %s330, [#allocation9]
        $region24: #{tpu_custom_call.1} parent=11 // pred_fallthru
          _
        // Predicated region
        $region25: #{tpu_custom_call.1} parent=11 // pred_check
          %p333 = pneg %p140
        $region26: #{tpu_custom_call.1} parent=11 // pred_check_branch
          %335 = sbr.rel (%p333) target = $region28
        $region27: #{tpu_custom_call.1} parent=11 // pred_region
          %s337 = ssub.s32 2048, 2048
          %338 = vsyncadd [#allocation9], %s337
          %s339 = sshll.u32 [#allocation10], 4
          %s340 = int_to_ptr.vmem [resolvable:$true] %s339
          %345 = dma.hbm_to_vmem [thread:$0]  %s4, 2048, %s340, [#allocation9], 128, 128, 8
        $region28: #{tpu_custom_call.1} parent=11 // pred_fallthru
          _
        // Predicated region
        $region29: #{tpu_custom_call.1} parent=11 // pred_check
          %p346 = pneg %p161
        $region30: #{tpu_custom_call.1} parent=11 // pred_check_branch
          %348 = sbr.rel (%p346) target = $region32
        $region31: #{tpu_custom_call.1} parent=11 // pred_region
          %s350 = ssub.s32 18432, 18432
          %351 = vsyncadd [#allocation12], %s350
          %s352 = sshll.u32 [#allocation11], 4
          %s353 = int_to_ptr.vmem [resolvable:$true] %s352
          %358 = dma.hbm_to_vmem [thread:$0]  %s5, 18432, %s353, [#allocation12], 128, 128, 8
        $region32: #{tpu_custom_call.1} parent=11 // pred_fallthru
          _
        // Predicated region
        $region33: #{tpu_custom_call.1} parent=11 // pred_check
          %p359 = pneg %p182
        $region34: #{tpu_custom_call.1} parent=11 // pred_check_branch
          %361 = sbr.rel (%p359) target = $region36
        $region35: #{tpu_custom_call.1} parent=11 // pred_region
          %s363 = ssub.s32 18432, 18432
          %364 = vsyncadd [#allocation12], %s363
          %s365 = sshll.u32 [#allocation13], 4
          %s366 = int_to_ptr.vmem [resolvable:$true] %s365
          %371 = dma.hbm_to_vmem [thread:$0]  %s6, 18432, %s366, [#allocation12], 128, 128, 8
        $region36: #{tpu_custom_call.1} parent=11 // pred_fallthru
          _
        // Predicated region
        $region37: #{tpu_custom_call.1} parent=11 // pred_check
          %p372 = pneg %p203
        $region38: #{tpu_custom_call.1} parent=11 // pred_check_branch
          %374 = sbr.rel (%p372) target = $region40
        $region39: #{tpu_custom_call.1} parent=11 // pred_region
          %s376 = ssub.s32 18432, 18432
          %377 = vsyncadd [#allocation15], %s376
          %s378 = sshll.u32 [#allocation14], 4
          %s379 = int_to_ptr.vmem [resolvable:$true] %s378
          %384 = dma.hbm_to_vmem [thread:$0]  %s7, 18432, %s379, [#allocation15], 128, 128, 8
        $region40: #{tpu_custom_call.1} parent=11 // pred_fallthru
          _
      $region12: #{tpu_custom_call.1} parent=5 // pred_fallthru
        _
      %p385 = scmp.lt.s32.totalorder %s30, 2
      // Predicated region
      $region41: #{tpu_custom_call.1} parent=5 // pred_check
        %p386 = pneg %p385
      $region42: #{tpu_custom_call.1} parent=5 // pred_check_branch
        %388 = sbr.rel (%p386) target = $region44
      $region43: #{tpu_custom_call.1} parent=5 // pred_region
        // Predicated region
        $region45: #{tpu_custom_call.1} parent=43 // pred_check
          %p389 = pneg %p50
        $region46: #{tpu_custom_call.1} parent=43 // pred_check_branch
          %391 = sbr.rel (%p389) target = $region48
        $region47: #{tpu_custom_call.1} parent=43 // pred_region
          %s392 = sand.u32 %s40, 1
          %s393 = scalar_lea.sflag [#allocation3], %s392
          %s394 = sand.u32 %s40, 1
          %s395 = smul.addr %s394, 256
          %s396 = scalar_lea.vmem [#allocation2], %s395
          %s398 = ssub.s32 4096, 4096
          %399 = vsyncadd %s393, %s398
          %s400 = smul.addr %s30, 32
          %s401 = smul.addr %s400, 128
          %s402 = scalar_lea.hbm %s0, %s401
          %s403 = sshll.u32 %s396, 4
          %s404 = int_to_ptr.vmem [resolvable:$true] %s403
          %409 = dma.hbm_to_vmem [thread:$0]  %s402, 4096, %s404, %s393, 128, 128, 8
        $region48: #{tpu_custom_call.1} parent=43 // pred_fallthru
          _
      $region44: #{tpu_custom_call.1} parent=5 // pred_fallthru
        _
      %p410 = scmp.le.s32.totalorder 1, %s30
      %p411 = scmp.lt.s32.totalorder %s30, 3
      %p412 = pnand %p410, %p411
      %p413 = pneg %p412
      // Predicated region
      $region49: #{tpu_custom_call.1} parent=5 // pred_check
        _
      $region50: #{tpu_custom_call.1} parent=5 // pred_check_branch
        %415 = sbr.rel (%p412) target = $region52
      $region51: #{tpu_custom_call.1} parent=5 // pred_region
        %s416 = ssub.s32 %s30, 1
        %s417 = sand.u32 %s43, 1
        %s418 = scalar_lea.sflag [#allocation3], %s417
        %s419 = sand.u32 %s43, 1
        %s420 = smul.addr %s419, 256
        %s421 = scalar_lea.vmem [#allocation2], %s420
        // Predicated region
        $region53: #{tpu_custom_call.1} parent=51 // pred_check
          %p422 = pneg %p56
        $region54: #{tpu_custom_call.1} parent=51 // pred_check_branch
          %424 = sbr.rel (%p422) target = $region56
        $region55: #{tpu_custom_call.1} parent=51 // pred_region
          %425 = dma.done %s418, 4096
        $region56: #{tpu_custom_call.1} parent=51 // pred_fallthru
          _
        // Predicated region
        $region57: #{tpu_custom_call.1} parent=51 // pred_check
          %p426 = pneg %p77
        $region58: #{tpu_custom_call.1} parent=51 // pred_check_branch
          %428 = sbr.rel (%p426) target = $region60
        $region59: #{tpu_custom_call.1} parent=51 // pred_region
          %429 = dma.done [#allocation6], 4096
        $region60: #{tpu_custom_call.1} parent=51 // pred_fallthru
          _
        // Predicated region
        $region61: #{tpu_custom_call.1} parent=51 // pred_check
          %p430 = pneg %p98
        $region62: #{tpu_custom_call.1} parent=51 // pred_check_branch
          %432 = sbr.rel (%p430) target = $region64
        $region63: #{tpu_custom_call.1} parent=51 // pred_region
          %433 = dma.done [#allocation6], 2048
        $region64: #{tpu_custom_call.1} parent=51 // pred_fallthru
          _
        // Predicated region
        $region65: #{tpu_custom_call.1} parent=51 // pred_check
          %p434 = pneg %p119
        $region66: #{tpu_custom_call.1} parent=51 // pred_check_branch
          %436 = sbr.rel (%p434) target = $region68
        $region67: #{tpu_custom_call.1} parent=51 // pred_region
          %437 = dma.done [#allocation9], 16
        $region68: #{tpu_custom_call.1} parent=51 // pred_fallthru
          _
        // Predicated region
        $region69: #{tpu_custom_call.1} parent=51 // pred_check
          %p438 = pneg %p140
        $region70: #{tpu_custom_call.1} parent=51 // pred_check_branch
          %440 = sbr.rel (%p438) target = $region72
        $region71: #{tpu_custom_call.1} parent=51 // pred_region
          %441 = dma.done [#allocation9], 2048
        $region72: #{tpu_custom_call.1} parent=51 // pred_fallthru
          _
        // Predicated region
        $region73: #{tpu_custom_call.1} parent=51 // pred_check
          %p442 = pneg %p161
        $region74: #{tpu_custom_call.1} parent=51 // pred_check_branch
          %444 = sbr.rel (%p442) target = $region76
        $region75: #{tpu_custom_call.1} parent=51 // pred_region
          %445 = dma.done [#allocation12], 18432
        $region76: #{tpu_custom_call.1} parent=51 // pred_fallthru
          _
        // Predicated region
        $region77: #{tpu_custom_call.1} parent=51 // pred_check
          %p446 = pneg %p182
        $region78: #{tpu_custom_call.1} parent=51 // pred_check_branch
          %448 = sbr.rel (%p446) target = $region80
        $region79: #{tpu_custom_call.1} parent=51 // pred_region
          %449 = dma.done [#allocation12], 18432
        $region80: #{tpu_custom_call.1} parent=51 // pred_fallthru
          _
        // Predicated region
        $region81: #{tpu_custom_call.1} parent=51 // pred_check
          %p450 = pneg %p203
        $region82: #{tpu_custom_call.1} parent=51 // pred_check_branch
          %452 = sbr.rel (%p450) target = $region84
        $region83: #{tpu_custom_call.1} parent=51 // pred_region
          %453 = dma.done [#allocation15], 18432
        $region84: #{tpu_custom_call.1} parent=51 // pred_fallthru
          _
        %s454 = sand.u32 %s43, 1
        %s455 = scalar_lea.sflag [#allocation3], %s454
        %s456 = sand.u32 %s43, 1
        %s457 = smul.addr %s456, 256
        %s458 = scalar_lea.vmem [#allocation2], %s457
        %p459 = pneg %p56
        %p460 = pneg %p53
        %p461 = pneg %p77
        %p462 = pneg %p74
        %p463 = pneg %p98
        %p464 = pneg %p95
        %p465 = pneg %p119
        %p466 = pneg %p116
        %p467 = pneg %p140
        %p468 = pneg %p137
        %p469 = pneg %p161
        %p470 = pneg %p158
        %p471 = pneg %p182
        %p472 = pneg %p179
        %p473 = pneg %p203
        %p474 = pneg %p200
        %p475 = pneg %p229
        %p476 = pneg %p226
        %s477 = sand.u32 %s216, 1
        %s478 = scalar_lea.sflag [#allocation4], %s477
        %s479 = sand.u32 %s216, 1
        %s480 = smul.addr %s479, 512
        %s481 = scalar_lea.vmem [#allocation16], %s480
        %p482 = pneg %p255
        %p483 = pneg %p252
        %s484 = sand.u32 %s35, 1
        %s485 = scalar_lea.sflag [#allocation18], %s484
        %s486 = sand.u32 %s242, 1
        %s487 = smul.addr %s486, 8
        %s488 = scalar_lea.vmem [#allocation17], %s487
        %p489 = pneg %p281
        %p490 = pneg %p278
        %s491 = sand.u32 %s35, 1
        %s492 = scalar_lea.sflag [#allocation18], %s491
        %s493 = sand.u32 %s268, 1
        %s494 = scalar_lea.vmem [#allocation19], %s493
        %v496 = vld [vmem:[%s421] sm:$0xff]
        %v497 = vld [vmem:[%s421 + $0x8] sm:$0xff]
        %v498 = vld [vmem:[%s421 + $0x10] sm:$0xff]
        %v499 = vld [vmem:[%s421 + $0x18] sm:$0xff]
        %v500 = vld [vmem:[%s421 + $0x20] sm:$0xff]
        %v501 = vld [vmem:[%s421 + $0x28] sm:$0xff]
        %v502 = vld [vmem:[%s421 + $0x30] sm:$0xff]
        %v503 = vld [vmem:[%s421 + $0x38] sm:$0xff]
        %v504 = vld [vmem:[%s421 + $0x40] sm:$0xff]
        %v505 = vld [vmem:[%s421 + $0x48] sm:$0xff]
        %v506 = vld [vmem:[%s421 + $0x50] sm:$0xff]
        %v507 = vld [vmem:[%s421 + $0x58] sm:$0xff]
        %v508 = vld [vmem:[%s421 + $0x60] sm:$0xff]
        %v509 = vld [vmem:[%s421 + $0x68] sm:$0xff]
        %v510 = vld [vmem:[%s421 + $0x70] sm:$0xff]
        %v511 = vld [vmem:[%s421 + $0x78] sm:$0xff]
        %v512 = vld [vmem:[%s421 + $0x80] sm:$0xff]
        %v513 = vld [vmem:[%s421 + $0x88] sm:$0xff]
        %v514 = vld [vmem:[%s421 + $0x90] sm:$0xff]
        %v515 = vld [vmem:[%s421 + $0x98] sm:$0xff]
        %v516 = vld [vmem:[%s421 + $0xa0] sm:$0xff]
        %v517 = vld [vmem:[%s421 + $0xa8] sm:$0xff]
        %v518 = vld [vmem:[%s421 + $0xb0] sm:$0xff]
        %v519 = vld [vmem:[%s421 + $0xb8] sm:$0xff]
        %v520 = vld [vmem:[%s421 + $0xc0] sm:$0xff]
        %v521 = vld [vmem:[%s421 + $0xc8] sm:$0xff]
        %v522 = vld [vmem:[%s421 + $0xd0] sm:$0xff]
        %v523 = vld [vmem:[%s421 + $0xd8] sm:$0xff]
        %v524 = vld [vmem:[%s421 + $0xe0] sm:$0xff]
        %v525 = vld [vmem:[%s421 + $0xe8] sm:$0xff]
        %v526 = vld [vmem:[%s421 + $0xf0] sm:$0xff]
        %v527 = vld [vmem:[%s421 + $0xf8] sm:$0xff]
        %v528 = vld [vmem:[#allocation7] sm:$0xff]
        %v529 = vld [vmem:[#allocation7 + $0x8] sm:$0xff]
        %v530 = vld [vmem:[#allocation7 + $0x10] sm:$0xff]
        %v531 = vld [vmem:[#allocation7 + $0x18] sm:$0xff]
        %v532 = vld [vmem:[#allocation7 + $0x20] sm:$0xff]
        %v533 = vld [vmem:[#allocation7 + $0x28] sm:$0xff]
        %v534 = vld [vmem:[#allocation7 + $0x30] sm:$0xff]
        %v535 = vld [vmem:[#allocation7 + $0x38] sm:$0xff]
        %v536 = vld [vmem:[#allocation7 + $0x40] sm:$0xff]
        %v537 = vld [vmem:[#allocation7 + $0x48] sm:$0xff]
        %v538 = vld [vmem:[#allocation7 + $0x50] sm:$0xff]
        %v539 = vld [vmem:[#allocation7 + $0x58] sm:$0xff]
        %v540 = vld [vmem:[#allocation7 + $0x60] sm:$0xff]
        %v541 = vld [vmem:[#allocation7 + $0x68] sm:$0xff]
        %v542 = vld [vmem:[#allocation7 + $0x70] sm:$0xff]
        %v543 = vld [vmem:[#allocation7 + $0x78] sm:$0xff]
        %v544 = vpack.c.bf16 %v497, %v496
        %v545 = vpack.c.bf16 %v499, %v498
        %v546 = vpack.c.bf16 %v501, %v500
        %v547 = vpack.c.bf16 %v503, %v502
        %v548 = vpack.c.bf16 %v505, %v504
        %v549 = vpack.c.bf16 %v507, %v506
        %v550 = vpack.c.bf16 %v509, %v508
        %v551 = vpack.c.bf16 %v511, %v510
        %v552 = vpack.c.bf16 %v513, %v512
        %v553 = vpack.c.bf16 %v515, %v514
        %v554 = vpack.c.bf16 %v517, %v516
        %v555 = vpack.c.bf16 %v519, %v518
        %v556 = vpack.c.bf16 %v521, %v520
        %v557 = vpack.c.bf16 %v523, %v522
        %v558 = vpack.c.bf16 %v525, %v524
        %v559 = vpack.c.bf16 %v527, %v526
        %v560 = vpack.c.bf16 %v529, %v528
        %v561 = vpack.c.bf16 %v531, %v530
        %v562 = vpack.c.bf16 %v533, %v532
        %v563 = vpack.c.bf16 %v535, %v534
        %v564 = vpack.c.bf16 %v537, %v536
        %v565 = vpack.c.bf16 %v539, %v538
        %v566 = vpack.c.bf16 %v541, %v540
        %v567 = vpack.c.bf16 %v543, %v542
        %v568 = vld [vmem:[#allocation8] sm:$0x1]
        %v570 = vlaneseq
        %v571 = vshrl.u32 %v570, 7
        %v572 = vsub.s32 0, %v571
        %v573 = vrot.slane %v568, %v572
        %575 = vmatprep.subr.bf16.mxu0 0
        %576 = vmatpush1.bf16.msra.mxu0 %v560
        %577 = vmatprep.subr.bf16.mxu0 0
        %578 = vmatpush1.bf16.msra.mxu0 %v561
        %579 = vmatprep.subr.bf16.mxu0 0
        %580 = vmatpush1.bf16.msra.mxu0 %v562
        %581 = vmatprep.subr.bf16.mxu0 0
        %582 = vmatpush1.bf16.msra.mxu0 %v563
        %583 = vmatprep.subr.bf16.mxu0 0
        %584 = vmatpush1.bf16.msra.mxu0 %v564
        %585 = vmatprep.subr.bf16.mxu0 0
        %586 = vmatpush1.bf16.msra.mxu0 %v565
        %587 = vmatprep.subr.bf16.mxu0 0
        %588 = vmatpush1.bf16.msra.mxu0 %v566
        %589 = vmatprep.subr.bf16.mxu0 0
        %590 = vmatpush1.bf16.msra.mxu0 %v567
        %591 = vmatprep.subr.bf16.mxu0 0
        %592 = vmatpush1.bf16.msra.mxu0 0
        %593 = vmatprep.subr.bf16.mxu0 0
        %594 = vmatpush1.bf16.msra.mxu0 0
        %595 = vmatprep.subr.bf16.mxu0 0
        %596 = vmatpush1.bf16.msra.mxu0 0
        %597 = vmatprep.subr.bf16.mxu0 0
        %598 = vmatpush1.bf16.msra.mxu0 0
        %599 = vmatprep.subr.bf16.mxu0 0
        %600 = vmatpush1.bf16.msra.mxu0 0
        %601 = vmatprep.subr.bf16.mxu0 0
        %602 = vmatpush1.bf16.msra.mxu0 0
        %603 = vmatprep.subr.bf16.mxu0 0
        %604 = vmatpush1.bf16.msra.mxu0 0
        %605 = vmatprep.subr.bf16.mxu0 0
        %606 = vmatpush1.bf16.msra.mxu0 0
        %607 = vmatprep.mubr.bf16.mxu0 0
        %608 = vmatmul.mubr.bf16.gmra.mrb[0].mxu0 %v544
        %v609 = vpop.f32.mrb[0].mxu0
        %v610 = vadd.f32 %v573, %v609
        %v611 = vpop.f32.mrb[0].mxu0
        %v612 = vpop.f32.mrb[0].mxu0
        %v613 = vadd.f32 %v573, %v612
        %v614 = vpop.f32.mrb[0].mxu0
        %615 = vmatprep.mubr.bf16.mxu0 0
        %616 = vmatmul.mubr.bf16.gmra.mrb[0].mxu0 %v545
        %v617 = vpop.f32.mrb[0].mxu0
        %v618 = vadd.f32 %v573, %v617
        %v619 = vpop.f32.mrb[0].mxu0
        %v620 = vpop.f32.mrb[0].mxu0
        %v621 = vadd.f32 %v573, %v620
        %v622 = vpop.f32.mrb[0].mxu0
        %623 = vmatprep.mubr.bf16.mxu0 0
        %624 = vmatmul.mubr.bf16.gmra.mrb[0].mxu0 %v546
        %v625 = vpop.f32.mrb[0].mxu0
        %v626 = vadd.f32 %v573, %v625
        %v627 = vpop.f32.mrb[0].mxu0
        %v628 = vpop.f32.mrb[0].mxu0
        %v629 = vadd.f32 %v573, %v628
        %v630 = vpop.f32.mrb[0].mxu0
        %631 = vmatprep.mubr.bf16.mxu0 0
        %632 = vmatmul.mubr.bf16.gmra.mrb[0].mxu0 %v547
        %v633 = vpop.f32.mrb[0].mxu0
        %v634 = vadd.f32 %v573, %v633
        %v635 = vpop.f32.mrb[0].mxu0
        %v636 = vpop.f32.mrb[0].mxu0
        %v637 = vadd.f32 %v573, %v636
        %v638 = vpop.f32.mrb[0].mxu0
        %639 = vmatprep.mubr.bf16.mxu0 0
        %640 = vmatmul.mubr.bf16.gmra.mrb[0].mxu0 %v548
        %v641 = vpop.f32.mrb[0].mxu0
        %v642 = vadd.f32 %v573, %v641
        %v643 = vpop.f32.mrb[0].mxu0
        %v644 = vpop.f32.mrb[0].mxu0
        %v645 = vadd.f32 %v573, %v644
        %v646 = vpop.f32.mrb[0].mxu0
        %647 = vmatprep.mubr.bf16.mxu0 0
        %648 = vmatmul.mubr.bf16.gmra.mrb[0].mxu0 %v549
        %v649 = vpop.f32.mrb[0].mxu0
        %v650 = vadd.f32 %v573, %v649
        %v651 = vpop.f32.mrb[0].mxu0
        %v652 = vpop.f32.mrb[0].mxu0
        %v653 = vadd.f32 %v573, %v652
        %v654 = vpop.f32.mrb[0].mxu0
        %655 = vmatprep.mubr.bf16.mxu0 0
        %656 = vmatmul.mubr.bf16.gmra.mrb[0].mxu0 %v550
        %v657 = vpop.f32.mrb[0].mxu0
        %v658 = vadd.f32 %v573, %v657
        %v659 = vpop.f32.mrb[0].mxu0
        %v660 = vpop.f32.mrb[0].mxu0
        %v661 = vadd.f32 %v573, %v660
        %v662 = vpop.f32.mrb[0].mxu0
        %663 = vmatprep.mubr.bf16.mxu0 0
        %664 = vmatmul.mubr.bf16.gmra.mrb[0].mxu0 %v551
        %v665 = vpop.f32.mrb[0].mxu0
        %v666 = vadd.f32 %v573, %v665
        %v667 = vpop.f32.mrb[0].mxu0
        %v668 = vpop.f32.mrb[0].mxu0
        %v669 = vadd.f32 %v573, %v668
        %v670 = vpop.f32.mrb[0].mxu0
        %671 = vmatprep.mubr.bf16.mxu0 0
        %672 = vmatmul.mubr.bf16.gmra.mrb[0].mxu0 %v552
        %v673 = vpop.f32.mrb[0].mxu0
        %v674 = vadd.f32 %v573, %v673
        %v675 = vpop.f32.mrb[0].mxu0
        %v676 = vpop.f32.mrb[0].mxu0
        %v677 = vadd.f32 %v573, %v676
        %v678 = vpop.f32.mrb[0].mxu0
        %679 = vmatprep.mubr.bf16.mxu0 0
        %680 = vmatmul.mubr.bf16.gmra.mrb[0].mxu0 %v553
        %v681 = vpop.f32.mrb[0].mxu0
        %v682 = vadd.f32 %v573, %v681
        %v683 = vpop.f32.mrb[0].mxu0
        %v684 = vpop.f32.mrb[0].mxu0
        %v685 = vadd.f32 %v573, %v684
        %v686 = vpop.f32.mrb[0].mxu0
        %687 = vmatprep.mubr.bf16.mxu0 0
        %688 = vmatmul.mubr.bf16.gmra.mrb[0].mxu0 %v554
        %v689 = vpop.f32.mrb[0].mxu0
        %v690 = vadd.f32 %v573, %v689
        %v691 = vpop.f32.mrb[0].mxu0
        %v692 = vpop.f32.mrb[0].mxu0
        %v693 = vadd.f32 %v573, %v692
        %v694 = vpop.f32.mrb[0].mxu0
        %695 = vmatprep.mubr.bf16.mxu0 0
        %696 = vmatmul.mubr.bf16.gmra.mrb[0].mxu0 %v555
        %v697 = vpop.f32.mrb[0].mxu0
        %v698 = vadd.f32 %v573, %v697
        %v699 = vpop.f32.mrb[0].mxu0
        %v700 = vpop.f32.mrb[0].mxu0
        %v701 = vadd.f32 %v573, %v700
        %v702 = vpop.f32.mrb[0].mxu0
        %703 = vmatprep.mubr.bf16.mxu0 0
        %704 = vmatmul.mubr.bf16.gmra.mrb[0].mxu0 %v556
        %v705 = vpop.f32.mrb[0].mxu0
        %v706 = vadd.f32 %v573, %v705
        %v707 = vpop.f32.mrb[0].mxu0
        %v708 = vpop.f32.mrb[0].mxu0
        %v709 = vadd.f32 %v573, %v708
        %v710 = vpop.f32.mrb[0].mxu0
        %711 = vmatprep.mubr.bf16.mxu0 0
        %712 = vmatmul.mubr.bf16.gmra.mrb[0].mxu0 %v557
        %v713 = vpop.f32.mrb[0].mxu0
        %v714 = vadd.f32 %v573, %v713
        %v715 = vpop.f32.mrb[0].mxu0
        %v716 = vpop.f32.mrb[0].mxu0
        %v717 = vadd.f32 %v573, %v716
        %v718 = vpop.f32.mrb[0].mxu0
        %719 = vmatprep.mubr.bf16.mxu0 0
        %720 = vmatmul.mubr.bf16.gmra.mrb[0].mxu0 %v558
        %v721 = vpop.f32.mrb[0].mxu0
        %v722 = vadd.f32 %v573, %v721
        %v723 = vpop.f32.mrb[0].mxu0
        %v724 = vpop.f32.mrb[0].mxu0
        %v725 = vadd.f32 %v573, %v724
        %v726 = vpop.f32.mrb[0].mxu0
        %727 = vmatprep.mubr.bf16.mxu0 0
        %728 = vmatmul.mubr.bf16.gmra.mrb[0].mxu0 %v559
        %v729 = vpop.f32.mrb[0].mxu0
        %v730 = vadd.f32 %v573, %v729
        %v731 = vpop.f32.mrb[0].mxu0
        %v732 = vpop.f32.mrb[0].mxu0
        %v733 = vadd.f32 %v573, %v732
        %v734 = vpop.f32.mrb[0].mxu0
        %735 = vdwg.mxu0
        %v736 = vld [vmem:[#allocation10] sm:$0xff]
        %v737 = vld [vmem:[#allocation10 + $0x8] sm:$0xff]
        %v738 = vld [vmem:[#allocation10 + $0x10] sm:$0xff]
        %v739 = vld [vmem:[#allocation10 + $0x18] sm:$0xff]
        %v740 = vld [vmem:[#allocation10 + $0x20] sm:$0xff]
        %v741 = vld [vmem:[#allocation10 + $0x28] sm:$0xff]
        %v742 = vld [vmem:[#allocation10 + $0x30] sm:$0xff]
        %v743 = vld [vmem:[#allocation10 + $0x38] sm:$0xff]
        %v744 = vld [vmem:[#allocation10 + $0x40] sm:$0xff]
        %v745 = vld [vmem:[#allocation10 + $0x48] sm:$0xff]
        %v746 = vld [vmem:[#allocation10 + $0x50] sm:$0xff]
        %v747 = vld [vmem:[#allocation10 + $0x58] sm:$0xff]
        %v748 = vld [vmem:[#allocation10 + $0x60] sm:$0xff]
        %v749 = vld [vmem:[#allocation10 + $0x68] sm:$0xff]
        %v750 = vld [vmem:[#allocation10 + $0x70] sm:$0xff]
        %v751 = vld [vmem:[#allocation10 + $0x78] sm:$0xff]
        %v752 = vpack.c.bf16 %v613, %v610
        %v753 = vpack.c.bf16 %v621, %v618
        %v754 = vpack.c.bf16 %v629, %v626
        %v755 = vpack.c.bf16 %v637, %v634
        %v756 = vpack.c.bf16 %v645, %v642
        %v757 = vpack.c.bf16 %v653, %v650
        %v758 = vpack.c.bf16 %v661, %v658
        %v759 = vpack.c.bf16 %v669, %v666
        %v760 = vpack.c.bf16 %v677, %v674
        %v761 = vpack.c.bf16 %v685, %v682
        %v762 = vpack.c.bf16 %v693, %v690
        %v763 = vpack.c.bf16 %v701, %v698
        %v764 = vpack.c.bf16 %v709, %v706
        %v765 = vpack.c.bf16 %v717, %v714
        %v766 = vpack.c.bf16 %v725, %v722
        %v767 = vpack.c.bf16 %v733, %v730
        %v768 = vpack.c.bf16 %v737, %v736
        %v769 = vpack.c.bf16 %v739, %v738
        %v770 = vpack.c.bf16 %v741, %v740
        %v771 = vpack.c.bf16 %v743, %v742
        %v772 = vpack.c.bf16 %v745, %v744
        %v773 = vpack.c.bf16 %v747, %v746
        %v774 = vpack.c.bf16 %v749, %v748
        %v775 = vpack.c.bf16 %v751, %v750
        %776 = vmatprep.subr.bf16.mxu0 0
        %777 = vmatpush1.bf16.msra.mxu0 %v768
        %778 = vmatprep.subr.bf16.mxu0 0
        %779 = vmatpush1.bf16.msra.mxu0 %v769
        %780 = vmatprep.subr.bf16.mxu0 0
        %781 = vmatpush1.bf16.msra.mxu0 %v770
        %782 = vmatprep.subr.bf16.mxu0 0
        %783 = vmatpush1.bf16.msra.mxu0 %v771
        %784 = vmatprep.subr.bf16.mxu0 0
        %785 = vmatpush1.bf16.msra.mxu0 %v772
        %786 = vmatprep.subr.bf16.mxu0 0
        %787 = vmatpush1.bf16.msra.mxu0 %v773
        %788 = vmatprep.subr.bf16.mxu0 0
        %789 = vmatpush1.bf16.msra.mxu0 %v774
        %790 = vmatprep.subr.bf16.mxu0 0
        %791 = vmatpush1.bf16.msra.mxu0 %v775
        %792 = vmatprep.subr.bf16.mxu0 0
        %793 = vmatpush1.bf16.msra.mxu0 0
        %794 = vmatprep.subr.bf16.mxu0 0
        %795 = vmatpush1.bf16.msra.mxu0 0
        %796 = vmatprep.subr.bf16.mxu0 0
        %797 = vmatpush1.bf16.msra.mxu0 0
        %798 = vmatprep.subr.bf16.mxu0 0
        %799 = vmatpush1.bf16.msra.mxu0 0
        %800 = vmatprep.subr.bf16.mxu0 0
        %801 = vmatpush1.bf16.msra.mxu0 0
        %802 = vmatprep.subr.bf16.mxu0 0
        %803 = vmatpush1.bf16.msra.mxu0 0
        %804 = vmatprep.subr.bf16.mxu0 0
        %805 = vmatpush1.bf16.msra.mxu0 0
        %806 = vmatprep.subr.bf16.mxu0 0
        %807 = vmatpush1.bf16.msra.mxu0 0
        %808 = vmatprep.mubr.bf16.mxu0 0
        %809 = vmatmul.mubr.bf16.gmra.mrb[0].mxu0 %v752
        %v810 = vpop.f32.mrb[0].mxu0
        %v811 = vadd.f32 0.0, %v810
        %v812 = vpop.f32.mrb[0].mxu0
        %v813 = vpop.f32.mrb[0].mxu0
        %v814 = vadd.f32 0.0, %v813
        %v815 = vpop.f32.mrb[0].mxu0
        %816 = vmatprep.mubr.bf16.mxu0 0
        %817 = vmatmul.mubr.bf16.gmra.mrb[0].mxu0 %v753
        %v818 = vpop.f32.mrb[0].mxu0
        %v819 = vadd.f32 0.0, %v818
        %v820 = vpop.f32.mrb[0].mxu0
        %v821 = vpop.f32.mrb[0].mxu0
        %v822 = vadd.f32 0.0, %v821
        %v823 = vpop.f32.mrb[0].mxu0
        %824 = vmatprep.mubr.bf16.mxu0 0
        %825 = vmatmul.mubr.bf16.gmra.mrb[0].mxu0 %v754
        %v826 = vpop.f32.mrb[0].mxu0
        %v827 = vadd.f32 0.0, %v826
        %v828 = vpop.f32.mrb[0].mxu0
        %v829 = vpop.f32.mrb[0].mxu0
        %v830 = vadd.f32 0.0, %v829
        %v831 = vpop.f32.mrb[0].mxu0
        %832 = vmatprep.mubr.bf16.mxu0 0
        %833 = vmatmul.mubr.bf16.gmra.mrb[0].mxu0 %v755
        %v834 = vpop.f32.mrb[0].mxu0
        %v835 = vadd.f32 0.0, %v834
        %v836 = vpop.f32.mrb[0].mxu0
        %v837 = vpop.f32.mrb[0].mxu0
        %v838 = vadd.f32 0.0, %v837
        %v839 = vpop.f32.mrb[0].mxu0
        %840 = vmatprep.mubr.bf16.mxu0 0
        %841 = vmatmul.mubr.bf16.gmra.mrb[0].mxu0 %v756
        %v842 = vpop.f32.mrb[0].mxu0
        %v843 = vadd.f32 0.0, %v842
        %v844 = vpop.f32.mrb[0].mxu0
        %v845 = vpop.f32.mrb[0].mxu0
        %v846 = vadd.f32 0.0, %v845
        %v847 = vpop.f32.mrb[0].mxu0
        %848 = vmatprep.mubr.bf16.mxu0 0
        %849 = vmatmul.mubr.bf16.gmra.mrb[0].mxu0 %v757
        %v850 = vpop.f32.mrb[0].mxu0
        %v851 = vadd.f32 0.0, %v850
        %v852 = vpop.f32.mrb[0].mxu0
        %v853 = vpop.f32.mrb[0].mxu0
        %v854 = vadd.f32 0.0, %v853
        %v855 = vpop.f32.mrb[0].mxu0
        %856 = vmatprep.mubr.bf16.mxu0 0
        %857 = vmatmul.mubr.bf16.gmra.mrb[0].mxu0 %v758
        %v858 = vpop.f32.mrb[0].mxu0
        %v859 = vadd.f32 0.0, %v858
        %v860 = vpop.f32.mrb[0].mxu0
        %v861 = vpop.f32.mrb[0].mxu0
        %v862 = vadd.f32 0.0, %v861
        %v863 = vpop.f32.mrb[0].mxu0
        %864 = vmatprep.mubr.bf16.mxu0 0
        %865 = vmatmul.mubr.bf16.gmra.mrb[0].mxu0 %v759
        %v866 = vpop.f32.mrb[0].mxu0
        %v867 = vadd.f32 0.0, %v866
        %v868 = vpop.f32.mrb[0].mxu0
        %v869 = vpop.f32.mrb[0].mxu0
        %v870 = vadd.f32 0.0, %v869
        %v871 = vpop.f32.mrb[0].mxu0
        %872 = vmatprep.mubr.bf16.mxu0 0
        %873 = vmatmul.mubr.bf16.gmra.mrb[0].mxu0 %v760
        %v874 = vpop.f32.mrb[0].mxu0
        %v875 = vadd.f32 0.0, %v874
        %v876 = vpop.f32.mrb[0].mxu0
        %v877 = vpop.f32.mrb[0].mxu0
        %v878 = vadd.f32 0.0, %v877
        %v879 = vpop.f32.mrb[0].mxu0
        %880 = vmatprep.mubr.bf16.mxu0 0
        %881 = vmatmul.mubr.bf16.gmra.mrb[0].mxu0 %v761
        %v882 = vpop.f32.mrb[0].mxu0
        %v883 = vadd.f32 0.0, %v882
        %v884 = vpop.f32.mrb[0].mxu0
        %v885 = vpop.f32.mrb[0].mxu0
        %v886 = vadd.f32 0.0, %v885
        %v887 = vpop.f32.mrb[0].mxu0
        %888 = vmatprep.mubr.bf16.mxu0 0
        %889 = vmatmul.mubr.bf16.gmra.mrb[0].mxu0 %v762
        %v890 = vpop.f32.mrb[0].mxu0
        %v891 = vadd.f32 0.0, %v890
        %v892 = vpop.f32.mrb[0].mxu0
        %v893 = vpop.f32.mrb[0].mxu0
        %v894 = vadd.f32 0.0, %v893
        %v895 = vpop.f32.mrb[0].mxu0
        %896 = vmatprep.mubr.bf16.mxu0 0
        %897 = vmatmul.mubr.bf16.gmra.mrb[0].mxu0 %v763
        %v898 = vpop.f32.mrb[0].mxu0
        %v899 = vadd.f32 0.0, %v898
        %v900 = vpop.f32.mrb[0].mxu0
        %v901 = vpop.f32.mrb[0].mxu0
        %v902 = vadd.f32 0.0, %v901
        %v903 = vpop.f32.mrb[0].mxu0
        %904 = vmatprep.mubr.bf16.mxu0 0
        %905 = vmatmul.mubr.bf16.gmra.mrb[0].mxu0 %v764
        %v906 = vpop.f32.mrb[0].mxu0
        %v907 = vadd.f32 0.0, %v906
        %v908 = vpop.f32.mrb[0].mxu0
        %v909 = vpop.f32.mrb[0].mxu0
        %v910 = vadd.f32 0.0, %v909
        %v911 = vpop.f32.mrb[0].mxu0
        %912 = vmatprep.mubr.bf16.mxu0 0
        %913 = vmatmul.mubr.bf16.gmra.mrb[0].mxu0 %v765
        %v914 = vpop.f32.mrb[0].mxu0
        %v915 = vadd.f32 0.0, %v914
        %v916 = vpop.f32.mrb[0].mxu0
        %v917 = vpop.f32.mrb[0].mxu0
        %v918 = vadd.f32 0.0, %v917
        %v919 = vpop.f32.mrb[0].mxu0
        %920 = vmatprep.mubr.bf16.mxu0 0
        %921 = vmatmul.mubr.bf16.gmra.mrb[0].mxu0 %v766
        %v922 = vpop.f32.mrb[0].mxu0
        %v923 = vadd.f32 0.0, %v922
        %v924 = vpop.f32.mrb[0].mxu0
        %v925 = vpop.f32.mrb[0].mxu0
        %v926 = vadd.f32 0.0, %v925
        %v927 = vpop.f32.mrb[0].mxu0
        %928 = vmatprep.mubr.bf16.mxu0 0
        %929 = vmatmul.mubr.bf16.gmra.mrb[0].mxu0 %v767
        %v930 = vpop.f32.mrb[0].mxu0
        %v931 = vadd.f32 0.0, %v930
        %v932 = vpop.f32.mrb[0].mxu0
        %v933 = vpop.f32.mrb[0].mxu0
        %v934 = vadd.f32 0.0, %v933
        %v935 = vpop.f32.mrb[0].mxu0
        %936 = vdwg.mxu0
        %v937 = vrot.slane %v610, 5
        %v938 = vrot.slane %v613, 5
        %v939 = vrot.slane %v618, 5
        %v940 = vrot.slane %v621, 5
        %v941 = vrot.slane %v626, 5
        %v942 = vrot.slane %v629, 5
        %v943 = vrot.slane %v634, 5
        %v944 = vrot.slane %v637, 5
        %v945 = vrot.slane %v642, 5
        %v946 = vrot.slane %v645, 5
        %v947 = vrot.slane %v650, 5
        %v948 = vrot.slane %v653, 5
        %v949 = vrot.slane %v658, 5
        %v950 = vrot.slane %v661, 5
        %v951 = vrot.slane %v666, 5
        %v952 = vrot.slane %v669, 5
        %v953 = vrot.slane %v674, 5
        %v954 = vrot.slane %v677, 5
        %v955 = vrot.slane %v682, 5
        %v956 = vrot.slane %v685, 5
        %v957 = vrot.slane %v690, 5
        %v958 = vrot.slane %v693, 5
        %v959 = vrot.slane %v698, 5
        %v960 = vrot.slane %v701, 5
        %v961 = vrot.slane %v706, 5
        %v962 = vrot.slane %v709, 5
        %v963 = vrot.slane %v714, 5
        %v964 = vrot.slane %v717, 5
        %v965 = vrot.slane %v722, 5
        %v966 = vrot.slane %v725, 5
        %v967 = vrot.slane %v730, 5
        %v968 = vrot.slane %v733, 5
        %v969 = vlaneseq
        %v970 = vshrl.u32 %v969, 7
        %vm971 = vcmp.lt.s32.totalorder %v970, 3
        %v972 = vsel %vm971, %v967, %v968
        %v973 = vsel %vm971, %v966, %v967
        %v974 = vsel %vm971, %v965, %v966
        %v975 = vsel %vm971, %v964, %v965
        %v976 = vsel %vm971, %v963, %v964
        %v977 = vsel %vm971, %v962, %v963
        %v978 = vsel %vm971, %v961, %v962
        %v979 = vsel %vm971, %v960, %v961
        %v980 = vsel %vm971, %v959, %v960
        %v981 = vsel %vm971, %v958, %v959
        %v982 = vsel %vm971, %v957, %v958
        %v983 = vsel %vm971, %v956, %v957
        %v984 = vsel %vm971, %v955, %v956
        %v985 = vsel %vm971, %v954, %v955
        %v986 = vsel %vm971, %v953, %v954
        %v987 = vsel %vm971, %v952, %v953
        %v988 = vsel %vm971, %v951, %v952
        %v989 = vsel %vm971, %v950, %v951
        %v990 = vsel %vm971, %v949, %v950
        %v991 = vsel %vm971, %v948, %v949
        %v992 = vsel %vm971, %v947, %v948
        %v993 = vsel %vm971, %v946, %v947
        %v994 = vsel %vm971, %v945, %v946
        %v995 = vsel %vm971, %v944, %v945
        %v996 = vsel %vm971, %v943, %v944
        %v997 = vsel %vm971, %v942, %v943
        %v998 = vsel %vm971, %v941, %v942
        %v999 = vsel %vm971, %v940, %v941
        %v1000 = vsel %vm971, %v939, %v940
        %v1001 = vsel %vm971, %v938, %v939
        %v1002 = vsel %vm971, %v937, %v938
        %v1003 = vsel %vm971, %v968, %v937
        %v1004 = vld [vmem:[#allocation5] sm:$0xff]
        %v1005 = vld [vmem:[#allocation5 + $0x8] sm:$0xff]
        %v1006 = vld [vmem:[#allocation5 + $0x10] sm:$0xff]
        %v1007 = vld [vmem:[#allocation5 + $0x18] sm:$0xff]
        %v1008 = vld [vmem:[#allocation5 + $0x20] sm:$0xff]
        %v1009 = vld [vmem:[#allocation5 + $0x28] sm:$0xff]
        %v1010 = vld [vmem:[#allocation5 + $0x30] sm:$0xff]
        %v1011 = vld [vmem:[#allocation5 + $0x38] sm:$0xff]
        %v1012 = vld [vmem:[#allocation5 + $0x40] sm:$0xff]
        %v1013 = vld [vmem:[#allocation5 + $0x48] sm:$0xff]
        %v1014 = vld [vmem:[#allocation5 + $0x50] sm:$0xff]
        %v1015 = vld [vmem:[#allocation5 + $0x58] sm:$0xff]
        %v1016 = vld [vmem:[#allocation5 + $0x60] sm:$0xff]
        %v1017 = vld [vmem:[#allocation5 + $0x68] sm:$0xff]
        %v1018 = vld [vmem:[#allocation5 + $0x70] sm:$0xff]
        %v1019 = vld [vmem:[#allocation5 + $0x78] sm:$0xff]
        %v1020 = vld [vmem:[#allocation5 + $0x80] sm:$0xff]
        %v1021 = vld [vmem:[#allocation5 + $0x88] sm:$0xff]
        %v1022 = vld [vmem:[#allocation5 + $0x90] sm:$0xff]
        %v1023 = vld [vmem:[#allocation5 + $0x98] sm:$0xff]
        %v1024 = vld [vmem:[#allocation5 + $0xa0] sm:$0xff]
        %v1025 = vld [vmem:[#allocation5 + $0xa8] sm:$0xff]
        %v1026 = vld [vmem:[#allocation5 + $0xb0] sm:$0xff]
        %v1027 = vld [vmem:[#allocation5 + $0xb8] sm:$0xff]
        %v1028 = vld [vmem:[#allocation5 + $0xc0] sm:$0xff]
        %v1029 = vld [vmem:[#allocation5 + $0xc8] sm:$0xff]
        %v1030 = vld [vmem:[#allocation5 + $0xd0] sm:$0xff]
        %v1031 = vld [vmem:[#allocation5 + $0xd8] sm:$0xff]
        %v1032 = vld [vmem:[#allocation5 + $0xe0] sm:$0xff]
        %v1033 = vld [vmem:[#allocation5 + $0xe8] sm:$0xff]
        %v1034 = vld [vmem:[#allocation5 + $0xf0] sm:$0xff]
        %v1035 = vld [vmem:[#allocation5 + $0xf8] sm:$0xff]
        %1037 = vset.pattern.permute.xlu0 0
        %1038 = vperm.xlu0 %1037, %v1004
        %v1039 = vpop.permute.xlu0 %1038
        %1042 = vset.pattern.permute.xlu0 0
        %1043 = vperm.xlu0 %1042, %v1005
        %v1044 = vpop.permute.xlu0 %1043
        %1047 = vset.pattern.permute.xlu0 0
        %1048 = vperm.xlu0 %1047, %v1006
        %v1049 = vpop.permute.xlu0 %1048
        %1052 = vset.pattern.permute.xlu0 0
        %1053 = vperm.xlu0 %1052, %v1007
        %v1054 = vpop.permute.xlu0 %1053
        %1057 = vset.pattern.permute.xlu0 0
        %1058 = vperm.xlu0 %1057, %v1008
        %v1059 = vpop.permute.xlu0 %1058
        %1062 = vset.pattern.permute.xlu0 0
        %1063 = vperm.xlu0 %1062, %v1009
        %v1064 = vpop.permute.xlu0 %1063
        %1067 = vset.pattern.permute.xlu0 0
        %1068 = vperm.xlu0 %1067, %v1010
        %v1069 = vpop.permute.xlu0 %1068
        %1072 = vset.pattern.permute.xlu0 0
        %1073 = vperm.xlu0 %1072, %v1011
        %v1074 = vpop.permute.xlu0 %1073
        %1077 = vset.pattern.permute.xlu0 0
        %1078 = vperm.xlu0 %1077, %v1012
        %v1079 = vpop.permute.xlu0 %1078
        %1082 = vset.pattern.permute.xlu0 0
        %1083 = vperm.xlu0 %1082, %v1013
        %v1084 = vpop.permute.xlu0 %1083
        %1087 = vset.pattern.permute.xlu0 0
        %1088 = vperm.xlu0 %1087, %v1014
        %v1089 = vpop.permute.xlu0 %1088
        %1092 = vset.pattern.permute.xlu0 0
        %1093 = vperm.xlu0 %1092, %v1015
        %v1094 = vpop.permute.xlu0 %1093
        %1097 = vset.pattern.permute.xlu0 0
        %1098 = vperm.xlu0 %1097, %v1016
        %v1099 = vpop.permute.xlu0 %1098
        %1102 = vset.pattern.permute.xlu0 0
        %1103 = vperm.xlu0 %1102, %v1017
        %v1104 = vpop.permute.xlu0 %1103
        %1107 = vset.pattern.permute.xlu0 0
        %1108 = vperm.xlu0 %1107, %v1018
        %v1109 = vpop.permute.xlu0 %1108
        %1112 = vset.pattern.permute.xlu0 0
        %1113 = vperm.xlu0 %1112, %v1019
        %v1114 = vpop.permute.xlu0 %1113
        %1117 = vset.pattern.permute.xlu0 0
        %1118 = vperm.xlu0 %1117, %v1020
        %v1119 = vpop.permute.xlu0 %1118
        %1122 = vset.pattern.permute.xlu0 0
        %1123 = vperm.xlu0 %1122, %v1021
        %v1124 = vpop.permute.xlu0 %1123
        %1127 = vset.pattern.permute.xlu0 0
        %1128 = vperm.xlu0 %1127, %v1022
        %v1129 = vpop.permute.xlu0 %1128
        %1132 = vset.pattern.permute.xlu0 0
        %1133 = vperm.xlu0 %1132, %v1023
        %v1134 = vpop.permute.xlu0 %1133
        %1137 = vset.pattern.permute.xlu0 0
        %1138 = vperm.xlu0 %1137, %v1024
        %v1139 = vpop.permute.xlu0 %1138
        %1142 = vset.pattern.permute.xlu0 0
        %1143 = vperm.xlu0 %1142, %v1025
        %v1144 = vpop.permute.xlu0 %1143
        %1147 = vset.pattern.permute.xlu0 0
        %1148 = vperm.xlu0 %1147, %v1026
        %v1149 = vpop.permute.xlu0 %1148
        %1152 = vset.pattern.permute.xlu0 0
        %1153 = vperm.xlu0 %1152, %v1027
        %v1154 = vpop.permute.xlu0 %1153
        %1157 = vset.pattern.permute.xlu0 0
        %1158 = vperm.xlu0 %1157, %v1028
        %v1159 = vpop.permute.xlu0 %1158
        %1162 = vset.pattern.permute.xlu0 0
        %1163 = vperm.xlu0 %1162, %v1029
        %v1164 = vpop.permute.xlu0 %1163
        %1167 = vset.pattern.permute.xlu0 0
        %1168 = vperm.xlu0 %1167, %v1030
        %v1169 = vpop.permute.xlu0 %1168
        %1172 = vset.pattern.permute.xlu0 0
        %1173 = vperm.xlu0 %1172, %v1031
        %v1174 = vpop.permute.xlu0 %1173
        %1177 = vset.pattern.permute.xlu0 0
        %1178 = vperm.xlu0 %1177, %v1032
        %v1179 = vpop.permute.xlu0 %1178
        %1182 = vset.pattern.permute.xlu0 0
        %1183 = vperm.xlu0 %1182, %v1033
        %v1184 = vpop.permute.xlu0 %1183
        %1187 = vset.pattern.permute.xlu0 0
        %1188 = vperm.xlu0 %1187, %v1034
        %v1189 = vpop.permute.xlu0 %1188
        %1192 = vset.pattern.permute.xlu0 0
        %1193 = vperm.xlu0 %1192, %v1035
        %v1194 = vpop.permute.xlu0 %1193
        %v1196 = vmul.f32 %v977, %v1039
        %v1197 = vmul.f32 %v976, %v1044
        %v1198 = vmul.f32 %v975, %v1049
        %v1199 = vmul.f32 %v974, %v1054
        %v1200 = vmul.f32 %v973, %v1059
        %v1201 = vmul.f32 %v972, %v1064
        %v1202 = vmul.f32 %v1003, %v1069
        %v1203 = vmul.f32 %v1002, %v1074
        %v1204 = vmul.f32 %v1001, %v1079
        %v1205 = vmul.f32 %v1000, %v1084
        %v1206 = vmul.f32 %v999, %v1089
        %v1207 = vmul.f32 %v998, %v1094
        %v1208 = vmul.f32 %v997, %v1099
        %v1209 = vmul.f32 %v996, %v1104
        %v1210 = vmul.f32 %v995, %v1109
        %v1211 = vmul.f32 %v994, %v1114
        %v1212 = vmul.f32 %v993, %v1119
        %v1213 = vmul.f32 %v992, %v1124
        %v1214 = vmul.f32 %v991, %v1129
        %v1215 = vmul.f32 %v990, %v1134
        %v1216 = vmul.f32 %v989, %v1139
        %v1217 = vmul.f32 %v988, %v1144
        %v1218 = vmul.f32 %v987, %v1149
        %v1219 = vmul.f32 %v986, %v1154
        %v1220 = vmul.f32 %v985, %v1159
        %v1221 = vmul.f32 %v984, %v1164
        %v1222 = vmul.f32 %v983, %v1169
        %v1223 = vmul.f32 %v982, %v1174
        %v1224 = vmul.f32 %v981, %v1179
        %v1225 = vmul.f32 %v980, %v1184
        %v1226 = vmul.f32 %v979, %v1189
        %v1227 = vmul.f32 %v978, %v1194
        %1228 = vset.pattern.permute.xlu0 1
        %1229 = vperm.xlu0 %1228, %v1004
        %v1230 = vpop.permute.xlu0 %1229
        %1232 = vset.pattern.permute.xlu0 1
        %1233 = vperm.xlu0 %1232, %v1005
        %v1234 = vpop.permute.xlu0 %1233
        %1236 = vset.pattern.permute.xlu0 1
        %1237 = vperm.xlu0 %1236, %v1006
        %v1238 = vpop.permute.xlu0 %1237
        %1240 = vset.pattern.permute.xlu0 1
        %1241 = vperm.xlu0 %1240, %v1007
        %v1242 = vpop.permute.xlu0 %1241
        %1244 = vset.pattern.permute.xlu0 1
        %1245 = vperm.xlu0 %1244, %v1008
        %v1246 = vpop.permute.xlu0 %1245
        %1248 = vset.pattern.permute.xlu0 1
        %1249 = vperm.xlu0 %1248, %v1009
        %v1250 = vpop.permute.xlu0 %1249
        %1252 = vset.pattern.permute.xlu0 1
        %1253 = vperm.xlu0 %1252, %v1010
        %v1254 = vpop.permute.xlu0 %1253
        %1256 = vset.pattern.permute.xlu0 1
        %1257 = vperm.xlu0 %1256, %v1011
        %v1258 = vpop.permute.xlu0 %1257
        %1260 = vset.pattern.permute.xlu0 1
        %1261 = vperm.xlu0 %1260, %v1012
        %v1262 = vpop.permute.xlu0 %1261
        %1264 = vset.pattern.permute.xlu0 1
        %1265 = vperm.xlu0 %1264, %v1013
        %v1266 = vpop.permute.xlu0 %1265
        %1268 = vset.pattern.permute.xlu0 1
        %1269 = vperm.xlu0 %1268, %v1014
        %v1270 = vpop.permute.xlu0 %1269
        %1272 = vset.pattern.permute.xlu0 1
        %1273 = vperm.xlu0 %1272, %v1015
        %v1274 = vpop.permute.xlu0 %1273
        %1276 = vset.pattern.permute.xlu0 1
        %1277 = vperm.xlu0 %1276, %v1016
        %v1278 = vpop.permute.xlu0 %1277
        %1280 = vset.pattern.permute.xlu0 1
        %1281 = vperm.xlu0 %1280, %v1017
        %v1282 = vpop.permute.xlu0 %1281
        %1284 = vset.pattern.permute.xlu0 1
        %1285 = vperm.xlu0 %1284, %v1018
        %v1286 = vpop.permute.xlu0 %1285
        %1288 = vset.pattern.permute.xlu0 1
        %1289 = vperm.xlu0 %1288, %v1019
        %v1290 = vpop.permute.xlu0 %1289
        %1292 = vset.pattern.permute.xlu0 1
        %1293 = vperm.xlu0 %1292, %v1020
        %v1294 = vpop.permute.xlu0 %1293
        %1296 = vset.pattern.permute.xlu0 1
        %1297 = vperm.xlu0 %1296, %v1021
        %v1298 = vpop.permute.xlu0 %1297
        %1300 = vset.pattern.permute.xlu0 1
        %1301 = vperm.xlu0 %1300, %v1022
        %v1302 = vpop.permute.xlu0 %1301
        %1304 = vset.pattern.permute.xlu0 1
        %1305 = vperm.xlu0 %1304, %v1023
        %v1306 = vpop.permute.xlu0 %1305
        %1308 = vset.pattern.permute.xlu0 1
        %1309 = vperm.xlu0 %1308, %v1024
        %v1310 = vpop.permute.xlu0 %1309
        %1312 = vset.pattern.permute.xlu0 1
        %1313 = vperm.xlu0 %1312, %v1025
        %v1314 = vpop.permute.xlu0 %1313
        %1316 = vset.pattern.permute.xlu0 1
        %1317 = vperm.xlu0 %1316, %v1026
        %v1318 = vpop.permute.xlu0 %1317
        %1320 = vset.pattern.permute.xlu0 1
        %1321 = vperm.xlu0 %1320, %v1027
        %v1322 = vpop.permute.xlu0 %1321
        %1324 = vset.pattern.permute.xlu0 1
        %1325 = vperm.xlu0 %1324, %v1028
        %v1326 = vpop.permute.xlu0 %1325
        %1328 = vset.pattern.permute.xlu0 1
        %1329 = vperm.xlu0 %1328, %v1029
        %v1330 = vpop.permute.xlu0 %1329
        %1332 = vset.pattern.permute.xlu0 1
        %1333 = vperm.xlu0 %1332, %v1030
        %v1334 = vpop.permute.xlu0 %1333
        %1336 = vset.pattern.permute.xlu0 1
        %1337 = vperm.xlu0 %1336, %v1031
        %v1338 = vpop.permute.xlu0 %1337
        %1340 = vset.pattern.permute.xlu0 1
        %1341 = vperm.xlu0 %1340, %v1032
        %v1342 = vpop.permute.xlu0 %1341
        %1344 = vset.pattern.permute.xlu0 1
        %1345 = vperm.xlu0 %1344, %v1033
        %v1346 = vpop.permute.xlu0 %1345
        %1348 = vset.pattern.permute.xlu0 1
        %1349 = vperm.xlu0 %1348, %v1034
        %v1350 = vpop.permute.xlu0 %1349
        %1352 = vset.pattern.permute.xlu0 1
        %1353 = vperm.xlu0 %1352, %v1035
        %v1354 = vpop.permute.xlu0 %1353
        %v1356 = vmul.f32 %v714, %v1230
        %v1357 = vmul.f32 %v717, %v1234
        %v1358 = vmul.f32 %v722, %v1238
        %v1359 = vmul.f32 %v725, %v1242
        %v1360 = vmul.f32 %v730, %v1246
        %v1361 = vmul.f32 %v733, %v1250
        %v1362 = vmul.f32 %v610, %v1254
        %v1363 = vmul.f32 %v613, %v1258
        %v1364 = vmul.f32 %v618, %v1262
        %v1365 = vmul.f32 %v621, %v1266
        %v1366 = vmul.f32 %v626, %v1270
        %v1367 = vmul.f32 %v629, %v1274
        %v1368 = vmul.f32 %v634, %v1278
        %v1369 = vmul.f32 %v637, %v1282
        %v1370 = vmul.f32 %v642, %v1286
        %v1371 = vmul.f32 %v645, %v1290
        %v1372 = vmul.f32 %v650, %v1294
        %v1373 = vmul.f32 %v653, %v1298
        %v1374 = vmul.f32 %v658, %v1302
        %v1375 = vmul.f32 %v661, %v1306
        %v1376 = vmul.f32 %v666, %v1310
        %v1377 = vmul.f32 %v669, %v1314
        %v1378 = vmul.f32 %v674, %v1318
        %v1379 = vmul.f32 %v677, %v1322
        %v1380 = vmul.f32 %v682, %v1326
        %v1381 = vmul.f32 %v685, %v1330
        %v1382 = vmul.f32 %v690, %v1334
        %v1383 = vmul.f32 %v693, %v1338
        %v1384 = vmul.f32 %v698, %v1342
        %v1385 = vmul.f32 %v701, %v1346
        %v1386 = vmul.f32 %v706, %v1350
        %v1387 = vmul.f32 %v709, %v1354
        %v1388 = vrot.slane %v610, 3
        %v1389 = vrot.slane %v613, 3
        %v1390 = vrot.slane %v618, 3
        %v1391 = vrot.slane %v621, 3
        %v1392 = vrot.slane %v626, 3
        %v1393 = vrot.slane %v629, 3
        %v1394 = vrot.slane %v634, 3
        %v1395 = vrot.slane %v637, 3
        %v1396 = vrot.slane %v642, 3
        %v1397 = vrot.slane %v645, 3
        %v1398 = vrot.slane %v650, 3
        %v1399 = vrot.slane %v653, 3
        %v1400 = vrot.slane %v658, 3
        %v1401 = vrot.slane %v661, 3
        %v1402 = vrot.slane %v666, 3
        %v1403 = vrot.slane %v669, 3
        %v1404 = vrot.slane %v674, 3
        %v1405 = vrot.slane %v677, 3
        %v1406 = vrot.slane %v682, 3
        %v1407 = vrot.slane %v685, 3
        %v1408 = vrot.slane %v690, 3
        %v1409 = vrot.slane %v693, 3
        %v1410 = vrot.slane %v698, 3
        %v1411 = vrot.slane %v701, 3
        %v1412 = vrot.slane %v706, 3
        %v1413 = vrot.slane %v709, 3
        %v1414 = vrot.slane %v714, 3
        %v1415 = vrot.slane %v717, 3
        %v1416 = vrot.slane %v722, 3
        %v1417 = vrot.slane %v725, 3
        %v1418 = vrot.slane %v730, 3
        %v1419 = vrot.slane %v733, 3
        %vm1420 = vcmp.lt.s32.totalorder %v970, 5
        %v1421 = vsel %vm1420, %v1418, %v1419
        %v1422 = vsel %vm1420, %v1417, %v1418
        %v1423 = vsel %vm1420, %v1416, %v1417
        %v1424 = vsel %vm1420, %v1415, %v1416
        %v1425 = vsel %vm1420, %v1414, %v1415
        %v1426 = vsel %vm1420, %v1413, %v1414
        %v1427 = vsel %vm1420, %v1412, %v1413
        %v1428 = vsel %vm1420, %v1411, %v1412
        %v1429 = vsel %vm1420, %v1410, %v1411
        %v1430 = vsel %vm1420, %v1409, %v1410
        %v1431 = vsel %vm1420, %v1408, %v1409
        %v1432 = vsel %vm1420, %v1407, %v1408
        %v1433 = vsel %vm1420, %v1406, %v1407
        %v1434 = vsel %vm1420, %v1405, %v1406
        %v1435 = vsel %vm1420, %v1404, %v1405
        %v1436 = vsel %vm1420, %v1403, %v1404
        %v1437 = vsel %vm1420, %v1402, %v1403
        %v1438 = vsel %vm1420, %v1401, %v1402
        %v1439 = vsel %vm1420, %v1400, %v1401
        %v1440 = vsel %vm1420, %v1399, %v1400
        %v1441 = vsel %vm1420, %v1398, %v1399
        %v1442 = vsel %vm1420, %v1397, %v1398
        %v1443 = vsel %vm1420, %v1396, %v1397
        %v1444 = vsel %vm1420, %v1395, %v1396
        %v1445 = vsel %vm1420, %v1394, %v1395
        %v1446 = vsel %vm1420, %v1393, %v1394
        %v1447 = vsel %vm1420, %v1392, %v1393
        %v1448 = vsel %vm1420, %v1391, %v1392
        %v1449 = vsel %vm1420, %v1390, %v1391
        %v1450 = vsel %vm1420, %v1389, %v1390
        %v1451 = vsel %vm1420, %v1388, %v1389
        %v1452 = vsel %vm1420, %v1419, %v1388
        %1453 = vset.pattern.permute.xlu0 2
        %1454 = vperm.xlu0 %1453, %v1004
        %v1455 = vpop.permute.xlu0 %1454
        %1457 = vset.pattern.permute.xlu0 2
        %1458 = vperm.xlu0 %1457, %v1005
        %v1459 = vpop.permute.xlu0 %1458
        %1461 = vset.pattern.permute.xlu0 2
        %1462 = vperm.xlu0 %1461, %v1006
        %v1463 = vpop.permute.xlu0 %1462
        %1465 = vset.pattern.permute.xlu0 2
        %1466 = vperm.xlu0 %1465, %v1007
        %v1467 = vpop.permute.xlu0 %1466
        %1469 = vset.pattern.permute.xlu0 2
        %1470 = vperm.xlu0 %1469, %v1008
        %v1471 = vpop.permute.xlu0 %1470
        %1473 = vset.pattern.permute.xlu0 2
        %1474 = vperm.xlu0 %1473, %v1009
        %v1475 = vpop.permute.xlu0 %1474
        %1477 = vset.pattern.permute.xlu0 2
        %1478 = vperm.xlu0 %1477, %v1010
        %v1479 = vpop.permute.xlu0 %1478
        %1481 = vset.pattern.permute.xlu0 2
        %1482 = vperm.xlu0 %1481, %v1011
        %v1483 = vpop.permute.xlu0 %1482
        %1485 = vset.pattern.permute.xlu0 2
        %1486 = vperm.xlu0 %1485, %v1012
        %v1487 = vpop.permute.xlu0 %1486
        %1489 = vset.pattern.permute.xlu0 2
        %1490 = vperm.xlu0 %1489, %v1013
        %v1491 = vpop.permute.xlu0 %1490
        %1493 = vset.pattern.permute.xlu0 2
        %1494 = vperm.xlu0 %1493, %v1014
        %v1495 = vpop.permute.xlu0 %1494
        %1497 = vset.pattern.permute.xlu0 2
        %1498 = vperm.xlu0 %1497, %v1015
        %v1499 = vpop.permute.xlu0 %1498
        %1501 = vset.pattern.permute.xlu0 2
        %1502 = vperm.xlu0 %1501, %v1016
        %v1503 = vpop.permute.xlu0 %1502
        %1505 = vset.pattern.permute.xlu0 2
        %1506 = vperm.xlu0 %1505, %v1017
        %v1507 = vpop.permute.xlu0 %1506
        %1509 = vset.pattern.permute.xlu0 2
        %1510 = vperm.xlu0 %1509, %v1018
        %v1511 = vpop.permute.xlu0 %1510
        %1513 = vset.pattern.permute.xlu0 2
        %1514 = vperm.xlu0 %1513, %v1019
        %v1515 = vpop.permute.xlu0 %1514
        %1517 = vset.pattern.permute.xlu0 2
        %1518 = vperm.xlu0 %1517, %v1020
        %v1519 = vpop.permute.xlu0 %1518
        %1521 = vset.pattern.permute.xlu0 2
        %1522 = vperm.xlu0 %1521, %v1021
        %v1523 = vpop.permute.xlu0 %1522
        %1525 = vset.pattern.permute.xlu0 2
        %1526 = vperm.xlu0 %1525, %v1022
        %v1527 = vpop.permute.xlu0 %1526
        %1529 = vset.pattern.permute.xlu0 2
        %1530 = vperm.xlu0 %1529, %v1023
        %v1531 = vpop.permute.xlu0 %1530
        %1533 = vset.pattern.permute.xlu0 2
        %1534 = vperm.xlu0 %1533, %v1024
        %v1535 = vpop.permute.xlu0 %1534
        %1537 = vset.pattern.permute.xlu0 2
        %1538 = vperm.xlu0 %1537, %v1025
        %v1539 = vpop.permute.xlu0 %1538
        %1541 = vset.pattern.permute.xlu0 2
        %1542 = vperm.xlu0 %1541, %v1026
        %v1543 = vpop.permute.xlu0 %1542
        %1545 = vset.pattern.permute.xlu0 2
        %1546 = vperm.xlu0 %1545, %v1027
        %v1547 = vpop.permute.xlu0 %1546
        %1549 = vset.pattern.permute.xlu0 2
        %1550 = vperm.xlu0 %1549, %v1028
        %v1551 = vpop.permute.xlu0 %1550
        %1553 = vset.pattern.permute.xlu0 2
        %1554 = vperm.xlu0 %1553, %v1029
        %v1555 = vpop.permute.xlu0 %1554
        %1557 = vset.pattern.permute.xlu0 2
        %1558 = vperm.xlu0 %1557, %v1030
        %v1559 = vpop.permute.xlu0 %1558
        %1561 = vset.pattern.permute.xlu0 2
        %1562 = vperm.xlu0 %1561, %v1031
        %v1563 = vpop.permute.xlu0 %1562
        %1565 = vset.pattern.permute.xlu0 2
        %1566 = vperm.xlu0 %1565, %v1032
        %v1567 = vpop.permute.xlu0 %1566
        %1569 = vset.pattern.permute.xlu0 2
        %1570 = vperm.xlu0 %1569, %v1033
        %v1571 = vpop.permute.xlu0 %1570
        %1573 = vset.pattern.permute.xlu0 2
        %1574 = vperm.xlu0 %1573, %v1034
        %v1575 = vpop.permute.xlu0 %1574
        %1577 = vset.pattern.permute.xlu0 2
        %1578 = vperm.xlu0 %1577, %v1035
        %v1579 = vpop.permute.xlu0 %1578
        %v1581 = vmul.f32 %v1425, %v1455
        %v1582 = vmul.f32 %v1424, %v1459
        %v1583 = vmul.f32 %v1423, %v1463
        %v1584 = vmul.f32 %v1422, %v1467
        %v1585 = vmul.f32 %v1421, %v1471
        %v1586 = vmul.f32 %v1452, %v1475
        %v1587 = vmul.f32 %v1451, %v1479
        %v1588 = vmul.f32 %v1450, %v1483
        %v1589 = vmul.f32 %v1449, %v1487
        %v1590 = vmul.f32 %v1448, %v1491
        %v1591 = vmul.f32 %v1447, %v1495
        %v1592 = vmul.f32 %v1446, %v1499
        %v1593 = vmul.f32 %v1445, %v1503
        %v1594 = vmul.f32 %v1444, %v1507
        %v1595 = vmul.f32 %v1443, %v1511
        %v1596 = vmul.f32 %v1442, %v1515
        %v1597 = vmul.f32 %v1441, %v1519
        %v1598 = vmul.f32 %v1440, %v1523
        %v1599 = vmul.f32 %v1439, %v1527
        %v1600 = vmul.f32 %v1438, %v1531
        %v1601 = vmul.f32 %v1437, %v1535
        %v1602 = vmul.f32 %v1436, %v1539
        %v1603 = vmul.f32 %v1435, %v1543
        %v1604 = vmul.f32 %v1434, %v1547
        %v1605 = vmul.f32 %v1433, %v1551
        %v1606 = vmul.f32 %v1432, %v1555
        %v1607 = vmul.f32 %v1431, %v1559
        %v1608 = vmul.f32 %v1430, %v1563
        %v1609 = vmul.f32 %v1429, %v1567
        %v1610 = vmul.f32 %v1428, %v1571
        %v1611 = vmul.f32 %v1427, %v1575
        %v1612 = vmul.f32 %v1426, %v1579
        %v1613 = vld [vmem:[#allocation11] sm:$0xff]
        %v1614 = vld [vmem:[#allocation11 + $0x8] sm:$0xff]
        %v1615 = vld [vmem:[#allocation11 + $0x10] sm:$0xff]
        %v1616 = vld [vmem:[#allocation11 + $0x18] sm:$0xff]
        %v1617 = vld [vmem:[#allocation11 + $0x20] sm:$0xff]
        %v1618 = vld [vmem:[#allocation11 + $0x28] sm:$0xff]
        %v1619 = vld [vmem:[#allocation11 + $0x30] sm:$0xff]
        %v1620 = vld [vmem:[#allocation11 + $0x38] sm:$0xff]
        %v1621 = vld [vmem:[#allocation11 + $0x40] sm:$0xff]
        %v1622 = vld [vmem:[#allocation11 + $0x48] sm:$0xff]
        %v1623 = vld [vmem:[#allocation11 + $0x50] sm:$0xff]
        %v1624 = vld [vmem:[#allocation11 + $0x58] sm:$0xff]
        %v1625 = vld [vmem:[#allocation11 + $0x60] sm:$0xff]
        %v1626 = vld [vmem:[#allocation11 + $0x68] sm:$0xff]
        %v1627 = vld [vmem:[#allocation11 + $0x70] sm:$0xff]
        %v1628 = vld [vmem:[#allocation11 + $0x78] sm:$0xff]
        %v1629 = vld [vmem:[#allocation11 + $0x80] sm:$0xff]
        %v1630 = vld [vmem:[#allocation11 + $0x88] sm:$0xff]
        %v1631 = vld [vmem:[#allocation11 + $0x90] sm:$0xff]
        %v1632 = vld [vmem:[#allocation11 + $0x98] sm:$0xff]
        %v1633 = vld [vmem:[#allocation11 + $0xa0] sm:$0xff]
        %v1634 = vld [vmem:[#allocation11 + $0xa8] sm:$0xff]
        %v1635 = vld [vmem:[#allocation11 + $0xb0] sm:$0xff]
        %v1636 = vld [vmem:[#allocation11 + $0xb8] sm:$0xff]
        %v1637 = vld [vmem:[#allocation11 + $0xc0] sm:$0xff]
        %v1638 = vld [vmem:[#allocation11 + $0xc8] sm:$0xff]
        %v1639 = vld [vmem:[#allocation11 + $0xd0] sm:$0xff]
        %v1640 = vld [vmem:[#allocation11 + $0xd8] sm:$0xff]
        %v1641 = vld [vmem:[#allocation11 + $0xe0] sm:$0xff]
        %v1642 = vld [vmem:[#allocation11 + $0xe8] sm:$0xff]
        %v1643 = vld [vmem:[#allocation11 + $0xf0] sm:$0xff]
        %v1644 = vld [vmem:[#allocation11 + $0xf8] sm:$0xff]
        %v1645 = vld [vmem:[#allocation11 + $0x100] sm:$0xff]
        %v1646 = vld [vmem:[#allocation11 + $0x108] sm:$0xff]
        %v1647 = vld [vmem:[#allocation11 + $0x110] sm:$0xff]
        %v1648 = vld [vmem:[#allocation11 + $0x118] sm:$0xff]
        %v1649 = vld [vmem:[#allocation11 + $0x120] sm:$0xff]
        %v1650 = vld [vmem:[#allocation11 + $0x128] sm:$0xff]
        %v1651 = vld [vmem:[#allocation11 + $0x130] sm:$0xff]
        %v1652 = vld [vmem:[#allocation11 + $0x138] sm:$0xff]
        %v1653 = vld [vmem:[#allocation11 + $0x140] sm:$0xff]
        %v1654 = vld [vmem:[#allocation11 + $0x148] sm:$0xff]
        %v1655 = vld [vmem:[#allocation11 + $0x150] sm:$0xff]
        %v1656 = vld [vmem:[#allocation11 + $0x158] sm:$0xff]
        %v1657 = vld [vmem:[#allocation11 + $0x160] sm:$0xff]
        %v1658 = vld [vmem:[#allocation11 + $0x168] sm:$0xff]
        %v1659 = vld [vmem:[#allocation11 + $0x170] sm:$0xff]
        %v1660 = vld [vmem:[#allocation11 + $0x178] sm:$0xff]
        %v1661 = vpack.c.bf16 %v1197, %v1196
        %v1662 = vpack.c.bf16 %v1357, %v1356
        %v1663 = vpack.c.bf16 %v1582, %v1581
        %v1664 = vpack.c.bf16 %v1199, %v1198
        %v1665 = vpack.c.bf16 %v1359, %v1358
        %v1666 = vpack.c.bf16 %v1584, %v1583
        %v1667 = vpack.c.bf16 %v1201, %v1200
        %v1668 = vpack.c.bf16 %v1361, %v1360
        %v1669 = vpack.c.bf16 %v1586, %v1585
        %v1670 = vpack.c.bf16 %v1203, %v1202
        %v1671 = vpack.c.bf16 %v1363, %v1362
        %v1672 = vpack.c.bf16 %v1588, %v1587
        %v1673 = vpack.c.bf16 %v1205, %v1204
        %v1674 = vpack.c.bf16 %v1365, %v1364
        %v1675 = vpack.c.bf16 %v1590, %v1589
        %v1676 = vpack.c.bf16 %v1207, %v1206
        %v1677 = vpack.c.bf16 %v1367, %v1366
        %v1678 = vpack.c.bf16 %v1592, %v1591
        %v1679 = vpack.c.bf16 %v1209, %v1208
        %v1680 = vpack.c.bf16 %v1369, %v1368
        %v1681 = vpack.c.bf16 %v1594, %v1593
        %v1682 = vpack.c.bf16 %v1211, %v1210
        %v1683 = vpack.c.bf16 %v1371, %v1370
        %v1684 = vpack.c.bf16 %v1596, %v1595
        %v1685 = vpack.c.bf16 %v1213, %v1212
        %v1686 = vpack.c.bf16 %v1373, %v1372
        %v1687 = vpack.c.bf16 %v1598, %v1597
        %v1688 = vpack.c.bf16 %v1215, %v1214
        %v1689 = vpack.c.bf16 %v1375, %v1374
        %v1690 = vpack.c.bf16 %v1600, %v1599
        %v1691 = vpack.c.bf16 %v1217, %v1216
        %v1692 = vpack.c.bf16 %v1377, %v1376
        %v1693 = vpack.c.bf16 %v1602, %v1601
        %v1694 = vpack.c.bf16 %v1219, %v1218
        %v1695 = vpack.c.bf16 %v1379, %v1378
        %v1696 = vpack.c.bf16 %v1604, %v1603
        %v1697 = vpack.c.bf16 %v1221, %v1220
        %v1698 = vpack.c.bf16 %v1381, %v1380
        %v1699 = vpack.c.bf16 %v1606, %v1605
        %v1700 = vpack.c.bf16 %v1223, %v1222
        %v1701 = vpack.c.bf16 %v1383, %v1382
        %v1702 = vpack.c.bf16 %v1608, %v1607
        %v1703 = vpack.c.bf16 %v1225, %v1224
        %v1704 = vpack.c.bf16 %v1385, %v1384
        %v1705 = vpack.c.bf16 %v1610, %v1609
        %v1706 = vpack.c.bf16 %v1227, %v1226
        %v1707 = vpack.c.bf16 %v1387, %v1386
        %v1708 = vpack.c.bf16 %v1612, %v1611
        %v1709 = vpack.c.bf16 %v1614, %v1613
        %v1710 = vpack.c.bf16 %v1616, %v1615
        %v1711 = vpack.c.bf16 %v1618, %v1617
        %v1712 = vpack.c.bf16 %v1620, %v1619
        %v1713 = vpack.c.bf16 %v1622, %v1621
        %v1714 = vpack.c.bf16 %v1624, %v1623
        %v1715 = vpack.c.bf16 %v1626, %v1625
        %v1716 = vpack.c.bf16 %v1628, %v1627
        %v1717 = vpack.c.bf16 %v1630, %v1629
        %v1718 = vpack.c.bf16 %v1632, %v1631
        %v1719 = vpack.c.bf16 %v1634, %v1633
        %v1720 = vpack.c.bf16 %v1636, %v1635
        %v1721 = vpack.c.bf16 %v1638, %v1637
        %v1722 = vpack.c.bf16 %v1640, %v1639
        %v1723 = vpack.c.bf16 %v1642, %v1641
        %v1724 = vpack.c.bf16 %v1644, %v1643
        %v1725 = vpack.c.bf16 %v1646, %v1645
        %v1726 = vpack.c.bf16 %v1648, %v1647
        %v1727 = vpack.c.bf16 %v1650, %v1649
        %v1728 = vpack.c.bf16 %v1652, %v1651
        %v1729 = vpack.c.bf16 %v1654, %v1653
        %v1730 = vpack.c.bf16 %v1656, %v1655
        %v1731 = vpack.c.bf16 %v1658, %v1657
        %v1732 = vpack.c.bf16 %v1660, %v1659
        %1733 = vset.pattern.permute.xlu0 3
        %1734 = vperm.xlu0 %1733, %v1004
        %v1735 = vpop.permute.xlu0 %1734
        %1737 = vset.pattern.permute.xlu0 3
        %1738 = vperm.xlu0 %1737, %v1005
        %v1739 = vpop.permute.xlu0 %1738
        %1741 = vset.pattern.permute.xlu0 3
        %1742 = vperm.xlu0 %1741, %v1006
        %v1743 = vpop.permute.xlu0 %1742
        %1745 = vset.pattern.permute.xlu0 3
        %1746 = vperm.xlu0 %1745, %v1007
        %v1747 = vpop.permute.xlu0 %1746
        %1749 = vset.pattern.permute.xlu0 3
        %1750 = vperm.xlu0 %1749, %v1008
        %v1751 = vpop.permute.xlu0 %1750
        %1753 = vset.pattern.permute.xlu0 3
        %1754 = vperm.xlu0 %1753, %v1009
        %v1755 = vpop.permute.xlu0 %1754
        %1757 = vset.pattern.permute.xlu0 3
        %1758 = vperm.xlu0 %1757, %v1010
        %v1759 = vpop.permute.xlu0 %1758
        %1761 = vset.pattern.permute.xlu0 3
        %1762 = vperm.xlu0 %1761, %v1011
        %v1763 = vpop.permute.xlu0 %1762
        %1765 = vset.pattern.permute.xlu0 3
        %1766 = vperm.xlu0 %1765, %v1012
        %v1767 = vpop.permute.xlu0 %1766
        %1769 = vset.pattern.permute.xlu0 3
        %1770 = vperm.xlu0 %1769, %v1013
        %v1771 = vpop.permute.xlu0 %1770
        %1773 = vset.pattern.permute.xlu0 3
        %1774 = vperm.xlu0 %1773, %v1014
        %v1775 = vpop.permute.xlu0 %1774
        %1777 = vset.pattern.permute.xlu0 3
        %1778 = vperm.xlu0 %1777, %v1015
        %v1779 = vpop.permute.xlu0 %1778
        %1781 = vset.pattern.permute.xlu0 3
        %1782 = vperm.xlu0 %1781, %v1016
        %v1783 = vpop.permute.xlu0 %1782
        %1785 = vset.pattern.permute.xlu0 3
        %1786 = vperm.xlu0 %1785, %v1017
        %v1787 = vpop.permute.xlu0 %1786
        %1789 = vset.pattern.permute.xlu0 3
        %1790 = vperm.xlu0 %1789, %v1018
        %v1791 = vpop.permute.xlu0 %1790
        %1793 = vset.pattern.permute.xlu0 3
        %1794 = vperm.xlu0 %1793, %v1019
        %v1795 = vpop.permute.xlu0 %1794
        %1797 = vset.pattern.permute.xlu0 3
        %1798 = vperm.xlu0 %1797, %v1020
        %v1799 = vpop.permute.xlu0 %1798
        %1801 = vset.pattern.permute.xlu0 3
        %1802 = vperm.xlu0 %1801, %v1021
        %v1803 = vpop.permute.xlu0 %1802
        %1805 = vset.pattern.permute.xlu0 3
        %1806 = vperm.xlu0 %1805, %v1022
        %v1807 = vpop.permute.xlu0 %1806
        %1809 = vset.pattern.permute.xlu0 3
        %1810 = vperm.xlu0 %1809, %v1023
        %v1811 = vpop.permute.xlu0 %1810
        %1813 = vset.pattern.permute.xlu0 3
        %1814 = vperm.xlu0 %1813, %v1024
        %v1815 = vpop.permute.xlu0 %1814
        %1817 = vset.pattern.permute.xlu0 3
        %1818 = vperm.xlu0 %1817, %v1025
        %v1819 = vpop.permute.xlu0 %1818
        %1821 = vset.pattern.permute.xlu0 3
        %1822 = vperm.xlu0 %1821, %v1026
        %v1823 = vpop.permute.xlu0 %1822
        %1825 = vset.pattern.permute.xlu0 3
        %1826 = vperm.xlu0 %1825, %v1027
        %v1827 = vpop.permute.xlu0 %1826
        %1829 = vset.pattern.permute.xlu0 3
        %1830 = vperm.xlu0 %1829, %v1028
        %v1831 = vpop.permute.xlu0 %1830
        %1833 = vset.pattern.permute.xlu0 3
        %1834 = vperm.xlu0 %1833, %v1029
        %v1835 = vpop.permute.xlu0 %1834
        %1837 = vset.pattern.permute.xlu0 3
        %1838 = vperm.xlu0 %1837, %v1030
        %v1839 = vpop.permute.xlu0 %1838
        %1841 = vset.pattern.permute.xlu0 3
        %1842 = vperm.xlu0 %1841, %v1031
        %v1843 = vpop.permute.xlu0 %1842
        %1845 = vset.pattern.permute.xlu0 3
        %1846 = vperm.xlu0 %1845, %v1032
        %v1847 = vpop.permute.xlu0 %1846
        %1849 = vset.pattern.permute.xlu0 3
        %1850 = vperm.xlu0 %1849, %v1033
        %v1851 = vpop.permute.xlu0 %1850
        %1853 = vset.pattern.permute.xlu0 3
        %1854 = vperm.xlu0 %1853, %v1034
        %v1855 = vpop.permute.xlu0 %1854
        %1857 = vset.pattern.permute.xlu0 3
        %1858 = vperm.xlu0 %1857, %v1035
        %v1859 = vpop.permute.xlu0 %1858
        %v1861 = vmul.f32 %v1003, %v1735
        %v1862 = vmul.f32 %v1002, %v1739
        %v1863 = vmul.f32 %v1001, %v1743
        %v1864 = vmul.f32 %v1000, %v1747
        %v1865 = vmul.f32 %v999, %v1751
        %v1866 = vmul.f32 %v998, %v1755
        %v1867 = vmul.f32 %v997, %v1759
        %v1868 = vmul.f32 %v996, %v1763
        %v1869 = vmul.f32 %v995, %v1767
        %v1870 = vmul.f32 %v994, %v1771
        %v1871 = vmul.f32 %v993, %v1775
        %v1872 = vmul.f32 %v992, %v1779
        %v1873 = vmul.f32 %v991, %v1783
        %v1874 = vmul.f32 %v990, %v1787
        %v1875 = vmul.f32 %v989, %v1791
        %v1876 = vmul.f32 %v988, %v1795
        %v1877 = vmul.f32 %v987, %v1799
        %v1878 = vmul.f32 %v986, %v1803
        %v1879 = vmul.f32 %v985, %v1807
        %v1880 = vmul.f32 %v984, %v1811
        %v1881 = vmul.f32 %v983, %v1815
        %v1882 = vmul.f32 %v982, %v1819
        %v1883 = vmul.f32 %v981, %v1823
        %v1884 = vmul.f32 %v980, %v1827
        %v1885 = vmul.f32 %v979, %v1831
        %v1886 = vmul.f32 %v978, %v1835
        %v1887 = vmul.f32 %v977, %v1839
        %v1888 = vmul.f32 %v976, %v1843
        %v1889 = vmul.f32 %v975, %v1847
        %v1890 = vmul.f32 %v974, %v1851
        %v1891 = vmul.f32 %v973, %v1855
        %v1892 = vmul.f32 %v972, %v1859
        %1893 = vset.pattern.permute.xlu0 5
        %1894 = vperm.xlu0 %1893, %v1004
        %v1895 = vpop.permute.xlu0 %1894
        %1897 = vset.pattern.permute.xlu0 5
        %1898 = vperm.xlu0 %1897, %v1005
        %v1899 = vpop.permute.xlu0 %1898
        %1901 = vset.pattern.permute.xlu0 5
        %1902 = vperm.xlu0 %1901, %v1006
        %v1903 = vpop.permute.xlu0 %1902
        %1905 = vset.pattern.permute.xlu0 5
        %1906 = vperm.xlu0 %1905, %v1007
        %v1907 = vpop.permute.xlu0 %1906
        %1909 = vset.pattern.permute.xlu0 5
        %1910 = vperm.xlu0 %1909, %v1008
        %v1911 = vpop.permute.xlu0 %1910
        %1913 = vset.pattern.permute.xlu0 5
        %1914 = vperm.xlu0 %1913, %v1009
        %v1915 = vpop.permute.xlu0 %1914
        %1917 = vset.pattern.permute.xlu0 5
        %1918 = vperm.xlu0 %1917, %v1010
        %v1919 = vpop.permute.xlu0 %1918
        %1921 = vset.pattern.permute.xlu0 5
        %1922 = vperm.xlu0 %1921, %v1011
        %v1923 = vpop.permute.xlu0 %1922
        %1925 = vset.pattern.permute.xlu0 5
        %1926 = vperm.xlu0 %1925, %v1012
        %v1927 = vpop.permute.xlu0 %1926
        %1929 = vset.pattern.permute.xlu0 5
        %1930 = vperm.xlu0 %1929, %v1013
        %v1931 = vpop.permute.xlu0 %1930
        %1933 = vset.pattern.permute.xlu0 5
        %1934 = vperm.xlu0 %1933, %v1014
        %v1935 = vpop.permute.xlu0 %1934
        %1937 = vset.pattern.permute.xlu0 5
        %1938 = vperm.xlu0 %1937, %v1015
        %v1939 = vpop.permute.xlu0 %1938
        %1941 = vset.pattern.permute.xlu0 5
        %1942 = vperm.xlu0 %1941, %v1016
        %v1943 = vpop.permute.xlu0 %1942
        %1945 = vset.pattern.permute.xlu0 5
        %1946 = vperm.xlu0 %1945, %v1017
        %v1947 = vpop.permute.xlu0 %1946
        %1949 = vset.pattern.permute.xlu0 5
        %1950 = vperm.xlu0 %1949, %v1018
        %v1951 = vpop.permute.xlu0 %1950
        %1953 = vset.pattern.permute.xlu0 5
        %1954 = vperm.xlu0 %1953, %v1019
        %v1955 = vpop.permute.xlu0 %1954
        %1957 = vset.pattern.permute.xlu0 5
        %1958 = vperm.xlu0 %1957, %v1020
        %v1959 = vpop.permute.xlu0 %1958
        %1961 = vset.pattern.permute.xlu0 5
        %1962 = vperm.xlu0 %1961, %v1021
        %v1963 = vpop.permute.xlu0 %1962
        %1965 = vset.pattern.permute.xlu0 5
        %1966 = vperm.xlu0 %1965, %v1022
        %v1967 = vpop.permute.xlu0 %1966
        %1969 = vset.pattern.permute.xlu0 5
        %1970 = vperm.xlu0 %1969, %v1023
        %v1971 = vpop.permute.xlu0 %1970
        %1973 = vset.pattern.permute.xlu0 5
        %1974 = vperm.xlu0 %1973, %v1024
        %v1975 = vpop.permute.xlu0 %1974
        %1977 = vset.pattern.permute.xlu0 5
        %1978 = vperm.xlu0 %1977, %v1025
        %v1979 = vpop.permute.xlu0 %1978
        %1981 = vset.pattern.permute.xlu0 5
        %1982 = vperm.xlu0 %1981, %v1026
        %v1983 = vpop.permute.xlu0 %1982
        %1985 = vset.pattern.permute.xlu0 5
        %1986 = vperm.xlu0 %1985, %v1027
        %v1987 = vpop.permute.xlu0 %1986
        %1989 = vset.pattern.permute.xlu0 5
        %1990 = vperm.xlu0 %1989, %v1028
        %v1991 = vpop.permute.xlu0 %1990
        %1993 = vset.pattern.permute.xlu0 5
        %1994 = vperm.xlu0 %1993, %v1029
        %v1995 = vpop.permute.xlu0 %1994
        %1997 = vset.pattern.permute.xlu0 5
        %1998 = vperm.xlu0 %1997, %v1030
        %v1999 = vpop.permute.xlu0 %1998
        %2001 = vset.pattern.permute.xlu0 5
        %2002 = vperm.xlu0 %2001, %v1031
        %v2003 = vpop.permute.xlu0 %2002
        %2005 = vset.pattern.permute.xlu0 5
        %2006 = vperm.xlu0 %2005, %v1032
        %v2007 = vpop.permute.xlu0 %2006
        %2009 = vset.pattern.permute.xlu0 5
        %2010 = vperm.xlu0 %2009, %v1033
        %v2011 = vpop.permute.xlu0 %2010
        %2013 = vset.pattern.permute.xlu0 5
        %2014 = vperm.xlu0 %2013, %v1034
        %v2015 = vpop.permute.xlu0 %2014
        %2017 = vset.pattern.permute.xlu0 5
        %2018 = vperm.xlu0 %2017, %v1035
        %v2019 = vpop.permute.xlu0 %2018
        %v2021 = vmul.f32 %v1451, %v1895
        %v2022 = vmul.f32 %v1450, %v1899
        %v2023 = vmul.f32 %v1449, %v1903
        %v2024 = vmul.f32 %v1448, %v1907
        %v2025 = vmul.f32 %v1447, %v1911
        %v2026 = vmul.f32 %v1446, %v1915
        %v2027 = vmul.f32 %v1445, %v1919
        %v2028 = vmul.f32 %v1444, %v1923
        %v2029 = vmul.f32 %v1443, %v1927
        %v2030 = vmul.f32 %v1442, %v1931
        %v2031 = vmul.f32 %v1441, %v1935
        %v2032 = vmul.f32 %v1440, %v1939
        %v2033 = vmul.f32 %v1439, %v1943
        %v2034 = vmul.f32 %v1438, %v1947
        %v2035 = vmul.f32 %v1437, %v1951
        %v2036 = vmul.f32 %v1436, %v1955
        %v2037 = vmul.f32 %v1435, %v1959
        %v2038 = vmul.f32 %v1434, %v1963
        %v2039 = vmul.f32 %v1433, %v1967
        %v2040 = vmul.f32 %v1432, %v1971
        %v2041 = vmul.f32 %v1431, %v1975
        %v2042 = vmul.f32 %v1430, %v1979
        %v2043 = vmul.f32 %v1429, %v1983
        %v2044 = vmul.f32 %v1428, %v1987
        %v2045 = vmul.f32 %v1427, %v1991
        %v2046 = vmul.f32 %v1426, %v1995
        %v2047 = vmul.f32 %v1425, %v1999
        %v2048 = vmul.f32 %v1424, %v2003
        %v2049 = vmul.f32 %v1423, %v2007
        %v2050 = vmul.f32 %v1422, %v2011
        %v2051 = vmul.f32 %v1421, %v2015
        %v2052 = vmul.f32 %v1452, %v2019
        %v2053 = vld [vmem:[#allocation11 + $0x180] sm:$0xff]
        %v2054 = vld [vmem:[#allocation11 + $0x188] sm:$0xff]
        %v2055 = vld [vmem:[#allocation11 + $0x190] sm:$0xff]
        %v2056 = vld [vmem:[#allocation11 + $0x198] sm:$0xff]
        %v2057 = vld [vmem:[#allocation11 + $0x1a0] sm:$0xff]
        %v2058 = vld [vmem:[#allocation11 + $0x1a8] sm:$0xff]
        %v2059 = vld [vmem:[#allocation11 + $0x1b0] sm:$0xff]
        %v2060 = vld [vmem:[#allocation11 + $0x1b8] sm:$0xff]
        %v2061 = vld [vmem:[#allocation11 + $0x1c0] sm:$0xff]
        %v2062 = vld [vmem:[#allocation11 + $0x1c8] sm:$0xff]
        %v2063 = vld [vmem:[#allocation11 + $0x1d0] sm:$0xff]
        %v2064 = vld [vmem:[#allocation11 + $0x1d8] sm:$0xff]
        %v2065 = vld [vmem:[#allocation11 + $0x1e0] sm:$0xff]
        %v2066 = vld [vmem:[#allocation11 + $0x1e8] sm:$0xff]
        %v2067 = vld [vmem:[#allocation11 + $0x1f0] sm:$0xff]
        %v2068 = vld [vmem:[#allocation11 + $0x1f8] sm:$0xff]
        %v2069 = vld [vmem:[#allocation11 + $0x200] sm:$0xff]
        %v2070 = vld [vmem:[#allocation11 + $0x208] sm:$0xff]
        %v2071 = vld [vmem:[#allocation11 + $0x210] sm:$0xff]
        %v2072 = vld [vmem:[#allocation11 + $0x218] sm:$0xff]
        %v2073 = vld [vmem:[#allocation11 + $0x220] sm:$0xff]
        %v2074 = vld [vmem:[#allocation11 + $0x228] sm:$0xff]
        %v2075 = vld [vmem:[#allocation11 + $0x230] sm:$0xff]
        %v2076 = vld [vmem:[#allocation11 + $0x238] sm:$0xff]
        %v2077 = vld [vmem:[#allocation11 + $0x240] sm:$0xff]
        %v2078 = vld [vmem:[#allocation11 + $0x248] sm:$0xff]
        %v2079 = vld [vmem:[#allocation11 + $0x250] sm:$0xff]
        %v2080 = vld [vmem:[#allocation11 + $0x258] sm:$0xff]
        %v2081 = vld [vmem:[#allocation11 + $0x260] sm:$0xff]
        %v2082 = vld [vmem:[#allocation11 + $0x268] sm:$0xff]
        %v2083 = vld [vmem:[#allocation11 + $0x270] sm:$0xff]
        %v2084 = vld [vmem:[#allocation11 + $0x278] sm:$0xff]
        %v2085 = vld [vmem:[#allocation11 + $0x280] sm:$0xff]
        %v2086 = vld [vmem:[#allocation11 + $0x288] sm:$0xff]
        %v2087 = vld [vmem:[#allocation11 + $0x290] sm:$0xff]
        %v2088 = vld [vmem:[#allocation11 + $0x298] sm:$0xff]
        %v2089 = vld [vmem:[#allocation11 + $0x2a0] sm:$0xff]
        %v2090 = vld [vmem:[#allocation11 + $0x2a8] sm:$0xff]
        %v2091 = vld [vmem:[#allocation11 + $0x2b0] sm:$0xff]
        %v2092 = vld [vmem:[#allocation11 + $0x2b8] sm:$0xff]
        %v2093 = vld [vmem:[#allocation11 + $0x2c0] sm:$0xff]
        %v2094 = vld [vmem:[#allocation11 + $0x2c8] sm:$0xff]
        %v2095 = vld [vmem:[#allocation11 + $0x2d0] sm:$0xff]
        %v2096 = vld [vmem:[#allocation11 + $0x2d8] sm:$0xff]
        %v2097 = vld [vmem:[#allocation11 + $0x2e0] sm:$0xff]
        %v2098 = vld [vmem:[#allocation11 + $0x2e8] sm:$0xff]
        %v2099 = vld [vmem:[#allocation11 + $0x2f0] sm:$0xff]
        %v2100 = vld [vmem:[#allocation11 + $0x2f8] sm:$0xff]
        %v2101 = vpack.c.bf16 %v1862, %v1861
        %v2102 = vpack.c.bf16 %v2022, %v2021
        %v2103 = vpack.c.bf16 %v1864, %v1863
        %v2104 = vpack.c.bf16 %v2024, %v2023
        %v2105 = vpack.c.bf16 %v1866, %v1865
        %v2106 = vpack.c.bf16 %v2026, %v2025
        %v2107 = vpack.c.bf16 %v1868, %v1867
        %v2108 = vpack.c.bf16 %v2028, %v2027
        %v2109 = vpack.c.bf16 %v1870, %v1869
        %v2110 = vpack.c.bf16 %v2030, %v2029
        %v2111 = vpack.c.bf16 %v1872, %v1871
        %v2112 = vpack.c.bf16 %v2032, %v2031
        %v2113 = vpack.c.bf16 %v1874, %v1873
        %v2114 = vpack.c.bf16 %v2034, %v2033
        %v2115 = vpack.c.bf16 %v1876, %v1875
        %v2116 = vpack.c.bf16 %v2036, %v2035
        %v2117 = vpack.c.bf16 %v1878, %v1877
        %v2118 = vpack.c.bf16 %v2038, %v2037
        %v2119 = vpack.c.bf16 %v1880, %v1879
        %v2120 = vpack.c.bf16 %v2040, %v2039
        %v2121 = vpack.c.bf16 %v1882, %v1881
        %v2122 = vpack.c.bf16 %v2042, %v2041
        %v2123 = vpack.c.bf16 %v1884, %v1883
        %v2124 = vpack.c.bf16 %v2044, %v2043
        %v2125 = vpack.c.bf16 %v1886, %v1885
        %v2126 = vpack.c.bf16 %v2046, %v2045
        %v2127 = vpack.c.bf16 %v1888, %v1887
        %v2128 = vpack.c.bf16 %v2048, %v2047
        %v2129 = vpack.c.bf16 %v1890, %v1889
        %v2130 = vpack.c.bf16 %v2050, %v2049
        %v2131 = vpack.c.bf16 %v1892, %v1891
        %v2132 = vpack.c.bf16 %v2052, %v2051
        %v2133 = vpack.c.bf16 %v2054, %v2053
        %v2134 = vpack.c.bf16 %v2056, %v2055
        %v2135 = vpack.c.bf16 %v2058, %v2057
        %v2136 = vpack.c.bf16 %v2060, %v2059
        %v2137 = vpack.c.bf16 %v2062, %v2061
        %v2138 = vpack.c.bf16 %v2064, %v2063
        %v2139 = vpack.c.bf16 %v2066, %v2065
        %v2140 = vpack.c.bf16 %v2068, %v2067
        %v2141 = vpack.c.bf16 %v2070, %v2069
        %v2142 = vpack.c.bf16 %v2072, %v2071
        %v2143 = vpack.c.bf16 %v2074, %v2073
        %v2144 = vpack.c.bf16 %v2076, %v2075
        %v2145 = vpack.c.bf16 %v2078, %v2077
        %v2146 = vpack.c.bf16 %v2080, %v2079
        %v2147 = vpack.c.bf16 %v2082, %v2081
        %v2148 = vpack.c.bf16 %v2084, %v2083
        %v2149 = vpack.c.bf16 %v2086, %v2085
        %v2150 = vpack.c.bf16 %v2088, %v2087
        %v2151 = vpack.c.bf16 %v2090, %v2089
        %v2152 = vpack.c.bf16 %v2092, %v2091
        %v2153 = vpack.c.bf16 %v2094, %v2093
        %v2154 = vpack.c.bf16 %v2096, %v2095
        %v2155 = vpack.c.bf16 %v2098, %v2097
        %v2156 = vpack.c.bf16 %v2100, %v2099
        %2157 = vmatprep.subr.bf16.mxu0 0
        %2158 = vmatpush1.bf16.msra.mxu0 %v2133
        %2159 = vmatprep.subr.bf16.mxu0 0
        %2160 = vmatpush1.bf16.msra.mxu0 %v2134
        %2161 = vmatprep.subr.bf16.mxu0 0
        %2162 = vmatpush1.bf16.msra.mxu0 %v2135
        %2163 = vmatprep.subr.bf16.mxu0 0
        %2164 = vmatpush1.bf16.msra.mxu0 %v2136
        %2165 = vmatprep.subr.bf16.mxu0 0
        %2166 = vmatpush1.bf16.msra.mxu0 %v2137
        %2167 = vmatprep.subr.bf16.mxu0 0
        %2168 = vmatpush1.bf16.msra.mxu0 %v2138
        %2169 = vmatprep.subr.bf16.mxu0 0
        %2170 = vmatpush1.bf16.msra.mxu0 %v2139
        %2171 = vmatprep.subr.bf16.mxu0 0
        %2172 = vmatpush1.bf16.msra.mxu0 %v2140
        %2173 = vmatprep.subr.bf16.mxu0 0
        %2174 = vmatpush1.bf16.msra.mxu0 %v2141
        %2175 = vmatprep.subr.bf16.mxu0 0
        %2176 = vmatpush1.bf16.msra.mxu0 %v2142
        %2177 = vmatprep.subr.bf16.mxu0 0
        %2178 = vmatpush1.bf16.msra.mxu0 %v2143
        %2179 = vmatprep.subr.bf16.mxu0 0
        %2180 = vmatpush1.bf16.msra.mxu0 %v2144
        %2181 = vmatprep.subr.bf16.mxu0 0
        %2182 = vmatpush1.bf16.msra.mxu0 %v2145
        %2183 = vmatprep.subr.bf16.mxu0 0
        %2184 = vmatpush1.bf16.msra.mxu0 %v2146
        %2185 = vmatprep.subr.bf16.mxu0 0
        %2186 = vmatpush1.bf16.msra.mxu0 %v2147
        %2187 = vmatprep.subr.bf16.mxu0 0
        %2188 = vmatpush1.bf16.msra.mxu0 %v2148
        %2189 = vmatprep.mubr.bf16.mxu0 %v752
        %2190 = vmatmul.mubr.bf16.gmra.mrb[0].mxu0 %v2101
        %v2191 = vpop.f32.mrb[0].mxu0
        %v2192 = vadd.f32 0.0, %v2191
        %v2193 = vpop.f32.mrb[0].mxu0
        %v2194 = vpop.f32.mrb[0].mxu0
        %v2195 = vadd.f32 0.0, %v2194
        %v2196 = vpop.f32.mrb[0].mxu0
        %2197 = vmatprep.mubr.bf16.mxu0 %v753
        %2198 = vmatmul.mubr.bf16.gmra.mrb[0].mxu0 %v2103
        %v2199 = vpop.f32.mrb[0].mxu0
        %v2200 = vadd.f32 0.0, %v2199
        %v2201 = vpop.f32.mrb[0].mxu0
        %v2202 = vpop.f32.mrb[0].mxu0
        %v2203 = vadd.f32 0.0, %v2202
        %v2204 = vpop.f32.mrb[0].mxu0
        %2205 = vmatprep.mubr.bf16.mxu0 %v754
        %2206 = vmatmul.mubr.bf16.gmra.mrb[0].mxu0 %v2105
        %v2207 = vpop.f32.mrb[0].mxu0
        %v2208 = vadd.f32 0.0, %v2207
        %v2209 = vpop.f32.mrb[0].mxu0
        %v2210 = vpop.f32.mrb[0].mxu0
        %v2211 = vadd.f32 0.0, %v2210
        %v2212 = vpop.f32.mrb[0].mxu0
        %2213 = vmatprep.mubr.bf16.mxu0 %v755
        %2214 = vmatmul.mubr.bf16.gmra.mrb[0].mxu0 %v2107
        %v2215 = vpop.f32.mrb[0].mxu0
        %v2216 = vadd.f32 0.0, %v2215
        %v2217 = vpop.f32.mrb[0].mxu0
        %v2218 = vpop.f32.mrb[0].mxu0
        %v2219 = vadd.f32 0.0, %v2218
        %v2220 = vpop.f32.mrb[0].mxu0
        %2221 = vmatprep.mubr.bf16.mxu0 %v756
        %2222 = vmatmul.mubr.bf16.gmra.mrb[0].mxu0 %v2109
        %v2223 = vpop.f32.mrb[0].mxu0
        %v2224 = vadd.f32 0.0, %v2223
        %v2225 = vpop.f32.mrb[0].mxu0
        %v2226 = vpop.f32.mrb[0].mxu0
        %v2227 = vadd.f32 0.0, %v2226
        %v2228 = vpop.f32.mrb[0].mxu0
        %2229 = vmatprep.mubr.bf16.mxu0 %v757
        %2230 = vmatmul.mubr.bf16.gmra.mrb[0].mxu0 %v2111
        %v2231 = vpop.f32.mrb[0].mxu0
        %v2232 = vadd.f32 0.0, %v2231
        %v2233 = vpop.f32.mrb[0].mxu0
        %v2234 = vpop.f32.mrb[0].mxu0
        %v2235 = vadd.f32 0.0, %v2234
        %v2236 = vpop.f32.mrb[0].mxu0
        %2237 = vmatprep.mubr.bf16.mxu0 %v758
        %2238 = vmatmul.mubr.bf16.gmra.mrb[0].mxu0 %v2113
        %v2239 = vpop.f32.mrb[0].mxu0
        %v2240 = vadd.f32 0.0, %v2239
        %v2241 = vpop.f32.mrb[0].mxu0
        %v2242 = vpop.f32.mrb[0].mxu0
        %v2243 = vadd.f32 0.0, %v2242
        %v2244 = vpop.f32.mrb[0].mxu0
        %2245 = vmatprep.mubr.bf16.mxu0 %v759
        %2246 = vmatmul.mubr.bf16.gmra.mrb[0].mxu0 %v2115
        %v2247 = vpop.f32.mrb[0].mxu0
        %v2248 = vadd.f32 0.0, %v2247
        %v2249 = vpop.f32.mrb[0].mxu0
        %v2250 = vpop.f32.mrb[0].mxu0
        %v2251 = vadd.f32 0.0, %v2250
        %v2252 = vpop.f32.mrb[0].mxu0
        %2253 = vmatprep.mubr.bf16.mxu0 %v760
        %2254 = vmatmul.mubr.bf16.gmra.mrb[0].mxu0 %v2117
        %v2255 = vpop.f32.mrb[0].mxu0
        %v2256 = vadd.f32 0.0, %v2255
        %v2257 = vpop.f32.mrb[0].mxu0
        %v2258 = vpop.f32.mrb[0].mxu0
        %v2259 = vadd.f32 0.0, %v2258
        %v2260 = vpop.f32.mrb[0].mxu0
        %2261 = vmatprep.mubr.bf16.mxu0 %v761
        %2262 = vmatmul.mubr.bf16.gmra.mrb[0].mxu0 %v2119
        %v2263 = vpop.f32.mrb[0].mxu0
        %v2264 = vadd.f32 0.0, %v2263
        %v2265 = vpop.f32.mrb[0].mxu0
        %v2266 = vpop.f32.mrb[0].mxu0
        %v2267 = vadd.f32 0.0, %v2266
        %v2268 = vpop.f32.mrb[0].mxu0
        %2269 = vmatprep.mubr.bf16.mxu0 %v762
        %2270 = vmatmul.mubr.bf16.gmra.mrb[0].mxu0 %v2121
        %v2271 = vpop.f32.mrb[0].mxu0
        %v2272 = vadd.f32 0.0, %v2271
        %v2273 = vpop.f32.mrb[0].mxu0
        %v2274 = vpop.f32.mrb[0].mxu0
        %v2275 = vadd.f32 0.0, %v2274
        %v2276 = vpop.f32.mrb[0].mxu0
        %2277 = vmatprep.mubr.bf16.mxu0 %v763
        %2278 = vmatmul.mubr.bf16.gmra.mrb[0].mxu0 %v2123
        %v2279 = vpop.f32.mrb[0].mxu0
        %v2280 = vadd.f32 0.0, %v2279
        %v2281 = vpop.f32.mrb[0].mxu0
        %v2282 = vpop.f32.mrb[0].mxu0
        %v2283 = vadd.f32 0.0, %v2282
        %v2284 = vpop.f32.mrb[0].mxu0
        %2285 = vmatprep.mubr.bf16.mxu0 %v764
        %2286 = vmatmul.mubr.bf16.gmra.mrb[0].mxu0 %v2125
        %v2287 = vpop.f32.mrb[0].mxu0
        %v2288 = vadd.f32 0.0, %v2287
        %v2289 = vpop.f32.mrb[0].mxu0
        %v2290 = vpop.f32.mrb[0].mxu0
        %v2291 = vadd.f32 0.0, %v2290
        %v2292 = vpop.f32.mrb[0].mxu0
        %2293 = vmatprep.mubr.bf16.mxu0 %v765
        %2294 = vmatmul.mubr.bf16.gmra.mrb[0].mxu0 %v2127
        %v2295 = vpop.f32.mrb[0].mxu0
        %v2296 = vadd.f32 0.0, %v2295
        %v2297 = vpop.f32.mrb[0].mxu0
        %v2298 = vpop.f32.mrb[0].mxu0
        %v2299 = vadd.f32 0.0, %v2298
        %v2300 = vpop.f32.mrb[0].mxu0
        %2301 = vmatprep.mubr.bf16.mxu0 %v766
        %2302 = vmatmul.mubr.bf16.gmra.mrb[0].mxu0 %v2129
        %v2303 = vpop.f32.mrb[0].mxu0
        %v2304 = vadd.f32 0.0, %v2303
        %v2305 = vpop.f32.mrb[0].mxu0
        %v2306 = vpop.f32.mrb[0].mxu0
        %v2307 = vadd.f32 0.0, %v2306
        %v2308 = vpop.f32.mrb[0].mxu0
        %2309 = vmatprep.mubr.bf16.mxu0 %v767
        %2310 = vmatmul.mubr.bf16.gmra.mrb[0].mxu0 %v2131
        %v2311 = vpop.f32.mrb[0].mxu0
        %v2312 = vadd.f32 0.0, %v2311
        %v2313 = vpop.f32.mrb[0].mxu0
        %v2314 = vpop.f32.mrb[0].mxu0
        %v2315 = vadd.f32 0.0, %v2314
        %v2316 = vpop.f32.mrb[0].mxu0
        %2317 = vdwg.mxu0
        %2318 = vmatprep.subr.bf16.mxu0 0
        %2319 = vmatpush1.bf16.msra.mxu0 %v2149
        %2320 = vmatprep.subr.bf16.mxu0 0
        %2321 = vmatpush1.bf16.msra.mxu0 %v2150
        %2322 = vmatprep.subr.bf16.mxu0 0
        %2323 = vmatpush1.bf16.msra.mxu0 %v2151
        %2324 = vmatprep.subr.bf16.mxu0 0
        %2325 = vmatpush1.bf16.msra.mxu0 %v2152
        %2326 = vmatprep.subr.bf16.mxu0 0
        %2327 = vmatpush1.bf16.msra.mxu0 %v2153
        %2328 = vmatprep.subr.bf16.mxu0 0
        %2329 = vmatpush1.bf16.msra.mxu0 %v2154
        %2330 = vmatprep.subr.bf16.mxu0 0
        %2331 = vmatpush1.bf16.msra.mxu0 %v2155
        %2332 = vmatprep.subr.bf16.mxu0 0
        %2333 = vmatpush1.bf16.msra.mxu0 %v2156
        %2334 = vmatprep.subr.bf16.mxu0 0
        %2335 = vmatpush1.bf16.msra.mxu0 0
        %2336 = vmatprep.subr.bf16.mxu0 0
        %2337 = vmatpush1.bf16.msra.mxu0 0
        %2338 = vmatprep.subr.bf16.mxu0 0
        %2339 = vmatpush1.bf16.msra.mxu0 0
        %2340 = vmatprep.subr.bf16.mxu0 0
        %2341 = vmatpush1.bf16.msra.mxu0 0
        %2342 = vmatprep.subr.bf16.mxu0 0
        %2343 = vmatpush1.bf16.msra.mxu0 0
        %2344 = vmatprep.subr.bf16.mxu0 0
        %2345 = vmatpush1.bf16.msra.mxu0 0
        %2346 = vmatprep.subr.bf16.mxu0 0
        %2347 = vmatpush1.bf16.msra.mxu0 0
        %2348 = vmatprep.subr.bf16.mxu0 0
        %2349 = vmatpush1.bf16.msra.mxu0 0
        %2350 = vmatprep.mubr.bf16.mxu0 0
        %2351 = vmatmul.mubr.bf16.gmra.mrb[0].mxu0 %v2102
        %v2352 = vpop.f32.mrb[0].mxu0
        %v2353 = vadd.f32 %v2192, %v2352
        %v2354 = vpop.f32.mrb[0].mxu0
        %v2355 = vpop.f32.mrb[0].mxu0
        %v2356 = vadd.f32 %v2195, %v2355
        %v2357 = vpop.f32.mrb[0].mxu0
        %2358 = vmatprep.mubr.bf16.mxu0 0
        %2359 = vmatmul.mubr.bf16.gmra.mrb[0].mxu0 %v2104
        %v2360 = vpop.f32.mrb[0].mxu0
        %v2361 = vadd.f32 %v2200, %v2360
        %v2362 = vpop.f32.mrb[0].mxu0
        %v2363 = vpop.f32.mrb[0].mxu0
        %v2364 = vadd.f32 %v2203, %v2363
        %v2365 = vpop.f32.mrb[0].mxu0
        %2366 = vmatprep.mubr.bf16.mxu0 0
        %2367 = vmatmul.mubr.bf16.gmra.mrb[0].mxu0 %v2106
        %v2368 = vpop.f32.mrb[0].mxu0
        %v2369 = vadd.f32 %v2208, %v2368
        %v2370 = vpop.f32.mrb[0].mxu0
        %v2371 = vpop.f32.mrb[0].mxu0
        %v2372 = vadd.f32 %v2211, %v2371
        %v2373 = vpop.f32.mrb[0].mxu0
        %2374 = vmatprep.mubr.bf16.mxu0 0
        %2375 = vmatmul.mubr.bf16.gmra.mrb[0].mxu0 %v2108
        %v2376 = vpop.f32.mrb[0].mxu0
        %v2377 = vadd.f32 %v2216, %v2376
        %v2378 = vpop.f32.mrb[0].mxu0
        %v2379 = vpop.f32.mrb[0].mxu0
        %v2380 = vadd.f32 %v2219, %v2379
        %v2381 = vpop.f32.mrb[0].mxu0
        %2382 = vmatprep.mubr.bf16.mxu0 0
        %2383 = vmatmul.mubr.bf16.gmra.mrb[0].mxu0 %v2110
        %v2384 = vpop.f32.mrb[0].mxu0
        %v2385 = vadd.f32 %v2224, %v2384
        %v2386 = vpop.f32.mrb[0].mxu0
        %v2387 = vpop.f32.mrb[0].mxu0
        %v2388 = vadd.f32 %v2227, %v2387
        %v2389 = vpop.f32.mrb[0].mxu0
        %2390 = vmatprep.mubr.bf16.mxu0 0
        %2391 = vmatmul.mubr.bf16.gmra.mrb[0].mxu0 %v2112
        %v2392 = vpop.f32.mrb[0].mxu0
        %v2393 = vadd.f32 %v2232, %v2392
        %v2394 = vpop.f32.mrb[0].mxu0
        %v2395 = vpop.f32.mrb[0].mxu0
        %v2396 = vadd.f32 %v2235, %v2395
        %v2397 = vpop.f32.mrb[0].mxu0
        %2398 = vmatprep.mubr.bf16.mxu0 0
        %2399 = vmatmul.mubr.bf16.gmra.mrb[0].mxu0 %v2114
        %v2400 = vpop.f32.mrb[0].mxu0
        %v2401 = vadd.f32 %v2240, %v2400
        %v2402 = vpop.f32.mrb[0].mxu0
        %v2403 = vpop.f32.mrb[0].mxu0
        %v2404 = vadd.f32 %v2243, %v2403
        %v2405 = vpop.f32.mrb[0].mxu0
        %2406 = vmatprep.mubr.bf16.mxu0 0
        %2407 = vmatmul.mubr.bf16.gmra.mrb[0].mxu0 %v2116
        %v2408 = vpop.f32.mrb[0].mxu0
        %v2409 = vadd.f32 %v2248, %v2408
        %v2410 = vpop.f32.mrb[0].mxu0
        %v2411 = vpop.f32.mrb[0].mxu0
        %v2412 = vadd.f32 %v2251, %v2411
        %v2413 = vpop.f32.mrb[0].mxu0
        %2414 = vmatprep.mubr.bf16.mxu0 0
        %2415 = vmatmul.mubr.bf16.gmra.mrb[0].mxu0 %v2118
        %v2416 = vpop.f32.mrb[0].mxu0
        %v2417 = vadd.f32 %v2256, %v2416
        %v2418 = vpop.f32.mrb[0].mxu0
        %v2419 = vpop.f32.mrb[0].mxu0
        %v2420 = vadd.f32 %v2259, %v2419
        %v2421 = vpop.f32.mrb[0].mxu0
        %2422 = vmatprep.mubr.bf16.mxu0 0
        %2423 = vmatmul.mubr.bf16.gmra.mrb[0].mxu0 %v2120
        %v2424 = vpop.f32.mrb[0].mxu0
        %v2425 = vadd.f32 %v2264, %v2424
        %v2426 = vpop.f32.mrb[0].mxu0
        %v2427 = vpop.f32.mrb[0].mxu0
        %v2428 = vadd.f32 %v2267, %v2427
        %v2429 = vpop.f32.mrb[0].mxu0
        %2430 = vmatprep.mubr.bf16.mxu0 0
        %2431 = vmatmul.mubr.bf16.gmra.mrb[0].mxu0 %v2122
        %v2432 = vpop.f32.mrb[0].mxu0
        %v2433 = vadd.f32 %v2272, %v2432
        %v2434 = vpop.f32.mrb[0].mxu0
        %v2435 = vpop.f32.mrb[0].mxu0
        %v2436 = vadd.f32 %v2275, %v2435
        %v2437 = vpop.f32.mrb[0].mxu0
        %2438 = vmatprep.mubr.bf16.mxu0 0
        %2439 = vmatmul.mubr.bf16.gmra.mrb[0].mxu0 %v2124
        %v2440 = vpop.f32.mrb[0].mxu0
        %v2441 = vadd.f32 %v2280, %v2440
        %v2442 = vpop.f32.mrb[0].mxu0
        %v2443 = vpop.f32.mrb[0].mxu0
        %v2444 = vadd.f32 %v2283, %v2443
        %v2445 = vpop.f32.mrb[0].mxu0
        %2446 = vmatprep.mubr.bf16.mxu0 0
        %2447 = vmatmul.mubr.bf16.gmra.mrb[0].mxu0 %v2126
        %v2448 = vpop.f32.mrb[0].mxu0
        %v2449 = vadd.f32 %v2288, %v2448
        %v2450 = vpop.f32.mrb[0].mxu0
        %v2451 = vpop.f32.mrb[0].mxu0
        %v2452 = vadd.f32 %v2291, %v2451
        %v2453 = vpop.f32.mrb[0].mxu0
        %2454 = vmatprep.mubr.bf16.mxu0 0
        %2455 = vmatmul.mubr.bf16.gmra.mrb[0].mxu0 %v2128
        %v2456 = vpop.f32.mrb[0].mxu0
        %v2457 = vadd.f32 %v2296, %v2456
        %v2458 = vpop.f32.mrb[0].mxu0
        %v2459 = vpop.f32.mrb[0].mxu0
        %v2460 = vadd.f32 %v2299, %v2459
        %v2461 = vpop.f32.mrb[0].mxu0
        %2462 = vmatprep.mubr.bf16.mxu0 0
        %2463 = vmatmul.mubr.bf16.gmra.mrb[0].mxu0 %v2130
        %v2464 = vpop.f32.mrb[0].mxu0
        %v2465 = vadd.f32 %v2304, %v2464
        %v2466 = vpop.f32.mrb[0].mxu0
        %v2467 = vpop.f32.mrb[0].mxu0
        %v2468 = vadd.f32 %v2307, %v2467
        %v2469 = vpop.f32.mrb[0].mxu0
        %2470 = vmatprep.mubr.bf16.mxu0 0
        %2471 = vmatmul.mubr.bf16.gmra.mrb[0].mxu0 %v2132
        %v2472 = vpop.f32.mrb[0].mxu0
        %v2473 = vadd.f32 %v2312, %v2472
        %v2474 = vpop.f32.mrb[0].mxu0
        %v2475 = vpop.f32.mrb[0].mxu0
        %v2476 = vadd.f32 %v2315, %v2475
        %v2477 = vpop.f32.mrb[0].mxu0
        %2478 = vdwg.mxu0
        %2479 = vmatprep.subr.bf16.mxu0 0
        %2480 = vmatpush1.bf16.msra.mxu0 %v1709
        %2481 = vmatprep.subr.bf16.mxu0 0
        %2482 = vmatpush1.bf16.msra.mxu0 %v1710
        %2483 = vmatprep.subr.bf16.mxu0 0
        %2484 = vmatpush1.bf16.msra.mxu0 %v1711
        %2485 = vmatprep.subr.bf16.mxu0 0
        %2486 = vmatpush1.bf16.msra.mxu0 %v1712
        %2487 = vmatprep.subr.bf16.mxu0 0
        %2488 = vmatpush1.bf16.msra.mxu0 %v1713
        %2489 = vmatprep.subr.bf16.mxu0 0
        %2490 = vmatpush1.bf16.msra.mxu0 %v1714
        %2491 = vmatprep.subr.bf16.mxu0 0
        %2492 = vmatpush1.bf16.msra.mxu0 %v1715
        %2493 = vmatprep.subr.bf16.mxu0 0
        %2494 = vmatpush1.bf16.msra.mxu0 %v1716
        %2495 = vmatprep.subr.bf16.mxu0 0
        %2496 = vmatpush1.bf16.msra.mxu0 %v1717
        %2497 = vmatprep.subr.bf16.mxu0 0
        %2498 = vmatpush1.bf16.msra.mxu0 %v1718
        %2499 = vmatprep.subr.bf16.mxu0 0
        %2500 = vmatpush1.bf16.msra.mxu0 %v1719
        %2501 = vmatprep.subr.bf16.mxu0 0
        %2502 = vmatpush1.bf16.msra.mxu0 %v1720
        %2503 = vmatprep.subr.bf16.mxu0 0
        %2504 = vmatpush1.bf16.msra.mxu0 %v1721
        %2505 = vmatprep.subr.bf16.mxu0 0
        %2506 = vmatpush1.bf16.msra.mxu0 %v1722
        %2507 = vmatprep.subr.bf16.mxu0 0
        %2508 = vmatpush1.bf16.msra.mxu0 %v1723
        %2509 = vmatprep.subr.bf16.mxu0 0
        %2510 = vmatpush1.bf16.msra.mxu0 %v1724
        %2511 = vmatprep.mubr.bf16.mxu0 %v1662
        %2512 = vmatmul.mubr.bf16.gmra.mrb[0].mxu0 %v1661
        %v2513 = vpop.f32.mrb[0].mxu0
        %v2514 = vadd.f32 %v2353, %v2513
        %v2515 = vpop.f32.mrb[0].mxu0
        %v2516 = vpop.f32.mrb[0].mxu0
        %v2517 = vadd.f32 %v2356, %v2516
        %v2518 = vpop.f32.mrb[0].mxu0
        %2519 = vmatprep.mubr.bf16.mxu0 %v1665
        %2520 = vmatmul.mubr.bf16.gmra.mrb[0].mxu0 %v1664
        %v2521 = vpop.f32.mrb[0].mxu0
        %v2522 = vadd.f32 %v2361, %v2521
        %v2523 = vpop.f32.mrb[0].mxu0
        %v2524 = vpop.f32.mrb[0].mxu0
        %v2525 = vadd.f32 %v2364, %v2524
        %v2526 = vpop.f32.mrb[0].mxu0
        %2527 = vmatprep.mubr.bf16.mxu0 %v1668
        %2528 = vmatmul.mubr.bf16.gmra.mrb[0].mxu0 %v1667
        %v2529 = vpop.f32.mrb[0].mxu0
        %v2530 = vadd.f32 %v2369, %v2529
        %v2531 = vpop.f32.mrb[0].mxu0
        %v2532 = vpop.f32.mrb[0].mxu0
        %v2533 = vadd.f32 %v2372, %v2532
        %v2534 = vpop.f32.mrb[0].mxu0
        %2535 = vmatprep.mubr.bf16.mxu0 %v1671
        %2536 = vmatmul.mubr.bf16.gmra.mrb[0].mxu0 %v1670
        %v2537 = vpop.f32.mrb[0].mxu0
        %v2538 = vadd.f32 %v2377, %v2537
        %v2539 = vpop.f32.mrb[0].mxu0
        %v2540 = vpop.f32.mrb[0].mxu0
        %v2541 = vadd.f32 %v2380, %v2540
        %v2542 = vpop.f32.mrb[0].mxu0
        %2543 = vmatprep.mubr.bf16.mxu0 %v1674
        %2544 = vmatmul.mubr.bf16.gmra.mrb[0].mxu0 %v1673
        %v2545 = vpop.f32.mrb[0].mxu0
        %v2546 = vadd.f32 %v2385, %v2545
        %v2547 = vpop.f32.mrb[0].mxu0
        %v2548 = vpop.f32.mrb[0].mxu0
        %v2549 = vadd.f32 %v2388, %v2548
        %v2550 = vpop.f32.mrb[0].mxu0
        %2551 = vmatprep.mubr.bf16.mxu0 %v1677
        %2552 = vmatmul.mubr.bf16.gmra.mrb[0].mxu0 %v1676
        %v2553 = vpop.f32.mrb[0].mxu0
        %v2554 = vadd.f32 %v2393, %v2553
        %v2555 = vpop.f32.mrb[0].mxu0
        %v2556 = vpop.f32.mrb[0].mxu0
        %v2557 = vadd.f32 %v2396, %v2556
        %v2558 = vpop.f32.mrb[0].mxu0
        %2559 = vmatprep.mubr.bf16.mxu0 %v1680
        %2560 = vmatmul.mubr.bf16.gmra.mrb[0].mxu0 %v1679
        %v2561 = vpop.f32.mrb[0].mxu0
        %v2562 = vadd.f32 %v2401, %v2561
        %v2563 = vpop.f32.mrb[0].mxu0
        %v2564 = vpop.f32.mrb[0].mxu0
        %v2565 = vadd.f32 %v2404, %v2564
        %v2566 = vpop.f32.mrb[0].mxu0
        %2567 = vmatprep.mubr.bf16.mxu0 %v1683
        %2568 = vmatmul.mubr.bf16.gmra.mrb[0].mxu0 %v1682
        %v2569 = vpop.f32.mrb[0].mxu0
        %v2570 = vadd.f32 %v2409, %v2569
        %v2571 = vpop.f32.mrb[0].mxu0
        %v2572 = vpop.f32.mrb[0].mxu0
        %v2573 = vadd.f32 %v2412, %v2572
        %v2574 = vpop.f32.mrb[0].mxu0
        %2575 = vmatprep.mubr.bf16.mxu0 %v1686
        %2576 = vmatmul.mubr.bf16.gmra.mrb[0].mxu0 %v1685
        %v2577 = vpop.f32.mrb[0].mxu0
        %v2578 = vadd.f32 %v2417, %v2577
        %v2579 = vpop.f32.mrb[0].mxu0
        %v2580 = vpop.f32.mrb[0].mxu0
        %v2581 = vadd.f32 %v2420, %v2580
        %v2582 = vpop.f32.mrb[0].mxu0
        %2583 = vmatprep.mubr.bf16.mxu0 %v1689
        %2584 = vmatmul.mubr.bf16.gmra.mrb[0].mxu0 %v1688
        %v2585 = vpop.f32.mrb[0].mxu0
        %v2586 = vadd.f32 %v2425, %v2585
        %v2587 = vpop.f32.mrb[0].mxu0
        %v2588 = vpop.f32.mrb[0].mxu0
        %v2589 = vadd.f32 %v2428, %v2588
        %v2590 = vpop.f32.mrb[0].mxu0
        %2591 = vmatprep.mubr.bf16.mxu0 %v1692
        %2592 = vmatmul.mubr.bf16.gmra.mrb[0].mxu0 %v1691
        %v2593 = vpop.f32.mrb[0].mxu0
        %v2594 = vadd.f32 %v2433, %v2593
        %v2595 = vpop.f32.mrb[0].mxu0
        %v2596 = vpop.f32.mrb[0].mxu0
        %v2597 = vadd.f32 %v2436, %v2596
        %v2598 = vpop.f32.mrb[0].mxu0
        %2599 = vmatprep.mubr.bf16.mxu0 %v1695
        %2600 = vmatmul.mubr.bf16.gmra.mrb[0].mxu0 %v1694
        %v2601 = vpop.f32.mrb[0].mxu0
        %v2602 = vadd.f32 %v2441, %v2601
        %v2603 = vpop.f32.mrb[0].mxu0
        %v2604 = vpop.f32.mrb[0].mxu0
        %v2605 = vadd.f32 %v2444, %v2604
        %v2606 = vpop.f32.mrb[0].mxu0
        %2607 = vmatprep.mubr.bf16.mxu0 %v1698
        %2608 = vmatmul.mubr.bf16.gmra.mrb[0].mxu0 %v1697
        %v2609 = vpop.f32.mrb[0].mxu0
        %v2610 = vadd.f32 %v2449, %v2609
        %v2611 = vpop.f32.mrb[0].mxu0
        %v2612 = vpop.f32.mrb[0].mxu0
        %v2613 = vadd.f32 %v2452, %v2612
        %v2614 = vpop.f32.mrb[0].mxu0
        %2615 = vmatprep.mubr.bf16.mxu0 %v1701
        %2616 = vmatmul.mubr.bf16.gmra.mrb[0].mxu0 %v1700
        %v2617 = vpop.f32.mrb[0].mxu0
        %v2618 = vadd.f32 %v2457, %v2617
        %v2619 = vpop.f32.mrb[0].mxu0
        %v2620 = vpop.f32.mrb[0].mxu0
        %v2621 = vadd.f32 %v2460, %v2620
        %v2622 = vpop.f32.mrb[0].mxu0
        %2623 = vmatprep.mubr.bf16.mxu0 %v1704
        %2624 = vmatmul.mubr.bf16.gmra.mrb[0].mxu0 %v1703
        %v2625 = vpop.f32.mrb[0].mxu0
        %v2626 = vadd.f32 %v2465, %v2625
        %v2627 = vpop.f32.mrb[0].mxu0
        %v2628 = vpop.f32.mrb[0].mxu0
        %v2629 = vadd.f32 %v2468, %v2628
        %v2630 = vpop.f32.mrb[0].mxu0
        %2631 = vmatprep.mubr.bf16.mxu0 %v1707
        %2632 = vmatmul.mubr.bf16.gmra.mrb[0].mxu0 %v1706
        %v2633 = vpop.f32.mrb[0].mxu0
        %v2634 = vadd.f32 %v2473, %v2633
        %v2635 = vpop.f32.mrb[0].mxu0
        %v2636 = vpop.f32.mrb[0].mxu0
        %v2637 = vadd.f32 %v2476, %v2636
        %v2638 = vpop.f32.mrb[0].mxu0
        %2639 = vdwg.mxu0
        %2640 = vmatprep.subr.bf16.mxu0 0
        %2641 = vmatpush1.bf16.msra.mxu0 %v1725
        %2642 = vmatprep.subr.bf16.mxu0 0
        %2643 = vmatpush1.bf16.msra.mxu0 %v1726
        %2644 = vmatprep.subr.bf16.mxu0 0
        %2645 = vmatpush1.bf16.msra.mxu0 %v1727
        %2646 = vmatprep.subr.bf16.mxu0 0
        %2647 = vmatpush1.bf16.msra.mxu0 %v1728
        %2648 = vmatprep.subr.bf16.mxu0 0
        %2649 = vmatpush1.bf16.msra.mxu0 %v1729
        %2650 = vmatprep.subr.bf16.mxu0 0
        %2651 = vmatpush1.bf16.msra.mxu0 %v1730
        %2652 = vmatprep.subr.bf16.mxu0 0
        %2653 = vmatpush1.bf16.msra.mxu0 %v1731
        %2654 = vmatprep.subr.bf16.mxu0 0
        %2655 = vmatpush1.bf16.msra.mxu0 %v1732
        %2656 = vmatprep.subr.bf16.mxu0 0
        %2657 = vmatpush1.bf16.msra.mxu0 0
        %2658 = vmatprep.subr.bf16.mxu0 0
        %2659 = vmatpush1.bf16.msra.mxu0 0
        %2660 = vmatprep.subr.bf16.mxu0 0
        %2661 = vmatpush1.bf16.msra.mxu0 0
        %2662 = vmatprep.subr.bf16.mxu0 0
        %2663 = vmatpush1.bf16.msra.mxu0 0
        %2664 = vmatprep.subr.bf16.mxu0 0
        %2665 = vmatpush1.bf16.msra.mxu0 0
        %2666 = vmatprep.subr.bf16.mxu0 0
        %2667 = vmatpush1.bf16.msra.mxu0 0
        %2668 = vmatprep.subr.bf16.mxu0 0
        %2669 = vmatpush1.bf16.msra.mxu0 0
        %2670 = vmatprep.subr.bf16.mxu0 0
        %2671 = vmatpush1.bf16.msra.mxu0 0
        %2672 = vmatprep.mubr.bf16.mxu0 0
        %2673 = vmatmul.mubr.bf16.gmra.mrb[0].mxu0 %v1663
        %v2674 = vpop.f32.mrb[0].mxu0
        %v2675 = vadd.f32 %v2514, %v2674
        %v2676 = vpop.f32.mrb[0].mxu0
        %v2677 = vpop.f32.mrb[0].mxu0
        %v2678 = vadd.f32 %v2517, %v2677
        %v2679 = vpop.f32.mrb[0].mxu0
        %2680 = vmatprep.mubr.bf16.mxu0 0
        %2681 = vmatmul.mubr.bf16.gmra.mrb[0].mxu0 %v1666
        %v2682 = vpop.f32.mrb[0].mxu0
        %v2683 = vadd.f32 %v2522, %v2682
        %v2684 = vpop.f32.mrb[0].mxu0
        %v2685 = vpop.f32.mrb[0].mxu0
        %v2686 = vadd.f32 %v2525, %v2685
        %v2687 = vpop.f32.mrb[0].mxu0
        %2688 = vmatprep.mubr.bf16.mxu0 0
        %2689 = vmatmul.mubr.bf16.gmra.mrb[0].mxu0 %v1669
        %v2690 = vpop.f32.mrb[0].mxu0
        %v2691 = vadd.f32 %v2530, %v2690
        %v2692 = vpop.f32.mrb[0].mxu0
        %v2693 = vpop.f32.mrb[0].mxu0
        %v2694 = vadd.f32 %v2533, %v2693
        %v2695 = vpop.f32.mrb[0].mxu0
        %2696 = vmatprep.mubr.bf16.mxu0 0
        %2697 = vmatmul.mubr.bf16.gmra.mrb[0].mxu0 %v1672
        %v2698 = vpop.f32.mrb[0].mxu0
        %v2699 = vadd.f32 %v2538, %v2698
        %v2700 = vpop.f32.mrb[0].mxu0
        %v2701 = vpop.f32.mrb[0].mxu0
        %v2702 = vadd.f32 %v2541, %v2701
        %v2703 = vpop.f32.mrb[0].mxu0
        %2704 = vmatprep.mubr.bf16.mxu0 0
        %2705 = vmatmul.mubr.bf16.gmra.mrb[0].mxu0 %v1675
        %v2706 = vpop.f32.mrb[0].mxu0
        %v2707 = vadd.f32 %v2546, %v2706
        %v2708 = vpop.f32.mrb[0].mxu0
        %v2709 = vpop.f32.mrb[0].mxu0
        %v2710 = vadd.f32 %v2549, %v2709
        %v2711 = vpop.f32.mrb[0].mxu0
        %2712 = vmatprep.mubr.bf16.mxu0 0
        %2713 = vmatmul.mubr.bf16.gmra.mrb[0].mxu0 %v1678
        %v2714 = vpop.f32.mrb[0].mxu0
        %v2715 = vadd.f32 %v2554, %v2714
        %v2716 = vpop.f32.mrb[0].mxu0
        %v2717 = vpop.f32.mrb[0].mxu0
        %v2718 = vadd.f32 %v2557, %v2717
        %v2719 = vpop.f32.mrb[0].mxu0
        %2720 = vmatprep.mubr.bf16.mxu0 0
        %2721 = vmatmul.mubr.bf16.gmra.mrb[0].mxu0 %v1681
        %v2722 = vpop.f32.mrb[0].mxu0
        %v2723 = vadd.f32 %v2562, %v2722
        %v2724 = vpop.f32.mrb[0].mxu0
        %v2725 = vpop.f32.mrb[0].mxu0
        %v2726 = vadd.f32 %v2565, %v2725
        %v2727 = vpop.f32.mrb[0].mxu0
        %2728 = vmatprep.mubr.bf16.mxu0 0
        %2729 = vmatmul.mubr.bf16.gmra.mrb[0].mxu0 %v1684
        %v2730 = vpop.f32.mrb[0].mxu0
        %v2731 = vadd.f32 %v2570, %v2730
        %v2732 = vpop.f32.mrb[0].mxu0
        %v2733 = vpop.f32.mrb[0].mxu0
        %v2734 = vadd.f32 %v2573, %v2733
        %v2735 = vpop.f32.mrb[0].mxu0
        %2736 = vmatprep.mubr.bf16.mxu0 0
        %2737 = vmatmul.mubr.bf16.gmra.mrb[0].mxu0 %v1687
        %v2738 = vpop.f32.mrb[0].mxu0
        %v2739 = vadd.f32 %v2578, %v2738
        %v2740 = vpop.f32.mrb[0].mxu0
        %v2741 = vpop.f32.mrb[0].mxu0
        %v2742 = vadd.f32 %v2581, %v2741
        %v2743 = vpop.f32.mrb[0].mxu0
        %2744 = vmatprep.mubr.bf16.mxu0 0
        %2745 = vmatmul.mubr.bf16.gmra.mrb[0].mxu0 %v1690
        %v2746 = vpop.f32.mrb[0].mxu0
        %v2747 = vadd.f32 %v2586, %v2746
        %v2748 = vpop.f32.mrb[0].mxu0
        %v2749 = vpop.f32.mrb[0].mxu0
        %v2750 = vadd.f32 %v2589, %v2749
        %v2751 = vpop.f32.mrb[0].mxu0
        %2752 = vmatprep.mubr.bf16.mxu0 0
        %2753 = vmatmul.mubr.bf16.gmra.mrb[0].mxu0 %v1693
        %v2754 = vpop.f32.mrb[0].mxu0
        %v2755 = vadd.f32 %v2594, %v2754
        %v2756 = vpop.f32.mrb[0].mxu0
        %v2757 = vpop.f32.mrb[0].mxu0
        %v2758 = vadd.f32 %v2597, %v2757
        %v2759 = vpop.f32.mrb[0].mxu0
        %2760 = vmatprep.mubr.bf16.mxu0 0
        %2761 = vmatmul.mubr.bf16.gmra.mrb[0].mxu0 %v1696
        %v2762 = vpop.f32.mrb[0].mxu0
        %v2763 = vadd.f32 %v2602, %v2762
        %v2764 = vpop.f32.mrb[0].mxu0
        %v2765 = vpop.f32.mrb[0].mxu0
        %v2766 = vadd.f32 %v2605, %v2765
        %v2767 = vpop.f32.mrb[0].mxu0
        %2768 = vmatprep.mubr.bf16.mxu0 0
        %2769 = vmatmul.mubr.bf16.gmra.mrb[0].mxu0 %v1699
        %v2770 = vpop.f32.mrb[0].mxu0
        %v2771 = vadd.f32 %v2610, %v2770
        %v2772 = vpop.f32.mrb[0].mxu0
        %v2773 = vpop.f32.mrb[0].mxu0
        %v2774 = vadd.f32 %v2613, %v2773
        %v2775 = vpop.f32.mrb[0].mxu0
        %2776 = vmatprep.mubr.bf16.mxu0 0
        %2777 = vmatmul.mubr.bf16.gmra.mrb[0].mxu0 %v1702
        %v2778 = vpop.f32.mrb[0].mxu0
        %v2779 = vadd.f32 %v2618, %v2778
        %v2780 = vpop.f32.mrb[0].mxu0
        %v2781 = vpop.f32.mrb[0].mxu0
        %v2782 = vadd.f32 %v2621, %v2781
        %v2783 = vpop.f32.mrb[0].mxu0
        %2784 = vmatprep.mubr.bf16.mxu0 0
        %2785 = vmatmul.mubr.bf16.gmra.mrb[0].mxu0 %v1705
        %v2786 = vpop.f32.mrb[0].mxu0
        %v2787 = vadd.f32 %v2626, %v2786
        %v2788 = vpop.f32.mrb[0].mxu0
        %v2789 = vpop.f32.mrb[0].mxu0
        %v2790 = vadd.f32 %v2629, %v2789
        %v2791 = vpop.f32.mrb[0].mxu0
        %2792 = vmatprep.mubr.bf16.mxu0 0
        %2793 = vmatmul.mubr.bf16.gmra.mrb[0].mxu0 %v1708
        %v2794 = vpop.f32.mrb[0].mxu0
        %v2795 = vadd.f32 %v2634, %v2794
        %v2796 = vpop.f32.mrb[0].mxu0
        %v2797 = vpop.f32.mrb[0].mxu0
        %v2798 = vadd.f32 %v2637, %v2797
        %v2799 = vpop.f32.mrb[0].mxu0
        %2800 = vdwg.mxu0
        %2801 = vset.pattern.permute.xlu0 6
        %2802 = vperm.xlu0 %2801, %v1004
        %v2803 = vpop.permute.xlu0 %2802
        %2805 = vset.pattern.permute.xlu0 6
        %2806 = vperm.xlu0 %2805, %v1005
        %v2807 = vpop.permute.xlu0 %2806
        %2809 = vset.pattern.permute.xlu0 6
        %2810 = vperm.xlu0 %2809, %v1006
        %v2811 = vpop.permute.xlu0 %2810
        %2813 = vset.pattern.permute.xlu0 6
        %2814 = vperm.xlu0 %2813, %v1007
        %v2815 = vpop.permute.xlu0 %2814
        %2817 = vset.pattern.permute.xlu0 6
        %2818 = vperm.xlu0 %2817, %v1008
        %v2819 = vpop.permute.xlu0 %2818
        %2821 = vset.pattern.permute.xlu0 6
        %2822 = vperm.xlu0 %2821, %v1009
        %v2823 = vpop.permute.xlu0 %2822
        %2825 = vset.pattern.permute.xlu0 6
        %2826 = vperm.xlu0 %2825, %v1010
        %v2827 = vpop.permute.xlu0 %2826
        %2829 = vset.pattern.permute.xlu0 6
        %2830 = vperm.xlu0 %2829, %v1011
        %v2831 = vpop.permute.xlu0 %2830
        %2833 = vset.pattern.permute.xlu0 6
        %2834 = vperm.xlu0 %2833, %v1012
        %v2835 = vpop.permute.xlu0 %2834
        %2837 = vset.pattern.permute.xlu0 6
        %2838 = vperm.xlu0 %2837, %v1013
        %v2839 = vpop.permute.xlu0 %2838
        %2841 = vset.pattern.permute.xlu0 6
        %2842 = vperm.xlu0 %2841, %v1014
        %v2843 = vpop.permute.xlu0 %2842
        %2845 = vset.pattern.permute.xlu0 6
        %2846 = vperm.xlu0 %2845, %v1015
        %v2847 = vpop.permute.xlu0 %2846
        %2849 = vset.pattern.permute.xlu0 6
        %2850 = vperm.xlu0 %2849, %v1016
        %v2851 = vpop.permute.xlu0 %2850
        %2853 = vset.pattern.permute.xlu0 6
        %2854 = vperm.xlu0 %2853, %v1017
        %v2855 = vpop.permute.xlu0 %2854
        %2857 = vset.pattern.permute.xlu0 6
        %2858 = vperm.xlu0 %2857, %v1018
        %v2859 = vpop.permute.xlu0 %2858
        %2861 = vset.pattern.permute.xlu0 6
        %2862 = vperm.xlu0 %2861, %v1019
        %v2863 = vpop.permute.xlu0 %2862
        %2865 = vset.pattern.permute.xlu0 6
        %2866 = vperm.xlu0 %2865, %v1020
        %v2867 = vpop.permute.xlu0 %2866
        %2869 = vset.pattern.permute.xlu0 6
        %2870 = vperm.xlu0 %2869, %v1021
        %v2871 = vpop.permute.xlu0 %2870
        %2873 = vset.pattern.permute.xlu0 6
        %2874 = vperm.xlu0 %2873, %v1022
        %v2875 = vpop.permute.xlu0 %2874
        %2877 = vset.pattern.permute.xlu0 6
        %2878 = vperm.xlu0 %2877, %v1023
        %v2879 = vpop.permute.xlu0 %2878
        %2881 = vset.pattern.permute.xlu0 6
        %2882 = vperm.xlu0 %2881, %v1024
        %v2883 = vpop.permute.xlu0 %2882
        %2885 = vset.pattern.permute.xlu0 6
        %2886 = vperm.xlu0 %2885, %v1025
        %v2887 = vpop.permute.xlu0 %2886
        %2889 = vset.pattern.permute.xlu0 6
        %2890 = vperm.xlu0 %2889, %v1026
        %v2891 = vpop.permute.xlu0 %2890
        %2893 = vset.pattern.permute.xlu0 6
        %2894 = vperm.xlu0 %2893, %v1027
        %v2895 = vpop.permute.xlu0 %2894
        %2897 = vset.pattern.permute.xlu0 6
        %2898 = vperm.xlu0 %2897, %v1028
        %v2899 = vpop.permute.xlu0 %2898
        %2901 = vset.pattern.permute.xlu0 6
        %2902 = vperm.xlu0 %2901, %v1029
        %v2903 = vpop.permute.xlu0 %2902
        %2905 = vset.pattern.permute.xlu0 6
        %2906 = vperm.xlu0 %2905, %v1030
        %v2907 = vpop.permute.xlu0 %2906
        %2909 = vset.pattern.permute.xlu0 6
        %2910 = vperm.xlu0 %2909, %v1031
        %v2911 = vpop.permute.xlu0 %2910
        %2913 = vset.pattern.permute.xlu0 6
        %2914 = vperm.xlu0 %2913, %v1032
        %v2915 = vpop.permute.xlu0 %2914
        %2917 = vset.pattern.permute.xlu0 6
        %2918 = vperm.xlu0 %2917, %v1033
        %v2919 = vpop.permute.xlu0 %2918
        %2921 = vset.pattern.permute.xlu0 6
        %2922 = vperm.xlu0 %2921, %v1034
        %v2923 = vpop.permute.xlu0 %2922
        %2925 = vset.pattern.permute.xlu0 6
        %2926 = vperm.xlu0 %2925, %v1035
        %v2927 = vpop.permute.xlu0 %2926
        %v2929 = vmul.f32 %v997, %v2803
        %v2930 = vmul.f32 %v996, %v2807
        %v2931 = vmul.f32 %v995, %v2811
        %v2932 = vmul.f32 %v994, %v2815
        %v2933 = vmul.f32 %v993, %v2819
        %v2934 = vmul.f32 %v992, %v2823
        %v2935 = vmul.f32 %v991, %v2827
        %v2936 = vmul.f32 %v990, %v2831
        %v2937 = vmul.f32 %v989, %v2835
        %v2938 = vmul.f32 %v988, %v2839
        %v2939 = vmul.f32 %v987, %v2843
        %v2940 = vmul.f32 %v986, %v2847
        %v2941 = vmul.f32 %v985, %v2851
        %v2942 = vmul.f32 %v984, %v2855
        %v2943 = vmul.f32 %v983, %v2859
        %v2944 = vmul.f32 %v982, %v2863
        %v2945 = vmul.f32 %v981, %v2867
        %v2946 = vmul.f32 %v980, %v2871
        %v2947 = vmul.f32 %v979, %v2875
        %v2948 = vmul.f32 %v978, %v2879
        %v2949 = vmul.f32 %v977, %v2883
        %v2950 = vmul.f32 %v976, %v2887
        %v2951 = vmul.f32 %v975, %v2891
        %v2952 = vmul.f32 %v974, %v2895
        %v2953 = vmul.f32 %v973, %v2899
        %v2954 = vmul.f32 %v972, %v2903
        %v2955 = vmul.f32 %v1003, %v2907
        %v2956 = vmul.f32 %v1002, %v2911
        %v2957 = vmul.f32 %v1001, %v2915
        %v2958 = vmul.f32 %v1000, %v2919
        %v2959 = vmul.f32 %v999, %v2923
        %v2960 = vmul.f32 %v998, %v2927
        %2961 = vset.pattern.permute.xlu0 7
        %2962 = vperm.xlu0 %2961, %v1004
        %v2963 = vpop.permute.xlu0 %2962
        %2965 = vset.pattern.permute.xlu0 7
        %2966 = vperm.xlu0 %2965, %v1005
        %v2967 = vpop.permute.xlu0 %2966
        %2969 = vset.pattern.permute.xlu0 7
        %2970 = vperm.xlu0 %2969, %v1006
        %v2971 = vpop.permute.xlu0 %2970
        %2973 = vset.pattern.permute.xlu0 7
        %2974 = vperm.xlu0 %2973, %v1007
        %v2975 = vpop.permute.xlu0 %2974
        %2977 = vset.pattern.permute.xlu0 7
        %2978 = vperm.xlu0 %2977, %v1008
        %v2979 = vpop.permute.xlu0 %2978
        %2981 = vset.pattern.permute.xlu0 7
        %2982 = vperm.xlu0 %2981, %v1009
        %v2983 = vpop.permute.xlu0 %2982
        %2985 = vset.pattern.permute.xlu0 7
        %2986 = vperm.xlu0 %2985, %v1010
        %v2987 = vpop.permute.xlu0 %2986
        %2989 = vset.pattern.permute.xlu0 7
        %2990 = vperm.xlu0 %2989, %v1011
        %v2991 = vpop.permute.xlu0 %2990
        %2993 = vset.pattern.permute.xlu0 7
        %2994 = vperm.xlu0 %2993, %v1012
        %v2995 = vpop.permute.xlu0 %2994
        %2997 = vset.pattern.permute.xlu0 7
        %2998 = vperm.xlu0 %2997, %v1013
        %v2999 = vpop.permute.xlu0 %2998
        %3001 = vset.pattern.permute.xlu0 7
        %3002 = vperm.xlu0 %3001, %v1014
        %v3003 = vpop.permute.xlu0 %3002
        %3005 = vset.pattern.permute.xlu0 7
        %3006 = vperm.xlu0 %3005, %v1015
        %v3007 = vpop.permute.xlu0 %3006
        %3009 = vset.pattern.permute.xlu0 7
        %3010 = vperm.xlu0 %3009, %v1016
        %v3011 = vpop.permute.xlu0 %3010
        %3013 = vset.pattern.permute.xlu0 7
        %3014 = vperm.xlu0 %3013, %v1017
        %v3015 = vpop.permute.xlu0 %3014
        %3017 = vset.pattern.permute.xlu0 7
        %3018 = vperm.xlu0 %3017, %v1018
        %v3019 = vpop.permute.xlu0 %3018
        %3021 = vset.pattern.permute.xlu0 7
        %3022 = vperm.xlu0 %3021, %v1019
        %v3023 = vpop.permute.xlu0 %3022
        %3025 = vset.pattern.permute.xlu0 7
        %3026 = vperm.xlu0 %3025, %v1020
        %v3027 = vpop.permute.xlu0 %3026
        %3029 = vset.pattern.permute.xlu0 7
        %3030 = vperm.xlu0 %3029, %v1021
        %v3031 = vpop.permute.xlu0 %3030
        %3033 = vset.pattern.permute.xlu0 7
        %3034 = vperm.xlu0 %3033, %v1022
        %v3035 = vpop.permute.xlu0 %3034
        %3037 = vset.pattern.permute.xlu0 7
        %3038 = vperm.xlu0 %3037, %v1023
        %v3039 = vpop.permute.xlu0 %3038
        %3041 = vset.pattern.permute.xlu0 7
        %3042 = vperm.xlu0 %3041, %v1024
        %v3043 = vpop.permute.xlu0 %3042
        %3045 = vset.pattern.permute.xlu0 7
        %3046 = vperm.xlu0 %3045, %v1025
        %v3047 = vpop.permute.xlu0 %3046
        %3049 = vset.pattern.permute.xlu0 7
        %3050 = vperm.xlu0 %3049, %v1026
        %v3051 = vpop.permute.xlu0 %3050
        %3053 = vset.pattern.permute.xlu0 7
        %3054 = vperm.xlu0 %3053, %v1027
        %v3055 = vpop.permute.xlu0 %3054
        %3057 = vset.pattern.permute.xlu0 7
        %3058 = vperm.xlu0 %3057, %v1028
        %v3059 = vpop.permute.xlu0 %3058
        %3061 = vset.pattern.permute.xlu0 7
        %3062 = vperm.xlu0 %3061, %v1029
        %v3063 = vpop.permute.xlu0 %3062
        %3065 = vset.pattern.permute.xlu0 7
        %3066 = vperm.xlu0 %3065, %v1030
        %v3067 = vpop.permute.xlu0 %3066
        %3069 = vset.pattern.permute.xlu0 7
        %3070 = vperm.xlu0 %3069, %v1031
        %v3071 = vpop.permute.xlu0 %3070
        %3073 = vset.pattern.permute.xlu0 7
        %3074 = vperm.xlu0 %3073, %v1032
        %v3075 = vpop.permute.xlu0 %3074
        %3077 = vset.pattern.permute.xlu0 7
        %3078 = vperm.xlu0 %3077, %v1033
        %v3079 = vpop.permute.xlu0 %3078
        %3081 = vset.pattern.permute.xlu0 7
        %3082 = vperm.xlu0 %3081, %v1034
        %v3083 = vpop.permute.xlu0 %3082
        %3085 = vset.pattern.permute.xlu0 7
        %3086 = vperm.xlu0 %3085, %v1035
        %v3087 = vpop.permute.xlu0 %3086
        %v3089 = vmul.f32 %v634, %v2963
        %v3090 = vmul.f32 %v637, %v2967
        %v3091 = vmul.f32 %v642, %v2971
        %v3092 = vmul.f32 %v645, %v2975
        %v3093 = vmul.f32 %v650, %v2979
        %v3094 = vmul.f32 %v653, %v2983
        %v3095 = vmul.f32 %v658, %v2987
        %v3096 = vmul.f32 %v661, %v2991
        %v3097 = vmul.f32 %v666, %v2995
        %v3098 = vmul.f32 %v669, %v2999
        %v3099 = vmul.f32 %v674, %v3003
        %v3100 = vmul.f32 %v677, %v3007
        %v3101 = vmul.f32 %v682, %v3011
        %v3102 = vmul.f32 %v685, %v3015
        %v3103 = vmul.f32 %v690, %v3019
        %v3104 = vmul.f32 %v693, %v3023
        %v3105 = vmul.f32 %v698, %v3027
        %v3106 = vmul.f32 %v701, %v3031
        %v3107 = vmul.f32 %v706, %v3035
        %v3108 = vmul.f32 %v709, %v3039
        %v3109 = vmul.f32 %v714, %v3043
        %v3110 = vmul.f32 %v717, %v3047
        %v3111 = vmul.f32 %v722, %v3051
        %v3112 = vmul.f32 %v725, %v3055
        %v3113 = vmul.f32 %v730, %v3059
        %v3114 = vmul.f32 %v733, %v3063
        %v3115 = vmul.f32 %v610, %v3067
        %v3116 = vmul.f32 %v613, %v3071
        %v3117 = vmul.f32 %v618, %v3075
        %v3118 = vmul.f32 %v621, %v3079
        %v3119 = vmul.f32 %v626, %v3083
        %v3120 = vmul.f32 %v629, %v3087
        %3121 = vset.pattern.permute.xlu0 8
        %3122 = vperm.xlu0 %3121, %v1004
        %v3123 = vpop.permute.xlu0 %3122
        %3125 = vset.pattern.permute.xlu0 8
        %3126 = vperm.xlu0 %3125, %v1005
        %v3127 = vpop.permute.xlu0 %3126
        %3129 = vset.pattern.permute.xlu0 8
        %3130 = vperm.xlu0 %3129, %v1006
        %v3131 = vpop.permute.xlu0 %3130
        %3133 = vset.pattern.permute.xlu0 8
        %3134 = vperm.xlu0 %3133, %v1007
        %v3135 = vpop.permute.xlu0 %3134
        %3137 = vset.pattern.permute.xlu0 8
        %3138 = vperm.xlu0 %3137, %v1008
        %v3139 = vpop.permute.xlu0 %3138
        %3141 = vset.pattern.permute.xlu0 8
        %3142 = vperm.xlu0 %3141, %v1009
        %v3143 = vpop.permute.xlu0 %3142
        %3145 = vset.pattern.permute.xlu0 8
        %3146 = vperm.xlu0 %3145, %v1010
        %v3147 = vpop.permute.xlu0 %3146
        %3149 = vset.pattern.permute.xlu0 8
        %3150 = vperm.xlu0 %3149, %v1011
        %v3151 = vpop.permute.xlu0 %3150
        %3153 = vset.pattern.permute.xlu0 8
        %3154 = vperm.xlu0 %3153, %v1012
        %v3155 = vpop.permute.xlu0 %3154
        %3157 = vset.pattern.permute.xlu0 8
        %3158 = vperm.xlu0 %3157, %v1013
        %v3159 = vpop.permute.xlu0 %3158
        %3161 = vset.pattern.permute.xlu0 8
        %3162 = vperm.xlu0 %3161, %v1014
        %v3163 = vpop.permute.xlu0 %3162
        %3165 = vset.pattern.permute.xlu0 8
        %3166 = vperm.xlu0 %3165, %v1015
        %v3167 = vpop.permute.xlu0 %3166
        %3169 = vset.pattern.permute.xlu0 8
        %3170 = vperm.xlu0 %3169, %v1016
        %v3171 = vpop.permute.xlu0 %3170
        %3173 = vset.pattern.permute.xlu0 8
        %3174 = vperm.xlu0 %3173, %v1017
        %v3175 = vpop.permute.xlu0 %3174
        %3177 = vset.pattern.permute.xlu0 8
        %3178 = vperm.xlu0 %3177, %v1018
        %v3179 = vpop.permute.xlu0 %3178
        %3181 = vset.pattern.permute.xlu0 8
        %3182 = vperm.xlu0 %3181, %v1019
        %v3183 = vpop.permute.xlu0 %3182
        %3185 = vset.pattern.permute.xlu0 8
        %3186 = vperm.xlu0 %3185, %v1020
        %v3187 = vpop.permute.xlu0 %3186
        %3189 = vset.pattern.permute.xlu0 8
        %3190 = vperm.xlu0 %3189, %v1021
        %v3191 = vpop.permute.xlu0 %3190
        %3193 = vset.pattern.permute.xlu0 8
        %3194 = vperm.xlu0 %3193, %v1022
        %v3195 = vpop.permute.xlu0 %3194
        %3197 = vset.pattern.permute.xlu0 8
        %3198 = vperm.xlu0 %3197, %v1023
        %v3199 = vpop.permute.xlu0 %3198
        %3201 = vset.pattern.permute.xlu0 8
        %3202 = vperm.xlu0 %3201, %v1024
        %v3203 = vpop.permute.xlu0 %3202
        %3205 = vset.pattern.permute.xlu0 8
        %3206 = vperm.xlu0 %3205, %v1025
        %v3207 = vpop.permute.xlu0 %3206
        %3209 = vset.pattern.permute.xlu0 8
        %3210 = vperm.xlu0 %3209, %v1026
        %v3211 = vpop.permute.xlu0 %3210
        %3213 = vset.pattern.permute.xlu0 8
        %3214 = vperm.xlu0 %3213, %v1027
        %v3215 = vpop.permute.xlu0 %3214
        %3217 = vset.pattern.permute.xlu0 8
        %3218 = vperm.xlu0 %3217, %v1028
        %v3219 = vpop.permute.xlu0 %3218
        %3221 = vset.pattern.permute.xlu0 8
        %3222 = vperm.xlu0 %3221, %v1029
        %v3223 = vpop.permute.xlu0 %3222
        %3225 = vset.pattern.permute.xlu0 8
        %3226 = vperm.xlu0 %3225, %v1030
        %v3227 = vpop.permute.xlu0 %3226
        %3229 = vset.pattern.permute.xlu0 8
        %3230 = vperm.xlu0 %3229, %v1031
        %v3231 = vpop.permute.xlu0 %3230
        %3233 = vset.pattern.permute.xlu0 8
        %3234 = vperm.xlu0 %3233, %v1032
        %v3235 = vpop.permute.xlu0 %3234
        %3237 = vset.pattern.permute.xlu0 8
        %3238 = vperm.xlu0 %3237, %v1033
        %v3239 = vpop.permute.xlu0 %3238
        %3241 = vset.pattern.permute.xlu0 8
        %3242 = vperm.xlu0 %3241, %v1034
        %v3243 = vpop.permute.xlu0 %3242
        %3245 = vset.pattern.permute.xlu0 8
        %3246 = vperm.xlu0 %3245, %v1035
        %v3247 = vpop.permute.xlu0 %3246
        %v3249 = vmul.f32 %v1445, %v3123
        %v3250 = vmul.f32 %v1444, %v3127
        %v3251 = vmul.f32 %v1443, %v3131
        %v3252 = vmul.f32 %v1442, %v3135
        %v3253 = vmul.f32 %v1441, %v3139
        %v3254 = vmul.f32 %v1440, %v3143
        %v3255 = vmul.f32 %v1439, %v3147
        %v3256 = vmul.f32 %v1438, %v3151
        %v3257 = vmul.f32 %v1437, %v3155
        %v3258 = vmul.f32 %v1436, %v3159
        %v3259 = vmul.f32 %v1435, %v3163
        %v3260 = vmul.f32 %v1434, %v3167
        %v3261 = vmul.f32 %v1433, %v3171
        %v3262 = vmul.f32 %v1432, %v3175
        %v3263 = vmul.f32 %v1431, %v3179
        %v3264 = vmul.f32 %v1430, %v3183
        %v3265 = vmul.f32 %v1429, %v3187
        %v3266 = vmul.f32 %v1428, %v3191
        %v3267 = vmul.f32 %v1427, %v3195
        %v3268 = vmul.f32 %v1426, %v3199
        %v3269 = vmul.f32 %v1425, %v3203
        %v3270 = vmul.f32 %v1424, %v3207
        %v3271 = vmul.f32 %v1423, %v3211
        %v3272 = vmul.f32 %v1422, %v3215
        %v3273 = vmul.f32 %v1421, %v3219
        %v3274 = vmul.f32 %v1452, %v3223
        %v3275 = vmul.f32 %v1451, %v3227
        %v3276 = vmul.f32 %v1450, %v3231
        %v3277 = vmul.f32 %v1449, %v3235
        %v3278 = vmul.f32 %v1448, %v3239
        %v3279 = vmul.f32 %v1447, %v3243
        %v3280 = vmul.f32 %v1446, %v3247
        %v3281 = vld [vmem:[#allocation11 + $0x300] sm:$0xff]
        %v3282 = vld [vmem:[#allocation11 + $0x308] sm:$0xff]
        %v3283 = vld [vmem:[#allocation11 + $0x310] sm:$0xff]
        %v3284 = vld [vmem:[#allocation11 + $0x318] sm:$0xff]
        %v3285 = vld [vmem:[#allocation11 + $0x320] sm:$0xff]
        %v3286 = vld [vmem:[#allocation11 + $0x328] sm:$0xff]
        %v3287 = vld [vmem:[#allocation11 + $0x330] sm:$0xff]
        %v3288 = vld [vmem:[#allocation11 + $0x338] sm:$0xff]
        %v3289 = vld [vmem:[#allocation11 + $0x340] sm:$0xff]
        %v3290 = vld [vmem:[#allocation11 + $0x348] sm:$0xff]
        %v3291 = vld [vmem:[#allocation11 + $0x350] sm:$0xff]
        %v3292 = vld [vmem:[#allocation11 + $0x358] sm:$0xff]
        %v3293 = vld [vmem:[#allocation11 + $0x360] sm:$0xff]
        %v3294 = vld [vmem:[#allocation11 + $0x368] sm:$0xff]
        %v3295 = vld [vmem:[#allocation11 + $0x370] sm:$0xff]
        %v3296 = vld [vmem:[#allocation11 + $0x378] sm:$0xff]
        %v3297 = vld [vmem:[#allocation11 + $0x380] sm:$0xff]
        %v3298 = vld [vmem:[#allocation11 + $0x388] sm:$0xff]
        %v3299 = vld [vmem:[#allocation11 + $0x390] sm:$0xff]
        %v3300 = vld [vmem:[#allocation11 + $0x398] sm:$0xff]
        %v3301 = vld [vmem:[#allocation11 + $0x3a0] sm:$0xff]
        %v3302 = vld [vmem:[#allocation11 + $0x3a8] sm:$0xff]
        %v3303 = vld [vmem:[#allocation11 + $0x3b0] sm:$0xff]
        %v3304 = vld [vmem:[#allocation11 + $0x3b8] sm:$0xff]
        %v3305 = vld [vmem:[#allocation11 + $0x3c0] sm:$0xff]
        %v3306 = vld [vmem:[#allocation11 + $0x3c8] sm:$0xff]
        %v3307 = vld [vmem:[#allocation11 + $0x3d0] sm:$0xff]
        %v3308 = vld [vmem:[#allocation11 + $0x3d8] sm:$0xff]
        %v3309 = vld [vmem:[#allocation11 + $0x3e0] sm:$0xff]
        %v3310 = vld [vmem:[#allocation11 + $0x3e8] sm:$0xff]
        %v3311 = vld [vmem:[#allocation11 + $0x3f0] sm:$0xff]
        %v3312 = vld [vmem:[#allocation11 + $0x3f8] sm:$0xff]
        %v3313 = vld [vmem:[#allocation11 + $0x400] sm:$0xff]
        %v3314 = vld [vmem:[#allocation11 + $0x408] sm:$0xff]
        %v3315 = vld [vmem:[#allocation11 + $0x410] sm:$0xff]
        %v3316 = vld [vmem:[#allocation11 + $0x418] sm:$0xff]
        %v3317 = vld [vmem:[#allocation11 + $0x420] sm:$0xff]
        %v3318 = vld [vmem:[#allocation11 + $0x428] sm:$0xff]
        %v3319 = vld [vmem:[#allocation11 + $0x430] sm:$0xff]
        %v3320 = vld [vmem:[#allocation11 + $0x438] sm:$0xff]
        %v3321 = vld [vmem:[#allocation11 + $0x440] sm:$0xff]
        %v3322 = vld [vmem:[#allocation11 + $0x448] sm:$0xff]
        %v3323 = vld [vmem:[#allocation11 + $0x450] sm:$0xff]
        %v3324 = vld [vmem:[#allocation11 + $0x458] sm:$0xff]
        %v3325 = vld [vmem:[#allocation11 + $0x460] sm:$0xff]
        %v3326 = vld [vmem:[#allocation11 + $0x468] sm:$0xff]
        %v3327 = vld [vmem:[#allocation11 + $0x470] sm:$0xff]
        %v3328 = vld [vmem:[#allocation11 + $0x478] sm:$0xff]
        %v3329 = vpack.c.bf16 %v2930, %v2929
        %v3330 = vpack.c.bf16 %v3090, %v3089
        %v3331 = vpack.c.bf16 %v3250, %v3249
        %v3332 = vpack.c.bf16 %v2932, %v2931
        %v3333 = vpack.c.bf16 %v3092, %v3091
        %v3334 = vpack.c.bf16 %v3252, %v3251
        %v3335 = vpack.c.bf16 %v2934, %v2933
        %v3336 = vpack.c.bf16 %v3094, %v3093
        %v3337 = vpack.c.bf16 %v3254, %v3253
        %v3338 = vpack.c.bf16 %v2936, %v2935
        %v3339 = vpack.c.bf16 %v3096, %v3095
        %v3340 = vpack.c.bf16 %v3256, %v3255
        %v3341 = vpack.c.bf16 %v2938, %v2937
        %v3342 = vpack.c.bf16 %v3098, %v3097
        %v3343 = vpack.c.bf16 %v3258, %v3257
        %v3344 = vpack.c.bf16 %v2940, %v2939
        %v3345 = vpack.c.bf16 %v3100, %v3099
        %v3346 = vpack.c.bf16 %v3260, %v3259
        %v3347 = vpack.c.bf16 %v2942, %v2941
        %v3348 = vpack.c.bf16 %v3102, %v3101
        %v3349 = vpack.c.bf16 %v3262, %v3261
        %v3350 = vpack.c.bf16 %v2944, %v2943
        %v3351 = vpack.c.bf16 %v3104, %v3103
        %v3352 = vpack.c.bf16 %v3264, %v3263
        %v3353 = vpack.c.bf16 %v2946, %v2945
        %v3354 = vpack.c.bf16 %v3106, %v3105
        %v3355 = vpack.c.bf16 %v3266, %v3265
        %v3356 = vpack.c.bf16 %v2948, %v2947
        %v3357 = vpack.c.bf16 %v3108, %v3107
        %v3358 = vpack.c.bf16 %v3268, %v3267
        %v3359 = vpack.c.bf16 %v2950, %v2949
        %v3360 = vpack.c.bf16 %v3110, %v3109
        %v3361 = vpack.c.bf16 %v3270, %v3269
        %v3362 = vpack.c.bf16 %v2952, %v2951
        %v3363 = vpack.c.bf16 %v3112, %v3111
        %v3364 = vpack.c.bf16 %v3272, %v3271
        %v3365 = vpack.c.bf16 %v2954, %v2953
        %v3366 = vpack.c.bf16 %v3114, %v3113
        %v3367 = vpack.c.bf16 %v3274, %v3273
        %v3368 = vpack.c.bf16 %v2956, %v2955
        %v3369 = vpack.c.bf16 %v3116, %v3115
        %v3370 = vpack.c.bf16 %v3276, %v3275
        %v3371 = vpack.c.bf16 %v2958, %v2957
        %v3372 = vpack.c.bf16 %v3118, %v3117
        %v3373 = vpack.c.bf16 %v3278, %v3277
        %v3374 = vpack.c.bf16 %v2960, %v2959
        %v3375 = vpack.c.bf16 %v3120, %v3119
        %v3376 = vpack.c.bf16 %v3280, %v3279
        %v3377 = vpack.c.bf16 %v3282, %v3281
        %v3378 = vpack.c.bf16 %v3284, %v3283
        %v3379 = vpack.c.bf16 %v3286, %v3285
        %v3380 = vpack.c.bf16 %v3288, %v3287
        %v3381 = vpack.c.bf16 %v3290, %v3289
        %v3382 = vpack.c.bf16 %v3292, %v3291
        %v3383 = vpack.c.bf16 %v3294, %v3293
        %v3384 = vpack.c.bf16 %v3296, %v3295
        %v3385 = vpack.c.bf16 %v3298, %v3297
        %v3386 = vpack.c.bf16 %v3300, %v3299
        %v3387 = vpack.c.bf16 %v3302, %v3301
        %v3388 = vpack.c.bf16 %v3304, %v3303
        %v3389 = vpack.c.bf16 %v3306, %v3305
        %v3390 = vpack.c.bf16 %v3308, %v3307
        %v3391 = vpack.c.bf16 %v3310, %v3309
        %v3392 = vpack.c.bf16 %v3312, %v3311
        %v3393 = vpack.c.bf16 %v3314, %v3313
        %v3394 = vpack.c.bf16 %v3316, %v3315
        %v3395 = vpack.c.bf16 %v3318, %v3317
        %v3396 = vpack.c.bf16 %v3320, %v3319
        %v3397 = vpack.c.bf16 %v3322, %v3321
        %v3398 = vpack.c.bf16 %v3324, %v3323
        %v3399 = vpack.c.bf16 %v3326, %v3325
        %v3400 = vpack.c.bf16 %v3328, %v3327
        %3401 = vmatprep.subr.bf16.mxu0 0
        %3402 = vmatpush1.bf16.msra.mxu0 %v3377
        %3403 = vmatprep.subr.bf16.mxu0 0
        %3404 = vmatpush1.bf16.msra.mxu0 %v3378
        %3405 = vmatprep.subr.bf16.mxu0 0
        %3406 = vmatpush1.bf16.msra.mxu0 %v3379
        %3407 = vmatprep.subr.bf16.mxu0 0
        %3408 = vmatpush1.bf16.msra.mxu0 %v3380
        %3409 = vmatprep.subr.bf16.mxu0 0
        %3410 = vmatpush1.bf16.msra.mxu0 %v3381
        %3411 = vmatprep.subr.bf16.mxu0 0
        %3412 = vmatpush1.bf16.msra.mxu0 %v3382
        %3413 = vmatprep.subr.bf16.mxu0 0
        %3414 = vmatpush1.bf16.msra.mxu0 %v3383
        %3415 = vmatprep.subr.bf16.mxu0 0
        %3416 = vmatpush1.bf16.msra.mxu0 %v3384
        %3417 = vmatprep.subr.bf16.mxu0 0
        %3418 = vmatpush1.bf16.msra.mxu0 %v3385
        %3419 = vmatprep.subr.bf16.mxu0 0
        %3420 = vmatpush1.bf16.msra.mxu0 %v3386
        %3421 = vmatprep.subr.bf16.mxu0 0
        %3422 = vmatpush1.bf16.msra.mxu0 %v3387
        %3423 = vmatprep.subr.bf16.mxu0 0
        %3424 = vmatpush1.bf16.msra.mxu0 %v3388
        %3425 = vmatprep.subr.bf16.mxu0 0
        %3426 = vmatpush1.bf16.msra.mxu0 %v3389
        %3427 = vmatprep.subr.bf16.mxu0 0
        %3428 = vmatpush1.bf16.msra.mxu0 %v3390
        %3429 = vmatprep.subr.bf16.mxu0 0
        %3430 = vmatpush1.bf16.msra.mxu0 %v3391
        %3431 = vmatprep.subr.bf16.mxu0 0
        %3432 = vmatpush1.bf16.msra.mxu0 %v3392
        %3433 = vmatprep.mubr.bf16.mxu0 %v3330
        %3434 = vmatmul.mubr.bf16.gmra.mrb[0].mxu0 %v3329
        %v3435 = vpop.f32.mrb[0].mxu0
        %v3436 = vadd.f32 0.0, %v3435
        %v3437 = vpop.f32.mrb[0].mxu0
        %v3438 = vpop.f32.mrb[0].mxu0
        %v3439 = vadd.f32 0.0, %v3438
        %v3440 = vpop.f32.mrb[0].mxu0
        %3441 = vmatprep.mubr.bf16.mxu0 %v3333
        %3442 = vmatmul.mubr.bf16.gmra.mrb[0].mxu0 %v3332
        %v3443 = vpop.f32.mrb[0].mxu0
        %v3444 = vadd.f32 0.0, %v3443
        %v3445 = vpop.f32.mrb[0].mxu0
        %v3446 = vpop.f32.mrb[0].mxu0
        %v3447 = vadd.f32 0.0, %v3446
        %v3448 = vpop.f32.mrb[0].mxu0
        %3449 = vmatprep.mubr.bf16.mxu0 %v3336
        %3450 = vmatmul.mubr.bf16.gmra.mrb[0].mxu0 %v3335
        %v3451 = vpop.f32.mrb[0].mxu0
        %v3452 = vadd.f32 0.0, %v3451
        %v3453 = vpop.f32.mrb[0].mxu0
        %v3454 = vpop.f32.mrb[0].mxu0
        %v3455 = vadd.f32 0.0, %v3454
        %v3456 = vpop.f32.mrb[0].mxu0
        %3457 = vmatprep.mubr.bf16.mxu0 %v3339
        %3458 = vmatmul.mubr.bf16.gmra.mrb[0].mxu0 %v3338
        %v3459 = vpop.f32.mrb[0].mxu0
        %v3460 = vadd.f32 0.0, %v3459
        %v3461 = vpop.f32.mrb[0].mxu0
        %v3462 = vpop.f32.mrb[0].mxu0
        %v3463 = vadd.f32 0.0, %v3462
        %v3464 = vpop.f32.mrb[0].mxu0
        %3465 = vmatprep.mubr.bf16.mxu0 %v3342
        %3466 = vmatmul.mubr.bf16.gmra.mrb[0].mxu0 %v3341
        %v3467 = vpop.f32.mrb[0].mxu0
        %v3468 = vadd.f32 0.0, %v3467
        %v3469 = vpop.f32.mrb[0].mxu0
        %v3470 = vpop.f32.mrb[0].mxu0
        %v3471 = vadd.f32 0.0, %v3470
        %v3472 = vpop.f32.mrb[0].mxu0
        %3473 = vmatprep.mubr.bf16.mxu0 %v3345
        %3474 = vmatmul.mubr.bf16.gmra.mrb[0].mxu0 %v3344
        %v3475 = vpop.f32.mrb[0].mxu0
        %v3476 = vadd.f32 0.0, %v3475
        %v3477 = vpop.f32.mrb[0].mxu0
        %v3478 = vpop.f32.mrb[0].mxu0
        %v3479 = vadd.f32 0.0, %v3478
        %v3480 = vpop.f32.mrb[0].mxu0
        %3481 = vmatprep.mubr.bf16.mxu0 %v3348
        %3482 = vmatmul.mubr.bf16.gmra.mrb[0].mxu0 %v3347
        %v3483 = vpop.f32.mrb[0].mxu0
        %v3484 = vadd.f32 0.0, %v3483
        %v3485 = vpop.f32.mrb[0].mxu0
        %v3486 = vpop.f32.mrb[0].mxu0
        %v3487 = vadd.f32 0.0, %v3486
        %v3488 = vpop.f32.mrb[0].mxu0
        %3489 = vmatprep.mubr.bf16.mxu0 %v3351
        %3490 = vmatmul.mubr.bf16.gmra.mrb[0].mxu0 %v3350
        %v3491 = vpop.f32.mrb[0].mxu0
        %v3492 = vadd.f32 0.0, %v3491
        %v3493 = vpop.f32.mrb[0].mxu0
        %v3494 = vpop.f32.mrb[0].mxu0
        %v3495 = vadd.f32 0.0, %v3494
        %v3496 = vpop.f32.mrb[0].mxu0
        %3497 = vmatprep.mubr.bf16.mxu0 %v3354
        %3498 = vmatmul.mubr.bf16.gmra.mrb[0].mxu0 %v3353
        %v3499 = vpop.f32.mrb[0].mxu0
        %v3500 = vadd.f32 0.0, %v3499
        %v3501 = vpop.f32.mrb[0].mxu0
        %v3502 = vpop.f32.mrb[0].mxu0
        %v3503 = vadd.f32 0.0, %v3502
        %v3504 = vpop.f32.mrb[0].mxu0
        %3505 = vmatprep.mubr.bf16.mxu0 %v3357
        %3506 = vmatmul.mubr.bf16.gmra.mrb[0].mxu0 %v3356
        %v3507 = vpop.f32.mrb[0].mxu0
        %v3508 = vadd.f32 0.0, %v3507
        %v3509 = vpop.f32.mrb[0].mxu0
        %v3510 = vpop.f32.mrb[0].mxu0
        %v3511 = vadd.f32 0.0, %v3510
        %v3512 = vpop.f32.mrb[0].mxu0
        %3513 = vmatprep.mubr.bf16.mxu0 %v3360
        %3514 = vmatmul.mubr.bf16.gmra.mrb[0].mxu0 %v3359
        %v3515 = vpop.f32.mrb[0].mxu0
        %v3516 = vadd.f32 0.0, %v3515
        %v3517 = vpop.f32.mrb[0].mxu0
        %v3518 = vpop.f32.mrb[0].mxu0
        %v3519 = vadd.f32 0.0, %v3518
        %v3520 = vpop.f32.mrb[0].mxu0
        %3521 = vmatprep.mubr.bf16.mxu0 %v3363
        %3522 = vmatmul.mubr.bf16.gmra.mrb[0].mxu0 %v3362
        %v3523 = vpop.f32.mrb[0].mxu0
        %v3524 = vadd.f32 0.0, %v3523
        %v3525 = vpop.f32.mrb[0].mxu0
        %v3526 = vpop.f32.mrb[0].mxu0
        %v3527 = vadd.f32 0.0, %v3526
        %v3528 = vpop.f32.mrb[0].mxu0
        %3529 = vmatprep.mubr.bf16.mxu0 %v3366
        %3530 = vmatmul.mubr.bf16.gmra.mrb[0].mxu0 %v3365
        %v3531 = vpop.f32.mrb[0].mxu0
        %v3532 = vadd.f32 0.0, %v3531
        %v3533 = vpop.f32.mrb[0].mxu0
        %v3534 = vpop.f32.mrb[0].mxu0
        %v3535 = vadd.f32 0.0, %v3534
        %v3536 = vpop.f32.mrb[0].mxu0
        %3537 = vmatprep.mubr.bf16.mxu0 %v3369
        %3538 = vmatmul.mubr.bf16.gmra.mrb[0].mxu0 %v3368
        %v3539 = vpop.f32.mrb[0].mxu0
        %v3540 = vadd.f32 0.0, %v3539
        %v3541 = vpop.f32.mrb[0].mxu0
        %v3542 = vpop.f32.mrb[0].mxu0
        %v3543 = vadd.f32 0.0, %v3542
        %v3544 = vpop.f32.mrb[0].mxu0
        %3545 = vmatprep.mubr.bf16.mxu0 %v3372
        %3546 = vmatmul.mubr.bf16.gmra.mrb[0].mxu0 %v3371
        %v3547 = vpop.f32.mrb[0].mxu0
        %v3548 = vadd.f32 0.0, %v3547
        %v3549 = vpop.f32.mrb[0].mxu0
        %v3550 = vpop.f32.mrb[0].mxu0
        %v3551 = vadd.f32 0.0, %v3550
        %v3552 = vpop.f32.mrb[0].mxu0
        %3553 = vmatprep.mubr.bf16.mxu0 %v3375
        %3554 = vmatmul.mubr.bf16.gmra.mrb[0].mxu0 %v3374
        %v3555 = vpop.f32.mrb[0].mxu0
        %v3556 = vadd.f32 0.0, %v3555
        %v3557 = vpop.f32.mrb[0].mxu0
        %v3558 = vpop.f32.mrb[0].mxu0
        %v3559 = vadd.f32 0.0, %v3558
        %v3560 = vpop.f32.mrb[0].mxu0
        %3561 = vdwg.mxu0
        %3562 = vmatprep.subr.bf16.mxu0 0
        %3563 = vmatpush1.bf16.msra.mxu0 %v3393
        %3564 = vmatprep.subr.bf16.mxu0 0
        %3565 = vmatpush1.bf16.msra.mxu0 %v3394
        %3566 = vmatprep.subr.bf16.mxu0 0
        %3567 = vmatpush1.bf16.msra.mxu0 %v3395
        %3568 = vmatprep.subr.bf16.mxu0 0
        %3569 = vmatpush1.bf16.msra.mxu0 %v3396
        %3570 = vmatprep.subr.bf16.mxu0 0
        %3571 = vmatpush1.bf16.msra.mxu0 %v3397
        %3572 = vmatprep.subr.bf16.mxu0 0
        %3573 = vmatpush1.bf16.msra.mxu0 %v3398
        %3574 = vmatprep.subr.bf16.mxu0 0
        %3575 = vmatpush1.bf16.msra.mxu0 %v3399
        %3576 = vmatprep.subr.bf16.mxu0 0
        %3577 = vmatpush1.bf16.msra.mxu0 %v3400
        %3578 = vmatprep.subr.bf16.mxu0 0
        %3579 = vmatpush1.bf16.msra.mxu0 0
        %3580 = vmatprep.subr.bf16.mxu0 0
        %3581 = vmatpush1.bf16.msra.mxu0 0
        %3582 = vmatprep.subr.bf16.mxu0 0
        %3583 = vmatpush1.bf16.msra.mxu0 0
        %3584 = vmatprep.subr.bf16.mxu0 0
        %3585 = vmatpush1.bf16.msra.mxu0 0
        %3586 = vmatprep.subr.bf16.mxu0 0
        %3587 = vmatpush1.bf16.msra.mxu0 0
        %3588 = vmatprep.subr.bf16.mxu0 0
        %3589 = vmatpush1.bf16.msra.mxu0 0
        %3590 = vmatprep.subr.bf16.mxu0 0
        %3591 = vmatpush1.bf16.msra.mxu0 0
        %3592 = vmatprep.subr.bf16.mxu0 0
        %3593 = vmatpush1.bf16.msra.mxu0 0
        %3594 = vmatprep.mubr.bf16.mxu0 0
        %3595 = vmatmul.mubr.bf16.gmra.mrb[0].mxu0 %v3331
        %v3596 = vpop.f32.mrb[0].mxu0
        %v3597 = vadd.f32 %v3436, %v3596
        %v3598 = vpop.f32.mrb[0].mxu0
        %v3599 = vpop.f32.mrb[0].mxu0
        %v3600 = vadd.f32 %v3439, %v3599
        %v3601 = vpop.f32.mrb[0].mxu0
        %3602 = vmatprep.mubr.bf16.mxu0 0
        %3603 = vmatmul.mubr.bf16.gmra.mrb[0].mxu0 %v3334
        %v3604 = vpop.f32.mrb[0].mxu0
        %v3605 = vadd.f32 %v3444, %v3604
        %v3606 = vpop.f32.mrb[0].mxu0
        %v3607 = vpop.f32.mrb[0].mxu0
        %v3608 = vadd.f32 %v3447, %v3607
        %v3609 = vpop.f32.mrb[0].mxu0
        %3610 = vmatprep.mubr.bf16.mxu0 0
        %3611 = vmatmul.mubr.bf16.gmra.mrb[0].mxu0 %v3337
        %v3612 = vpop.f32.mrb[0].mxu0
        %v3613 = vadd.f32 %v3452, %v3612
        %v3614 = vpop.f32.mrb[0].mxu0
        %v3615 = vpop.f32.mrb[0].mxu0
        %v3616 = vadd.f32 %v3455, %v3615
        %v3617 = vpop.f32.mrb[0].mxu0
        %3618 = vmatprep.mubr.bf16.mxu0 0
        %3619 = vmatmul.mubr.bf16.gmra.mrb[0].mxu0 %v3340
        %v3620 = vpop.f32.mrb[0].mxu0
        %v3621 = vadd.f32 %v3460, %v3620
        %v3622 = vpop.f32.mrb[0].mxu0
        %v3623 = vpop.f32.mrb[0].mxu0
        %v3624 = vadd.f32 %v3463, %v3623
        %v3625 = vpop.f32.mrb[0].mxu0
        %3626 = vmatprep.mubr.bf16.mxu0 0
        %3627 = vmatmul.mubr.bf16.gmra.mrb[0].mxu0 %v3343
        %v3628 = vpop.f32.mrb[0].mxu0
        %v3629 = vadd.f32 %v3468, %v3628
        %v3630 = vpop.f32.mrb[0].mxu0
        %v3631 = vpop.f32.mrb[0].mxu0
        %v3632 = vadd.f32 %v3471, %v3631
        %v3633 = vpop.f32.mrb[0].mxu0
        %3634 = vmatprep.mubr.bf16.mxu0 0
        %3635 = vmatmul.mubr.bf16.gmra.mrb[0].mxu0 %v3346
        %v3636 = vpop.f32.mrb[0].mxu0
        %v3637 = vadd.f32 %v3476, %v3636
        %v3638 = vpop.f32.mrb[0].mxu0
        %v3639 = vpop.f32.mrb[0].mxu0
        %v3640 = vadd.f32 %v3479, %v3639
        %v3641 = vpop.f32.mrb[0].mxu0
        %3642 = vmatprep.mubr.bf16.mxu0 0
        %3643 = vmatmul.mubr.bf16.gmra.mrb[0].mxu0 %v3349
        %v3644 = vpop.f32.mrb[0].mxu0
        %v3645 = vadd.f32 %v3484, %v3644
        %v3646 = vpop.f32.mrb[0].mxu0
        %v3647 = vpop.f32.mrb[0].mxu0
        %v3648 = vadd.f32 %v3487, %v3647
        %v3649 = vpop.f32.mrb[0].mxu0
        %3650 = vmatprep.mubr.bf16.mxu0 0
        %3651 = vmatmul.mubr.bf16.gmra.mrb[0].mxu0 %v3352
        %v3652 = vpop.f32.mrb[0].mxu0
        %v3653 = vadd.f32 %v3492, %v3652
        %v3654 = vpop.f32.mrb[0].mxu0
        %v3655 = vpop.f32.mrb[0].mxu0
        %v3656 = vadd.f32 %v3495, %v3655
        %v3657 = vpop.f32.mrb[0].mxu0
        %3658 = vmatprep.mubr.bf16.mxu0 0
        %3659 = vmatmul.mubr.bf16.gmra.mrb[0].mxu0 %v3355
        %v3660 = vpop.f32.mrb[0].mxu0
        %v3661 = vadd.f32 %v3500, %v3660
        %v3662 = vpop.f32.mrb[0].mxu0
        %v3663 = vpop.f32.mrb[0].mxu0
        %v3664 = vadd.f32 %v3503, %v3663
        %v3665 = vpop.f32.mrb[0].mxu0
        %3666 = vmatprep.mubr.bf16.mxu0 0
        %3667 = vmatmul.mubr.bf16.gmra.mrb[0].mxu0 %v3358
        %v3668 = vpop.f32.mrb[0].mxu0
        %v3669 = vadd.f32 %v3508, %v3668
        %v3670 = vpop.f32.mrb[0].mxu0
        %v3671 = vpop.f32.mrb[0].mxu0
        %v3672 = vadd.f32 %v3511, %v3671
        %v3673 = vpop.f32.mrb[0].mxu0
        %3674 = vmatprep.mubr.bf16.mxu0 0
        %3675 = vmatmul.mubr.bf16.gmra.mrb[0].mxu0 %v3361
        %v3676 = vpop.f32.mrb[0].mxu0
        %v3677 = vadd.f32 %v3516, %v3676
        %v3678 = vpop.f32.mrb[0].mxu0
        %v3679 = vpop.f32.mrb[0].mxu0
        %v3680 = vadd.f32 %v3519, %v3679
        %v3681 = vpop.f32.mrb[0].mxu0
        %3682 = vmatprep.mubr.bf16.mxu0 0
        %3683 = vmatmul.mubr.bf16.gmra.mrb[0].mxu0 %v3364
        %v3684 = vpop.f32.mrb[0].mxu0
        %v3685 = vadd.f32 %v3524, %v3684
        %v3686 = vpop.f32.mrb[0].mxu0
        %v3687 = vpop.f32.mrb[0].mxu0
        %v3688 = vadd.f32 %v3527, %v3687
        %v3689 = vpop.f32.mrb[0].mxu0
        %3690 = vmatprep.mubr.bf16.mxu0 0
        %3691 = vmatmul.mubr.bf16.gmra.mrb[0].mxu0 %v3367
        %v3692 = vpop.f32.mrb[0].mxu0
        %v3693 = vadd.f32 %v3532, %v3692
        %v3694 = vpop.f32.mrb[0].mxu0
        %v3695 = vpop.f32.mrb[0].mxu0
        %v3696 = vadd.f32 %v3535, %v3695
        %v3697 = vpop.f32.mrb[0].mxu0
        %3698 = vmatprep.mubr.bf16.mxu0 0
        %3699 = vmatmul.mubr.bf16.gmra.mrb[0].mxu0 %v3370
        %v3700 = vpop.f32.mrb[0].mxu0
        %v3701 = vadd.f32 %v3540, %v3700
        %v3702 = vpop.f32.mrb[0].mxu0
        %v3703 = vpop.f32.mrb[0].mxu0
        %v3704 = vadd.f32 %v3543, %v3703
        %v3705 = vpop.f32.mrb[0].mxu0
        %3706 = vmatprep.mubr.bf16.mxu0 0
        %3707 = vmatmul.mubr.bf16.gmra.mrb[0].mxu0 %v3373
        %v3708 = vpop.f32.mrb[0].mxu0
        %v3709 = vadd.f32 %v3548, %v3708
        %v3710 = vpop.f32.mrb[0].mxu0
        %v3711 = vpop.f32.mrb[0].mxu0
        %v3712 = vadd.f32 %v3551, %v3711
        %v3713 = vpop.f32.mrb[0].mxu0
        %3714 = vmatprep.mubr.bf16.mxu0 0
        %3715 = vmatmul.mubr.bf16.gmra.mrb[0].mxu0 %v3376
        %v3716 = vpop.f32.mrb[0].mxu0
        %v3717 = vadd.f32 %v3556, %v3716
        %v3718 = vpop.f32.mrb[0].mxu0
        %v3719 = vpop.f32.mrb[0].mxu0
        %v3720 = vadd.f32 %v3559, %v3719
        %v3721 = vpop.f32.mrb[0].mxu0
        %3722 = vdwg.mxu0
        %v3723 = vadd.f32 %v2675, %v3597
        %v3724 = vadd.f32 %v2678, %v3600
        %v3725 = vadd.f32 %v2683, %v3605
        %v3726 = vadd.f32 %v2686, %v3608
        %v3727 = vadd.f32 %v2691, %v3613
        %v3728 = vadd.f32 %v2694, %v3616
        %v3729 = vadd.f32 %v2699, %v3621
        %v3730 = vadd.f32 %v2702, %v3624
        %v3731 = vadd.f32 %v2707, %v3629
        %v3732 = vadd.f32 %v2710, %v3632
        %v3733 = vadd.f32 %v2715, %v3637
        %v3734 = vadd.f32 %v2718, %v3640
        %v3735 = vadd.f32 %v2723, %v3645
        %v3736 = vadd.f32 %v2726, %v3648
        %v3737 = vadd.f32 %v2731, %v3653
        %v3738 = vadd.f32 %v2734, %v3656
        %v3739 = vadd.f32 %v2739, %v3661
        %v3740 = vadd.f32 %v2742, %v3664
        %v3741 = vadd.f32 %v2747, %v3669
        %v3742 = vadd.f32 %v2750, %v3672
        %v3743 = vadd.f32 %v2755, %v3677
        %v3744 = vadd.f32 %v2758, %v3680
        %v3745 = vadd.f32 %v2763, %v3685
        %v3746 = vadd.f32 %v2766, %v3688
        %v3747 = vadd.f32 %v2771, %v3693
        %v3748 = vadd.f32 %v2774, %v3696
        %v3749 = vadd.f32 %v2779, %v3701
        %v3750 = vadd.f32 %v2782, %v3704
        %v3751 = vadd.f32 %v2787, %v3709
        %v3752 = vadd.f32 %v2790, %v3712
        %v3753 = vadd.f32 %v2795, %v3717
        %v3754 = vadd.f32 %v2798, %v3720
        %v3755 = vrot.slane %v610, 2
        %v3756 = vrot.slane %v613, 2
        %v3757 = vrot.slane %v618, 2
        %v3758 = vrot.slane %v621, 2
        %v3759 = vrot.slane %v626, 2
        %v3760 = vrot.slane %v629, 2
        %v3761 = vrot.slane %v634, 2
        %v3762 = vrot.slane %v637, 2
        %v3763 = vrot.slane %v642, 2
        %v3764 = vrot.slane %v645, 2
        %v3765 = vrot.slane %v650, 2
        %v3766 = vrot.slane %v653, 2
        %v3767 = vrot.slane %v658, 2
        %v3768 = vrot.slane %v661, 2
        %v3769 = vrot.slane %v666, 2
        %v3770 = vrot.slane %v669, 2
        %v3771 = vrot.slane %v674, 2
        %v3772 = vrot.slane %v677, 2
        %v3773 = vrot.slane %v682, 2
        %v3774 = vrot.slane %v685, 2
        %v3775 = vrot.slane %v690, 2
        %v3776 = vrot.slane %v693, 2
        %v3777 = vrot.slane %v698, 2
        %v3778 = vrot.slane %v701, 2
        %v3779 = vrot.slane %v706, 2
        %v3780 = vrot.slane %v709, 2
        %v3781 = vrot.slane %v714, 2
        %v3782 = vrot.slane %v717, 2
        %v3783 = vrot.slane %v722, 2
        %v3784 = vrot.slane %v725, 2
        %v3785 = vrot.slane %v730, 2
        %v3786 = vrot.slane %v733, 2
        %vm3787 = vcmp.lt.s32.totalorder %v970, 6
        %v3788 = vsel %vm3787, %v3785, %v3786
        %v3789 = vsel %vm3787, %v3784, %v3785
        %v3790 = vsel %vm3787, %v3783, %v3784
        %v3791 = vsel %vm3787, %v3782, %v3783
        %v3792 = vsel %vm3787, %v3781, %v3782
        %v3793 = vsel %vm3787, %v3780, %v3781
        %v3794 = vsel %vm3787, %v3779, %v3780
        %v3795 = vsel %vm3787, %v3778, %v3779
        %v3796 = vsel %vm3787, %v3777, %v3778
        %v3797 = vsel %vm3787, %v3776, %v3777
        %v3798 = vsel %vm3787, %v3775, %v3776
        %v3799 = vsel %vm3787, %v3774, %v3775
        %v3800 = vsel %vm3787, %v3773, %v3774
        %v3801 = vsel %vm3787, %v3772, %v3773
        %v3802 = vsel %vm3787, %v3771, %v3772
        %v3803 = vsel %vm3787, %v3770, %v3771
        %v3804 = vsel %vm3787, %v3769, %v3770
        %v3805 = vsel %vm3787, %v3768, %v3769
        %v3806 = vsel %vm3787, %v3767, %v3768
        %v3807 = vsel %vm3787, %v3766, %v3767
        %v3808 = vsel %vm3787, %v3765, %v3766
        %v3809 = vsel %vm3787, %v3764, %v3765
        %v3810 = vsel %vm3787, %v3763, %v3764
        %v3811 = vsel %vm3787, %v3762, %v3763
        %v3812 = vsel %vm3787, %v3761, %v3762
        %v3813 = vsel %vm3787, %v3760, %v3761
        %v3814 = vsel %vm3787, %v3759, %v3760
        %v3815 = vsel %vm3787, %v3758, %v3759
        %v3816 = vsel %vm3787, %v3757, %v3758
        %v3817 = vsel %vm3787, %v3756, %v3757
        %v3818 = vsel %vm3787, %v3755, %v3756
        %v3819 = vsel %vm3787, %v3786, %v3755
        %3820 = vset.pattern.permute.xlu0 9
        %3821 = vperm.xlu0 %3820, %v1004
        %v3822 = vpop.permute.xlu0 %3821
        %3824 = vset.pattern.permute.xlu0 9
        %3825 = vperm.xlu0 %3824, %v1005
        %v3826 = vpop.permute.xlu0 %3825
        %3828 = vset.pattern.permute.xlu0 9
        %3829 = vperm.xlu0 %3828, %v1006
        %v3830 = vpop.permute.xlu0 %3829
        %3832 = vset.pattern.permute.xlu0 9
        %3833 = vperm.xlu0 %3832, %v1007
        %v3834 = vpop.permute.xlu0 %3833
        %3836 = vset.pattern.permute.xlu0 9
        %3837 = vperm.xlu0 %3836, %v1008
        %v3838 = vpop.permute.xlu0 %3837
        %3840 = vset.pattern.permute.xlu0 9
        %3841 = vperm.xlu0 %3840, %v1009
        %v3842 = vpop.permute.xlu0 %3841
        %3844 = vset.pattern.permute.xlu0 9
        %3845 = vperm.xlu0 %3844, %v1010
        %v3846 = vpop.permute.xlu0 %3845
        %3848 = vset.pattern.permute.xlu0 9
        %3849 = vperm.xlu0 %3848, %v1011
        %v3850 = vpop.permute.xlu0 %3849
        %3852 = vset.pattern.permute.xlu0 9
        %3853 = vperm.xlu0 %3852, %v1012
        %v3854 = vpop.permute.xlu0 %3853
        %3856 = vset.pattern.permute.xlu0 9
        %3857 = vperm.xlu0 %3856, %v1013
        %v3858 = vpop.permute.xlu0 %3857
        %3860 = vset.pattern.permute.xlu0 9
        %3861 = vperm.xlu0 %3860, %v1014
        %v3862 = vpop.permute.xlu0 %3861
        %3864 = vset.pattern.permute.xlu0 9
        %3865 = vperm.xlu0 %3864, %v1015
        %v3866 = vpop.permute.xlu0 %3865
        %3868 = vset.pattern.permute.xlu0 9
        %3869 = vperm.xlu0 %3868, %v1016
        %v3870 = vpop.permute.xlu0 %3869
        %3872 = vset.pattern.permute.xlu0 9
        %3873 = vperm.xlu0 %3872, %v1017
        %v3874 = vpop.permute.xlu0 %3873
        %3876 = vset.pattern.permute.xlu0 9
        %3877 = vperm.xlu0 %3876, %v1018
        %v3878 = vpop.permute.xlu0 %3877
        %3880 = vset.pattern.permute.xlu0 9
        %3881 = vperm.xlu0 %3880, %v1019
        %v3882 = vpop.permute.xlu0 %3881
        %3884 = vset.pattern.permute.xlu0 9
        %3885 = vperm.xlu0 %3884, %v1020
        %v3886 = vpop.permute.xlu0 %3885
        %3888 = vset.pattern.permute.xlu0 9
        %3889 = vperm.xlu0 %3888, %v1021
        %v3890 = vpop.permute.xlu0 %3889
        %3892 = vset.pattern.permute.xlu0 9
        %3893 = vperm.xlu0 %3892, %v1022
        %v3894 = vpop.permute.xlu0 %3893
        %3896 = vset.pattern.permute.xlu0 9
        %3897 = vperm.xlu0 %3896, %v1023
        %v3898 = vpop.permute.xlu0 %3897
        %3900 = vset.pattern.permute.xlu0 9
        %3901 = vperm.xlu0 %3900, %v1024
        %v3902 = vpop.permute.xlu0 %3901
        %3904 = vset.pattern.permute.xlu0 9
        %3905 = vperm.xlu0 %3904, %v1025
        %v3906 = vpop.permute.xlu0 %3905
        %3908 = vset.pattern.permute.xlu0 9
        %3909 = vperm.xlu0 %3908, %v1026
        %v3910 = vpop.permute.xlu0 %3909
        %3912 = vset.pattern.permute.xlu0 9
        %3913 = vperm.xlu0 %3912, %v1027
        %v3914 = vpop.permute.xlu0 %3913
        %3916 = vset.pattern.permute.xlu0 9
        %3917 = vperm.xlu0 %3916, %v1028
        %v3918 = vpop.permute.xlu0 %3917
        %3920 = vset.pattern.permute.xlu0 9
        %3921 = vperm.xlu0 %3920, %v1029
        %v3922 = vpop.permute.xlu0 %3921
        %3924 = vset.pattern.permute.xlu0 9
        %3925 = vperm.xlu0 %3924, %v1030
        %v3926 = vpop.permute.xlu0 %3925
        %3928 = vset.pattern.permute.xlu0 9
        %3929 = vperm.xlu0 %3928, %v1031
        %v3930 = vpop.permute.xlu0 %3929
        %3932 = vset.pattern.permute.xlu0 9
        %3933 = vperm.xlu0 %3932, %v1032
        %v3934 = vpop.permute.xlu0 %3933
        %3936 = vset.pattern.permute.xlu0 9
        %3937 = vperm.xlu0 %3936, %v1033
        %v3938 = vpop.permute.xlu0 %3937
        %3940 = vset.pattern.permute.xlu0 9
        %3941 = vperm.xlu0 %3940, %v1034
        %v3942 = vpop.permute.xlu0 %3941
        %3944 = vset.pattern.permute.xlu0 9
        %3945 = vperm.xlu0 %3944, %v1035
        %v3946 = vpop.permute.xlu0 %3945
        %v3948 = vmul.f32 %v3799, %v3822
        %v3949 = vmul.f32 %v3798, %v3826
        %v3950 = vmul.f32 %v3797, %v3830
        %v3951 = vmul.f32 %v3796, %v3834
        %v3952 = vmul.f32 %v3795, %v3838
        %v3953 = vmul.f32 %v3794, %v3842
        %v3954 = vmul.f32 %v3793, %v3846
        %v3955 = vmul.f32 %v3792, %v3850
        %v3956 = vmul.f32 %v3791, %v3854
        %v3957 = vmul.f32 %v3790, %v3858
        %v3958 = vmul.f32 %v3789, %v3862
        %v3959 = vmul.f32 %v3788, %v3866
        %v3960 = vmul.f32 %v3819, %v3870
        %v3961 = vmul.f32 %v3818, %v3874
        %v3962 = vmul.f32 %v3817, %v3878
        %v3963 = vmul.f32 %v3816, %v3882
        %v3964 = vmul.f32 %v3815, %v3886
        %v3965 = vmul.f32 %v3814, %v3890
        %v3966 = vmul.f32 %v3813, %v3894
        %v3967 = vmul.f32 %v3812, %v3898
        %v3968 = vmul.f32 %v3811, %v3902
        %v3969 = vmul.f32 %v3810, %v3906
        %v3970 = vmul.f32 %v3809, %v3910
        %v3971 = vmul.f32 %v3808, %v3914
        %v3972 = vmul.f32 %v3807, %v3918
        %v3973 = vmul.f32 %v3806, %v3922
        %v3974 = vmul.f32 %v3805, %v3926
        %v3975 = vmul.f32 %v3804, %v3930
        %v3976 = vmul.f32 %v3803, %v3934
        %v3977 = vmul.f32 %v3802, %v3938
        %v3978 = vmul.f32 %v3801, %v3942
        %v3979 = vmul.f32 %v3800, %v3946
        %3980 = vset.pattern.permute.xlu0 10
        %3981 = vperm.xlu0 %3980, %v1004
        %v3982 = vpop.permute.xlu0 %3981
        %3984 = vset.pattern.permute.xlu0 10
        %3985 = vperm.xlu0 %3984, %v1005
        %v3986 = vpop.permute.xlu0 %3985
        %3988 = vset.pattern.permute.xlu0 10
        %3989 = vperm.xlu0 %3988, %v1006
        %v3990 = vpop.permute.xlu0 %3989
        %3992 = vset.pattern.permute.xlu0 10
        %3993 = vperm.xlu0 %3992, %v1007
        %v3994 = vpop.permute.xlu0 %3993
        %3996 = vset.pattern.permute.xlu0 10
        %3997 = vperm.xlu0 %3996, %v1008
        %v3998 = vpop.permute.xlu0 %3997
        %4000 = vset.pattern.permute.xlu0 10
        %4001 = vperm.xlu0 %4000, %v1009
        %v4002 = vpop.permute.xlu0 %4001
        %4004 = vset.pattern.permute.xlu0 10
        %4005 = vperm.xlu0 %4004, %v1010
        %v4006 = vpop.permute.xlu0 %4005
        %4008 = vset.pattern.permute.xlu0 10
        %4009 = vperm.xlu0 %4008, %v1011
        %v4010 = vpop.permute.xlu0 %4009
        %4012 = vset.pattern.permute.xlu0 10
        %4013 = vperm.xlu0 %4012, %v1012
        %v4014 = vpop.permute.xlu0 %4013
        %4016 = vset.pattern.permute.xlu0 10
        %4017 = vperm.xlu0 %4016, %v1013
        %v4018 = vpop.permute.xlu0 %4017
        %4020 = vset.pattern.permute.xlu0 10
        %4021 = vperm.xlu0 %4020, %v1014
        %v4022 = vpop.permute.xlu0 %4021
        %4024 = vset.pattern.permute.xlu0 10
        %4025 = vperm.xlu0 %4024, %v1015
        %v4026 = vpop.permute.xlu0 %4025
        %4028 = vset.pattern.permute.xlu0 10
        %4029 = vperm.xlu0 %4028, %v1016
        %v4030 = vpop.permute.xlu0 %4029
        %4032 = vset.pattern.permute.xlu0 10
        %4033 = vperm.xlu0 %4032, %v1017
        %v4034 = vpop.permute.xlu0 %4033
        %4036 = vset.pattern.permute.xlu0 10
        %4037 = vperm.xlu0 %4036, %v1018
        %v4038 = vpop.permute.xlu0 %4037
        %4040 = vset.pattern.permute.xlu0 10
        %4041 = vperm.xlu0 %4040, %v1019
        %v4042 = vpop.permute.xlu0 %4041
        %4044 = vset.pattern.permute.xlu0 10
        %4045 = vperm.xlu0 %4044, %v1020
        %v4046 = vpop.permute.xlu0 %4045
        %4048 = vset.pattern.permute.xlu0 10
        %4049 = vperm.xlu0 %4048, %v1021
        %v4050 = vpop.permute.xlu0 %4049
        %4052 = vset.pattern.permute.xlu0 10
        %4053 = vperm.xlu0 %4052, %v1022
        %v4054 = vpop.permute.xlu0 %4053
        %4056 = vset.pattern.permute.xlu0 10
        %4057 = vperm.xlu0 %4056, %v1023
        %v4058 = vpop.permute.xlu0 %4057
        %4060 = vset.pattern.permute.xlu0 10
        %4061 = vperm.xlu0 %4060, %v1024
        %v4062 = vpop.permute.xlu0 %4061
        %4064 = vset.pattern.permute.xlu0 10
        %4065 = vperm.xlu0 %4064, %v1025
        %v4066 = vpop.permute.xlu0 %4065
        %4068 = vset.pattern.permute.xlu0 10
        %4069 = vperm.xlu0 %4068, %v1026
        %v4070 = vpop.permute.xlu0 %4069
        %4072 = vset.pattern.permute.xlu0 10
        %4073 = vperm.xlu0 %4072, %v1027
        %v4074 = vpop.permute.xlu0 %4073
        %4076 = vset.pattern.permute.xlu0 10
        %4077 = vperm.xlu0 %4076, %v1028
        %v4078 = vpop.permute.xlu0 %4077
        %4080 = vset.pattern.permute.xlu0 10
        %4081 = vperm.xlu0 %4080, %v1029
        %v4082 = vpop.permute.xlu0 %4081
        %4084 = vset.pattern.permute.xlu0 10
        %4085 = vperm.xlu0 %4084, %v1030
        %v4086 = vpop.permute.xlu0 %4085
        %4088 = vset.pattern.permute.xlu0 10
        %4089 = vperm.xlu0 %4088, %v1031
        %v4090 = vpop.permute.xlu0 %4089
        %4092 = vset.pattern.permute.xlu0 10
        %4093 = vperm.xlu0 %4092, %v1032
        %v4094 = vpop.permute.xlu0 %4093
        %4096 = vset.pattern.permute.xlu0 10
        %4097 = vperm.xlu0 %4096, %v1033
        %v4098 = vpop.permute.xlu0 %4097
        %4100 = vset.pattern.permute.xlu0 10
        %4101 = vperm.xlu0 %4100, %v1034
        %v4102 = vpop.permute.xlu0 %4101
        %4104 = vset.pattern.permute.xlu0 10
        %4105 = vperm.xlu0 %4104, %v1035
        %v4106 = vpop.permute.xlu0 %4105
        %v4108 = vmul.f32 %v690, %v3982
        %v4109 = vmul.f32 %v693, %v3986
        %v4110 = vmul.f32 %v698, %v3990
        %v4111 = vmul.f32 %v701, %v3994
        %v4112 = vmul.f32 %v706, %v3998
        %v4113 = vmul.f32 %v709, %v4002
        %v4114 = vmul.f32 %v714, %v4006
        %v4115 = vmul.f32 %v717, %v4010
        %v4116 = vmul.f32 %v722, %v4014
        %v4117 = vmul.f32 %v725, %v4018
        %v4118 = vmul.f32 %v730, %v4022
        %v4119 = vmul.f32 %v733, %v4026
        %v4120 = vmul.f32 %v610, %v4030
        %v4121 = vmul.f32 %v613, %v4034
        %v4122 = vmul.f32 %v618, %v4038
        %v4123 = vmul.f32 %v621, %v4042
        %v4124 = vmul.f32 %v626, %v4046
        %v4125 = vmul.f32 %v629, %v4050
        %v4126 = vmul.f32 %v634, %v4054
        %v4127 = vmul.f32 %v637, %v4058
        %v4128 = vmul.f32 %v642, %v4062
        %v4129 = vmul.f32 %v645, %v4066
        %v4130 = vmul.f32 %v650, %v4070
        %v4131 = vmul.f32 %v653, %v4074
        %v4132 = vmul.f32 %v658, %v4078
        %v4133 = vmul.f32 %v661, %v4082
        %v4134 = vmul.f32 %v666, %v4086
        %v4135 = vmul.f32 %v669, %v4090
        %v4136 = vmul.f32 %v674, %v4094
        %v4137 = vmul.f32 %v677, %v4098
        %v4138 = vmul.f32 %v682, %v4102
        %v4139 = vmul.f32 %v685, %v4106
        %v4140 = vrot.slane %v610, 6
        %v4141 = vrot.slane %v613, 6
        %v4142 = vrot.slane %v618, 6
        %v4143 = vrot.slane %v621, 6
        %v4144 = vrot.slane %v626, 6
        %v4145 = vrot.slane %v629, 6
        %v4146 = vrot.slane %v634, 6
        %v4147 = vrot.slane %v637, 6
        %v4148 = vrot.slane %v642, 6
        %v4149 = vrot.slane %v645, 6
        %v4150 = vrot.slane %v650, 6
        %v4151 = vrot.slane %v653, 6
        %v4152 = vrot.slane %v658, 6
        %v4153 = vrot.slane %v661, 6
        %v4154 = vrot.slane %v666, 6
        %v4155 = vrot.slane %v669, 6
        %v4156 = vrot.slane %v674, 6
        %v4157 = vrot.slane %v677, 6
        %v4158 = vrot.slane %v682, 6
        %v4159 = vrot.slane %v685, 6
        %v4160 = vrot.slane %v690, 6
        %v4161 = vrot.slane %v693, 6
        %v4162 = vrot.slane %v698, 6
        %v4163 = vrot.slane %v701, 6
        %v4164 = vrot.slane %v706, 6
        %v4165 = vrot.slane %v709, 6
        %v4166 = vrot.slane %v714, 6
        %v4167 = vrot.slane %v717, 6
        %v4168 = vrot.slane %v722, 6
        %v4169 = vrot.slane %v725, 6
        %v4170 = vrot.slane %v730, 6
        %v4171 = vrot.slane %v733, 6
        %vm4172 = vcmp.lt.s32.totalorder %v970, 2
        %v4173 = vsel %vm4172, %v4170, %v4171
        %v4174 = vsel %vm4172, %v4169, %v4170
        %v4175 = vsel %vm4172, %v4168, %v4169
        %v4176 = vsel %vm4172, %v4167, %v4168
        %v4177 = vsel %vm4172, %v4166, %v4167
        %v4178 = vsel %vm4172, %v4165, %v4166
        %v4179 = vsel %vm4172, %v4164, %v4165
        %v4180 = vsel %vm4172, %v4163, %v4164
        %v4181 = vsel %vm4172, %v4162, %v4163
        %v4182 = vsel %vm4172, %v4161, %v4162
        %v4183 = vsel %vm4172, %v4160, %v4161
        %v4184 = vsel %vm4172, %v4159, %v4160
        %v4185 = vsel %vm4172, %v4158, %v4159
        %v4186 = vsel %vm4172, %v4157, %v4158
        %v4187 = vsel %vm4172, %v4156, %v4157
        %v4188 = vsel %vm4172, %v4155, %v4156
        %v4189 = vsel %vm4172, %v4154, %v4155
        %v4190 = vsel %vm4172, %v4153, %v4154
        %v4191 = vsel %vm4172, %v4152, %v4153
        %v4192 = vsel %vm4172, %v4151, %v4152
        %v4193 = vsel %vm4172, %v4150, %v4151
        %v4194 = vsel %vm4172, %v4149, %v4150
        %v4195 = vsel %vm4172, %v4148, %v4149
        %v4196 = vsel %vm4172, %v4147, %v4148
        %v4197 = vsel %vm4172, %v4146, %v4147
        %v4198 = vsel %vm4172, %v4145, %v4146
        %v4199 = vsel %vm4172, %v4144, %v4145
        %v4200 = vsel %vm4172, %v4143, %v4144
        %v4201 = vsel %vm4172, %v4142, %v4143
        %v4202 = vsel %vm4172, %v4141, %v4142
        %v4203 = vsel %vm4172, %v4140, %v4141
        %v4204 = vsel %vm4172, %v4171, %v4140
        %4205 = vset.pattern.permute.xlu0 11
        %4206 = vperm.xlu0 %4205, %v1004
        %v4207 = vpop.permute.xlu0 %4206
        %4209 = vset.pattern.permute.xlu0 11
        %4210 = vperm.xlu0 %4209, %v1005
        %v4211 = vpop.permute.xlu0 %4210
        %4213 = vset.pattern.permute.xlu0 11
        %4214 = vperm.xlu0 %4213, %v1006
        %v4215 = vpop.permute.xlu0 %4214
        %4217 = vset.pattern.permute.xlu0 11
        %4218 = vperm.xlu0 %4217, %v1007
        %v4219 = vpop.permute.xlu0 %4218
        %4221 = vset.pattern.permute.xlu0 11
        %4222 = vperm.xlu0 %4221, %v1008
        %v4223 = vpop.permute.xlu0 %4222
        %4225 = vset.pattern.permute.xlu0 11
        %4226 = vperm.xlu0 %4225, %v1009
        %v4227 = vpop.permute.xlu0 %4226
        %4229 = vset.pattern.permute.xlu0 11
        %4230 = vperm.xlu0 %4229, %v1010
        %v4231 = vpop.permute.xlu0 %4230
        %4233 = vset.pattern.permute.xlu0 11
        %4234 = vperm.xlu0 %4233, %v1011
        %v4235 = vpop.permute.xlu0 %4234
        %4237 = vset.pattern.permute.xlu0 11
        %4238 = vperm.xlu0 %4237, %v1012
        %v4239 = vpop.permute.xlu0 %4238
        %4241 = vset.pattern.permute.xlu0 11
        %4242 = vperm.xlu0 %4241, %v1013
        %v4243 = vpop.permute.xlu0 %4242
        %4245 = vset.pattern.permute.xlu0 11
        %4246 = vperm.xlu0 %4245, %v1014
        %v4247 = vpop.permute.xlu0 %4246
        %4249 = vset.pattern.permute.xlu0 11
        %4250 = vperm.xlu0 %4249, %v1015
        %v4251 = vpop.permute.xlu0 %4250
        %4253 = vset.pattern.permute.xlu0 11
        %4254 = vperm.xlu0 %4253, %v1016
        %v4255 = vpop.permute.xlu0 %4254
        %4257 = vset.pattern.permute.xlu0 11
        %4258 = vperm.xlu0 %4257, %v1017
        %v4259 = vpop.permute.xlu0 %4258
        %4261 = vset.pattern.permute.xlu0 11
        %4262 = vperm.xlu0 %4261, %v1018
        %v4263 = vpop.permute.xlu0 %4262
        %4265 = vset.pattern.permute.xlu0 11
        %4266 = vperm.xlu0 %4265, %v1019
        %v4267 = vpop.permute.xlu0 %4266
        %4269 = vset.pattern.permute.xlu0 11
        %4270 = vperm.xlu0 %4269, %v1020
        %v4271 = vpop.permute.xlu0 %4270
        %4273 = vset.pattern.permute.xlu0 11
        %4274 = vperm.xlu0 %4273, %v1021
        %v4275 = vpop.permute.xlu0 %4274
        %4277 = vset.pattern.permute.xlu0 11
        %4278 = vperm.xlu0 %4277, %v1022
        %v4279 = vpop.permute.xlu0 %4278
        %4281 = vset.pattern.permute.xlu0 11
        %4282 = vperm.xlu0 %4281, %v1023
        %v4283 = vpop.permute.xlu0 %4282
        %4285 = vset.pattern.permute.xlu0 11
        %4286 = vperm.xlu0 %4285, %v1024
        %v4287 = vpop.permute.xlu0 %4286
        %4289 = vset.pattern.permute.xlu0 11
        %4290 = vperm.xlu0 %4289, %v1025
        %v4291 = vpop.permute.xlu0 %4290
        %4293 = vset.pattern.permute.xlu0 11
        %4294 = vperm.xlu0 %4293, %v1026
        %v4295 = vpop.permute.xlu0 %4294
        %4297 = vset.pattern.permute.xlu0 11
        %4298 = vperm.xlu0 %4297, %v1027
        %v4299 = vpop.permute.xlu0 %4298
        %4301 = vset.pattern.permute.xlu0 11
        %4302 = vperm.xlu0 %4301, %v1028
        %v4303 = vpop.permute.xlu0 %4302
        %4305 = vset.pattern.permute.xlu0 11
        %4306 = vperm.xlu0 %4305, %v1029
        %v4307 = vpop.permute.xlu0 %4306
        %4309 = vset.pattern.permute.xlu0 11
        %4310 = vperm.xlu0 %4309, %v1030
        %v4311 = vpop.permute.xlu0 %4310
        %4313 = vset.pattern.permute.xlu0 11
        %4314 = vperm.xlu0 %4313, %v1031
        %v4315 = vpop.permute.xlu0 %4314
        %4317 = vset.pattern.permute.xlu0 11
        %4318 = vperm.xlu0 %4317, %v1032
        %v4319 = vpop.permute.xlu0 %4318
        %4321 = vset.pattern.permute.xlu0 11
        %4322 = vperm.xlu0 %4321, %v1033
        %v4323 = vpop.permute.xlu0 %4322
        %4325 = vset.pattern.permute.xlu0 11
        %4326 = vperm.xlu0 %4325, %v1034
        %v4327 = vpop.permute.xlu0 %4326
        %4329 = vset.pattern.permute.xlu0 11
        %4330 = vperm.xlu0 %4329, %v1035
        %v4331 = vpop.permute.xlu0 %4330
        %v4333 = vmul.f32 %v4183, %v4207
        %v4334 = vmul.f32 %v4182, %v4211
        %v4335 = vmul.f32 %v4181, %v4215
        %v4336 = vmul.f32 %v4180, %v4219
        %v4337 = vmul.f32 %v4179, %v4223
        %v4338 = vmul.f32 %v4178, %v4227
        %v4339 = vmul.f32 %v4177, %v4231
        %v4340 = vmul.f32 %v4176, %v4235
        %v4341 = vmul.f32 %v4175, %v4239
        %v4342 = vmul.f32 %v4174, %v4243
        %v4343 = vmul.f32 %v4173, %v4247
        %v4344 = vmul.f32 %v4204, %v4251
        %v4345 = vmul.f32 %v4203, %v4255
        %v4346 = vmul.f32 %v4202, %v4259
        %v4347 = vmul.f32 %v4201, %v4263
        %v4348 = vmul.f32 %v4200, %v4267
        %v4349 = vmul.f32 %v4199, %v4271
        %v4350 = vmul.f32 %v4198, %v4275
        %v4351 = vmul.f32 %v4197, %v4279
        %v4352 = vmul.f32 %v4196, %v4283
        %v4353 = vmul.f32 %v4195, %v4287
        %v4354 = vmul.f32 %v4194, %v4291
        %v4355 = vmul.f32 %v4193, %v4295
        %v4356 = vmul.f32 %v4192, %v4299
        %v4357 = vmul.f32 %v4191, %v4303
        %v4358 = vmul.f32 %v4190, %v4307
        %v4359 = vmul.f32 %v4189, %v4311
        %v4360 = vmul.f32 %v4188, %v4315
        %v4361 = vmul.f32 %v4187, %v4319
        %v4362 = vmul.f32 %v4186, %v4323
        %v4363 = vmul.f32 %v4185, %v4327
        %v4364 = vmul.f32 %v4184, %v4331
        %v4365 = vld [vmem:[#allocation13] sm:$0xff]
        %v4366 = vld [vmem:[#allocation13 + $0x8] sm:$0xff]
        %v4367 = vld [vmem:[#allocation13 + $0x10] sm:$0xff]
        %v4368 = vld [vmem:[#allocation13 + $0x18] sm:$0xff]
        %v4369 = vld [vmem:[#allocation13 + $0x20] sm:$0xff]
        %v4370 = vld [vmem:[#allocation13 + $0x28] sm:$0xff]
        %v4371 = vld [vmem:[#allocation13 + $0x30] sm:$0xff]
        %v4372 = vld [vmem:[#allocation13 + $0x38] sm:$0xff]
        %v4373 = vld [vmem:[#allocation13 + $0x40] sm:$0xff]
        %v4374 = vld [vmem:[#allocation13 + $0x48] sm:$0xff]
        %v4375 = vld [vmem:[#allocation13 + $0x50] sm:$0xff]
        %v4376 = vld [vmem:[#allocation13 + $0x58] sm:$0xff]
        %v4377 = vld [vmem:[#allocation13 + $0x60] sm:$0xff]
        %v4378 = vld [vmem:[#allocation13 + $0x68] sm:$0xff]
        %v4379 = vld [vmem:[#allocation13 + $0x70] sm:$0xff]
        %v4380 = vld [vmem:[#allocation13 + $0x78] sm:$0xff]
        %v4381 = vld [vmem:[#allocation13 + $0x80] sm:$0xff]
        %v4382 = vld [vmem:[#allocation13 + $0x88] sm:$0xff]
        %v4383 = vld [vmem:[#allocation13 + $0x90] sm:$0xff]
        %v4384 = vld [vmem:[#allocation13 + $0x98] sm:$0xff]
        %v4385 = vld [vmem:[#allocation13 + $0xa0] sm:$0xff]
        %v4386 = vld [vmem:[#allocation13 + $0xa8] sm:$0xff]
        %v4387 = vld [vmem:[#allocation13 + $0xb0] sm:$0xff]
        %v4388 = vld [vmem:[#allocation13 + $0xb8] sm:$0xff]
        %v4389 = vld [vmem:[#allocation13 + $0xc0] sm:$0xff]
        %v4390 = vld [vmem:[#allocation13 + $0xc8] sm:$0xff]
        %v4391 = vld [vmem:[#allocation13 + $0xd0] sm:$0xff]
        %v4392 = vld [vmem:[#allocation13 + $0xd8] sm:$0xff]
        %v4393 = vld [vmem:[#allocation13 + $0xe0] sm:$0xff]
        %v4394 = vld [vmem:[#allocation13 + $0xe8] sm:$0xff]
        %v4395 = vld [vmem:[#allocation13 + $0xf0] sm:$0xff]
        %v4396 = vld [vmem:[#allocation13 + $0xf8] sm:$0xff]
        %v4397 = vld [vmem:[#allocation13 + $0x100] sm:$0xff]
        %v4398 = vld [vmem:[#allocation13 + $0x108] sm:$0xff]
        %v4399 = vld [vmem:[#allocation13 + $0x110] sm:$0xff]
        %v4400 = vld [vmem:[#allocation13 + $0x118] sm:$0xff]
        %v4401 = vld [vmem:[#allocation13 + $0x120] sm:$0xff]
        %v4402 = vld [vmem:[#allocation13 + $0x128] sm:$0xff]
        %v4403 = vld [vmem:[#allocation13 + $0x130] sm:$0xff]
        %v4404 = vld [vmem:[#allocation13 + $0x138] sm:$0xff]
        %v4405 = vld [vmem:[#allocation13 + $0x140] sm:$0xff]
        %v4406 = vld [vmem:[#allocation13 + $0x148] sm:$0xff]
        %v4407 = vld [vmem:[#allocation13 + $0x150] sm:$0xff]
        %v4408 = vld [vmem:[#allocation13 + $0x158] sm:$0xff]
        %v4409 = vld [vmem:[#allocation13 + $0x160] sm:$0xff]
        %v4410 = vld [vmem:[#allocation13 + $0x168] sm:$0xff]
        %v4411 = vld [vmem:[#allocation13 + $0x170] sm:$0xff]
        %v4412 = vld [vmem:[#allocation13 + $0x178] sm:$0xff]
        %v4413 = vpack.c.bf16 %v3949, %v3948
        %v4414 = vpack.c.bf16 %v4109, %v4108
        %v4415 = vpack.c.bf16 %v4334, %v4333
        %v4416 = vpack.c.bf16 %v3951, %v3950
        %v4417 = vpack.c.bf16 %v4111, %v4110
        %v4418 = vpack.c.bf16 %v4336, %v4335
        %v4419 = vpack.c.bf16 %v3953, %v3952
        %v4420 = vpack.c.bf16 %v4113, %v4112
        %v4421 = vpack.c.bf16 %v4338, %v4337
        %v4422 = vpack.c.bf16 %v3955, %v3954
        %v4423 = vpack.c.bf16 %v4115, %v4114
        %v4424 = vpack.c.bf16 %v4340, %v4339
        %v4425 = vpack.c.bf16 %v3957, %v3956
        %v4426 = vpack.c.bf16 %v4117, %v4116
        %v4427 = vpack.c.bf16 %v4342, %v4341
        %v4428 = vpack.c.bf16 %v3959, %v3958
        %v4429 = vpack.c.bf16 %v4119, %v4118
        %v4430 = vpack.c.bf16 %v4344, %v4343
        %v4431 = vpack.c.bf16 %v3961, %v3960
        %v4432 = vpack.c.bf16 %v4121, %v4120
        %v4433 = vpack.c.bf16 %v4346, %v4345
        %v4434 = vpack.c.bf16 %v3963, %v3962
        %v4435 = vpack.c.bf16 %v4123, %v4122
        %v4436 = vpack.c.bf16 %v4348, %v4347
        %v4437 = vpack.c.bf16 %v3965, %v3964
        %v4438 = vpack.c.bf16 %v4125, %v4124
        %v4439 = vpack.c.bf16 %v4350, %v4349
        %v4440 = vpack.c.bf16 %v3967, %v3966
        %v4441 = vpack.c.bf16 %v4127, %v4126
        %v4442 = vpack.c.bf16 %v4352, %v4351
        %v4443 = vpack.c.bf16 %v3969, %v3968
        %v4444 = vpack.c.bf16 %v4129, %v4128
        %v4445 = vpack.c.bf16 %v4354, %v4353
        %v4446 = vpack.c.bf16 %v3971, %v3970
        %v4447 = vpack.c.bf16 %v4131, %v4130
        %v4448 = vpack.c.bf16 %v4356, %v4355
        %v4449 = vpack.c.bf16 %v3973, %v3972
        %v4450 = vpack.c.bf16 %v4133, %v4132
        %v4451 = vpack.c.bf16 %v4358, %v4357
        %v4452 = vpack.c.bf16 %v3975, %v3974
        %v4453 = vpack.c.bf16 %v4135, %v4134
        %v4454 = vpack.c.bf16 %v4360, %v4359
        %v4455 = vpack.c.bf16 %v3977, %v3976
        %v4456 = vpack.c.bf16 %v4137, %v4136
        %v4457 = vpack.c.bf16 %v4362, %v4361
        %v4458 = vpack.c.bf16 %v3979, %v3978
        %v4459 = vpack.c.bf16 %v4139, %v4138
        %v4460 = vpack.c.bf16 %v4364, %v4363
        %v4461 = vpack.c.bf16 %v4366, %v4365
        %v4462 = vpack.c.bf16 %v4368, %v4367
        %v4463 = vpack.c.bf16 %v4370, %v4369
        %v4464 = vpack.c.bf16 %v4372, %v4371
        %v4465 = vpack.c.bf16 %v4374, %v4373
        %v4466 = vpack.c.bf16 %v4376, %v4375
        %v4467 = vpack.c.bf16 %v4378, %v4377
        %v4468 = vpack.c.bf16 %v4380, %v4379
        %v4469 = vpack.c.bf16 %v4382, %v4381
        %v4470 = vpack.c.bf16 %v4384, %v4383
        %v4471 = vpack.c.bf16 %v4386, %v4385
        %v4472 = vpack.c.bf16 %v4388, %v4387
        %v4473 = vpack.c.bf16 %v4390, %v4389
        %v4474 = vpack.c.bf16 %v4392, %v4391
        %v4475 = vpack.c.bf16 %v4394, %v4393
        %v4476 = vpack.c.bf16 %v4396, %v4395
        %v4477 = vpack.c.bf16 %v4398, %v4397
        %v4478 = vpack.c.bf16 %v4400, %v4399
        %v4479 = vpack.c.bf16 %v4402, %v4401
        %v4480 = vpack.c.bf16 %v4404, %v4403
        %v4481 = vpack.c.bf16 %v4406, %v4405
        %v4482 = vpack.c.bf16 %v4408, %v4407
        %v4483 = vpack.c.bf16 %v4410, %v4409
        %v4484 = vpack.c.bf16 %v4412, %v4411
        %4485 = vset.pattern.permute.xlu0 12
        %4486 = vperm.xlu0 %4485, %v1004
        %v4487 = vpop.permute.xlu0 %4486
        %4489 = vset.pattern.permute.xlu0 12
        %4490 = vperm.xlu0 %4489, %v1005
        %v4491 = vpop.permute.xlu0 %4490
        %4493 = vset.pattern.permute.xlu0 12
        %4494 = vperm.xlu0 %4493, %v1006
        %v4495 = vpop.permute.xlu0 %4494
        %4497 = vset.pattern.permute.xlu0 12
        %4498 = vperm.xlu0 %4497, %v1007
        %v4499 = vpop.permute.xlu0 %4498
        %4501 = vset.pattern.permute.xlu0 12
        %4502 = vperm.xlu0 %4501, %v1008
        %v4503 = vpop.permute.xlu0 %4502
        %4505 = vset.pattern.permute.xlu0 12
        %4506 = vperm.xlu0 %4505, %v1009
        %v4507 = vpop.permute.xlu0 %4506
        %4509 = vset.pattern.permute.xlu0 12
        %4510 = vperm.xlu0 %4509, %v1010
        %v4511 = vpop.permute.xlu0 %4510
        %4513 = vset.pattern.permute.xlu0 12
        %4514 = vperm.xlu0 %4513, %v1011
        %v4515 = vpop.permute.xlu0 %4514
        %4517 = vset.pattern.permute.xlu0 12
        %4518 = vperm.xlu0 %4517, %v1012
        %v4519 = vpop.permute.xlu0 %4518
        %4521 = vset.pattern.permute.xlu0 12
        %4522 = vperm.xlu0 %4521, %v1013
        %v4523 = vpop.permute.xlu0 %4522
        %4525 = vset.pattern.permute.xlu0 12
        %4526 = vperm.xlu0 %4525, %v1014
        %v4527 = vpop.permute.xlu0 %4526
        %4529 = vset.pattern.permute.xlu0 12
        %4530 = vperm.xlu0 %4529, %v1015
        %v4531 = vpop.permute.xlu0 %4530
        %4533 = vset.pattern.permute.xlu0 12
        %4534 = vperm.xlu0 %4533, %v1016
        %v4535 = vpop.permute.xlu0 %4534
        %4537 = vset.pattern.permute.xlu0 12
        %4538 = vperm.xlu0 %4537, %v1017
        %v4539 = vpop.permute.xlu0 %4538
        %4541 = vset.pattern.permute.xlu0 12
        %4542 = vperm.xlu0 %4541, %v1018
        %v4543 = vpop.permute.xlu0 %4542
        %4545 = vset.pattern.permute.xlu0 12
        %4546 = vperm.xlu0 %4545, %v1019
        %v4547 = vpop.permute.xlu0 %4546
        %4549 = vset.pattern.permute.xlu0 12
        %4550 = vperm.xlu0 %4549, %v1020
        %v4551 = vpop.permute.xlu0 %4550
        %4553 = vset.pattern.permute.xlu0 12
        %4554 = vperm.xlu0 %4553, %v1021
        %v4555 = vpop.permute.xlu0 %4554
        %4557 = vset.pattern.permute.xlu0 12
        %4558 = vperm.xlu0 %4557, %v1022
        %v4559 = vpop.permute.xlu0 %4558
        %4561 = vset.pattern.permute.xlu0 12
        %4562 = vperm.xlu0 %4561, %v1023
        %v4563 = vpop.permute.xlu0 %4562
        %4565 = vset.pattern.permute.xlu0 12
        %4566 = vperm.xlu0 %4565, %v1024
        %v4567 = vpop.permute.xlu0 %4566
        %4569 = vset.pattern.permute.xlu0 12
        %4570 = vperm.xlu0 %4569, %v1025
        %v4571 = vpop.permute.xlu0 %4570
        %4573 = vset.pattern.permute.xlu0 12
        %4574 = vperm.xlu0 %4573, %v1026
        %v4575 = vpop.permute.xlu0 %4574
        %4577 = vset.pattern.permute.xlu0 12
        %4578 = vperm.xlu0 %4577, %v1027
        %v4579 = vpop.permute.xlu0 %4578
        %4581 = vset.pattern.permute.xlu0 12
        %4582 = vperm.xlu0 %4581, %v1028
        %v4583 = vpop.permute.xlu0 %4582
        %4585 = vset.pattern.permute.xlu0 12
        %4586 = vperm.xlu0 %4585, %v1029
        %v4587 = vpop.permute.xlu0 %4586
        %4589 = vset.pattern.permute.xlu0 12
        %4590 = vperm.xlu0 %4589, %v1030
        %v4591 = vpop.permute.xlu0 %4590
        %4593 = vset.pattern.permute.xlu0 12
        %4594 = vperm.xlu0 %4593, %v1031
        %v4595 = vpop.permute.xlu0 %4594
        %4597 = vset.pattern.permute.xlu0 12
        %4598 = vperm.xlu0 %4597, %v1032
        %v4599 = vpop.permute.xlu0 %4598
        %4601 = vset.pattern.permute.xlu0 12
        %4602 = vperm.xlu0 %4601, %v1033
        %v4603 = vpop.permute.xlu0 %4602
        %4605 = vset.pattern.permute.xlu0 12
        %4606 = vperm.xlu0 %4605, %v1034
        %v4607 = vpop.permute.xlu0 %4606
        %4609 = vset.pattern.permute.xlu0 12
        %4610 = vperm.xlu0 %4609, %v1035
        %v4611 = vpop.permute.xlu0 %4610
        %v4613 = vmul.f32 %v3819, %v4487
        %v4614 = vmul.f32 %v3818, %v4491
        %v4615 = vmul.f32 %v3817, %v4495
        %v4616 = vmul.f32 %v3816, %v4499
        %v4617 = vmul.f32 %v3815, %v4503
        %v4618 = vmul.f32 %v3814, %v4507
        %v4619 = vmul.f32 %v3813, %v4511
        %v4620 = vmul.f32 %v3812, %v4515
        %v4621 = vmul.f32 %v3811, %v4519
        %v4622 = vmul.f32 %v3810, %v4523
        %v4623 = vmul.f32 %v3809, %v4527
        %v4624 = vmul.f32 %v3808, %v4531
        %v4625 = vmul.f32 %v3807, %v4535
        %v4626 = vmul.f32 %v3806, %v4539
        %v4627 = vmul.f32 %v3805, %v4543
        %v4628 = vmul.f32 %v3804, %v4547
        %v4629 = vmul.f32 %v3803, %v4551
        %v4630 = vmul.f32 %v3802, %v4555
        %v4631 = vmul.f32 %v3801, %v4559
        %v4632 = vmul.f32 %v3800, %v4563
        %v4633 = vmul.f32 %v3799, %v4567
        %v4634 = vmul.f32 %v3798, %v4571
        %v4635 = vmul.f32 %v3797, %v4575
        %v4636 = vmul.f32 %v3796, %v4579
        %v4637 = vmul.f32 %v3795, %v4583
        %v4638 = vmul.f32 %v3794, %v4587
        %v4639 = vmul.f32 %v3793, %v4591
        %v4640 = vmul.f32 %v3792, %v4595
        %v4641 = vmul.f32 %v3791, %v4599
        %v4642 = vmul.f32 %v3790, %v4603
        %v4643 = vmul.f32 %v3789, %v4607
        %v4644 = vmul.f32 %v3788, %v4611
        %4645 = vset.pattern.permute.xlu0 14
        %4646 = vperm.xlu0 %4645, %v1004
        %v4647 = vpop.permute.xlu0 %4646
        %4649 = vset.pattern.permute.xlu0 14
        %4650 = vperm.xlu0 %4649, %v1005
        %v4651 = vpop.permute.xlu0 %4650
        %4653 = vset.pattern.permute.xlu0 14
        %4654 = vperm.xlu0 %4653, %v1006
        %v4655 = vpop.permute.xlu0 %4654
        %4657 = vset.pattern.permute.xlu0 14
        %4658 = vperm.xlu0 %4657, %v1007
        %v4659 = vpop.permute.xlu0 %4658
        %4661 = vset.pattern.permute.xlu0 14
        %4662 = vperm.xlu0 %4661, %v1008
        %v4663 = vpop.permute.xlu0 %4662
        %4665 = vset.pattern.permute.xlu0 14
        %4666 = vperm.xlu0 %4665, %v1009
        %v4667 = vpop.permute.xlu0 %4666
        %4669 = vset.pattern.permute.xlu0 14
        %4670 = vperm.xlu0 %4669, %v1010
        %v4671 = vpop.permute.xlu0 %4670
        %4673 = vset.pattern.permute.xlu0 14
        %4674 = vperm.xlu0 %4673, %v1011
        %v4675 = vpop.permute.xlu0 %4674
        %4677 = vset.pattern.permute.xlu0 14
        %4678 = vperm.xlu0 %4677, %v1012
        %v4679 = vpop.permute.xlu0 %4678
        %4681 = vset.pattern.permute.xlu0 14
        %4682 = vperm.xlu0 %4681, %v1013
        %v4683 = vpop.permute.xlu0 %4682
        %4685 = vset.pattern.permute.xlu0 14
        %4686 = vperm.xlu0 %4685, %v1014
        %v4687 = vpop.permute.xlu0 %4686
        %4689 = vset.pattern.permute.xlu0 14
        %4690 = vperm.xlu0 %4689, %v1015
        %v4691 = vpop.permute.xlu0 %4690
        %4693 = vset.pattern.permute.xlu0 14
        %4694 = vperm.xlu0 %4693, %v1016
        %v4695 = vpop.permute.xlu0 %4694
        %4697 = vset.pattern.permute.xlu0 14
        %4698 = vperm.xlu0 %4697, %v1017
        %v4699 = vpop.permute.xlu0 %4698
        %4701 = vset.pattern.permute.xlu0 14
        %4702 = vperm.xlu0 %4701, %v1018
        %v4703 = vpop.permute.xlu0 %4702
        %4705 = vset.pattern.permute.xlu0 14
        %4706 = vperm.xlu0 %4705, %v1019
        %v4707 = vpop.permute.xlu0 %4706
        %4709 = vset.pattern.permute.xlu0 14
        %4710 = vperm.xlu0 %4709, %v1020
        %v4711 = vpop.permute.xlu0 %4710
        %4713 = vset.pattern.permute.xlu0 14
        %4714 = vperm.xlu0 %4713, %v1021
        %v4715 = vpop.permute.xlu0 %4714
        %4717 = vset.pattern.permute.xlu0 14
        %4718 = vperm.xlu0 %4717, %v1022
        %v4719 = vpop.permute.xlu0 %4718
        %4721 = vset.pattern.permute.xlu0 14
        %4722 = vperm.xlu0 %4721, %v1023
        %v4723 = vpop.permute.xlu0 %4722
        %4725 = vset.pattern.permute.xlu0 14
        %4726 = vperm.xlu0 %4725, %v1024
        %v4727 = vpop.permute.xlu0 %4726
        %4729 = vset.pattern.permute.xlu0 14
        %4730 = vperm.xlu0 %4729, %v1025
        %v4731 = vpop.permute.xlu0 %4730
        %4733 = vset.pattern.permute.xlu0 14
        %4734 = vperm.xlu0 %4733, %v1026
        %v4735 = vpop.permute.xlu0 %4734
        %4737 = vset.pattern.permute.xlu0 14
        %4738 = vperm.xlu0 %4737, %v1027
        %v4739 = vpop.permute.xlu0 %4738
        %4741 = vset.pattern.permute.xlu0 14
        %4742 = vperm.xlu0 %4741, %v1028
        %v4743 = vpop.permute.xlu0 %4742
        %4745 = vset.pattern.permute.xlu0 14
        %4746 = vperm.xlu0 %4745, %v1029
        %v4747 = vpop.permute.xlu0 %4746
        %4749 = vset.pattern.permute.xlu0 14
        %4750 = vperm.xlu0 %4749, %v1030
        %v4751 = vpop.permute.xlu0 %4750
        %4753 = vset.pattern.permute.xlu0 14
        %4754 = vperm.xlu0 %4753, %v1031
        %v4755 = vpop.permute.xlu0 %4754
        %4757 = vset.pattern.permute.xlu0 14
        %4758 = vperm.xlu0 %4757, %v1032
        %v4759 = vpop.permute.xlu0 %4758
        %4761 = vset.pattern.permute.xlu0 14
        %4762 = vperm.xlu0 %4761, %v1033
        %v4763 = vpop.permute.xlu0 %4762
        %4765 = vset.pattern.permute.xlu0 14
        %4766 = vperm.xlu0 %4765, %v1034
        %v4767 = vpop.permute.xlu0 %4766
        %4769 = vset.pattern.permute.xlu0 14
        %4770 = vperm.xlu0 %4769, %v1035
        %v4771 = vpop.permute.xlu0 %4770
        %v4773 = vmul.f32 %v4203, %v4647
        %v4774 = vmul.f32 %v4202, %v4651
        %v4775 = vmul.f32 %v4201, %v4655
        %v4776 = vmul.f32 %v4200, %v4659
        %v4777 = vmul.f32 %v4199, %v4663
        %v4778 = vmul.f32 %v4198, %v4667
        %v4779 = vmul.f32 %v4197, %v4671
        %v4780 = vmul.f32 %v4196, %v4675
        %v4781 = vmul.f32 %v4195, %v4679
        %v4782 = vmul.f32 %v4194, %v4683
        %v4783 = vmul.f32 %v4193, %v4687
        %v4784 = vmul.f32 %v4192, %v4691
        %v4785 = vmul.f32 %v4191, %v4695
        %v4786 = vmul.f32 %v4190, %v4699
        %v4787 = vmul.f32 %v4189, %v4703
        %v4788 = vmul.f32 %v4188, %v4707
        %v4789 = vmul.f32 %v4187, %v4711
        %v4790 = vmul.f32 %v4186, %v4715
        %v4791 = vmul.f32 %v4185, %v4719
        %v4792 = vmul.f32 %v4184, %v4723
        %v4793 = vmul.f32 %v4183, %v4727
        %v4794 = vmul.f32 %v4182, %v4731
        %v4795 = vmul.f32 %v4181, %v4735
        %v4796 = vmul.f32 %v4180, %v4739
        %v4797 = vmul.f32 %v4179, %v4743
        %v4798 = vmul.f32 %v4178, %v4747
        %v4799 = vmul.f32 %v4177, %v4751
        %v4800 = vmul.f32 %v4176, %v4755
        %v4801 = vmul.f32 %v4175, %v4759
        %v4802 = vmul.f32 %v4174, %v4763
        %v4803 = vmul.f32 %v4173, %v4767
        %v4804 = vmul.f32 %v4204, %v4771
        %v4805 = vld [vmem:[#allocation13 + $0x180] sm:$0xff]
        %v4806 = vld [vmem:[#allocation13 + $0x188] sm:$0xff]
        %v4807 = vld [vmem:[#allocation13 + $0x190] sm:$0xff]
        %v4808 = vld [vmem:[#allocation13 + $0x198] sm:$0xff]
        %v4809 = vld [vmem:[#allocation13 + $0x1a0] sm:$0xff]
        %v4810 = vld [vmem:[#allocation13 + $0x1a8] sm:$0xff]
        %v4811 = vld [vmem:[#allocation13 + $0x1b0] sm:$0xff]
        %v4812 = vld [vmem:[#allocation13 + $0x1b8] sm:$0xff]
        %v4813 = vld [vmem:[#allocation13 + $0x1c0] sm:$0xff]
        %v4814 = vld [vmem:[#allocation13 + $0x1c8] sm:$0xff]
        %v4815 = vld [vmem:[#allocation13 + $0x1d0] sm:$0xff]
        %v4816 = vld [vmem:[#allocation13 + $0x1d8] sm:$0xff]
        %v4817 = vld [vmem:[#allocation13 + $0x1e0] sm:$0xff]
        %v4818 = vld [vmem:[#allocation13 + $0x1e8] sm:$0xff]
        %v4819 = vld [vmem:[#allocation13 + $0x1f0] sm:$0xff]
        %v4820 = vld [vmem:[#allocation13 + $0x1f8] sm:$0xff]
        %v4821 = vld [vmem:[#allocation13 + $0x200] sm:$0xff]
        %v4822 = vld [vmem:[#allocation13 + $0x208] sm:$0xff]
        %v4823 = vld [vmem:[#allocation13 + $0x210] sm:$0xff]
        %v4824 = vld [vmem:[#allocation13 + $0x218] sm:$0xff]
        %v4825 = vld [vmem:[#allocation13 + $0x220] sm:$0xff]
        %v4826 = vld [vmem:[#allocation13 + $0x228] sm:$0xff]
        %v4827 = vld [vmem:[#allocation13 + $0x230] sm:$0xff]
        %v4828 = vld [vmem:[#allocation13 + $0x238] sm:$0xff]
        %v4829 = vld [vmem:[#allocation13 + $0x240] sm:$0xff]
        %v4830 = vld [vmem:[#allocation13 + $0x248] sm:$0xff]
        %v4831 = vld [vmem:[#allocation13 + $0x250] sm:$0xff]
        %v4832 = vld [vmem:[#allocation13 + $0x258] sm:$0xff]
        %v4833 = vld [vmem:[#allocation13 + $0x260] sm:$0xff]
        %v4834 = vld [vmem:[#allocation13 + $0x268] sm:$0xff]
        %v4835 = vld [vmem:[#allocation13 + $0x270] sm:$0xff]
        %v4836 = vld [vmem:[#allocation13 + $0x278] sm:$0xff]
        %v4837 = vld [vmem:[#allocation13 + $0x280] sm:$0xff]
        %v4838 = vld [vmem:[#allocation13 + $0x288] sm:$0xff]
        %v4839 = vld [vmem:[#allocation13 + $0x290] sm:$0xff]
        %v4840 = vld [vmem:[#allocation13 + $0x298] sm:$0xff]
        %v4841 = vld [vmem:[#allocation13 + $0x2a0] sm:$0xff]
        %v4842 = vld [vmem:[#allocation13 + $0x2a8] sm:$0xff]
        %v4843 = vld [vmem:[#allocation13 + $0x2b0] sm:$0xff]
        %v4844 = vld [vmem:[#allocation13 + $0x2b8] sm:$0xff]
        %v4845 = vld [vmem:[#allocation13 + $0x2c0] sm:$0xff]
        %v4846 = vld [vmem:[#allocation13 + $0x2c8] sm:$0xff]
        %v4847 = vld [vmem:[#allocation13 + $0x2d0] sm:$0xff]
        %v4848 = vld [vmem:[#allocation13 + $0x2d8] sm:$0xff]
        %v4849 = vld [vmem:[#allocation13 + $0x2e0] sm:$0xff]
        %v4850 = vld [vmem:[#allocation13 + $0x2e8] sm:$0xff]
        %v4851 = vld [vmem:[#allocation13 + $0x2f0] sm:$0xff]
        %v4852 = vld [vmem:[#allocation13 + $0x2f8] sm:$0xff]
        %v4853 = vpack.c.bf16 %v4614, %v4613
        %v4854 = vpack.c.bf16 %v4774, %v4773
        %v4855 = vpack.c.bf16 %v4616, %v4615
        %v4856 = vpack.c.bf16 %v4776, %v4775
        %v4857 = vpack.c.bf16 %v4618, %v4617
        %v4858 = vpack.c.bf16 %v4778, %v4777
        %v4859 = vpack.c.bf16 %v4620, %v4619
        %v4860 = vpack.c.bf16 %v4780, %v4779
        %v4861 = vpack.c.bf16 %v4622, %v4621
        %v4862 = vpack.c.bf16 %v4782, %v4781
        %v4863 = vpack.c.bf16 %v4624, %v4623
        %v4864 = vpack.c.bf16 %v4784, %v4783
        %v4865 = vpack.c.bf16 %v4626, %v4625
        %v4866 = vpack.c.bf16 %v4786, %v4785
        %v4867 = vpack.c.bf16 %v4628, %v4627
        %v4868 = vpack.c.bf16 %v4788, %v4787
        %v4869 = vpack.c.bf16 %v4630, %v4629
        %v4870 = vpack.c.bf16 %v4790, %v4789
        %v4871 = vpack.c.bf16 %v4632, %v4631
        %v4872 = vpack.c.bf16 %v4792, %v4791
        %v4873 = vpack.c.bf16 %v4634, %v4633
        %v4874 = vpack.c.bf16 %v4794, %v4793
        %v4875 = vpack.c.bf16 %v4636, %v4635
        %v4876 = vpack.c.bf16 %v4796, %v4795
        %v4877 = vpack.c.bf16 %v4638, %v4637
        %v4878 = vpack.c.bf16 %v4798, %v4797
        %v4879 = vpack.c.bf16 %v4640, %v4639
        %v4880 = vpack.c.bf16 %v4800, %v4799
        %v4881 = vpack.c.bf16 %v4642, %v4641
        %v4882 = vpack.c.bf16 %v4802, %v4801
        %v4883 = vpack.c.bf16 %v4644, %v4643
        %v4884 = vpack.c.bf16 %v4804, %v4803
        %v4885 = vpack.c.bf16 %v4806, %v4805
        %v4886 = vpack.c.bf16 %v4808, %v4807
        %v4887 = vpack.c.bf16 %v4810, %v4809
        %v4888 = vpack.c.bf16 %v4812, %v4811
        %v4889 = vpack.c.bf16 %v4814, %v4813
        %v4890 = vpack.c.bf16 %v4816, %v4815
        %v4891 = vpack.c.bf16 %v4818, %v4817
        %v4892 = vpack.c.bf16 %v4820, %v4819
        %v4893 = vpack.c.bf16 %v4822, %v4821
        %v4894 = vpack.c.bf16 %v4824, %v4823
        %v4895 = vpack.c.bf16 %v4826, %v4825
        %v4896 = vpack.c.bf16 %v4828, %v4827
        %v4897 = vpack.c.bf16 %v4830, %v4829
        %v4898 = vpack.c.bf16 %v4832, %v4831
        %v4899 = vpack.c.bf16 %v4834, %v4833
        %v4900 = vpack.c.bf16 %v4836, %v4835
        %v4901 = vpack.c.bf16 %v4838, %v4837
        %v4902 = vpack.c.bf16 %v4840, %v4839
        %v4903 = vpack.c.bf16 %v4842, %v4841
        %v4904 = vpack.c.bf16 %v4844, %v4843
        %v4905 = vpack.c.bf16 %v4846, %v4845
        %v4906 = vpack.c.bf16 %v4848, %v4847
        %v4907 = vpack.c.bf16 %v4850, %v4849
        %v4908 = vpack.c.bf16 %v4852, %v4851
        %4909 = vmatprep.subr.bf16.mxu0 0
        %4910 = vmatpush1.bf16.msra.mxu0 %v4885
        %4911 = vmatprep.subr.bf16.mxu0 0
        %4912 = vmatpush1.bf16.msra.mxu0 %v4886
        %4913 = vmatprep.subr.bf16.mxu0 0
        %4914 = vmatpush1.bf16.msra.mxu0 %v4887
        %4915 = vmatprep.subr.bf16.mxu0 0
        %4916 = vmatpush1.bf16.msra.mxu0 %v4888
        %4917 = vmatprep.subr.bf16.mxu0 0
        %4918 = vmatpush1.bf16.msra.mxu0 %v4889
        %4919 = vmatprep.subr.bf16.mxu0 0
        %4920 = vmatpush1.bf16.msra.mxu0 %v4890
        %4921 = vmatprep.subr.bf16.mxu0 0
        %4922 = vmatpush1.bf16.msra.mxu0 %v4891
        %4923 = vmatprep.subr.bf16.mxu0 0
        %4924 = vmatpush1.bf16.msra.mxu0 %v4892
        %4925 = vmatprep.subr.bf16.mxu0 0
        %4926 = vmatpush1.bf16.msra.mxu0 %v4893
        %4927 = vmatprep.subr.bf16.mxu0 0
        %4928 = vmatpush1.bf16.msra.mxu0 %v4894
        %4929 = vmatprep.subr.bf16.mxu0 0
        %4930 = vmatpush1.bf16.msra.mxu0 %v4895
        %4931 = vmatprep.subr.bf16.mxu0 0
        %4932 = vmatpush1.bf16.msra.mxu0 %v4896
        %4933 = vmatprep.subr.bf16.mxu0 0
        %4934 = vmatpush1.bf16.msra.mxu0 %v4897
        %4935 = vmatprep.subr.bf16.mxu0 0
        %4936 = vmatpush1.bf16.msra.mxu0 %v4898
        %4937 = vmatprep.subr.bf16.mxu0 0
        %4938 = vmatpush1.bf16.msra.mxu0 %v4899
        %4939 = vmatprep.subr.bf16.mxu0 0
        %4940 = vmatpush1.bf16.msra.mxu0 %v4900
        %4941 = vmatprep.mubr.bf16.mxu0 %v752
        %4942 = vmatmul.mubr.bf16.gmra.mrb[0].mxu0 %v4853
        %v4943 = vpop.f32.mrb[0].mxu0
        %v4944 = vadd.f32 0.0, %v4943
        %v4945 = vpop.f32.mrb[0].mxu0
        %v4946 = vpop.f32.mrb[0].mxu0
        %v4947 = vadd.f32 0.0, %v4946
        %v4948 = vpop.f32.mrb[0].mxu0
        %4949 = vmatprep.mubr.bf16.mxu0 %v753
        %4950 = vmatmul.mubr.bf16.gmra.mrb[0].mxu0 %v4855
        %v4951 = vpop.f32.mrb[0].mxu0
        %v4952 = vadd.f32 0.0, %v4951
        %v4953 = vpop.f32.mrb[0].mxu0
        %v4954 = vpop.f32.mrb[0].mxu0
        %v4955 = vadd.f32 0.0, %v4954
        %v4956 = vpop.f32.mrb[0].mxu0
        %4957 = vmatprep.mubr.bf16.mxu0 %v754
        %4958 = vmatmul.mubr.bf16.gmra.mrb[0].mxu0 %v4857
        %v4959 = vpop.f32.mrb[0].mxu0
        %v4960 = vadd.f32 0.0, %v4959
        %v4961 = vpop.f32.mrb[0].mxu0
        %v4962 = vpop.f32.mrb[0].mxu0
        %v4963 = vadd.f32 0.0, %v4962
        %v4964 = vpop.f32.mrb[0].mxu0
        %4965 = vmatprep.mubr.bf16.mxu0 %v755
        %4966 = vmatmul.mubr.bf16.gmra.mrb[0].mxu0 %v4859
        %v4967 = vpop.f32.mrb[0].mxu0
        %v4968 = vadd.f32 0.0, %v4967
        %v4969 = vpop.f32.mrb[0].mxu0
        %v4970 = vpop.f32.mrb[0].mxu0
        %v4971 = vadd.f32 0.0, %v4970
        %v4972 = vpop.f32.mrb[0].mxu0
        %4973 = vmatprep.mubr.bf16.mxu0 %v756
        %4974 = vmatmul.mubr.bf16.gmra.mrb[0].mxu0 %v4861
        %v4975 = vpop.f32.mrb[0].mxu0
        %v4976 = vadd.f32 0.0, %v4975
        %v4977 = vpop.f32.mrb[0].mxu0
        %v4978 = vpop.f32.mrb[0].mxu0
        %v4979 = vadd.f32 0.0, %v4978
        %v4980 = vpop.f32.mrb[0].mxu0
        %4981 = vmatprep.mubr.bf16.mxu0 %v757
        %4982 = vmatmul.mubr.bf16.gmra.mrb[0].mxu0 %v4863
        %v4983 = vpop.f32.mrb[0].mxu0
        %v4984 = vadd.f32 0.0, %v4983
        %v4985 = vpop.f32.mrb[0].mxu0
        %v4986 = vpop.f32.mrb[0].mxu0
        %v4987 = vadd.f32 0.0, %v4986
        %v4988 = vpop.f32.mrb[0].mxu0
        %4989 = vmatprep.mubr.bf16.mxu0 %v758
        %4990 = vmatmul.mubr.bf16.gmra.mrb[0].mxu0 %v4865
        %v4991 = vpop.f32.mrb[0].mxu0
        %v4992 = vadd.f32 0.0, %v4991
        %v4993 = vpop.f32.mrb[0].mxu0
        %v4994 = vpop.f32.mrb[0].mxu0
        %v4995 = vadd.f32 0.0, %v4994
        %v4996 = vpop.f32.mrb[0].mxu0
        %4997 = vmatprep.mubr.bf16.mxu0 %v759
        %4998 = vmatmul.mubr.bf16.gmra.mrb[0].mxu0 %v4867
        %v4999 = vpop.f32.mrb[0].mxu0
        %v5000 = vadd.f32 0.0, %v4999
        %v5001 = vpop.f32.mrb[0].mxu0
        %v5002 = vpop.f32.mrb[0].mxu0
        %v5003 = vadd.f32 0.0, %v5002
        %v5004 = vpop.f32.mrb[0].mxu0
        %5005 = vmatprep.mubr.bf16.mxu0 %v760
        %5006 = vmatmul.mubr.bf16.gmra.mrb[0].mxu0 %v4869
        %v5007 = vpop.f32.mrb[0].mxu0
        %v5008 = vadd.f32 0.0, %v5007
        %v5009 = vpop.f32.mrb[0].mxu0
        %v5010 = vpop.f32.mrb[0].mxu0
        %v5011 = vadd.f32 0.0, %v5010
        %v5012 = vpop.f32.mrb[0].mxu0
        %5013 = vmatprep.mubr.bf16.mxu0 %v761
        %5014 = vmatmul.mubr.bf16.gmra.mrb[0].mxu0 %v4871
        %v5015 = vpop.f32.mrb[0].mxu0
        %v5016 = vadd.f32 0.0, %v5015
        %v5017 = vpop.f32.mrb[0].mxu0
        %v5018 = vpop.f32.mrb[0].mxu0
        %v5019 = vadd.f32 0.0, %v5018
        %v5020 = vpop.f32.mrb[0].mxu0
        %5021 = vmatprep.mubr.bf16.mxu0 %v762
        %5022 = vmatmul.mubr.bf16.gmra.mrb[0].mxu0 %v4873
        %v5023 = vpop.f32.mrb[0].mxu0
        %v5024 = vadd.f32 0.0, %v5023
        %v5025 = vpop.f32.mrb[0].mxu0
        %v5026 = vpop.f32.mrb[0].mxu0
        %v5027 = vadd.f32 0.0, %v5026
        %v5028 = vpop.f32.mrb[0].mxu0
        %5029 = vmatprep.mubr.bf16.mxu0 %v763
        %5030 = vmatmul.mubr.bf16.gmra.mrb[0].mxu0 %v4875
        %v5031 = vpop.f32.mrb[0].mxu0
        %v5032 = vadd.f32 0.0, %v5031
        %v5033 = vpop.f32.mrb[0].mxu0
        %v5034 = vpop.f32.mrb[0].mxu0
        %v5035 = vadd.f32 0.0, %v5034
        %v5036 = vpop.f32.mrb[0].mxu0
        %5037 = vmatprep.mubr.bf16.mxu0 %v764
        %5038 = vmatmul.mubr.bf16.gmra.mrb[0].mxu0 %v4877
        %v5039 = vpop.f32.mrb[0].mxu0
        %v5040 = vadd.f32 0.0, %v5039
        %v5041 = vpop.f32.mrb[0].mxu0
        %v5042 = vpop.f32.mrb[0].mxu0
        %v5043 = vadd.f32 0.0, %v5042
        %v5044 = vpop.f32.mrb[0].mxu0
        %5045 = vmatprep.mubr.bf16.mxu0 %v765
        %5046 = vmatmul.mubr.bf16.gmra.mrb[0].mxu0 %v4879
        %v5047 = vpop.f32.mrb[0].mxu0
        %v5048 = vadd.f32 0.0, %v5047
        %v5049 = vpop.f32.mrb[0].mxu0
        %v5050 = vpop.f32.mrb[0].mxu0
        %v5051 = vadd.f32 0.0, %v5050
        %v5052 = vpop.f32.mrb[0].mxu0
        %5053 = vmatprep.mubr.bf16.mxu0 %v766
        %5054 = vmatmul.mubr.bf16.gmra.mrb[0].mxu0 %v4881
        %v5055 = vpop.f32.mrb[0].mxu0
        %v5056 = vadd.f32 0.0, %v5055
        %v5057 = vpop.f32.mrb[0].mxu0
        %v5058 = vpop.f32.mrb[0].mxu0
        %v5059 = vadd.f32 0.0, %v5058
        %v5060 = vpop.f32.mrb[0].mxu0
        %5061 = vmatprep.mubr.bf16.mxu0 %v767
        %5062 = vmatmul.mubr.bf16.gmra.mrb[0].mxu0 %v4883
        %v5063 = vpop.f32.mrb[0].mxu0
        %v5064 = vadd.f32 0.0, %v5063
        %v5065 = vpop.f32.mrb[0].mxu0
        %v5066 = vpop.f32.mrb[0].mxu0
        %v5067 = vadd.f32 0.0, %v5066
        %v5068 = vpop.f32.mrb[0].mxu0
        %5069 = vdwg.mxu0
        %5070 = vmatprep.subr.bf16.mxu0 0
        %5071 = vmatpush1.bf16.msra.mxu0 %v4901
        %5072 = vmatprep.subr.bf16.mxu0 0
        %5073 = vmatpush1.bf16.msra.mxu0 %v4902
        %5074 = vmatprep.subr.bf16.mxu0 0
        %5075 = vmatpush1.bf16.msra.mxu0 %v4903
        %5076 = vmatprep.subr.bf16.mxu0 0
        %5077 = vmatpush1.bf16.msra.mxu0 %v4904
        %5078 = vmatprep.subr.bf16.mxu0 0
        %5079 = vmatpush1.bf16.msra.mxu0 %v4905
        %5080 = vmatprep.subr.bf16.mxu0 0
        %5081 = vmatpush1.bf16.msra.mxu0 %v4906
        %5082 = vmatprep.subr.bf16.mxu0 0
        %5083 = vmatpush1.bf16.msra.mxu0 %v4907
        %5084 = vmatprep.subr.bf16.mxu0 0
        %5085 = vmatpush1.bf16.msra.mxu0 %v4908
        %5086 = vmatprep.subr.bf16.mxu0 0
        %5087 = vmatpush1.bf16.msra.mxu0 0
        %5088 = vmatprep.subr.bf16.mxu0 0
        %5089 = vmatpush1.bf16.msra.mxu0 0
        %5090 = vmatprep.subr.bf16.mxu0 0
        %5091 = vmatpush1.bf16.msra.mxu0 0
        %5092 = vmatprep.subr.bf16.mxu0 0
        %5093 = vmatpush1.bf16.msra.mxu0 0
        %5094 = vmatprep.subr.bf16.mxu0 0
        %5095 = vmatpush1.bf16.msra.mxu0 0
        %5096 = vmatprep.subr.bf16.mxu0 0
        %5097 = vmatpush1.bf16.msra.mxu0 0
        %5098 = vmatprep.subr.bf16.mxu0 0
        %5099 = vmatpush1.bf16.msra.mxu0 0
        %5100 = vmatprep.subr.bf16.mxu0 0
        %5101 = vmatpush1.bf16.msra.mxu0 0
        %5102 = vmatprep.mubr.bf16.mxu0 0
        %5103 = vmatmul.mubr.bf16.gmra.mrb[0].mxu0 %v4854
        %v5104 = vpop.f32.mrb[0].mxu0
        %v5105 = vadd.f32 %v4944, %v5104
        %v5106 = vpop.f32.mrb[0].mxu0
        %v5107 = vpop.f32.mrb[0].mxu0
        %v5108 = vadd.f32 %v4947, %v5107
        %v5109 = vpop.f32.mrb[0].mxu0
        %5110 = vmatprep.mubr.bf16.mxu0 0
        %5111 = vmatmul.mubr.bf16.gmra.mrb[0].mxu0 %v4856
        %v5112 = vpop.f32.mrb[0].mxu0
        %v5113 = vadd.f32 %v4952, %v5112
        %v5114 = vpop.f32.mrb[0].mxu0
        %v5115 = vpop.f32.mrb[0].mxu0
        %v5116 = vadd.f32 %v4955, %v5115
        %v5117 = vpop.f32.mrb[0].mxu0
        %5118 = vmatprep.mubr.bf16.mxu0 0
        %5119 = vmatmul.mubr.bf16.gmra.mrb[0].mxu0 %v4858
        %v5120 = vpop.f32.mrb[0].mxu0
        %v5121 = vadd.f32 %v4960, %v5120
        %v5122 = vpop.f32.mrb[0].mxu0
        %v5123 = vpop.f32.mrb[0].mxu0
        %v5124 = vadd.f32 %v4963, %v5123
        %v5125 = vpop.f32.mrb[0].mxu0
        %5126 = vmatprep.mubr.bf16.mxu0 0
        %5127 = vmatmul.mubr.bf16.gmra.mrb[0].mxu0 %v4860
        %v5128 = vpop.f32.mrb[0].mxu0
        %v5129 = vadd.f32 %v4968, %v5128
        %v5130 = vpop.f32.mrb[0].mxu0
        %v5131 = vpop.f32.mrb[0].mxu0
        %v5132 = vadd.f32 %v4971, %v5131
        %v5133 = vpop.f32.mrb[0].mxu0
        %5134 = vmatprep.mubr.bf16.mxu0 0
        %5135 = vmatmul.mubr.bf16.gmra.mrb[0].mxu0 %v4862
        %v5136 = vpop.f32.mrb[0].mxu0
        %v5137 = vadd.f32 %v4976, %v5136
        %v5138 = vpop.f32.mrb[0].mxu0
        %v5139 = vpop.f32.mrb[0].mxu0
        %v5140 = vadd.f32 %v4979, %v5139
        %v5141 = vpop.f32.mrb[0].mxu0
        %5142 = vmatprep.mubr.bf16.mxu0 0
        %5143 = vmatmul.mubr.bf16.gmra.mrb[0].mxu0 %v4864
        %v5144 = vpop.f32.mrb[0].mxu0
        %v5145 = vadd.f32 %v4984, %v5144
        %v5146 = vpop.f32.mrb[0].mxu0
        %v5147 = vpop.f32.mrb[0].mxu0
        %v5148 = vadd.f32 %v4987, %v5147
        %v5149 = vpop.f32.mrb[0].mxu0
        %5150 = vmatprep.mubr.bf16.mxu0 0
        %5151 = vmatmul.mubr.bf16.gmra.mrb[0].mxu0 %v4866
        %v5152 = vpop.f32.mrb[0].mxu0
        %v5153 = vadd.f32 %v4992, %v5152
        %v5154 = vpop.f32.mrb[0].mxu0
        %v5155 = vpop.f32.mrb[0].mxu0
        %v5156 = vadd.f32 %v4995, %v5155
        %v5157 = vpop.f32.mrb[0].mxu0
        %5158 = vmatprep.mubr.bf16.mxu0 0
        %5159 = vmatmul.mubr.bf16.gmra.mrb[0].mxu0 %v4868
        %v5160 = vpop.f32.mrb[0].mxu0
        %v5161 = vadd.f32 %v5000, %v5160
        %v5162 = vpop.f32.mrb[0].mxu0
        %v5163 = vpop.f32.mrb[0].mxu0
        %v5164 = vadd.f32 %v5003, %v5163
        %v5165 = vpop.f32.mrb[0].mxu0
        %5166 = vmatprep.mubr.bf16.mxu0 0
        %5167 = vmatmul.mubr.bf16.gmra.mrb[0].mxu0 %v4870
        %v5168 = vpop.f32.mrb[0].mxu0
        %v5169 = vadd.f32 %v5008, %v5168
        %v5170 = vpop.f32.mrb[0].mxu0
        %v5171 = vpop.f32.mrb[0].mxu0
        %v5172 = vadd.f32 %v5011, %v5171
        %v5173 = vpop.f32.mrb[0].mxu0
        %5174 = vmatprep.mubr.bf16.mxu0 0
        %5175 = vmatmul.mubr.bf16.gmra.mrb[0].mxu0 %v4872
        %v5176 = vpop.f32.mrb[0].mxu0
        %v5177 = vadd.f32 %v5016, %v5176
        %v5178 = vpop.f32.mrb[0].mxu0
        %v5179 = vpop.f32.mrb[0].mxu0
        %v5180 = vadd.f32 %v5019, %v5179
        %v5181 = vpop.f32.mrb[0].mxu0
        %5182 = vmatprep.mubr.bf16.mxu0 0
        %5183 = vmatmul.mubr.bf16.gmra.mrb[0].mxu0 %v4874
        %v5184 = vpop.f32.mrb[0].mxu0
        %v5185 = vadd.f32 %v5024, %v5184
        %v5186 = vpop.f32.mrb[0].mxu0
        %v5187 = vpop.f32.mrb[0].mxu0
        %v5188 = vadd.f32 %v5027, %v5187
        %v5189 = vpop.f32.mrb[0].mxu0
        %5190 = vmatprep.mubr.bf16.mxu0 0
        %5191 = vmatmul.mubr.bf16.gmra.mrb[0].mxu0 %v4876
        %v5192 = vpop.f32.mrb[0].mxu0
        %v5193 = vadd.f32 %v5032, %v5192
        %v5194 = vpop.f32.mrb[0].mxu0
        %v5195 = vpop.f32.mrb[0].mxu0
        %v5196 = vadd.f32 %v5035, %v5195
        %v5197 = vpop.f32.mrb[0].mxu0
        %5198 = vmatprep.mubr.bf16.mxu0 0
        %5199 = vmatmul.mubr.bf16.gmra.mrb[0].mxu0 %v4878
        %v5200 = vpop.f32.mrb[0].mxu0
        %v5201 = vadd.f32 %v5040, %v5200
        %v5202 = vpop.f32.mrb[0].mxu0
        %v5203 = vpop.f32.mrb[0].mxu0
        %v5204 = vadd.f32 %v5043, %v5203
        %v5205 = vpop.f32.mrb[0].mxu0
        %5206 = vmatprep.mubr.bf16.mxu0 0
        %5207 = vmatmul.mubr.bf16.gmra.mrb[0].mxu0 %v4880
        %v5208 = vpop.f32.mrb[0].mxu0
        %v5209 = vadd.f32 %v5048, %v5208
        %v5210 = vpop.f32.mrb[0].mxu0
        %v5211 = vpop.f32.mrb[0].mxu0
        %v5212 = vadd.f32 %v5051, %v5211
        %v5213 = vpop.f32.mrb[0].mxu0
        %5214 = vmatprep.mubr.bf16.mxu0 0
        %5215 = vmatmul.mubr.bf16.gmra.mrb[0].mxu0 %v4882
        %v5216 = vpop.f32.mrb[0].mxu0
        %v5217 = vadd.f32 %v5056, %v5216
        %v5218 = vpop.f32.mrb[0].mxu0
        %v5219 = vpop.f32.mrb[0].mxu0
        %v5220 = vadd.f32 %v5059, %v5219
        %v5221 = vpop.f32.mrb[0].mxu0
        %5222 = vmatprep.mubr.bf16.mxu0 0
        %5223 = vmatmul.mubr.bf16.gmra.mrb[0].mxu0 %v4884
        %v5224 = vpop.f32.mrb[0].mxu0
        %v5225 = vadd.f32 %v5064, %v5224
        %v5226 = vpop.f32.mrb[0].mxu0
        %v5227 = vpop.f32.mrb[0].mxu0
        %v5228 = vadd.f32 %v5067, %v5227
        %v5229 = vpop.f32.mrb[0].mxu0
        %5230 = vdwg.mxu0
        %5231 = vmatprep.subr.bf16.mxu0 0
        %5232 = vmatpush1.bf16.msra.mxu0 %v4461
        %5233 = vmatprep.subr.bf16.mxu0 0
        %5234 = vmatpush1.bf16.msra.mxu0 %v4462
        %5235 = vmatprep.subr.bf16.mxu0 0
        %5236 = vmatpush1.bf16.msra.mxu0 %v4463
        %5237 = vmatprep.subr.bf16.mxu0 0
        %5238 = vmatpush1.bf16.msra.mxu0 %v4464
        %5239 = vmatprep.subr.bf16.mxu0 0
        %5240 = vmatpush1.bf16.msra.mxu0 %v4465
        %5241 = vmatprep.subr.bf16.mxu0 0
        %5242 = vmatpush1.bf16.msra.mxu0 %v4466
        %5243 = vmatprep.subr.bf16.mxu0 0
        %5244 = vmatpush1.bf16.msra.mxu0 %v4467
        %5245 = vmatprep.subr.bf16.mxu0 0
        %5246 = vmatpush1.bf16.msra.mxu0 %v4468
        %5247 = vmatprep.subr.bf16.mxu0 0
        %5248 = vmatpush1.bf16.msra.mxu0 %v4469
        %5249 = vmatprep.subr.bf16.mxu0 0
        %5250 = vmatpush1.bf16.msra.mxu0 %v4470
        %5251 = vmatprep.subr.bf16.mxu0 0
        %5252 = vmatpush1.bf16.msra.mxu0 %v4471
        %5253 = vmatprep.subr.bf16.mxu0 0
        %5254 = vmatpush1.bf16.msra.mxu0 %v4472
        %5255 = vmatprep.subr.bf16.mxu0 0
        %5256 = vmatpush1.bf16.msra.mxu0 %v4473
        %5257 = vmatprep.subr.bf16.mxu0 0
        %5258 = vmatpush1.bf16.msra.mxu0 %v4474
        %5259 = vmatprep.subr.bf16.mxu0 0
        %5260 = vmatpush1.bf16.msra.mxu0 %v4475
        %5261 = vmatprep.subr.bf16.mxu0 0
        %5262 = vmatpush1.bf16.msra.mxu0 %v4476
        %5263 = vmatprep.mubr.bf16.mxu0 %v4414
        %5264 = vmatmul.mubr.bf16.gmra.mrb[0].mxu0 %v4413
        %v5265 = vpop.f32.mrb[0].mxu0
        %v5266 = vadd.f32 %v5105, %v5265
        %v5267 = vpop.f32.mrb[0].mxu0
        %v5268 = vpop.f32.mrb[0].mxu0
        %v5269 = vadd.f32 %v5108, %v5268
        %v5270 = vpop.f32.mrb[0].mxu0
        %5271 = vmatprep.mubr.bf16.mxu0 %v4417
        %5272 = vmatmul.mubr.bf16.gmra.mrb[0].mxu0 %v4416
        %v5273 = vpop.f32.mrb[0].mxu0
        %v5274 = vadd.f32 %v5113, %v5273
        %v5275 = vpop.f32.mrb[0].mxu0
        %v5276 = vpop.f32.mrb[0].mxu0
        %v5277 = vadd.f32 %v5116, %v5276
        %v5278 = vpop.f32.mrb[0].mxu0
        %5279 = vmatprep.mubr.bf16.mxu0 %v4420
        %5280 = vmatmul.mubr.bf16.gmra.mrb[0].mxu0 %v4419
        %v5281 = vpop.f32.mrb[0].mxu0
        %v5282 = vadd.f32 %v5121, %v5281
        %v5283 = vpop.f32.mrb[0].mxu0
        %v5284 = vpop.f32.mrb[0].mxu0
        %v5285 = vadd.f32 %v5124, %v5284
        %v5286 = vpop.f32.mrb[0].mxu0
        %5287 = vmatprep.mubr.bf16.mxu0 %v4423
        %5288 = vmatmul.mubr.bf16.gmra.mrb[0].mxu0 %v4422
        %v5289 = vpop.f32.mrb[0].mxu0
        %v5290 = vadd.f32 %v5129, %v5289
        %v5291 = vpop.f32.mrb[0].mxu0
        %v5292 = vpop.f32.mrb[0].mxu0
        %v5293 = vadd.f32 %v5132, %v5292
        %v5294 = vpop.f32.mrb[0].mxu0
        %5295 = vmatprep.mubr.bf16.mxu0 %v4426
        %5296 = vmatmul.mubr.bf16.gmra.mrb[0].mxu0 %v4425
        %v5297 = vpop.f32.mrb[0].mxu0
        %v5298 = vadd.f32 %v5137, %v5297
        %v5299 = vpop.f32.mrb[0].mxu0
        %v5300 = vpop.f32.mrb[0].mxu0
        %v5301 = vadd.f32 %v5140, %v5300
        %v5302 = vpop.f32.mrb[0].mxu0
        %5303 = vmatprep.mubr.bf16.mxu0 %v4429
        %5304 = vmatmul.mubr.bf16.gmra.mrb[0].mxu0 %v4428
        %v5305 = vpop.f32.mrb[0].mxu0
        %v5306 = vadd.f32 %v5145, %v5305
        %v5307 = vpop.f32.mrb[0].mxu0
        %v5308 = vpop.f32.mrb[0].mxu0
        %v5309 = vadd.f32 %v5148, %v5308
        %v5310 = vpop.f32.mrb[0].mxu0
        %5311 = vmatprep.mubr.bf16.mxu0 %v4432
        %5312 = vmatmul.mubr.bf16.gmra.mrb[0].mxu0 %v4431
        %v5313 = vpop.f32.mrb[0].mxu0
        %v5314 = vadd.f32 %v5153, %v5313
        %v5315 = vpop.f32.mrb[0].mxu0
        %v5316 = vpop.f32.mrb[0].mxu0
        %v5317 = vadd.f32 %v5156, %v5316
        %v5318 = vpop.f32.mrb[0].mxu0
        %5319 = vmatprep.mubr.bf16.mxu0 %v4435
        %5320 = vmatmul.mubr.bf16.gmra.mrb[0].mxu0 %v4434
        %v5321 = vpop.f32.mrb[0].mxu0
        %v5322 = vadd.f32 %v5161, %v5321
        %v5323 = vpop.f32.mrb[0].mxu0
        %v5324 = vpop.f32.mrb[0].mxu0
        %v5325 = vadd.f32 %v5164, %v5324
        %v5326 = vpop.f32.mrb[0].mxu0
        %5327 = vmatprep.mubr.bf16.mxu0 %v4438
        %5328 = vmatmul.mubr.bf16.gmra.mrb[0].mxu0 %v4437
        %v5329 = vpop.f32.mrb[0].mxu0
        %v5330 = vadd.f32 %v5169, %v5329
        %v5331 = vpop.f32.mrb[0].mxu0
        %v5332 = vpop.f32.mrb[0].mxu0
        %v5333 = vadd.f32 %v5172, %v5332
        %v5334 = vpop.f32.mrb[0].mxu0
        %5335 = vmatprep.mubr.bf16.mxu0 %v4441
        %5336 = vmatmul.mubr.bf16.gmra.mrb[0].mxu0 %v4440
        %v5337 = vpop.f32.mrb[0].mxu0
        %v5338 = vadd.f32 %v5177, %v5337
        %v5339 = vpop.f32.mrb[0].mxu0
        %v5340 = vpop.f32.mrb[0].mxu0
        %v5341 = vadd.f32 %v5180, %v5340
        %v5342 = vpop.f32.mrb[0].mxu0
        %5343 = vmatprep.mubr.bf16.mxu0 %v4444
        %5344 = vmatmul.mubr.bf16.gmra.mrb[0].mxu0 %v4443
        %v5345 = vpop.f32.mrb[0].mxu0
        %v5346 = vadd.f32 %v5185, %v5345
        %v5347 = vpop.f32.mrb[0].mxu0
        %v5348 = vpop.f32.mrb[0].mxu0
        %v5349 = vadd.f32 %v5188, %v5348
        %v5350 = vpop.f32.mrb[0].mxu0
        %5351 = vmatprep.mubr.bf16.mxu0 %v4447
        %5352 = vmatmul.mubr.bf16.gmra.mrb[0].mxu0 %v4446
        %v5353 = vpop.f32.mrb[0].mxu0
        %v5354 = vadd.f32 %v5193, %v5353
        %v5355 = vpop.f32.mrb[0].mxu0
        %v5356 = vpop.f32.mrb[0].mxu0
        %v5357 = vadd.f32 %v5196, %v5356
        %v5358 = vpop.f32.mrb[0].mxu0
        %5359 = vmatprep.mubr.bf16.mxu0 %v4450
        %5360 = vmatmul.mubr.bf16.gmra.mrb[0].mxu0 %v4449
        %v5361 = vpop.f32.mrb[0].mxu0
        %v5362 = vadd.f32 %v5201, %v5361
        %v5363 = vpop.f32.mrb[0].mxu0
        %v5364 = vpop.f32.mrb[0].mxu0
        %v5365 = vadd.f32 %v5204, %v5364
        %v5366 = vpop.f32.mrb[0].mxu0
        %5367 = vmatprep.mubr.bf16.mxu0 %v4453
        %5368 = vmatmul.mubr.bf16.gmra.mrb[0].mxu0 %v4452
        %v5369 = vpop.f32.mrb[0].mxu0
        %v5370 = vadd.f32 %v5209, %v5369
        %v5371 = vpop.f32.mrb[0].mxu0
        %v5372 = vpop.f32.mrb[0].mxu0
        %v5373 = vadd.f32 %v5212, %v5372
        %v5374 = vpop.f32.mrb[0].mxu0
        %5375 = vmatprep.mubr.bf16.mxu0 %v4456
        %5376 = vmatmul.mubr.bf16.gmra.mrb[0].mxu0 %v4455
        %v5377 = vpop.f32.mrb[0].mxu0
        %v5378 = vadd.f32 %v5217, %v5377
        %v5379 = vpop.f32.mrb[0].mxu0
        %v5380 = vpop.f32.mrb[0].mxu0
        %v5381 = vadd.f32 %v5220, %v5380
        %v5382 = vpop.f32.mrb[0].mxu0
        %5383 = vmatprep.mubr.bf16.mxu0 %v4459
        %5384 = vmatmul.mubr.bf16.gmra.mrb[0].mxu0 %v4458
        %v5385 = vpop.f32.mrb[0].mxu0
        %v5386 = vadd.f32 %v5225, %v5385
        %v5387 = vpop.f32.mrb[0].mxu0
        %v5388 = vpop.f32.mrb[0].mxu0
        %v5389 = vadd.f32 %v5228, %v5388
        %v5390 = vpop.f32.mrb[0].mxu0
        %5391 = vdwg.mxu0
        %5392 = vmatprep.subr.bf16.mxu0 0
        %5393 = vmatpush1.bf16.msra.mxu0 %v4477
        %5394 = vmatprep.subr.bf16.mxu0 0
        %5395 = vmatpush1.bf16.msra.mxu0 %v4478
        %5396 = vmatprep.subr.bf16.mxu0 0
        %5397 = vmatpush1.bf16.msra.mxu0 %v4479
        %5398 = vmatprep.subr.bf16.mxu0 0
        %5399 = vmatpush1.bf16.msra.mxu0 %v4480
        %5400 = vmatprep.subr.bf16.mxu0 0
        %5401 = vmatpush1.bf16.msra.mxu0 %v4481
        %5402 = vmatprep.subr.bf16.mxu0 0
        %5403 = vmatpush1.bf16.msra.mxu0 %v4482
        %5404 = vmatprep.subr.bf16.mxu0 0
        %5405 = vmatpush1.bf16.msra.mxu0 %v4483
        %5406 = vmatprep.subr.bf16.mxu0 0
        %5407 = vmatpush1.bf16.msra.mxu0 %v4484
        %5408 = vmatprep.subr.bf16.mxu0 0
        %5409 = vmatpush1.bf16.msra.mxu0 0
        %5410 = vmatprep.subr.bf16.mxu0 0
        %5411 = vmatpush1.bf16.msra.mxu0 0
        %5412 = vmatprep.subr.bf16.mxu0 0
        %5413 = vmatpush1.bf16.msra.mxu0 0
        %5414 = vmatprep.subr.bf16.mxu0 0
        %5415 = vmatpush1.bf16.msra.mxu0 0
        %5416 = vmatprep.subr.bf16.mxu0 0
        %5417 = vmatpush1.bf16.msra.mxu0 0
        %5418 = vmatprep.subr.bf16.mxu0 0
        %5419 = vmatpush1.bf16.msra.mxu0 0
        %5420 = vmatprep.subr.bf16.mxu0 0
        %5421 = vmatpush1.bf16.msra.mxu0 0
        %5422 = vmatprep.subr.bf16.mxu0 0
        %5423 = vmatpush1.bf16.msra.mxu0 0
        %5424 = vmatprep.mubr.bf16.mxu0 0
        %5425 = vmatmul.mubr.bf16.gmra.mrb[0].mxu0 %v4415
        %v5426 = vpop.f32.mrb[0].mxu0
        %v5427 = vadd.f32 %v5266, %v5426
        %v5428 = vpop.f32.mrb[0].mxu0
        %v5429 = vpop.f32.mrb[0].mxu0
        %v5430 = vadd.f32 %v5269, %v5429
        %v5431 = vpop.f32.mrb[0].mxu0
        %5432 = vmatprep.mubr.bf16.mxu0 0
        %5433 = vmatmul.mubr.bf16.gmra.mrb[0].mxu0 %v4418
        %v5434 = vpop.f32.mrb[0].mxu0
        %v5435 = vadd.f32 %v5274, %v5434
        %v5436 = vpop.f32.mrb[0].mxu0
        %v5437 = vpop.f32.mrb[0].mxu0
        %v5438 = vadd.f32 %v5277, %v5437
        %v5439 = vpop.f32.mrb[0].mxu0
        %5440 = vmatprep.mubr.bf16.mxu0 0
        %5441 = vmatmul.mubr.bf16.gmra.mrb[0].mxu0 %v4421
        %v5442 = vpop.f32.mrb[0].mxu0
        %v5443 = vadd.f32 %v5282, %v5442
        %v5444 = vpop.f32.mrb[0].mxu0
        %v5445 = vpop.f32.mrb[0].mxu0
        %v5446 = vadd.f32 %v5285, %v5445
        %v5447 = vpop.f32.mrb[0].mxu0
        %5448 = vmatprep.mubr.bf16.mxu0 0
        %5449 = vmatmul.mubr.bf16.gmra.mrb[0].mxu0 %v4424
        %v5450 = vpop.f32.mrb[0].mxu0
        %v5451 = vadd.f32 %v5290, %v5450
        %v5452 = vpop.f32.mrb[0].mxu0
        %v5453 = vpop.f32.mrb[0].mxu0
        %v5454 = vadd.f32 %v5293, %v5453
        %v5455 = vpop.f32.mrb[0].mxu0
        %5456 = vmatprep.mubr.bf16.mxu0 0
        %5457 = vmatmul.mubr.bf16.gmra.mrb[0].mxu0 %v4427
        %v5458 = vpop.f32.mrb[0].mxu0
        %v5459 = vadd.f32 %v5298, %v5458
        %v5460 = vpop.f32.mrb[0].mxu0
        %v5461 = vpop.f32.mrb[0].mxu0
        %v5462 = vadd.f32 %v5301, %v5461
        %v5463 = vpop.f32.mrb[0].mxu0
        %5464 = vmatprep.mubr.bf16.mxu0 0
        %5465 = vmatmul.mubr.bf16.gmra.mrb[0].mxu0 %v4430
        %v5466 = vpop.f32.mrb[0].mxu0
        %v5467 = vadd.f32 %v5306, %v5466
        %v5468 = vpop.f32.mrb[0].mxu0
        %v5469 = vpop.f32.mrb[0].mxu0
        %v5470 = vadd.f32 %v5309, %v5469
        %v5471 = vpop.f32.mrb[0].mxu0
        %5472 = vmatprep.mubr.bf16.mxu0 0
        %5473 = vmatmul.mubr.bf16.gmra.mrb[0].mxu0 %v4433
        %v5474 = vpop.f32.mrb[0].mxu0
        %v5475 = vadd.f32 %v5314, %v5474
        %v5476 = vpop.f32.mrb[0].mxu0
        %v5477 = vpop.f32.mrb[0].mxu0
        %v5478 = vadd.f32 %v5317, %v5477
        %v5479 = vpop.f32.mrb[0].mxu0
        %5480 = vmatprep.mubr.bf16.mxu0 0
        %5481 = vmatmul.mubr.bf16.gmra.mrb[0].mxu0 %v4436
        %v5482 = vpop.f32.mrb[0].mxu0
        %v5483 = vadd.f32 %v5322, %v5482
        %v5484 = vpop.f32.mrb[0].mxu0
        %v5485 = vpop.f32.mrb[0].mxu0
        %v5486 = vadd.f32 %v5325, %v5485
        %v5487 = vpop.f32.mrb[0].mxu0
        %5488 = vmatprep.mubr.bf16.mxu0 0
        %5489 = vmatmul.mubr.bf16.gmra.mrb[0].mxu0 %v4439
        %v5490 = vpop.f32.mrb[0].mxu0
        %v5491 = vadd.f32 %v5330, %v5490
        %v5492 = vpop.f32.mrb[0].mxu0
        %v5493 = vpop.f32.mrb[0].mxu0
        %v5494 = vadd.f32 %v5333, %v5493
        %v5495 = vpop.f32.mrb[0].mxu0
        %5496 = vmatprep.mubr.bf16.mxu0 0
        %5497 = vmatmul.mubr.bf16.gmra.mrb[0].mxu0 %v4442
        %v5498 = vpop.f32.mrb[0].mxu0
        %v5499 = vadd.f32 %v5338, %v5498
        %v5500 = vpop.f32.mrb[0].mxu0
        %v5501 = vpop.f32.mrb[0].mxu0
        %v5502 = vadd.f32 %v5341, %v5501
        %v5503 = vpop.f32.mrb[0].mxu0
        %5504 = vmatprep.mubr.bf16.mxu0 0
        %5505 = vmatmul.mubr.bf16.gmra.mrb[0].mxu0 %v4445
        %v5506 = vpop.f32.mrb[0].mxu0
        %v5507 = vadd.f32 %v5346, %v5506
        %v5508 = vpop.f32.mrb[0].mxu0
        %v5509 = vpop.f32.mrb[0].mxu0
        %v5510 = vadd.f32 %v5349, %v5509
        %v5511 = vpop.f32.mrb[0].mxu0
        %5512 = vmatprep.mubr.bf16.mxu0 0
        %5513 = vmatmul.mubr.bf16.gmra.mrb[0].mxu0 %v4448
        %v5514 = vpop.f32.mrb[0].mxu0
        %v5515 = vadd.f32 %v5354, %v5514
        %v5516 = vpop.f32.mrb[0].mxu0
        %v5517 = vpop.f32.mrb[0].mxu0
        %v5518 = vadd.f32 %v5357, %v5517
        %v5519 = vpop.f32.mrb[0].mxu0
        %5520 = vmatprep.mubr.bf16.mxu0 0
        %5521 = vmatmul.mubr.bf16.gmra.mrb[0].mxu0 %v4451
        %v5522 = vpop.f32.mrb[0].mxu0
        %v5523 = vadd.f32 %v5362, %v5522
        %v5524 = vpop.f32.mrb[0].mxu0
        %v5525 = vpop.f32.mrb[0].mxu0
        %v5526 = vadd.f32 %v5365, %v5525
        %v5527 = vpop.f32.mrb[0].mxu0
        %5528 = vmatprep.mubr.bf16.mxu0 0
        %5529 = vmatmul.mubr.bf16.gmra.mrb[0].mxu0 %v4454
        %v5530 = vpop.f32.mrb[0].mxu0
        %v5531 = vadd.f32 %v5370, %v5530
        %v5532 = vpop.f32.mrb[0].mxu0
        %v5533 = vpop.f32.mrb[0].mxu0
        %v5534 = vadd.f32 %v5373, %v5533
        %v5535 = vpop.f32.mrb[0].mxu0
        %5536 = vmatprep.mubr.bf16.mxu0 0
        %5537 = vmatmul.mubr.bf16.gmra.mrb[0].mxu0 %v4457
        %v5538 = vpop.f32.mrb[0].mxu0
        %v5539 = vadd.f32 %v5378, %v5538
        %v5540 = vpop.f32.mrb[0].mxu0
        %v5541 = vpop.f32.mrb[0].mxu0
        %v5542 = vadd.f32 %v5381, %v5541
        %v5543 = vpop.f32.mrb[0].mxu0
        %5544 = vmatprep.mubr.bf16.mxu0 0
        %5545 = vmatmul.mubr.bf16.gmra.mrb[0].mxu0 %v4460
        %v5546 = vpop.f32.mrb[0].mxu0
        %v5547 = vadd.f32 %v5386, %v5546
        %v5548 = vpop.f32.mrb[0].mxu0
        %v5549 = vpop.f32.mrb[0].mxu0
        %v5550 = vadd.f32 %v5389, %v5549
        %v5551 = vpop.f32.mrb[0].mxu0
        %5552 = vdwg.mxu0
        %5553 = vset.pattern.permute.xlu0 15
        %5554 = vperm.xlu0 %5553, %v1004
        %v5555 = vpop.permute.xlu0 %5554
        %5557 = vset.pattern.permute.xlu0 15
        %5558 = vperm.xlu0 %5557, %v1005
        %v5559 = vpop.permute.xlu0 %5558
        %5561 = vset.pattern.permute.xlu0 15
        %5562 = vperm.xlu0 %5561, %v1006
        %v5563 = vpop.permute.xlu0 %5562
        %5565 = vset.pattern.permute.xlu0 15
        %5566 = vperm.xlu0 %5565, %v1007
        %v5567 = vpop.permute.xlu0 %5566
        %5569 = vset.pattern.permute.xlu0 15
        %5570 = vperm.xlu0 %5569, %v1008
        %v5571 = vpop.permute.xlu0 %5570
        %5573 = vset.pattern.permute.xlu0 15
        %5574 = vperm.xlu0 %5573, %v1009
        %v5575 = vpop.permute.xlu0 %5574
        %5577 = vset.pattern.permute.xlu0 15
        %5578 = vperm.xlu0 %5577, %v1010
        %v5579 = vpop.permute.xlu0 %5578
        %5581 = vset.pattern.permute.xlu0 15
        %5582 = vperm.xlu0 %5581, %v1011
        %v5583 = vpop.permute.xlu0 %5582
        %5585 = vset.pattern.permute.xlu0 15
        %5586 = vperm.xlu0 %5585, %v1012
        %v5587 = vpop.permute.xlu0 %5586
        %5589 = vset.pattern.permute.xlu0 15
        %5590 = vperm.xlu0 %5589, %v1013
        %v5591 = vpop.permute.xlu0 %5590
        %5593 = vset.pattern.permute.xlu0 15
        %5594 = vperm.xlu0 %5593, %v1014
        %v5595 = vpop.permute.xlu0 %5594
        %5597 = vset.pattern.permute.xlu0 15
        %5598 = vperm.xlu0 %5597, %v1015
        %v5599 = vpop.permute.xlu0 %5598
        %5601 = vset.pattern.permute.xlu0 15
        %5602 = vperm.xlu0 %5601, %v1016
        %v5603 = vpop.permute.xlu0 %5602
        %5605 = vset.pattern.permute.xlu0 15
        %5606 = vperm.xlu0 %5605, %v1017
        %v5607 = vpop.permute.xlu0 %5606
        %5609 = vset.pattern.permute.xlu0 15
        %5610 = vperm.xlu0 %5609, %v1018
        %v5611 = vpop.permute.xlu0 %5610
        %5613 = vset.pattern.permute.xlu0 15
        %5614 = vperm.xlu0 %5613, %v1019
        %v5615 = vpop.permute.xlu0 %5614
        %5617 = vset.pattern.permute.xlu0 15
        %5618 = vperm.xlu0 %5617, %v1020
        %v5619 = vpop.permute.xlu0 %5618
        %5621 = vset.pattern.permute.xlu0 15
        %5622 = vperm.xlu0 %5621, %v1021
        %v5623 = vpop.permute.xlu0 %5622
        %5625 = vset.pattern.permute.xlu0 15
        %5626 = vperm.xlu0 %5625, %v1022
        %v5627 = vpop.permute.xlu0 %5626
        %5629 = vset.pattern.permute.xlu0 15
        %5630 = vperm.xlu0 %5629, %v1023
        %v5631 = vpop.permute.xlu0 %5630
        %5633 = vset.pattern.permute.xlu0 15
        %5634 = vperm.xlu0 %5633, %v1024
        %v5635 = vpop.permute.xlu0 %5634
        %5637 = vset.pattern.permute.xlu0 15
        %5638 = vperm.xlu0 %5637, %v1025
        %v5639 = vpop.permute.xlu0 %5638
        %5641 = vset.pattern.permute.xlu0 15
        %5642 = vperm.xlu0 %5641, %v1026
        %v5643 = vpop.permute.xlu0 %5642
        %5645 = vset.pattern.permute.xlu0 15
        %5646 = vperm.xlu0 %5645, %v1027
        %v5647 = vpop.permute.xlu0 %5646
        %5649 = vset.pattern.permute.xlu0 15
        %5650 = vperm.xlu0 %5649, %v1028
        %v5651 = vpop.permute.xlu0 %5650
        %5653 = vset.pattern.permute.xlu0 15
        %5654 = vperm.xlu0 %5653, %v1029
        %v5655 = vpop.permute.xlu0 %5654
        %5657 = vset.pattern.permute.xlu0 15
        %5658 = vperm.xlu0 %5657, %v1030
        %v5659 = vpop.permute.xlu0 %5658
        %5661 = vset.pattern.permute.xlu0 15
        %5662 = vperm.xlu0 %5661, %v1031
        %v5663 = vpop.permute.xlu0 %5662
        %5665 = vset.pattern.permute.xlu0 15
        %5666 = vperm.xlu0 %5665, %v1032
        %v5667 = vpop.permute.xlu0 %5666
        %5669 = vset.pattern.permute.xlu0 15
        %5670 = vperm.xlu0 %5669, %v1033
        %v5671 = vpop.permute.xlu0 %5670
        %5673 = vset.pattern.permute.xlu0 15
        %5674 = vperm.xlu0 %5673, %v1034
        %v5675 = vpop.permute.xlu0 %5674
        %5677 = vset.pattern.permute.xlu0 15
        %5678 = vperm.xlu0 %5677, %v1035
        %v5679 = vpop.permute.xlu0 %5678
        %v5681 = vmul.f32 %v3807, %v5555
        %v5682 = vmul.f32 %v3806, %v5559
        %v5683 = vmul.f32 %v3805, %v5563
        %v5684 = vmul.f32 %v3804, %v5567
        %v5685 = vmul.f32 %v3803, %v5571
        %v5686 = vmul.f32 %v3802, %v5575
        %v5687 = vmul.f32 %v3801, %v5579
        %v5688 = vmul.f32 %v3800, %v5583
        %v5689 = vmul.f32 %v3799, %v5587
        %v5690 = vmul.f32 %v3798, %v5591
        %v5691 = vmul.f32 %v3797, %v5595
        %v5692 = vmul.f32 %v3796, %v5599
        %v5693 = vmul.f32 %v3795, %v5603
        %v5694 = vmul.f32 %v3794, %v5607
        %v5695 = vmul.f32 %v3793, %v5611
        %v5696 = vmul.f32 %v3792, %v5615
        %v5697 = vmul.f32 %v3791, %v5619
        %v5698 = vmul.f32 %v3790, %v5623
        %v5699 = vmul.f32 %v3789, %v5627
        %v5700 = vmul.f32 %v3788, %v5631
        %v5701 = vmul.f32 %v3819, %v5635
        %v5702 = vmul.f32 %v3818, %v5639
        %v5703 = vmul.f32 %v3817, %v5643
        %v5704 = vmul.f32 %v3816, %v5647
        %v5705 = vmul.f32 %v3815, %v5651
        %v5706 = vmul.f32 %v3814, %v5655
        %v5707 = vmul.f32 %v3813, %v5659
        %v5708 = vmul.f32 %v3812, %v5663
        %v5709 = vmul.f32 %v3811, %v5667
        %v5710 = vmul.f32 %v3810, %v5671
        %v5711 = vmul.f32 %v3809, %v5675
        %v5712 = vmul.f32 %v3808, %v5679
        %5713 = vset.pattern.permute.xlu0 16
        %5714 = vperm.xlu0 %5713, %v1004
        %v5715 = vpop.permute.xlu0 %5714
        %5717 = vset.pattern.permute.xlu0 16
        %5718 = vperm.xlu0 %5717, %v1005
        %v5719 = vpop.permute.xlu0 %5718
        %5721 = vset.pattern.permute.xlu0 16
        %5722 = vperm.xlu0 %5721, %v1006
        %v5723 = vpop.permute.xlu0 %5722
        %5725 = vset.pattern.permute.xlu0 16
        %5726 = vperm.xlu0 %5725, %v1007
        %v5727 = vpop.permute.xlu0 %5726
        %5729 = vset.pattern.permute.xlu0 16
        %5730 = vperm.xlu0 %5729, %v1008
        %v5731 = vpop.permute.xlu0 %5730
        %5733 = vset.pattern.permute.xlu0 16
        %5734 = vperm.xlu0 %5733, %v1009
        %v5735 = vpop.permute.xlu0 %5734
        %5737 = vset.pattern.permute.xlu0 16
        %5738 = vperm.xlu0 %5737, %v1010
        %v5739 = vpop.permute.xlu0 %5738
        %5741 = vset.pattern.permute.xlu0 16
        %5742 = vperm.xlu0 %5741, %v1011
        %v5743 = vpop.permute.xlu0 %5742
        %5745 = vset.pattern.permute.xlu0 16
        %5746 = vperm.xlu0 %5745, %v1012
        %v5747 = vpop.permute.xlu0 %5746
        %5749 = vset.pattern.permute.xlu0 16
        %5750 = vperm.xlu0 %5749, %v1013
        %v5751 = vpop.permute.xlu0 %5750
        %5753 = vset.pattern.permute.xlu0 16
        %5754 = vperm.xlu0 %5753, %v1014
        %v5755 = vpop.permute.xlu0 %5754
        %5757 = vset.pattern.permute.xlu0 16
        %5758 = vperm.xlu0 %5757, %v1015
        %v5759 = vpop.permute.xlu0 %5758
        %5761 = vset.pattern.permute.xlu0 16
        %5762 = vperm.xlu0 %5761, %v1016
        %v5763 = vpop.permute.xlu0 %5762
        %5765 = vset.pattern.permute.xlu0 16
        %5766 = vperm.xlu0 %5765, %v1017
        %v5767 = vpop.permute.xlu0 %5766
        %5769 = vset.pattern.permute.xlu0 16
        %5770 = vperm.xlu0 %5769, %v1018
        %v5771 = vpop.permute.xlu0 %5770
        %5773 = vset.pattern.permute.xlu0 16
        %5774 = vperm.xlu0 %5773, %v1019
        %v5775 = vpop.permute.xlu0 %5774
        %5777 = vset.pattern.permute.xlu0 16
        %5778 = vperm.xlu0 %5777, %v1020
        %v5779 = vpop.permute.xlu0 %5778
        %5781 = vset.pattern.permute.xlu0 16
        %5782 = vperm.xlu0 %5781, %v1021
        %v5783 = vpop.permute.xlu0 %5782
        %5785 = vset.pattern.permute.xlu0 16
        %5786 = vperm.xlu0 %5785, %v1022
        %v5787 = vpop.permute.xlu0 %5786
        %5789 = vset.pattern.permute.xlu0 16
        %5790 = vperm.xlu0 %5789, %v1023
        %v5791 = vpop.permute.xlu0 %5790
        %5793 = vset.pattern.permute.xlu0 16
        %5794 = vperm.xlu0 %5793, %v1024
        %v5795 = vpop.permute.xlu0 %5794
        %5797 = vset.pattern.permute.xlu0 16
        %5798 = vperm.xlu0 %5797, %v1025
        %v5799 = vpop.permute.xlu0 %5798
        %5801 = vset.pattern.permute.xlu0 16
        %5802 = vperm.xlu0 %5801, %v1026
        %v5803 = vpop.permute.xlu0 %5802
        %5805 = vset.pattern.permute.xlu0 16
        %5806 = vperm.xlu0 %5805, %v1027
        %v5807 = vpop.permute.xlu0 %5806
        %5809 = vset.pattern.permute.xlu0 16
        %5810 = vperm.xlu0 %5809, %v1028
        %v5811 = vpop.permute.xlu0 %5810
        %5813 = vset.pattern.permute.xlu0 16
        %5814 = vperm.xlu0 %5813, %v1029
        %v5815 = vpop.permute.xlu0 %5814
        %5817 = vset.pattern.permute.xlu0 16
        %5818 = vperm.xlu0 %5817, %v1030
        %v5819 = vpop.permute.xlu0 %5818
        %5821 = vset.pattern.permute.xlu0 16
        %5822 = vperm.xlu0 %5821, %v1031
        %v5823 = vpop.permute.xlu0 %5822
        %5825 = vset.pattern.permute.xlu0 16
        %5826 = vperm.xlu0 %5825, %v1032
        %v5827 = vpop.permute.xlu0 %5826
        %5829 = vset.pattern.permute.xlu0 16
        %5830 = vperm.xlu0 %5829, %v1033
        %v5831 = vpop.permute.xlu0 %5830
        %5833 = vset.pattern.permute.xlu0 16
        %5834 = vperm.xlu0 %5833, %v1034
        %v5835 = vpop.permute.xlu0 %5834
        %5837 = vset.pattern.permute.xlu0 16
        %5838 = vperm.xlu0 %5837, %v1035
        %v5839 = vpop.permute.xlu0 %5838
        %v5841 = vmul.f32 %v658, %v5715
        %v5842 = vmul.f32 %v661, %v5719
        %v5843 = vmul.f32 %v666, %v5723
        %v5844 = vmul.f32 %v669, %v5727
        %v5845 = vmul.f32 %v674, %v5731
        %v5846 = vmul.f32 %v677, %v5735
        %v5847 = vmul.f32 %v682, %v5739
        %v5848 = vmul.f32 %v685, %v5743
        %v5849 = vmul.f32 %v690, %v5747
        %v5850 = vmul.f32 %v693, %v5751
        %v5851 = vmul.f32 %v698, %v5755
        %v5852 = vmul.f32 %v701, %v5759
        %v5853 = vmul.f32 %v706, %v5763
        %v5854 = vmul.f32 %v709, %v5767
        %v5855 = vmul.f32 %v714, %v5771
        %v5856 = vmul.f32 %v717, %v5775
        %v5857 = vmul.f32 %v722, %v5779
        %v5858 = vmul.f32 %v725, %v5783
        %v5859 = vmul.f32 %v730, %v5787
        %v5860 = vmul.f32 %v733, %v5791
        %v5861 = vmul.f32 %v610, %v5795
        %v5862 = vmul.f32 %v613, %v5799
        %v5863 = vmul.f32 %v618, %v5803
        %v5864 = vmul.f32 %v621, %v5807
        %v5865 = vmul.f32 %v626, %v5811
        %v5866 = vmul.f32 %v629, %v5815
        %v5867 = vmul.f32 %v634, %v5819
        %v5868 = vmul.f32 %v637, %v5823
        %v5869 = vmul.f32 %v642, %v5827
        %v5870 = vmul.f32 %v645, %v5831
        %v5871 = vmul.f32 %v650, %v5835
        %v5872 = vmul.f32 %v653, %v5839
        %5873 = vset.pattern.permute.xlu0 17
        %5874 = vperm.xlu0 %5873, %v1004
        %v5875 = vpop.permute.xlu0 %5874
        %5877 = vset.pattern.permute.xlu0 17
        %5878 = vperm.xlu0 %5877, %v1005
        %v5879 = vpop.permute.xlu0 %5878
        %5881 = vset.pattern.permute.xlu0 17
        %5882 = vperm.xlu0 %5881, %v1006
        %v5883 = vpop.permute.xlu0 %5882
        %5885 = vset.pattern.permute.xlu0 17
        %5886 = vperm.xlu0 %5885, %v1007
        %v5887 = vpop.permute.xlu0 %5886
        %5889 = vset.pattern.permute.xlu0 17
        %5890 = vperm.xlu0 %5889, %v1008
        %v5891 = vpop.permute.xlu0 %5890
        %5893 = vset.pattern.permute.xlu0 17
        %5894 = vperm.xlu0 %5893, %v1009
        %v5895 = vpop.permute.xlu0 %5894
        %5897 = vset.pattern.permute.xlu0 17
        %5898 = vperm.xlu0 %5897, %v1010
        %v5899 = vpop.permute.xlu0 %5898
        %5901 = vset.pattern.permute.xlu0 17
        %5902 = vperm.xlu0 %5901, %v1011
        %v5903 = vpop.permute.xlu0 %5902
        %5905 = vset.pattern.permute.xlu0 17
        %5906 = vperm.xlu0 %5905, %v1012
        %v5907 = vpop.permute.xlu0 %5906
        %5909 = vset.pattern.permute.xlu0 17
        %5910 = vperm.xlu0 %5909, %v1013
        %v5911 = vpop.permute.xlu0 %5910
        %5913 = vset.pattern.permute.xlu0 17
        %5914 = vperm.xlu0 %5913, %v1014
        %v5915 = vpop.permute.xlu0 %5914
        %5917 = vset.pattern.permute.xlu0 17
        %5918 = vperm.xlu0 %5917, %v1015
        %v5919 = vpop.permute.xlu0 %5918
        %5921 = vset.pattern.permute.xlu0 17
        %5922 = vperm.xlu0 %5921, %v1016
        %v5923 = vpop.permute.xlu0 %5922
        %5925 = vset.pattern.permute.xlu0 17
        %5926 = vperm.xlu0 %5925, %v1017
        %v5927 = vpop.permute.xlu0 %5926
        %5929 = vset.pattern.permute.xlu0 17
        %5930 = vperm.xlu0 %5929, %v1018
        %v5931 = vpop.permute.xlu0 %5930
        %5933 = vset.pattern.permute.xlu0 17
        %5934 = vperm.xlu0 %5933, %v1019
        %v5935 = vpop.permute.xlu0 %5934
        %5937 = vset.pattern.permute.xlu0 17
        %5938 = vperm.xlu0 %5937, %v1020
        %v5939 = vpop.permute.xlu0 %5938
        %5941 = vset.pattern.permute.xlu0 17
        %5942 = vperm.xlu0 %5941, %v1021
        %v5943 = vpop.permute.xlu0 %5942
        %5945 = vset.pattern.permute.xlu0 17
        %5946 = vperm.xlu0 %5945, %v1022
        %v5947 = vpop.permute.xlu0 %5946
        %5949 = vset.pattern.permute.xlu0 17
        %5950 = vperm.xlu0 %5949, %v1023
        %v5951 = vpop.permute.xlu0 %5950
        %5953 = vset.pattern.permute.xlu0 17
        %5954 = vperm.xlu0 %5953, %v1024
        %v5955 = vpop.permute.xlu0 %5954
        %5957 = vset.pattern.permute.xlu0 17
        %5958 = vperm.xlu0 %5957, %v1025
        %v5959 = vpop.permute.xlu0 %5958
        %5961 = vset.pattern.permute.xlu0 17
        %5962 = vperm.xlu0 %5961, %v1026
        %v5963 = vpop.permute.xlu0 %5962
        %5965 = vset.pattern.permute.xlu0 17
        %5966 = vperm.xlu0 %5965, %v1027
        %v5967 = vpop.permute.xlu0 %5966
        %5969 = vset.pattern.permute.xlu0 17
        %5970 = vperm.xlu0 %5969, %v1028
        %v5971 = vpop.permute.xlu0 %5970
        %5973 = vset.pattern.permute.xlu0 17
        %5974 = vperm.xlu0 %5973, %v1029
        %v5975 = vpop.permute.xlu0 %5974
        %5977 = vset.pattern.permute.xlu0 17
        %5978 = vperm.xlu0 %5977, %v1030
        %v5979 = vpop.permute.xlu0 %5978
        %5981 = vset.pattern.permute.xlu0 17
        %5982 = vperm.xlu0 %5981, %v1031
        %v5983 = vpop.permute.xlu0 %5982
        %5985 = vset.pattern.permute.xlu0 17
        %5986 = vperm.xlu0 %5985, %v1032
        %v5987 = vpop.permute.xlu0 %5986
        %5989 = vset.pattern.permute.xlu0 17
        %5990 = vperm.xlu0 %5989, %v1033
        %v5991 = vpop.permute.xlu0 %5990
        %5993 = vset.pattern.permute.xlu0 17
        %5994 = vperm.xlu0 %5993, %v1034
        %v5995 = vpop.permute.xlu0 %5994
        %5997 = vset.pattern.permute.xlu0 17
        %5998 = vperm.xlu0 %5997, %v1035
        %v5999 = vpop.permute.xlu0 %5998
        %v6001 = vmul.f32 %v4191, %v5875
        %v6002 = vmul.f32 %v4190, %v5879
        %v6003 = vmul.f32 %v4189, %v5883
        %v6004 = vmul.f32 %v4188, %v5887
        %v6005 = vmul.f32 %v4187, %v5891
        %v6006 = vmul.f32 %v4186, %v5895
        %v6007 = vmul.f32 %v4185, %v5899
        %v6008 = vmul.f32 %v4184, %v5903
        %v6009 = vmul.f32 %v4183, %v5907
        %v6010 = vmul.f32 %v4182, %v5911
        %v6011 = vmul.f32 %v4181, %v5915
        %v6012 = vmul.f32 %v4180, %v5919
        %v6013 = vmul.f32 %v4179, %v5923
        %v6014 = vmul.f32 %v4178, %v5927
        %v6015 = vmul.f32 %v4177, %v5931
        %v6016 = vmul.f32 %v4176, %v5935
        %v6017 = vmul.f32 %v4175, %v5939
        %v6018 = vmul.f32 %v4174, %v5943
        %v6019 = vmul.f32 %v4173, %v5947
        %v6020 = vmul.f32 %v4204, %v5951
        %v6021 = vmul.f32 %v4203, %v5955
        %v6022 = vmul.f32 %v4202, %v5959
        %v6023 = vmul.f32 %v4201, %v5963
        %v6024 = vmul.f32 %v4200, %v5967
        %v6025 = vmul.f32 %v4199, %v5971
        %v6026 = vmul.f32 %v4198, %v5975
        %v6027 = vmul.f32 %v4197, %v5979
        %v6028 = vmul.f32 %v4196, %v5983
        %v6029 = vmul.f32 %v4195, %v5987
        %v6030 = vmul.f32 %v4194, %v5991
        %v6031 = vmul.f32 %v4193, %v5995
        %v6032 = vmul.f32 %v4192, %v5999
        %v6033 = vld [vmem:[#allocation13 + $0x300] sm:$0xff]
        %v6034 = vld [vmem:[#allocation13 + $0x308] sm:$0xff]
        %v6035 = vld [vmem:[#allocation13 + $0x310] sm:$0xff]
        %v6036 = vld [vmem:[#allocation13 + $0x318] sm:$0xff]
        %v6037 = vld [vmem:[#allocation13 + $0x320] sm:$0xff]
        %v6038 = vld [vmem:[#allocation13 + $0x328] sm:$0xff]
        %v6039 = vld [vmem:[#allocation13 + $0x330] sm:$0xff]
        %v6040 = vld [vmem:[#allocation13 + $0x338] sm:$0xff]
        %v6041 = vld [vmem:[#allocation13 + $0x340] sm:$0xff]
        %v6042 = vld [vmem:[#allocation13 + $0x348] sm:$0xff]
        %v6043 = vld [vmem:[#allocation13 + $0x350] sm:$0xff]
        %v6044 = vld [vmem:[#allocation13 + $0x358] sm:$0xff]
        %v6045 = vld [vmem:[#allocation13 + $0x360] sm:$0xff]
        %v6046 = vld [vmem:[#allocation13 + $0x368] sm:$0xff]
        %v6047 = vld [vmem:[#allocation13 + $0x370] sm:$0xff]
        %v6048 = vld [vmem:[#allocation13 + $0x378] sm:$0xff]
        %v6049 = vld [vmem:[#allocation13 + $0x380] sm:$0xff]
        %v6050 = vld [vmem:[#allocation13 + $0x388] sm:$0xff]
        %v6051 = vld [vmem:[#allocation13 + $0x390] sm:$0xff]
        %v6052 = vld [vmem:[#allocation13 + $0x398] sm:$0xff]
        %v6053 = vld [vmem:[#allocation13 + $0x3a0] sm:$0xff]
        %v6054 = vld [vmem:[#allocation13 + $0x3a8] sm:$0xff]
        %v6055 = vld [vmem:[#allocation13 + $0x3b0] sm:$0xff]
        %v6056 = vld [vmem:[#allocation13 + $0x3b8] sm:$0xff]
        %v6057 = vld [vmem:[#allocation13 + $0x3c0] sm:$0xff]
        %v6058 = vld [vmem:[#allocation13 + $0x3c8] sm:$0xff]
        %v6059 = vld [vmem:[#allocation13 + $0x3d0] sm:$0xff]
        %v6060 = vld [vmem:[#allocation13 + $0x3d8] sm:$0xff]
        %v6061 = vld [vmem:[#allocation13 + $0x3e0] sm:$0xff]
        %v6062 = vld [vmem:[#allocation13 + $0x3e8] sm:$0xff]
        %v6063 = vld [vmem:[#allocation13 + $0x3f0] sm:$0xff]
        %v6064 = vld [vmem:[#allocation13 + $0x3f8] sm:$0xff]
        %v6065 = vld [vmem:[#allocation13 + $0x400] sm:$0xff]
        %v6066 = vld [vmem:[#allocation13 + $0x408] sm:$0xff]
        %v6067 = vld [vmem:[#allocation13 + $0x410] sm:$0xff]
        %v6068 = vld [vmem:[#allocation13 + $0x418] sm:$0xff]
        %v6069 = vld [vmem:[#allocation13 + $0x420] sm:$0xff]
        %v6070 = vld [vmem:[#allocation13 + $0x428] sm:$0xff]
        %v6071 = vld [vmem:[#allocation13 + $0x430] sm:$0xff]
        %v6072 = vld [vmem:[#allocation13 + $0x438] sm:$0xff]
        %v6073 = vld [vmem:[#allocation13 + $0x440] sm:$0xff]
        %v6074 = vld [vmem:[#allocation13 + $0x448] sm:$0xff]
        %v6075 = vld [vmem:[#allocation13 + $0x450] sm:$0xff]
        %v6076 = vld [vmem:[#allocation13 + $0x458] sm:$0xff]
        %v6077 = vld [vmem:[#allocation13 + $0x460] sm:$0xff]
        %v6078 = vld [vmem:[#allocation13 + $0x468] sm:$0xff]
        %v6079 = vld [vmem:[#allocation13 + $0x470] sm:$0xff]
        %v6080 = vld [vmem:[#allocation13 + $0x478] sm:$0xff]
        %v6081 = vpack.c.bf16 %v5682, %v5681
        %v6082 = vpack.c.bf16 %v5842, %v5841
        %v6083 = vpack.c.bf16 %v6002, %v6001
        %v6084 = vpack.c.bf16 %v5684, %v5683
        %v6085 = vpack.c.bf16 %v5844, %v5843
        %v6086 = vpack.c.bf16 %v6004, %v6003
        %v6087 = vpack.c.bf16 %v5686, %v5685
        %v6088 = vpack.c.bf16 %v5846, %v5845
        %v6089 = vpack.c.bf16 %v6006, %v6005
        %v6090 = vpack.c.bf16 %v5688, %v5687
        %v6091 = vpack.c.bf16 %v5848, %v5847
        %v6092 = vpack.c.bf16 %v6008, %v6007
        %v6093 = vpack.c.bf16 %v5690, %v5689
        %v6094 = vpack.c.bf16 %v5850, %v5849
        %v6095 = vpack.c.bf16 %v6010, %v6009
        %v6096 = vpack.c.bf16 %v5692, %v5691
        %v6097 = vpack.c.bf16 %v5852, %v5851
        %v6098 = vpack.c.bf16 %v6012, %v6011
        %v6099 = vpack.c.bf16 %v5694, %v5693
        %v6100 = vpack.c.bf16 %v5854, %v5853
        %v6101 = vpack.c.bf16 %v6014, %v6013
        %v6102 = vpack.c.bf16 %v5696, %v5695
        %v6103 = vpack.c.bf16 %v5856, %v5855
        %v6104 = vpack.c.bf16 %v6016, %v6015
        %v6105 = vpack.c.bf16 %v5698, %v5697
        %v6106 = vpack.c.bf16 %v5858, %v5857
        %v6107 = vpack.c.bf16 %v6018, %v6017
        %v6108 = vpack.c.bf16 %v5700, %v5699
        %v6109 = vpack.c.bf16 %v5860, %v5859
        %v6110 = vpack.c.bf16 %v6020, %v6019
        %v6111 = vpack.c.bf16 %v5702, %v5701
        %v6112 = vpack.c.bf16 %v5862, %v5861
        %v6113 = vpack.c.bf16 %v6022, %v6021
        %v6114 = vpack.c.bf16 %v5704, %v5703
        %v6115 = vpack.c.bf16 %v5864, %v5863
        %v6116 = vpack.c.bf16 %v6024, %v6023
        %v6117 = vpack.c.bf16 %v5706, %v5705
        %v6118 = vpack.c.bf16 %v5866, %v5865
        %v6119 = vpack.c.bf16 %v6026, %v6025
        %v6120 = vpack.c.bf16 %v5708, %v5707
        %v6121 = vpack.c.bf16 %v5868, %v5867
        %v6122 = vpack.c.bf16 %v6028, %v6027
        %v6123 = vpack.c.bf16 %v5710, %v5709
        %v6124 = vpack.c.bf16 %v5870, %v5869
        %v6125 = vpack.c.bf16 %v6030, %v6029
        %v6126 = vpack.c.bf16 %v5712, %v5711
        %v6127 = vpack.c.bf16 %v5872, %v5871
        %v6128 = vpack.c.bf16 %v6032, %v6031
        %v6129 = vpack.c.bf16 %v6034, %v6033
        %v6130 = vpack.c.bf16 %v6036, %v6035
        %v6131 = vpack.c.bf16 %v6038, %v6037
        %v6132 = vpack.c.bf16 %v6040, %v6039
        %v6133 = vpack.c.bf16 %v6042, %v6041
        %v6134 = vpack.c.bf16 %v6044, %v6043
        %v6135 = vpack.c.bf16 %v6046, %v6045
        %v6136 = vpack.c.bf16 %v6048, %v6047
        %v6137 = vpack.c.bf16 %v6050, %v6049
        %v6138 = vpack.c.bf16 %v6052, %v6051
        %v6139 = vpack.c.bf16 %v6054, %v6053
        %v6140 = vpack.c.bf16 %v6056, %v6055
        %v6141 = vpack.c.bf16 %v6058, %v6057
        %v6142 = vpack.c.bf16 %v6060, %v6059
        %v6143 = vpack.c.bf16 %v6062, %v6061
        %v6144 = vpack.c.bf16 %v6064, %v6063
        %v6145 = vpack.c.bf16 %v6066, %v6065
        %v6146 = vpack.c.bf16 %v6068, %v6067
        %v6147 = vpack.c.bf16 %v6070, %v6069
        %v6148 = vpack.c.bf16 %v6072, %v6071
        %v6149 = vpack.c.bf16 %v6074, %v6073
        %v6150 = vpack.c.bf16 %v6076, %v6075
        %v6151 = vpack.c.bf16 %v6078, %v6077
        %v6152 = vpack.c.bf16 %v6080, %v6079
        %6153 = vmatprep.subr.bf16.mxu0 0
        %6154 = vmatpush1.bf16.msra.mxu0 %v6129
        %6155 = vmatprep.subr.bf16.mxu0 0
        %6156 = vmatpush1.bf16.msra.mxu0 %v6130
        %6157 = vmatprep.subr.bf16.mxu0 0
        %6158 = vmatpush1.bf16.msra.mxu0 %v6131
        %6159 = vmatprep.subr.bf16.mxu0 0
        %6160 = vmatpush1.bf16.msra.mxu0 %v6132
        %6161 = vmatprep.subr.bf16.mxu0 0
        %6162 = vmatpush1.bf16.msra.mxu0 %v6133
        %6163 = vmatprep.subr.bf16.mxu0 0
        %6164 = vmatpush1.bf16.msra.mxu0 %v6134
        %6165 = vmatprep.subr.bf16.mxu0 0
        %6166 = vmatpush1.bf16.msra.mxu0 %v6135
        %6167 = vmatprep.subr.bf16.mxu0 0
        %6168 = vmatpush1.bf16.msra.mxu0 %v6136
        %6169 = vmatprep.subr.bf16.mxu0 0
        %6170 = vmatpush1.bf16.msra.mxu0 %v6137
        %6171 = vmatprep.subr.bf16.mxu0 0
        %6172 = vmatpush1.bf16.msra.mxu0 %v6138
        %6173 = vmatprep.subr.bf16.mxu0 0
        %6174 = vmatpush1.bf16.msra.mxu0 %v6139
        %6175 = vmatprep.subr.bf16.mxu0 0
        %6176 = vmatpush1.bf16.msra.mxu0 %v6140
        %6177 = vmatprep.subr.bf16.mxu0 0
        %6178 = vmatpush1.bf16.msra.mxu0 %v6141
        %6179 = vmatprep.subr.bf16.mxu0 0
        %6180 = vmatpush1.bf16.msra.mxu0 %v6142
        %6181 = vmatprep.subr.bf16.mxu0 0
        %6182 = vmatpush1.bf16.msra.mxu0 %v6143
        %6183 = vmatprep.subr.bf16.mxu0 0
        %6184 = vmatpush1.bf16.msra.mxu0 %v6144
        %6185 = vmatprep.mubr.bf16.mxu0 %v6082
        %6186 = vmatmul.mubr.bf16.gmra.mrb[0].mxu0 %v6081
        %v6187 = vpop.f32.mrb[0].mxu0
        %v6188 = vadd.f32 0.0, %v6187
        %v6189 = vpop.f32.mrb[0].mxu0
        %v6190 = vpop.f32.mrb[0].mxu0
        %v6191 = vadd.f32 0.0, %v6190
        %v6192 = vpop.f32.mrb[0].mxu0
        %6193 = vmatprep.mubr.bf16.mxu0 %v6085
        %6194 = vmatmul.mubr.bf16.gmra.mrb[0].mxu0 %v6084
        %v6195 = vpop.f32.mrb[0].mxu0
        %v6196 = vadd.f32 0.0, %v6195
        %v6197 = vpop.f32.mrb[0].mxu0
        %v6198 = vpop.f32.mrb[0].mxu0
        %v6199 = vadd.f32 0.0, %v6198
        %v6200 = vpop.f32.mrb[0].mxu0
        %6201 = vmatprep.mubr.bf16.mxu0 %v6088
        %6202 = vmatmul.mubr.bf16.gmra.mrb[0].mxu0 %v6087
        %v6203 = vpop.f32.mrb[0].mxu0
        %v6204 = vadd.f32 0.0, %v6203
        %v6205 = vpop.f32.mrb[0].mxu0
        %v6206 = vpop.f32.mrb[0].mxu0
        %v6207 = vadd.f32 0.0, %v6206
        %v6208 = vpop.f32.mrb[0].mxu0
        %6209 = vmatprep.mubr.bf16.mxu0 %v6091
        %6210 = vmatmul.mubr.bf16.gmra.mrb[0].mxu0 %v6090
        %v6211 = vpop.f32.mrb[0].mxu0
        %v6212 = vadd.f32 0.0, %v6211
        %v6213 = vpop.f32.mrb[0].mxu0
        %v6214 = vpop.f32.mrb[0].mxu0
        %v6215 = vadd.f32 0.0, %v6214
        %v6216 = vpop.f32.mrb[0].mxu0
        %6217 = vmatprep.mubr.bf16.mxu0 %v6094
        %6218 = vmatmul.mubr.bf16.gmra.mrb[0].mxu0 %v6093
        %v6219 = vpop.f32.mrb[0].mxu0
        %v6220 = vadd.f32 0.0, %v6219
        %v6221 = vpop.f32.mrb[0].mxu0
        %v6222 = vpop.f32.mrb[0].mxu0
        %v6223 = vadd.f32 0.0, %v6222
        %v6224 = vpop.f32.mrb[0].mxu0
        %6225 = vmatprep.mubr.bf16.mxu0 %v6097
        %6226 = vmatmul.mubr.bf16.gmra.mrb[0].mxu0 %v6096
        %v6227 = vpop.f32.mrb[0].mxu0
        %v6228 = vadd.f32 0.0, %v6227
        %v6229 = vpop.f32.mrb[0].mxu0
        %v6230 = vpop.f32.mrb[0].mxu0
        %v6231 = vadd.f32 0.0, %v6230
        %v6232 = vpop.f32.mrb[0].mxu0
        %6233 = vmatprep.mubr.bf16.mxu0 %v6100
        %6234 = vmatmul.mubr.bf16.gmra.mrb[0].mxu0 %v6099
        %v6235 = vpop.f32.mrb[0].mxu0
        %v6236 = vadd.f32 0.0, %v6235
        %v6237 = vpop.f32.mrb[0].mxu0
        %v6238 = vpop.f32.mrb[0].mxu0
        %v6239 = vadd.f32 0.0, %v6238
        %v6240 = vpop.f32.mrb[0].mxu0
        %6241 = vmatprep.mubr.bf16.mxu0 %v6103
        %6242 = vmatmul.mubr.bf16.gmra.mrb[0].mxu0 %v6102
        %v6243 = vpop.f32.mrb[0].mxu0
        %v6244 = vadd.f32 0.0, %v6243
        %v6245 = vpop.f32.mrb[0].mxu0
        %v6246 = vpop.f32.mrb[0].mxu0
        %v6247 = vadd.f32 0.0, %v6246
        %v6248 = vpop.f32.mrb[0].mxu0
        %6249 = vmatprep.mubr.bf16.mxu0 %v6106
        %6250 = vmatmul.mubr.bf16.gmra.mrb[0].mxu0 %v6105
        %v6251 = vpop.f32.mrb[0].mxu0
        %v6252 = vadd.f32 0.0, %v6251
        %v6253 = vpop.f32.mrb[0].mxu0
        %v6254 = vpop.f32.mrb[0].mxu0
        %v6255 = vadd.f32 0.0, %v6254
        %v6256 = vpop.f32.mrb[0].mxu0
        %6257 = vmatprep.mubr.bf16.mxu0 %v6109
        %6258 = vmatmul.mubr.bf16.gmra.mrb[0].mxu0 %v6108
        %v6259 = vpop.f32.mrb[0].mxu0
        %v6260 = vadd.f32 0.0, %v6259
        %v6261 = vpop.f32.mrb[0].mxu0
        %v6262 = vpop.f32.mrb[0].mxu0
        %v6263 = vadd.f32 0.0, %v6262
        %v6264 = vpop.f32.mrb[0].mxu0
        %6265 = vmatprep.mubr.bf16.mxu0 %v6112
        %6266 = vmatmul.mubr.bf16.gmra.mrb[0].mxu0 %v6111
        %v6267 = vpop.f32.mrb[0].mxu0
        %v6268 = vadd.f32 0.0, %v6267
        %v6269 = vpop.f32.mrb[0].mxu0
        %v6270 = vpop.f32.mrb[0].mxu0
        %v6271 = vadd.f32 0.0, %v6270
        %v6272 = vpop.f32.mrb[0].mxu0
        %6273 = vmatprep.mubr.bf16.mxu0 %v6115
        %6274 = vmatmul.mubr.bf16.gmra.mrb[0].mxu0 %v6114
        %v6275 = vpop.f32.mrb[0].mxu0
        %v6276 = vadd.f32 0.0, %v6275
        %v6277 = vpop.f32.mrb[0].mxu0
        %v6278 = vpop.f32.mrb[0].mxu0
        %v6279 = vadd.f32 0.0, %v6278
        %v6280 = vpop.f32.mrb[0].mxu0
        %6281 = vmatprep.mubr.bf16.mxu0 %v6118
        %6282 = vmatmul.mubr.bf16.gmra.mrb[0].mxu0 %v6117
        %v6283 = vpop.f32.mrb[0].mxu0
        %v6284 = vadd.f32 0.0, %v6283
        %v6285 = vpop.f32.mrb[0].mxu0
        %v6286 = vpop.f32.mrb[0].mxu0
        %v6287 = vadd.f32 0.0, %v6286
        %v6288 = vpop.f32.mrb[0].mxu0
        %6289 = vmatprep.mubr.bf16.mxu0 %v6121
        %6290 = vmatmul.mubr.bf16.gmra.mrb[0].mxu0 %v6120
        %v6291 = vpop.f32.mrb[0].mxu0
        %v6292 = vadd.f32 0.0, %v6291
        %v6293 = vpop.f32.mrb[0].mxu0
        %v6294 = vpop.f32.mrb[0].mxu0
        %v6295 = vadd.f32 0.0, %v6294
        %v6296 = vpop.f32.mrb[0].mxu0
        %6297 = vmatprep.mubr.bf16.mxu0 %v6124
        %6298 = vmatmul.mubr.bf16.gmra.mrb[0].mxu0 %v6123
        %v6299 = vpop.f32.mrb[0].mxu0
        %v6300 = vadd.f32 0.0, %v6299
        %v6301 = vpop.f32.mrb[0].mxu0
        %v6302 = vpop.f32.mrb[0].mxu0
        %v6303 = vadd.f32 0.0, %v6302
        %v6304 = vpop.f32.mrb[0].mxu0
        %6305 = vmatprep.mubr.bf16.mxu0 %v6127
        %6306 = vmatmul.mubr.bf16.gmra.mrb[0].mxu0 %v6126
        %v6307 = vpop.f32.mrb[0].mxu0
        %v6308 = vadd.f32 0.0, %v6307
        %v6309 = vpop.f32.mrb[0].mxu0
        %v6310 = vpop.f32.mrb[0].mxu0
        %v6311 = vadd.f32 0.0, %v6310
        %v6312 = vpop.f32.mrb[0].mxu0
        %6313 = vdwg.mxu0
        %6314 = vmatprep.subr.bf16.mxu0 0
        %6315 = vmatpush1.bf16.msra.mxu0 %v6145
        %6316 = vmatprep.subr.bf16.mxu0 0
        %6317 = vmatpush1.bf16.msra.mxu0 %v6146
        %6318 = vmatprep.subr.bf16.mxu0 0
        %6319 = vmatpush1.bf16.msra.mxu0 %v6147
        %6320 = vmatprep.subr.bf16.mxu0 0
        %6321 = vmatpush1.bf16.msra.mxu0 %v6148
        %6322 = vmatprep.subr.bf16.mxu0 0
        %6323 = vmatpush1.bf16.msra.mxu0 %v6149
        %6324 = vmatprep.subr.bf16.mxu0 0
        %6325 = vmatpush1.bf16.msra.mxu0 %v6150
        %6326 = vmatprep.subr.bf16.mxu0 0
        %6327 = vmatpush1.bf16.msra.mxu0 %v6151
        %6328 = vmatprep.subr.bf16.mxu0 0
        %6329 = vmatpush1.bf16.msra.mxu0 %v6152
        %6330 = vmatprep.subr.bf16.mxu0 0
        %6331 = vmatpush1.bf16.msra.mxu0 0
        %6332 = vmatprep.subr.bf16.mxu0 0
        %6333 = vmatpush1.bf16.msra.mxu0 0
        %6334 = vmatprep.subr.bf16.mxu0 0
        %6335 = vmatpush1.bf16.msra.mxu0 0
        %6336 = vmatprep.subr.bf16.mxu0 0
        %6337 = vmatpush1.bf16.msra.mxu0 0
        %6338 = vmatprep.subr.bf16.mxu0 0
        %6339 = vmatpush1.bf16.msra.mxu0 0
        %6340 = vmatprep.subr.bf16.mxu0 0
        %6341 = vmatpush1.bf16.msra.mxu0 0
        %6342 = vmatprep.subr.bf16.mxu0 0
        %6343 = vmatpush1.bf16.msra.mxu0 0
        %6344 = vmatprep.subr.bf16.mxu0 0
        %6345 = vmatpush1.bf16.msra.mxu0 0
        %6346 = vmatprep.mubr.bf16.mxu0 0
        %6347 = vmatmul.mubr.bf16.gmra.mrb[0].mxu0 %v6083
        %v6348 = vpop.f32.mrb[0].mxu0
        %v6349 = vadd.f32 %v6188, %v6348
        %v6350 = vpop.f32.mrb[0].mxu0
        %v6351 = vpop.f32.mrb[0].mxu0
        %v6352 = vadd.f32 %v6191, %v6351
        %v6353 = vpop.f32.mrb[0].mxu0
        %6354 = vmatprep.mubr.bf16.mxu0 0
        %6355 = vmatmul.mubr.bf16.gmra.mrb[0].mxu0 %v6086
        %v6356 = vpop.f32.mrb[0].mxu0
        %v6357 = vadd.f32 %v6196, %v6356
        %v6358 = vpop.f32.mrb[0].mxu0
        %v6359 = vpop.f32.mrb[0].mxu0
        %v6360 = vadd.f32 %v6199, %v6359
        %v6361 = vpop.f32.mrb[0].mxu0
        %6362 = vmatprep.mubr.bf16.mxu0 0
        %6363 = vmatmul.mubr.bf16.gmra.mrb[0].mxu0 %v6089
        %v6364 = vpop.f32.mrb[0].mxu0
        %v6365 = vadd.f32 %v6204, %v6364
        %v6366 = vpop.f32.mrb[0].mxu0
        %v6367 = vpop.f32.mrb[0].mxu0
        %v6368 = vadd.f32 %v6207, %v6367
        %v6369 = vpop.f32.mrb[0].mxu0
        %6370 = vmatprep.mubr.bf16.mxu0 0
        %6371 = vmatmul.mubr.bf16.gmra.mrb[0].mxu0 %v6092
        %v6372 = vpop.f32.mrb[0].mxu0
        %v6373 = vadd.f32 %v6212, %v6372
        %v6374 = vpop.f32.mrb[0].mxu0
        %v6375 = vpop.f32.mrb[0].mxu0
        %v6376 = vadd.f32 %v6215, %v6375
        %v6377 = vpop.f32.mrb[0].mxu0
        %6378 = vmatprep.mubr.bf16.mxu0 0
        %6379 = vmatmul.mubr.bf16.gmra.mrb[0].mxu0 %v6095
        %v6380 = vpop.f32.mrb[0].mxu0
        %v6381 = vadd.f32 %v6220, %v6380
        %v6382 = vpop.f32.mrb[0].mxu0
        %v6383 = vpop.f32.mrb[0].mxu0
        %v6384 = vadd.f32 %v6223, %v6383
        %v6385 = vpop.f32.mrb[0].mxu0
        %6386 = vmatprep.mubr.bf16.mxu0 0
        %6387 = vmatmul.mubr.bf16.gmra.mrb[0].mxu0 %v6098
        %v6388 = vpop.f32.mrb[0].mxu0
        %v6389 = vadd.f32 %v6228, %v6388
        %v6390 = vpop.f32.mrb[0].mxu0
        %v6391 = vpop.f32.mrb[0].mxu0
        %v6392 = vadd.f32 %v6231, %v6391
        %v6393 = vpop.f32.mrb[0].mxu0
        %6394 = vmatprep.mubr.bf16.mxu0 0
        %6395 = vmatmul.mubr.bf16.gmra.mrb[0].mxu0 %v6101
        %v6396 = vpop.f32.mrb[0].mxu0
        %v6397 = vadd.f32 %v6236, %v6396
        %v6398 = vpop.f32.mrb[0].mxu0
        %v6399 = vpop.f32.mrb[0].mxu0
        %v6400 = vadd.f32 %v6239, %v6399
        %v6401 = vpop.f32.mrb[0].mxu0
        %6402 = vmatprep.mubr.bf16.mxu0 0
        %6403 = vmatmul.mubr.bf16.gmra.mrb[0].mxu0 %v6104
        %v6404 = vpop.f32.mrb[0].mxu0
        %v6405 = vadd.f32 %v6244, %v6404
        %v6406 = vpop.f32.mrb[0].mxu0
        %v6407 = vpop.f32.mrb[0].mxu0
        %v6408 = vadd.f32 %v6247, %v6407
        %v6409 = vpop.f32.mrb[0].mxu0
        %6410 = vmatprep.mubr.bf16.mxu0 0
        %6411 = vmatmul.mubr.bf16.gmra.mrb[0].mxu0 %v6107
        %v6412 = vpop.f32.mrb[0].mxu0
        %v6413 = vadd.f32 %v6252, %v6412
        %v6414 = vpop.f32.mrb[0].mxu0
        %v6415 = vpop.f32.mrb[0].mxu0
        %v6416 = vadd.f32 %v6255, %v6415
        %v6417 = vpop.f32.mrb[0].mxu0
        %6418 = vmatprep.mubr.bf16.mxu0 0
        %6419 = vmatmul.mubr.bf16.gmra.mrb[0].mxu0 %v6110
        %v6420 = vpop.f32.mrb[0].mxu0
        %v6421 = vadd.f32 %v6260, %v6420
        %v6422 = vpop.f32.mrb[0].mxu0
        %v6423 = vpop.f32.mrb[0].mxu0
        %v6424 = vadd.f32 %v6263, %v6423
        %v6425 = vpop.f32.mrb[0].mxu0
        %6426 = vmatprep.mubr.bf16.mxu0 0
        %6427 = vmatmul.mubr.bf16.gmra.mrb[0].mxu0 %v6113
        %v6428 = vpop.f32.mrb[0].mxu0
        %v6429 = vadd.f32 %v6268, %v6428
        %v6430 = vpop.f32.mrb[0].mxu0
        %v6431 = vpop.f32.mrb[0].mxu0
        %v6432 = vadd.f32 %v6271, %v6431
        %v6433 = vpop.f32.mrb[0].mxu0
        %6434 = vmatprep.mubr.bf16.mxu0 0
        %6435 = vmatmul.mubr.bf16.gmra.mrb[0].mxu0 %v6116
        %v6436 = vpop.f32.mrb[0].mxu0
        %v6437 = vadd.f32 %v6276, %v6436
        %v6438 = vpop.f32.mrb[0].mxu0
        %v6439 = vpop.f32.mrb[0].mxu0
        %v6440 = vadd.f32 %v6279, %v6439
        %v6441 = vpop.f32.mrb[0].mxu0
        %6442 = vmatprep.mubr.bf16.mxu0 0
        %6443 = vmatmul.mubr.bf16.gmra.mrb[0].mxu0 %v6119
        %v6444 = vpop.f32.mrb[0].mxu0
        %v6445 = vadd.f32 %v6284, %v6444
        %v6446 = vpop.f32.mrb[0].mxu0
        %v6447 = vpop.f32.mrb[0].mxu0
        %v6448 = vadd.f32 %v6287, %v6447
        %v6449 = vpop.f32.mrb[0].mxu0
        %6450 = vmatprep.mubr.bf16.mxu0 0
        %6451 = vmatmul.mubr.bf16.gmra.mrb[0].mxu0 %v6122
        %v6452 = vpop.f32.mrb[0].mxu0
        %v6453 = vadd.f32 %v6292, %v6452
        %v6454 = vpop.f32.mrb[0].mxu0
        %v6455 = vpop.f32.mrb[0].mxu0
        %v6456 = vadd.f32 %v6295, %v6455
        %v6457 = vpop.f32.mrb[0].mxu0
        %6458 = vmatprep.mubr.bf16.mxu0 0
        %6459 = vmatmul.mubr.bf16.gmra.mrb[0].mxu0 %v6125
        %v6460 = vpop.f32.mrb[0].mxu0
        %v6461 = vadd.f32 %v6300, %v6460
        %v6462 = vpop.f32.mrb[0].mxu0
        %v6463 = vpop.f32.mrb[0].mxu0
        %v6464 = vadd.f32 %v6303, %v6463
        %v6465 = vpop.f32.mrb[0].mxu0
        %6466 = vmatprep.mubr.bf16.mxu0 0
        %6467 = vmatmul.mubr.bf16.gmra.mrb[0].mxu0 %v6128
        %v6468 = vpop.f32.mrb[0].mxu0
        %v6469 = vadd.f32 %v6308, %v6468
        %v6470 = vpop.f32.mrb[0].mxu0
        %v6471 = vpop.f32.mrb[0].mxu0
        %v6472 = vadd.f32 %v6311, %v6471
        %v6473 = vpop.f32.mrb[0].mxu0
        %6474 = vdwg.mxu0
        %v6475 = vadd.f32 %v5427, %v6349
        %v6476 = vadd.f32 %v5430, %v6352
        %v6477 = vadd.f32 %v5435, %v6357
        %v6478 = vadd.f32 %v5438, %v6360
        %v6479 = vadd.f32 %v5443, %v6365
        %v6480 = vadd.f32 %v5446, %v6368
        %v6481 = vadd.f32 %v5451, %v6373
        %v6482 = vadd.f32 %v5454, %v6376
        %v6483 = vadd.f32 %v5459, %v6381
        %v6484 = vadd.f32 %v5462, %v6384
        %v6485 = vadd.f32 %v5467, %v6389
        %v6486 = vadd.f32 %v5470, %v6392
        %v6487 = vadd.f32 %v5475, %v6397
        %v6488 = vadd.f32 %v5478, %v6400
        %v6489 = vadd.f32 %v5483, %v6405
        %v6490 = vadd.f32 %v5486, %v6408
        %v6491 = vadd.f32 %v5491, %v6413
        %v6492 = vadd.f32 %v5494, %v6416
        %v6493 = vadd.f32 %v5499, %v6421
        %v6494 = vadd.f32 %v5502, %v6424
        %v6495 = vadd.f32 %v5507, %v6429
        %v6496 = vadd.f32 %v5510, %v6432
        %v6497 = vadd.f32 %v5515, %v6437
        %v6498 = vadd.f32 %v5518, %v6440
        %v6499 = vadd.f32 %v5523, %v6445
        %v6500 = vadd.f32 %v5526, %v6448
        %v6501 = vadd.f32 %v5531, %v6453
        %v6502 = vadd.f32 %v5534, %v6456
        %v6503 = vadd.f32 %v5539, %v6461
        %v6504 = vadd.f32 %v5542, %v6464
        %v6505 = vadd.f32 %v5547, %v6469
        %v6506 = vadd.f32 %v5550, %v6472
        %v6507 = vrot.slane %v610, 7
        %v6508 = vrot.slane %v613, 7
        %v6509 = vrot.slane %v618, 7
        %v6510 = vrot.slane %v621, 7
        %v6511 = vrot.slane %v626, 7
        %v6512 = vrot.slane %v629, 7
        %v6513 = vrot.slane %v634, 7
        %v6514 = vrot.slane %v637, 7
        %v6515 = vrot.slane %v642, 7
        %v6516 = vrot.slane %v645, 7
        %v6517 = vrot.slane %v650, 7
        %v6518 = vrot.slane %v653, 7
        %v6519 = vrot.slane %v658, 7
        %v6520 = vrot.slane %v661, 7
        %v6521 = vrot.slane %v666, 7
        %v6522 = vrot.slane %v669, 7
        %v6523 = vrot.slane %v674, 7
        %v6524 = vrot.slane %v677, 7
        %v6525 = vrot.slane %v682, 7
        %v6526 = vrot.slane %v685, 7
        %v6527 = vrot.slane %v690, 7
        %v6528 = vrot.slane %v693, 7
        %v6529 = vrot.slane %v698, 7
        %v6530 = vrot.slane %v701, 7
        %v6531 = vrot.slane %v706, 7
        %v6532 = vrot.slane %v709, 7
        %v6533 = vrot.slane %v714, 7
        %v6534 = vrot.slane %v717, 7
        %v6535 = vrot.slane %v722, 7
        %v6536 = vrot.slane %v725, 7
        %v6537 = vrot.slane %v730, 7
        %v6538 = vrot.slane %v733, 7
        %vm6539 = vcmp.lt.s32.totalorder %v970, 1
        %v6540 = vsel %vm6539, %v6537, %v6538
        %v6541 = vsel %vm6539, %v6536, %v6537
        %v6542 = vsel %vm6539, %v6535, %v6536
        %v6543 = vsel %vm6539, %v6534, %v6535
        %v6544 = vsel %vm6539, %v6533, %v6534
        %v6545 = vsel %vm6539, %v6532, %v6533
        %v6546 = vsel %vm6539, %v6531, %v6532
        %v6547 = vsel %vm6539, %v6530, %v6531
        %v6548 = vsel %vm6539, %v6529, %v6530
        %v6549 = vsel %vm6539, %v6528, %v6529
        %v6550 = vsel %vm6539, %v6527, %v6528
        %v6551 = vsel %vm6539, %v6526, %v6527
        %v6552 = vsel %vm6539, %v6525, %v6526
        %v6553 = vsel %vm6539, %v6524, %v6525
        %v6554 = vsel %vm6539, %v6523, %v6524
        %v6555 = vsel %vm6539, %v6522, %v6523
        %v6556 = vsel %vm6539, %v6521, %v6522
        %v6557 = vsel %vm6539, %v6520, %v6521
        %v6558 = vsel %vm6539, %v6519, %v6520
        %v6559 = vsel %vm6539, %v6518, %v6519
        %v6560 = vsel %vm6539, %v6517, %v6518
        %v6561 = vsel %vm6539, %v6516, %v6517
        %v6562 = vsel %vm6539, %v6515, %v6516
        %v6563 = vsel %vm6539, %v6514, %v6515
        %v6564 = vsel %vm6539, %v6513, %v6514
        %v6565 = vsel %vm6539, %v6512, %v6513
        %v6566 = vsel %vm6539, %v6511, %v6512
        %v6567 = vsel %vm6539, %v6510, %v6511
        %v6568 = vsel %vm6539, %v6509, %v6510
        %v6569 = vsel %vm6539, %v6508, %v6509
        %v6570 = vsel %vm6539, %v6507, %v6508
        %v6571 = vsel %vm6539, %v6538, %v6507
        %6572 = vset.pattern.permute.xlu0 18
        %6573 = vperm.xlu0 %6572, %v1004
        %v6574 = vpop.permute.xlu0 %6573
        %6576 = vset.pattern.permute.xlu0 18
        %6577 = vperm.xlu0 %6576, %v1005
        %v6578 = vpop.permute.xlu0 %6577
        %6580 = vset.pattern.permute.xlu0 18
        %6581 = vperm.xlu0 %6580, %v1006
        %v6582 = vpop.permute.xlu0 %6581
        %6584 = vset.pattern.permute.xlu0 18
        %6585 = vperm.xlu0 %6584, %v1007
        %v6586 = vpop.permute.xlu0 %6585
        %6588 = vset.pattern.permute.xlu0 18
        %6589 = vperm.xlu0 %6588, %v1008
        %v6590 = vpop.permute.xlu0 %6589
        %6592 = vset.pattern.permute.xlu0 18
        %6593 = vperm.xlu0 %6592, %v1009
        %v6594 = vpop.permute.xlu0 %6593
        %6596 = vset.pattern.permute.xlu0 18
        %6597 = vperm.xlu0 %6596, %v1010
        %v6598 = vpop.permute.xlu0 %6597
        %6600 = vset.pattern.permute.xlu0 18
        %6601 = vperm.xlu0 %6600, %v1011
        %v6602 = vpop.permute.xlu0 %6601
        %6604 = vset.pattern.permute.xlu0 18
        %6605 = vperm.xlu0 %6604, %v1012
        %v6606 = vpop.permute.xlu0 %6605
        %6608 = vset.pattern.permute.xlu0 18
        %6609 = vperm.xlu0 %6608, %v1013
        %v6610 = vpop.permute.xlu0 %6609
        %6612 = vset.pattern.permute.xlu0 18
        %6613 = vperm.xlu0 %6612, %v1014
        %v6614 = vpop.permute.xlu0 %6613
        %6616 = vset.pattern.permute.xlu0 18
        %6617 = vperm.xlu0 %6616, %v1015
        %v6618 = vpop.permute.xlu0 %6617
        %6620 = vset.pattern.permute.xlu0 18
        %6621 = vperm.xlu0 %6620, %v1016
        %v6622 = vpop.permute.xlu0 %6621
        %6624 = vset.pattern.permute.xlu0 18
        %6625 = vperm.xlu0 %6624, %v1017
        %v6626 = vpop.permute.xlu0 %6625
        %6628 = vset.pattern.permute.xlu0 18
        %6629 = vperm.xlu0 %6628, %v1018
        %v6630 = vpop.permute.xlu0 %6629
        %6632 = vset.pattern.permute.xlu0 18
        %6633 = vperm.xlu0 %6632, %v1019
        %v6634 = vpop.permute.xlu0 %6633
        %6636 = vset.pattern.permute.xlu0 18
        %6637 = vperm.xlu0 %6636, %v1020
        %v6638 = vpop.permute.xlu0 %6637
        %6640 = vset.pattern.permute.xlu0 18
        %6641 = vperm.xlu0 %6640, %v1021
        %v6642 = vpop.permute.xlu0 %6641
        %6644 = vset.pattern.permute.xlu0 18
        %6645 = vperm.xlu0 %6644, %v1022
        %v6646 = vpop.permute.xlu0 %6645
        %6648 = vset.pattern.permute.xlu0 18
        %6649 = vperm.xlu0 %6648, %v1023
        %v6650 = vpop.permute.xlu0 %6649
        %6652 = vset.pattern.permute.xlu0 18
        %6653 = vperm.xlu0 %6652, %v1024
        %v6654 = vpop.permute.xlu0 %6653
        %6656 = vset.pattern.permute.xlu0 18
        %6657 = vperm.xlu0 %6656, %v1025
        %v6658 = vpop.permute.xlu0 %6657
        %6660 = vset.pattern.permute.xlu0 18
        %6661 = vperm.xlu0 %6660, %v1026
        %v6662 = vpop.permute.xlu0 %6661
        %6664 = vset.pattern.permute.xlu0 18
        %6665 = vperm.xlu0 %6664, %v1027
        %v6666 = vpop.permute.xlu0 %6665
        %6668 = vset.pattern.permute.xlu0 18
        %6669 = vperm.xlu0 %6668, %v1028
        %v6670 = vpop.permute.xlu0 %6669
        %6672 = vset.pattern.permute.xlu0 18
        %6673 = vperm.xlu0 %6672, %v1029
        %v6674 = vpop.permute.xlu0 %6673
        %6676 = vset.pattern.permute.xlu0 18
        %6677 = vperm.xlu0 %6676, %v1030
        %v6678 = vpop.permute.xlu0 %6677
        %6680 = vset.pattern.permute.xlu0 18
        %6681 = vperm.xlu0 %6680, %v1031
        %v6682 = vpop.permute.xlu0 %6681
        %6684 = vset.pattern.permute.xlu0 18
        %6685 = vperm.xlu0 %6684, %v1032
        %v6686 = vpop.permute.xlu0 %6685
        %6688 = vset.pattern.permute.xlu0 18
        %6689 = vperm.xlu0 %6688, %v1033
        %v6690 = vpop.permute.xlu0 %6689
        %6692 = vset.pattern.permute.xlu0 18
        %6693 = vperm.xlu0 %6692, %v1034
        %v6694 = vpop.permute.xlu0 %6693
        %6696 = vset.pattern.permute.xlu0 18
        %6697 = vperm.xlu0 %6696, %v1035
        %v6698 = vpop.permute.xlu0 %6697
        %v6700 = vmul.f32 %v6558, %v6574
        %v6701 = vmul.f32 %v6557, %v6578
        %v6702 = vmul.f32 %v6556, %v6582
        %v6703 = vmul.f32 %v6555, %v6586
        %v6704 = vmul.f32 %v6554, %v6590
        %v6705 = vmul.f32 %v6553, %v6594
        %v6706 = vmul.f32 %v6552, %v6598
        %v6707 = vmul.f32 %v6551, %v6602
        %v6708 = vmul.f32 %v6550, %v6606
        %v6709 = vmul.f32 %v6549, %v6610
        %v6710 = vmul.f32 %v6548, %v6614
        %v6711 = vmul.f32 %v6547, %v6618
        %v6712 = vmul.f32 %v6546, %v6622
        %v6713 = vmul.f32 %v6545, %v6626
        %v6714 = vmul.f32 %v6544, %v6630
        %v6715 = vmul.f32 %v6543, %v6634
        %v6716 = vmul.f32 %v6542, %v6638
        %v6717 = vmul.f32 %v6541, %v6642
        %v6718 = vmul.f32 %v6540, %v6646
        %v6719 = vmul.f32 %v6571, %v6650
        %v6720 = vmul.f32 %v6570, %v6654
        %v6721 = vmul.f32 %v6569, %v6658
        %v6722 = vmul.f32 %v6568, %v6662
        %v6723 = vmul.f32 %v6567, %v6666
        %v6724 = vmul.f32 %v6566, %v6670
        %v6725 = vmul.f32 %v6565, %v6674
        %v6726 = vmul.f32 %v6564, %v6678
        %v6727 = vmul.f32 %v6563, %v6682
        %v6728 = vmul.f32 %v6562, %v6686
        %v6729 = vmul.f32 %v6561, %v6690
        %v6730 = vmul.f32 %v6560, %v6694
        %v6731 = vmul.f32 %v6559, %v6698
        %6732 = vset.pattern.permute.xlu0 19
        %6733 = vperm.xlu0 %6732, %v1004
        %v6734 = vpop.permute.xlu0 %6733
        %6736 = vset.pattern.permute.xlu0 19
        %6737 = vperm.xlu0 %6736, %v1005
        %v6738 = vpop.permute.xlu0 %6737
        %6740 = vset.pattern.permute.xlu0 19
        %6741 = vperm.xlu0 %6740, %v1006
        %v6742 = vpop.permute.xlu0 %6741
        %6744 = vset.pattern.permute.xlu0 19
        %6745 = vperm.xlu0 %6744, %v1007
        %v6746 = vpop.permute.xlu0 %6745
        %6748 = vset.pattern.permute.xlu0 19
        %6749 = vperm.xlu0 %6748, %v1008
        %v6750 = vpop.permute.xlu0 %6749
        %6752 = vset.pattern.permute.xlu0 19
        %6753 = vperm.xlu0 %6752, %v1009
        %v6754 = vpop.permute.xlu0 %6753
        %6756 = vset.pattern.permute.xlu0 19
        %6757 = vperm.xlu0 %6756, %v1010
        %v6758 = vpop.permute.xlu0 %6757
        %6760 = vset.pattern.permute.xlu0 19
        %6761 = vperm.xlu0 %6760, %v1011
        %v6762 = vpop.permute.xlu0 %6761
        %6764 = vset.pattern.permute.xlu0 19
        %6765 = vperm.xlu0 %6764, %v1012
        %v6766 = vpop.permute.xlu0 %6765
        %6768 = vset.pattern.permute.xlu0 19
        %6769 = vperm.xlu0 %6768, %v1013
        %v6770 = vpop.permute.xlu0 %6769
        %6772 = vset.pattern.permute.xlu0 19
        %6773 = vperm.xlu0 %6772, %v1014
        %v6774 = vpop.permute.xlu0 %6773
        %6776 = vset.pattern.permute.xlu0 19
        %6777 = vperm.xlu0 %6776, %v1015
        %v6778 = vpop.permute.xlu0 %6777
        %6780 = vset.pattern.permute.xlu0 19
        %6781 = vperm.xlu0 %6780, %v1016
        %v6782 = vpop.permute.xlu0 %6781
        %6784 = vset.pattern.permute.xlu0 19
        %6785 = vperm.xlu0 %6784, %v1017
        %v6786 = vpop.permute.xlu0 %6785
        %6788 = vset.pattern.permute.xlu0 19
        %6789 = vperm.xlu0 %6788, %v1018
        %v6790 = vpop.permute.xlu0 %6789
        %6792 = vset.pattern.permute.xlu0 19
        %6793 = vperm.xlu0 %6792, %v1019
        %v6794 = vpop.permute.xlu0 %6793
        %6796 = vset.pattern.permute.xlu0 19
        %6797 = vperm.xlu0 %6796, %v1020
        %v6798 = vpop.permute.xlu0 %6797
        %6800 = vset.pattern.permute.xlu0 19
        %6801 = vperm.xlu0 %6800, %v1021
        %v6802 = vpop.permute.xlu0 %6801
        %6804 = vset.pattern.permute.xlu0 19
        %6805 = vperm.xlu0 %6804, %v1022
        %v6806 = vpop.permute.xlu0 %6805
        %6808 = vset.pattern.permute.xlu0 19
        %6809 = vperm.xlu0 %6808, %v1023
        %v6810 = vpop.permute.xlu0 %6809
        %6812 = vset.pattern.permute.xlu0 19
        %6813 = vperm.xlu0 %6812, %v1024
        %v6814 = vpop.permute.xlu0 %6813
        %6816 = vset.pattern.permute.xlu0 19
        %6817 = vperm.xlu0 %6816, %v1025
        %v6818 = vpop.permute.xlu0 %6817
        %6820 = vset.pattern.permute.xlu0 19
        %6821 = vperm.xlu0 %6820, %v1026
        %v6822 = vpop.permute.xlu0 %6821
        %6824 = vset.pattern.permute.xlu0 19
        %6825 = vperm.xlu0 %6824, %v1027
        %v6826 = vpop.permute.xlu0 %6825
        %6828 = vset.pattern.permute.xlu0 19
        %6829 = vperm.xlu0 %6828, %v1028
        %v6830 = vpop.permute.xlu0 %6829
        %6832 = vset.pattern.permute.xlu0 19
        %6833 = vperm.xlu0 %6832, %v1029
        %v6834 = vpop.permute.xlu0 %6833
        %6836 = vset.pattern.permute.xlu0 19
        %6837 = vperm.xlu0 %6836, %v1030
        %v6838 = vpop.permute.xlu0 %6837
        %6840 = vset.pattern.permute.xlu0 19
        %6841 = vperm.xlu0 %6840, %v1031
        %v6842 = vpop.permute.xlu0 %6841
        %6844 = vset.pattern.permute.xlu0 19
        %6845 = vperm.xlu0 %6844, %v1032
        %v6846 = vpop.permute.xlu0 %6845
        %6848 = vset.pattern.permute.xlu0 19
        %6849 = vperm.xlu0 %6848, %v1033
        %v6850 = vpop.permute.xlu0 %6849
        %6852 = vset.pattern.permute.xlu0 19
        %6853 = vperm.xlu0 %6852, %v1034
        %v6854 = vpop.permute.xlu0 %6853
        %6856 = vset.pattern.permute.xlu0 19
        %6857 = vperm.xlu0 %6856, %v1035
        %v6858 = vpop.permute.xlu0 %6857
        %v6860 = vmul.f32 %v666, %v6734
        %v6861 = vmul.f32 %v669, %v6738
        %v6862 = vmul.f32 %v674, %v6742
        %v6863 = vmul.f32 %v677, %v6746
        %v6864 = vmul.f32 %v682, %v6750
        %v6865 = vmul.f32 %v685, %v6754
        %v6866 = vmul.f32 %v690, %v6758
        %v6867 = vmul.f32 %v693, %v6762
        %v6868 = vmul.f32 %v698, %v6766
        %v6869 = vmul.f32 %v701, %v6770
        %v6870 = vmul.f32 %v706, %v6774
        %v6871 = vmul.f32 %v709, %v6778
        %v6872 = vmul.f32 %v714, %v6782
        %v6873 = vmul.f32 %v717, %v6786
        %v6874 = vmul.f32 %v722, %v6790
        %v6875 = vmul.f32 %v725, %v6794
        %v6876 = vmul.f32 %v730, %v6798
        %v6877 = vmul.f32 %v733, %v6802
        %v6878 = vmul.f32 %v610, %v6806
        %v6879 = vmul.f32 %v613, %v6810
        %v6880 = vmul.f32 %v618, %v6814
        %v6881 = vmul.f32 %v621, %v6818
        %v6882 = vmul.f32 %v626, %v6822
        %v6883 = vmul.f32 %v629, %v6826
        %v6884 = vmul.f32 %v634, %v6830
        %v6885 = vmul.f32 %v637, %v6834
        %v6886 = vmul.f32 %v642, %v6838
        %v6887 = vmul.f32 %v645, %v6842
        %v6888 = vmul.f32 %v650, %v6846
        %v6889 = vmul.f32 %v653, %v6850
        %v6890 = vmul.f32 %v658, %v6854
        %v6891 = vmul.f32 %v661, %v6858
        %v6892 = vrot.slane %v610, 1
        %v6893 = vrot.slane %v613, 1
        %v6894 = vrot.slane %v618, 1
        %v6895 = vrot.slane %v621, 1
        %v6896 = vrot.slane %v626, 1
        %v6897 = vrot.slane %v629, 1
        %v6898 = vrot.slane %v634, 1
        %v6899 = vrot.slane %v637, 1
        %v6900 = vrot.slane %v642, 1
        %v6901 = vrot.slane %v645, 1
        %v6902 = vrot.slane %v650, 1
        %v6903 = vrot.slane %v653, 1
        %v6904 = vrot.slane %v658, 1
        %v6905 = vrot.slane %v661, 1
        %v6906 = vrot.slane %v666, 1
        %v6907 = vrot.slane %v669, 1
        %v6908 = vrot.slane %v674, 1
        %v6909 = vrot.slane %v677, 1
        %v6910 = vrot.slane %v682, 1
        %v6911 = vrot.slane %v685, 1
        %v6912 = vrot.slane %v690, 1
        %v6913 = vrot.slane %v693, 1
        %v6914 = vrot.slane %v698, 1
        %v6915 = vrot.slane %v701, 1
        %v6916 = vrot.slane %v706, 1
        %v6917 = vrot.slane %v709, 1
        %v6918 = vrot.slane %v714, 1
        %v6919 = vrot.slane %v717, 1
        %v6920 = vrot.slane %v722, 1
        %v6921 = vrot.slane %v725, 1
        %v6922 = vrot.slane %v730, 1
        %v6923 = vrot.slane %v733, 1
        %vm6924 = vcmp.lt.s32.totalorder %v970, 7
        %v6925 = vsel %vm6924, %v6922, %v6923
        %v6926 = vsel %vm6924, %v6921, %v6922
        %v6927 = vsel %vm6924, %v6920, %v6921
        %v6928 = vsel %vm6924, %v6919, %v6920
        %v6929 = vsel %vm6924, %v6918, %v6919
        %v6930 = vsel %vm6924, %v6917, %v6918
        %v6931 = vsel %vm6924, %v6916, %v6917
        %v6932 = vsel %vm6924, %v6915, %v6916
        %v6933 = vsel %vm6924, %v6914, %v6915
        %v6934 = vsel %vm6924, %v6913, %v6914
        %v6935 = vsel %vm6924, %v6912, %v6913
        %v6936 = vsel %vm6924, %v6911, %v6912
        %v6937 = vsel %vm6924, %v6910, %v6911
        %v6938 = vsel %vm6924, %v6909, %v6910
        %v6939 = vsel %vm6924, %v6908, %v6909
        %v6940 = vsel %vm6924, %v6907, %v6908
        %v6941 = vsel %vm6924, %v6906, %v6907
        %v6942 = vsel %vm6924, %v6905, %v6906
        %v6943 = vsel %vm6924, %v6904, %v6905
        %v6944 = vsel %vm6924, %v6903, %v6904
        %v6945 = vsel %vm6924, %v6902, %v6903
        %v6946 = vsel %vm6924, %v6901, %v6902
        %v6947 = vsel %vm6924, %v6900, %v6901
        %v6948 = vsel %vm6924, %v6899, %v6900
        %v6949 = vsel %vm6924, %v6898, %v6899
        %v6950 = vsel %vm6924, %v6897, %v6898
        %v6951 = vsel %vm6924, %v6896, %v6897
        %v6952 = vsel %vm6924, %v6895, %v6896
        %v6953 = vsel %vm6924, %v6894, %v6895
        %v6954 = vsel %vm6924, %v6893, %v6894
        %v6955 = vsel %vm6924, %v6892, %v6893
        %v6956 = vsel %vm6924, %v6923, %v6892
        %6957 = vset.pattern.permute.xlu0 20
        %6958 = vperm.xlu0 %6957, %v1004
        %v6959 = vpop.permute.xlu0 %6958
        %6961 = vset.pattern.permute.xlu0 20
        %6962 = vperm.xlu0 %6961, %v1005
        %v6963 = vpop.permute.xlu0 %6962
        %6965 = vset.pattern.permute.xlu0 20
        %6966 = vperm.xlu0 %6965, %v1006
        %v6967 = vpop.permute.xlu0 %6966
        %6969 = vset.pattern.permute.xlu0 20
        %6970 = vperm.xlu0 %6969, %v1007
        %v6971 = vpop.permute.xlu0 %6970
        %6973 = vset.pattern.permute.xlu0 20
        %6974 = vperm.xlu0 %6973, %v1008
        %v6975 = vpop.permute.xlu0 %6974
        %6977 = vset.pattern.permute.xlu0 20
        %6978 = vperm.xlu0 %6977, %v1009
        %v6979 = vpop.permute.xlu0 %6978
        %6981 = vset.pattern.permute.xlu0 20
        %6982 = vperm.xlu0 %6981, %v1010
        %v6983 = vpop.permute.xlu0 %6982
        %6985 = vset.pattern.permute.xlu0 20
        %6986 = vperm.xlu0 %6985, %v1011
        %v6987 = vpop.permute.xlu0 %6986
        %6989 = vset.pattern.permute.xlu0 20
        %6990 = vperm.xlu0 %6989, %v1012
        %v6991 = vpop.permute.xlu0 %6990
        %6993 = vset.pattern.permute.xlu0 20
        %6994 = vperm.xlu0 %6993, %v1013
        %v6995 = vpop.permute.xlu0 %6994
        %6997 = vset.pattern.permute.xlu0 20
        %6998 = vperm.xlu0 %6997, %v1014
        %v6999 = vpop.permute.xlu0 %6998
        %7001 = vset.pattern.permute.xlu0 20
        %7002 = vperm.xlu0 %7001, %v1015
        %v7003 = vpop.permute.xlu0 %7002
        %7005 = vset.pattern.permute.xlu0 20
        %7006 = vperm.xlu0 %7005, %v1016
        %v7007 = vpop.permute.xlu0 %7006
        %7009 = vset.pattern.permute.xlu0 20
        %7010 = vperm.xlu0 %7009, %v1017
        %v7011 = vpop.permute.xlu0 %7010
        %7013 = vset.pattern.permute.xlu0 20
        %7014 = vperm.xlu0 %7013, %v1018
        %v7015 = vpop.permute.xlu0 %7014
        %7017 = vset.pattern.permute.xlu0 20
        %7018 = vperm.xlu0 %7017, %v1019
        %v7019 = vpop.permute.xlu0 %7018
        %7021 = vset.pattern.permute.xlu0 20
        %7022 = vperm.xlu0 %7021, %v1020
        %v7023 = vpop.permute.xlu0 %7022
        %7025 = vset.pattern.permute.xlu0 20
        %7026 = vperm.xlu0 %7025, %v1021
        %v7027 = vpop.permute.xlu0 %7026
        %7029 = vset.pattern.permute.xlu0 20
        %7030 = vperm.xlu0 %7029, %v1022
        %v7031 = vpop.permute.xlu0 %7030
        %7033 = vset.pattern.permute.xlu0 20
        %7034 = vperm.xlu0 %7033, %v1023
        %v7035 = vpop.permute.xlu0 %7034
        %7037 = vset.pattern.permute.xlu0 20
        %7038 = vperm.xlu0 %7037, %v1024
        %v7039 = vpop.permute.xlu0 %7038
        %7041 = vset.pattern.permute.xlu0 20
        %7042 = vperm.xlu0 %7041, %v1025
        %v7043 = vpop.permute.xlu0 %7042
        %7045 = vset.pattern.permute.xlu0 20
        %7046 = vperm.xlu0 %7045, %v1026
        %v7047 = vpop.permute.xlu0 %7046
        %7049 = vset.pattern.permute.xlu0 20
        %7050 = vperm.xlu0 %7049, %v1027
        %v7051 = vpop.permute.xlu0 %7050
        %7053 = vset.pattern.permute.xlu0 20
        %7054 = vperm.xlu0 %7053, %v1028
        %v7055 = vpop.permute.xlu0 %7054
        %7057 = vset.pattern.permute.xlu0 20
        %7058 = vperm.xlu0 %7057, %v1029
        %v7059 = vpop.permute.xlu0 %7058
        %7061 = vset.pattern.permute.xlu0 20
        %7062 = vperm.xlu0 %7061, %v1030
        %v7063 = vpop.permute.xlu0 %7062
        %7065 = vset.pattern.permute.xlu0 20
        %7066 = vperm.xlu0 %7065, %v1031
        %v7067 = vpop.permute.xlu0 %7066
        %7069 = vset.pattern.permute.xlu0 20
        %7070 = vperm.xlu0 %7069, %v1032
        %v7071 = vpop.permute.xlu0 %7070
        %7073 = vset.pattern.permute.xlu0 20
        %7074 = vperm.xlu0 %7073, %v1033
        %v7075 = vpop.permute.xlu0 %7074
        %7077 = vset.pattern.permute.xlu0 20
        %7078 = vperm.xlu0 %7077, %v1034
        %v7079 = vpop.permute.xlu0 %7078
        %7081 = vset.pattern.permute.xlu0 20
        %7082 = vperm.xlu0 %7081, %v1035
        %v7083 = vpop.permute.xlu0 %7082
        %v7085 = vmul.f32 %v6940, %v6959
        %v7086 = vmul.f32 %v6939, %v6963
        %v7087 = vmul.f32 %v6938, %v6967
        %v7088 = vmul.f32 %v6937, %v6971
        %v7089 = vmul.f32 %v6936, %v6975
        %v7090 = vmul.f32 %v6935, %v6979
        %v7091 = vmul.f32 %v6934, %v6983
        %v7092 = vmul.f32 %v6933, %v6987
        %v7093 = vmul.f32 %v6932, %v6991
        %v7094 = vmul.f32 %v6931, %v6995
        %v7095 = vmul.f32 %v6930, %v6999
        %v7096 = vmul.f32 %v6929, %v7003
        %v7097 = vmul.f32 %v6928, %v7007
        %v7098 = vmul.f32 %v6927, %v7011
        %v7099 = vmul.f32 %v6926, %v7015
        %v7100 = vmul.f32 %v6925, %v7019
        %v7101 = vmul.f32 %v6956, %v7023
        %v7102 = vmul.f32 %v6955, %v7027
        %v7103 = vmul.f32 %v6954, %v7031
        %v7104 = vmul.f32 %v6953, %v7035
        %v7105 = vmul.f32 %v6952, %v7039
        %v7106 = vmul.f32 %v6951, %v7043
        %v7107 = vmul.f32 %v6950, %v7047
        %v7108 = vmul.f32 %v6949, %v7051
        %v7109 = vmul.f32 %v6948, %v7055
        %v7110 = vmul.f32 %v6947, %v7059
        %v7111 = vmul.f32 %v6946, %v7063
        %v7112 = vmul.f32 %v6945, %v7067
        %v7113 = vmul.f32 %v6944, %v7071
        %v7114 = vmul.f32 %v6943, %v7075
        %v7115 = vmul.f32 %v6942, %v7079
        %v7116 = vmul.f32 %v6941, %v7083
        %v7117 = vld [vmem:[#allocation14] sm:$0xff]
        %v7118 = vld [vmem:[#allocation14 + $0x8] sm:$0xff]
        %v7119 = vld [vmem:[#allocation14 + $0x10] sm:$0xff]
        %v7120 = vld [vmem:[#allocation14 + $0x18] sm:$0xff]
        %v7121 = vld [vmem:[#allocation14 + $0x20] sm:$0xff]
        %v7122 = vld [vmem:[#allocation14 + $0x28] sm:$0xff]
        %v7123 = vld [vmem:[#allocation14 + $0x30] sm:$0xff]
        %v7124 = vld [vmem:[#allocation14 + $0x38] sm:$0xff]
        %v7125 = vld [vmem:[#allocation14 + $0x40] sm:$0xff]
        %v7126 = vld [vmem:[#allocation14 + $0x48] sm:$0xff]
        %v7127 = vld [vmem:[#allocation14 + $0x50] sm:$0xff]
        %v7128 = vld [vmem:[#allocation14 + $0x58] sm:$0xff]
        %v7129 = vld [vmem:[#allocation14 + $0x60] sm:$0xff]
        %v7130 = vld [vmem:[#allocation14 + $0x68] sm:$0xff]
        %v7131 = vld [vmem:[#allocation14 + $0x70] sm:$0xff]
        %v7132 = vld [vmem:[#allocation14 + $0x78] sm:$0xff]
        %v7133 = vld [vmem:[#allocation14 + $0x80] sm:$0xff]
        %v7134 = vld [vmem:[#allocation14 + $0x88] sm:$0xff]
        %v7135 = vld [vmem:[#allocation14 + $0x90] sm:$0xff]
        %v7136 = vld [vmem:[#allocation14 + $0x98] sm:$0xff]
        %v7137 = vld [vmem:[#allocation14 + $0xa0] sm:$0xff]
        %v7138 = vld [vmem:[#allocation14 + $0xa8] sm:$0xff]
        %v7139 = vld [vmem:[#allocation14 + $0xb0] sm:$0xff]
        %v7140 = vld [vmem:[#allocation14 + $0xb8] sm:$0xff]
        %v7141 = vld [vmem:[#allocation14 + $0xc0] sm:$0xff]
        %v7142 = vld [vmem:[#allocation14 + $0xc8] sm:$0xff]
        %v7143 = vld [vmem:[#allocation14 + $0xd0] sm:$0xff]
        %v7144 = vld [vmem:[#allocation14 + $0xd8] sm:$0xff]
        %v7145 = vld [vmem:[#allocation14 + $0xe0] sm:$0xff]
        %v7146 = vld [vmem:[#allocation14 + $0xe8] sm:$0xff]
        %v7147 = vld [vmem:[#allocation14 + $0xf0] sm:$0xff]
        %v7148 = vld [vmem:[#allocation14 + $0xf8] sm:$0xff]
        %v7149 = vld [vmem:[#allocation14 + $0x100] sm:$0xff]
        %v7150 = vld [vmem:[#allocation14 + $0x108] sm:$0xff]
        %v7151 = vld [vmem:[#allocation14 + $0x110] sm:$0xff]
        %v7152 = vld [vmem:[#allocation14 + $0x118] sm:$0xff]
        %v7153 = vld [vmem:[#allocation14 + $0x120] sm:$0xff]
        %v7154 = vld [vmem:[#allocation14 + $0x128] sm:$0xff]
        %v7155 = vld [vmem:[#allocation14 + $0x130] sm:$0xff]
        %v7156 = vld [vmem:[#allocation14 + $0x138] sm:$0xff]
        %v7157 = vld [vmem:[#allocation14 + $0x140] sm:$0xff]
        %v7158 = vld [vmem:[#allocation14 + $0x148] sm:$0xff]
        %v7159 = vld [vmem:[#allocation14 + $0x150] sm:$0xff]
        %v7160 = vld [vmem:[#allocation14 + $0x158] sm:$0xff]
        %v7161 = vld [vmem:[#allocation14 + $0x160] sm:$0xff]
        %v7162 = vld [vmem:[#allocation14 + $0x168] sm:$0xff]
        %v7163 = vld [vmem:[#allocation14 + $0x170] sm:$0xff]
        %v7164 = vld [vmem:[#allocation14 + $0x178] sm:$0xff]
        %v7165 = vpack.c.bf16 %v6701, %v6700
        %v7166 = vpack.c.bf16 %v6861, %v6860
        %v7167 = vpack.c.bf16 %v7086, %v7085
        %v7168 = vpack.c.bf16 %v6703, %v6702
        %v7169 = vpack.c.bf16 %v6863, %v6862
        %v7170 = vpack.c.bf16 %v7088, %v7087
        %v7171 = vpack.c.bf16 %v6705, %v6704
        %v7172 = vpack.c.bf16 %v6865, %v6864
        %v7173 = vpack.c.bf16 %v7090, %v7089
        %v7174 = vpack.c.bf16 %v6707, %v6706
        %v7175 = vpack.c.bf16 %v6867, %v6866
        %v7176 = vpack.c.bf16 %v7092, %v7091
        %v7177 = vpack.c.bf16 %v6709, %v6708
        %v7178 = vpack.c.bf16 %v6869, %v6868
        %v7179 = vpack.c.bf16 %v7094, %v7093
        %v7180 = vpack.c.bf16 %v6711, %v6710
        %v7181 = vpack.c.bf16 %v6871, %v6870
        %v7182 = vpack.c.bf16 %v7096, %v7095
        %v7183 = vpack.c.bf16 %v6713, %v6712
        %v7184 = vpack.c.bf16 %v6873, %v6872
        %v7185 = vpack.c.bf16 %v7098, %v7097
        %v7186 = vpack.c.bf16 %v6715, %v6714
        %v7187 = vpack.c.bf16 %v6875, %v6874
        %v7188 = vpack.c.bf16 %v7100, %v7099
        %v7189 = vpack.c.bf16 %v6717, %v6716
        %v7190 = vpack.c.bf16 %v6877, %v6876
        %v7191 = vpack.c.bf16 %v7102, %v7101
        %v7192 = vpack.c.bf16 %v6719, %v6718
        %v7193 = vpack.c.bf16 %v6879, %v6878
        %v7194 = vpack.c.bf16 %v7104, %v7103
        %v7195 = vpack.c.bf16 %v6721, %v6720
        %v7196 = vpack.c.bf16 %v6881, %v6880
        %v7197 = vpack.c.bf16 %v7106, %v7105
        %v7198 = vpack.c.bf16 %v6723, %v6722
        %v7199 = vpack.c.bf16 %v6883, %v6882
        %v7200 = vpack.c.bf16 %v7108, %v7107
        %v7201 = vpack.c.bf16 %v6725, %v6724
        %v7202 = vpack.c.bf16 %v6885, %v6884
        %v7203 = vpack.c.bf16 %v7110, %v7109
        %v7204 = vpack.c.bf16 %v6727, %v6726
        %v7205 = vpack.c.bf16 %v6887, %v6886
        %v7206 = vpack.c.bf16 %v7112, %v7111
        %v7207 = vpack.c.bf16 %v6729, %v6728
        %v7208 = vpack.c.bf16 %v6889, %v6888
        %v7209 = vpack.c.bf16 %v7114, %v7113
        %v7210 = vpack.c.bf16 %v6731, %v6730
        %v7211 = vpack.c.bf16 %v6891, %v6890
        %v7212 = vpack.c.bf16 %v7116, %v7115
        %v7213 = vpack.c.bf16 %v7118, %v7117
        %v7214 = vpack.c.bf16 %v7120, %v7119
        %v7215 = vpack.c.bf16 %v7122, %v7121
        %v7216 = vpack.c.bf16 %v7124, %v7123
        %v7217 = vpack.c.bf16 %v7126, %v7125
        %v7218 = vpack.c.bf16 %v7128, %v7127
        %v7219 = vpack.c.bf16 %v7130, %v7129
        %v7220 = vpack.c.bf16 %v7132, %v7131
        %v7221 = vpack.c.bf16 %v7134, %v7133
        %v7222 = vpack.c.bf16 %v7136, %v7135
        %v7223 = vpack.c.bf16 %v7138, %v7137
        %v7224 = vpack.c.bf16 %v7140, %v7139
        %v7225 = vpack.c.bf16 %v7142, %v7141
        %v7226 = vpack.c.bf16 %v7144, %v7143
        %v7227 = vpack.c.bf16 %v7146, %v7145
        %v7228 = vpack.c.bf16 %v7148, %v7147
        %v7229 = vpack.c.bf16 %v7150, %v7149
        %v7230 = vpack.c.bf16 %v7152, %v7151
        %v7231 = vpack.c.bf16 %v7154, %v7153
        %v7232 = vpack.c.bf16 %v7156, %v7155
        %v7233 = vpack.c.bf16 %v7158, %v7157
        %v7234 = vpack.c.bf16 %v7160, %v7159
        %v7235 = vpack.c.bf16 %v7162, %v7161
        %v7236 = vpack.c.bf16 %v7164, %v7163
        %7237 = vset.pattern.permute.xlu0 21
        %7238 = vperm.xlu0 %7237, %v1004
        %v7239 = vpop.permute.xlu0 %7238
        %7241 = vset.pattern.permute.xlu0 21
        %7242 = vperm.xlu0 %7241, %v1005
        %v7243 = vpop.permute.xlu0 %7242
        %7245 = vset.pattern.permute.xlu0 21
        %7246 = vperm.xlu0 %7245, %v1006
        %v7247 = vpop.permute.xlu0 %7246
        %7249 = vset.pattern.permute.xlu0 21
        %7250 = vperm.xlu0 %7249, %v1007
        %v7251 = vpop.permute.xlu0 %7250
        %7253 = vset.pattern.permute.xlu0 21
        %7254 = vperm.xlu0 %7253, %v1008
        %v7255 = vpop.permute.xlu0 %7254
        %7257 = vset.pattern.permute.xlu0 21
        %7258 = vperm.xlu0 %7257, %v1009
        %v7259 = vpop.permute.xlu0 %7258
        %7261 = vset.pattern.permute.xlu0 21
        %7262 = vperm.xlu0 %7261, %v1010
        %v7263 = vpop.permute.xlu0 %7262
        %7265 = vset.pattern.permute.xlu0 21
        %7266 = vperm.xlu0 %7265, %v1011
        %v7267 = vpop.permute.xlu0 %7266
        %7269 = vset.pattern.permute.xlu0 21
        %7270 = vperm.xlu0 %7269, %v1012
        %v7271 = vpop.permute.xlu0 %7270
        %7273 = vset.pattern.permute.xlu0 21
        %7274 = vperm.xlu0 %7273, %v1013
        %v7275 = vpop.permute.xlu0 %7274
        %7277 = vset.pattern.permute.xlu0 21
        %7278 = vperm.xlu0 %7277, %v1014
        %v7279 = vpop.permute.xlu0 %7278
        %7281 = vset.pattern.permute.xlu0 21
        %7282 = vperm.xlu0 %7281, %v1015
        %v7283 = vpop.permute.xlu0 %7282
        %7285 = vset.pattern.permute.xlu0 21
        %7286 = vperm.xlu0 %7285, %v1016
        %v7287 = vpop.permute.xlu0 %7286
        %7289 = vset.pattern.permute.xlu0 21
        %7290 = vperm.xlu0 %7289, %v1017
        %v7291 = vpop.permute.xlu0 %7290
        %7293 = vset.pattern.permute.xlu0 21
        %7294 = vperm.xlu0 %7293, %v1018
        %v7295 = vpop.permute.xlu0 %7294
        %7297 = vset.pattern.permute.xlu0 21
        %7298 = vperm.xlu0 %7297, %v1019
        %v7299 = vpop.permute.xlu0 %7298
        %7301 = vset.pattern.permute.xlu0 21
        %7302 = vperm.xlu0 %7301, %v1020
        %v7303 = vpop.permute.xlu0 %7302
        %7305 = vset.pattern.permute.xlu0 21
        %7306 = vperm.xlu0 %7305, %v1021
        %v7307 = vpop.permute.xlu0 %7306
        %7309 = vset.pattern.permute.xlu0 21
        %7310 = vperm.xlu0 %7309, %v1022
        %v7311 = vpop.permute.xlu0 %7310
        %7313 = vset.pattern.permute.xlu0 21
        %7314 = vperm.xlu0 %7313, %v1023
        %v7315 = vpop.permute.xlu0 %7314
        %7317 = vset.pattern.permute.xlu0 21
        %7318 = vperm.xlu0 %7317, %v1024
        %v7319 = vpop.permute.xlu0 %7318
        %7321 = vset.pattern.permute.xlu0 21
        %7322 = vperm.xlu0 %7321, %v1025
        %v7323 = vpop.permute.xlu0 %7322
        %7325 = vset.pattern.permute.xlu0 21
        %7326 = vperm.xlu0 %7325, %v1026
        %v7327 = vpop.permute.xlu0 %7326
        %7329 = vset.pattern.permute.xlu0 21
        %7330 = vperm.xlu0 %7329, %v1027
        %v7331 = vpop.permute.xlu0 %7330
        %7333 = vset.pattern.permute.xlu0 21
        %7334 = vperm.xlu0 %7333, %v1028
        %v7335 = vpop.permute.xlu0 %7334
        %7337 = vset.pattern.permute.xlu0 21
        %7338 = vperm.xlu0 %7337, %v1029
        %v7339 = vpop.permute.xlu0 %7338
        %7341 = vset.pattern.permute.xlu0 21
        %7342 = vperm.xlu0 %7341, %v1030
        %v7343 = vpop.permute.xlu0 %7342
        %7345 = vset.pattern.permute.xlu0 21
        %7346 = vperm.xlu0 %7345, %v1031
        %v7347 = vpop.permute.xlu0 %7346
        %7349 = vset.pattern.permute.xlu0 21
        %7350 = vperm.xlu0 %7349, %v1032
        %v7351 = vpop.permute.xlu0 %7350
        %7353 = vset.pattern.permute.xlu0 21
        %7354 = vperm.xlu0 %7353, %v1033
        %v7355 = vpop.permute.xlu0 %7354
        %7357 = vset.pattern.permute.xlu0 21
        %7358 = vperm.xlu0 %7357, %v1034
        %v7359 = vpop.permute.xlu0 %7358
        %7361 = vset.pattern.permute.xlu0 21
        %7362 = vperm.xlu0 %7361, %v1035
        %v7363 = vpop.permute.xlu0 %7362
        %v7365 = vmul.f32 %v6540, %v7239
        %v7366 = vmul.f32 %v6571, %v7243
        %v7367 = vmul.f32 %v6570, %v7247
        %v7368 = vmul.f32 %v6569, %v7251
        %v7369 = vmul.f32 %v6568, %v7255
        %v7370 = vmul.f32 %v6567, %v7259
        %v7371 = vmul.f32 %v6566, %v7263
        %v7372 = vmul.f32 %v6565, %v7267
        %v7373 = vmul.f32 %v6564, %v7271
        %v7374 = vmul.f32 %v6563, %v7275
        %v7375 = vmul.f32 %v6562, %v7279
        %v7376 = vmul.f32 %v6561, %v7283
        %v7377 = vmul.f32 %v6560, %v7287
        %v7378 = vmul.f32 %v6559, %v7291
        %v7379 = vmul.f32 %v6558, %v7295
        %v7380 = vmul.f32 %v6557, %v7299
        %v7381 = vmul.f32 %v6556, %v7303
        %v7382 = vmul.f32 %v6555, %v7307
        %v7383 = vmul.f32 %v6554, %v7311
        %v7384 = vmul.f32 %v6553, %v7315
        %v7385 = vmul.f32 %v6552, %v7319
        %v7386 = vmul.f32 %v6551, %v7323
        %v7387 = vmul.f32 %v6550, %v7327
        %v7388 = vmul.f32 %v6549, %v7331
        %v7389 = vmul.f32 %v6548, %v7335
        %v7390 = vmul.f32 %v6547, %v7339
        %v7391 = vmul.f32 %v6546, %v7343
        %v7392 = vmul.f32 %v6545, %v7347
        %v7393 = vmul.f32 %v6544, %v7351
        %v7394 = vmul.f32 %v6543, %v7355
        %v7395 = vmul.f32 %v6542, %v7359
        %v7396 = vmul.f32 %v6541, %v7363
        %7397 = vset.pattern.permute.xlu0 23
        %7398 = vperm.xlu0 %7397, %v1004
        %v7399 = vpop.permute.xlu0 %7398
        %7401 = vset.pattern.permute.xlu0 23
        %7402 = vperm.xlu0 %7401, %v1005
        %v7403 = vpop.permute.xlu0 %7402
        %7405 = vset.pattern.permute.xlu0 23
        %7406 = vperm.xlu0 %7405, %v1006
        %v7407 = vpop.permute.xlu0 %7406
        %7409 = vset.pattern.permute.xlu0 23
        %7410 = vperm.xlu0 %7409, %v1007
        %v7411 = vpop.permute.xlu0 %7410
        %7413 = vset.pattern.permute.xlu0 23
        %7414 = vperm.xlu0 %7413, %v1008
        %v7415 = vpop.permute.xlu0 %7414
        %7417 = vset.pattern.permute.xlu0 23
        %7418 = vperm.xlu0 %7417, %v1009
        %v7419 = vpop.permute.xlu0 %7418
        %7421 = vset.pattern.permute.xlu0 23
        %7422 = vperm.xlu0 %7421, %v1010
        %v7423 = vpop.permute.xlu0 %7422
        %7425 = vset.pattern.permute.xlu0 23
        %7426 = vperm.xlu0 %7425, %v1011
        %v7427 = vpop.permute.xlu0 %7426
        %7429 = vset.pattern.permute.xlu0 23
        %7430 = vperm.xlu0 %7429, %v1012
        %v7431 = vpop.permute.xlu0 %7430
        %7433 = vset.pattern.permute.xlu0 23
        %7434 = vperm.xlu0 %7433, %v1013
        %v7435 = vpop.permute.xlu0 %7434
        %7437 = vset.pattern.permute.xlu0 23
        %7438 = vperm.xlu0 %7437, %v1014
        %v7439 = vpop.permute.xlu0 %7438
        %7441 = vset.pattern.permute.xlu0 23
        %7442 = vperm.xlu0 %7441, %v1015
        %v7443 = vpop.permute.xlu0 %7442
        %7445 = vset.pattern.permute.xlu0 23
        %7446 = vperm.xlu0 %7445, %v1016
        %v7447 = vpop.permute.xlu0 %7446
        %7449 = vset.pattern.permute.xlu0 23
        %7450 = vperm.xlu0 %7449, %v1017
        %v7451 = vpop.permute.xlu0 %7450
        %7453 = vset.pattern.permute.xlu0 23
        %7454 = vperm.xlu0 %7453, %v1018
        %v7455 = vpop.permute.xlu0 %7454
        %7457 = vset.pattern.permute.xlu0 23
        %7458 = vperm.xlu0 %7457, %v1019
        %v7459 = vpop.permute.xlu0 %7458
        %7461 = vset.pattern.permute.xlu0 23
        %7462 = vperm.xlu0 %7461, %v1020
        %v7463 = vpop.permute.xlu0 %7462
        %7465 = vset.pattern.permute.xlu0 23
        %7466 = vperm.xlu0 %7465, %v1021
        %v7467 = vpop.permute.xlu0 %7466
        %7469 = vset.pattern.permute.xlu0 23
        %7470 = vperm.xlu0 %7469, %v1022
        %v7471 = vpop.permute.xlu0 %7470
        %7473 = vset.pattern.permute.xlu0 23
        %7474 = vperm.xlu0 %7473, %v1023
        %v7475 = vpop.permute.xlu0 %7474
        %7477 = vset.pattern.permute.xlu0 23
        %7478 = vperm.xlu0 %7477, %v1024
        %v7479 = vpop.permute.xlu0 %7478
        %7481 = vset.pattern.permute.xlu0 23
        %7482 = vperm.xlu0 %7481, %v1025
        %v7483 = vpop.permute.xlu0 %7482
        %7485 = vset.pattern.permute.xlu0 23
        %7486 = vperm.xlu0 %7485, %v1026
        %v7487 = vpop.permute.xlu0 %7486
        %7489 = vset.pattern.permute.xlu0 23
        %7490 = vperm.xlu0 %7489, %v1027
        %v7491 = vpop.permute.xlu0 %7490
        %7493 = vset.pattern.permute.xlu0 23
        %7494 = vperm.xlu0 %7493, %v1028
        %v7495 = vpop.permute.xlu0 %7494
        %7497 = vset.pattern.permute.xlu0 23
        %7498 = vperm.xlu0 %7497, %v1029
        %v7499 = vpop.permute.xlu0 %7498
        %7501 = vset.pattern.permute.xlu0 23
        %7502 = vperm.xlu0 %7501, %v1030
        %v7503 = vpop.permute.xlu0 %7502
        %7505 = vset.pattern.permute.xlu0 23
        %7506 = vperm.xlu0 %7505, %v1031
        %v7507 = vpop.permute.xlu0 %7506
        %7509 = vset.pattern.permute.xlu0 23
        %7510 = vperm.xlu0 %7509, %v1032
        %v7511 = vpop.permute.xlu0 %7510
        %7513 = vset.pattern.permute.xlu0 23
        %7514 = vperm.xlu0 %7513, %v1033
        %v7515 = vpop.permute.xlu0 %7514
        %7517 = vset.pattern.permute.xlu0 23
        %7518 = vperm.xlu0 %7517, %v1034
        %v7519 = vpop.permute.xlu0 %7518
        %7521 = vset.pattern.permute.xlu0 23
        %7522 = vperm.xlu0 %7521, %v1035
        %v7523 = vpop.permute.xlu0 %7522
        %v7525 = vmul.f32 %v6954, %v7399
        %v7526 = vmul.f32 %v6953, %v7403
        %v7527 = vmul.f32 %v6952, %v7407
        %v7528 = vmul.f32 %v6951, %v7411
        %v7529 = vmul.f32 %v6950, %v7415
        %v7530 = vmul.f32 %v6949, %v7419
        %v7531 = vmul.f32 %v6948, %v7423
        %v7532 = vmul.f32 %v6947, %v7427
        %v7533 = vmul.f32 %v6946, %v7431
        %v7534 = vmul.f32 %v6945, %v7435
        %v7535 = vmul.f32 %v6944, %v7439
        %v7536 = vmul.f32 %v6943, %v7443
        %v7537 = vmul.f32 %v6942, %v7447
        %v7538 = vmul.f32 %v6941, %v7451
        %v7539 = vmul.f32 %v6940, %v7455
        %v7540 = vmul.f32 %v6939, %v7459
        %v7541 = vmul.f32 %v6938, %v7463
        %v7542 = vmul.f32 %v6937, %v7467
        %v7543 = vmul.f32 %v6936, %v7471
        %v7544 = vmul.f32 %v6935, %v7475
        %v7545 = vmul.f32 %v6934, %v7479
        %v7546 = vmul.f32 %v6933, %v7483
        %v7547 = vmul.f32 %v6932, %v7487
        %v7548 = vmul.f32 %v6931, %v7491
        %v7549 = vmul.f32 %v6930, %v7495
        %v7550 = vmul.f32 %v6929, %v7499
        %v7551 = vmul.f32 %v6928, %v7503
        %v7552 = vmul.f32 %v6927, %v7507
        %v7553 = vmul.f32 %v6926, %v7511
        %v7554 = vmul.f32 %v6925, %v7515
        %v7555 = vmul.f32 %v6956, %v7519
        %v7556 = vmul.f32 %v6955, %v7523
        %v7557 = vld [vmem:[#allocation14 + $0x180] sm:$0xff]
        %v7558 = vld [vmem:[#allocation14 + $0x188] sm:$0xff]
        %v7559 = vld [vmem:[#allocation14 + $0x190] sm:$0xff]
        %v7560 = vld [vmem:[#allocation14 + $0x198] sm:$0xff]
        %v7561 = vld [vmem:[#allocation14 + $0x1a0] sm:$0xff]
        %v7562 = vld [vmem:[#allocation14 + $0x1a8] sm:$0xff]
        %v7563 = vld [vmem:[#allocation14 + $0x1b0] sm:$0xff]
        %v7564 = vld [vmem:[#allocation14 + $0x1b8] sm:$0xff]
        %v7565 = vld [vmem:[#allocation14 + $0x1c0] sm:$0xff]
        %v7566 = vld [vmem:[#allocation14 + $0x1c8] sm:$0xff]
        %v7567 = vld [vmem:[#allocation14 + $0x1d0] sm:$0xff]
        %v7568 = vld [vmem:[#allocation14 + $0x1d8] sm:$0xff]
        %v7569 = vld [vmem:[#allocation14 + $0x1e0] sm:$0xff]
        %v7570 = vld [vmem:[#allocation14 + $0x1e8] sm:$0xff]
        %v7571 = vld [vmem:[#allocation14 + $0x1f0] sm:$0xff]
        %v7572 = vld [vmem:[#allocation14 + $0x1f8] sm:$0xff]
        %v7573 = vld [vmem:[#allocation14 + $0x200] sm:$0xff]
        %v7574 = vld [vmem:[#allocation14 + $0x208] sm:$0xff]
        %v7575 = vld [vmem:[#allocation14 + $0x210] sm:$0xff]
        %v7576 = vld [vmem:[#allocation14 + $0x218] sm:$0xff]
        %v7577 = vld [vmem:[#allocation14 + $0x220] sm:$0xff]
        %v7578 = vld [vmem:[#allocation14 + $0x228] sm:$0xff]
        %v7579 = vld [vmem:[#allocation14 + $0x230] sm:$0xff]
        %v7580 = vld [vmem:[#allocation14 + $0x238] sm:$0xff]
        %v7581 = vld [vmem:[#allocation14 + $0x240] sm:$0xff]
        %v7582 = vld [vmem:[#allocation14 + $0x248] sm:$0xff]
        %v7583 = vld [vmem:[#allocation14 + $0x250] sm:$0xff]
        %v7584 = vld [vmem:[#allocation14 + $0x258] sm:$0xff]
        %v7585 = vld [vmem:[#allocation14 + $0x260] sm:$0xff]
        %v7586 = vld [vmem:[#allocation14 + $0x268] sm:$0xff]
        %v7587 = vld [vmem:[#allocation14 + $0x270] sm:$0xff]
        %v7588 = vld [vmem:[#allocation14 + $0x278] sm:$0xff]
        %v7589 = vld [vmem:[#allocation14 + $0x280] sm:$0xff]
        %v7590 = vld [vmem:[#allocation14 + $0x288] sm:$0xff]
        %v7591 = vld [vmem:[#allocation14 + $0x290] sm:$0xff]
        %v7592 = vld [vmem:[#allocation14 + $0x298] sm:$0xff]
        %v7593 = vld [vmem:[#allocation14 + $0x2a0] sm:$0xff]
        %v7594 = vld [vmem:[#allocation14 + $0x2a8] sm:$0xff]
        %v7595 = vld [vmem:[#allocation14 + $0x2b0] sm:$0xff]
        %v7596 = vld [vmem:[#allocation14 + $0x2b8] sm:$0xff]
        %v7597 = vld [vmem:[#allocation14 + $0x2c0] sm:$0xff]
        %v7598 = vld [vmem:[#allocation14 + $0x2c8] sm:$0xff]
        %v7599 = vld [vmem:[#allocation14 + $0x2d0] sm:$0xff]
        %v7600 = vld [vmem:[#allocation14 + $0x2d8] sm:$0xff]
        %v7601 = vld [vmem:[#allocation14 + $0x2e0] sm:$0xff]
        %v7602 = vld [vmem:[#allocation14 + $0x2e8] sm:$0xff]
        %v7603 = vld [vmem:[#allocation14 + $0x2f0] sm:$0xff]
        %v7604 = vld [vmem:[#allocation14 + $0x2f8] sm:$0xff]
        %v7605 = vpack.c.bf16 %v7366, %v7365
        %v7606 = vpack.c.bf16 %v7526, %v7525
        %v7607 = vpack.c.bf16 %v7368, %v7367
        %v7608 = vpack.c.bf16 %v7528, %v7527
        %v7609 = vpack.c.bf16 %v7370, %v7369
        %v7610 = vpack.c.bf16 %v7530, %v7529
        %v7611 = vpack.c.bf16 %v7372, %v7371
        %v7612 = vpack.c.bf16 %v7532, %v7531
        %v7613 = vpack.c.bf16 %v7374, %v7373
        %v7614 = vpack.c.bf16 %v7534, %v7533
        %v7615 = vpack.c.bf16 %v7376, %v7375
        %v7616 = vpack.c.bf16 %v7536, %v7535
        %v7617 = vpack.c.bf16 %v7378, %v7377
        %v7618 = vpack.c.bf16 %v7538, %v7537
        %v7619 = vpack.c.bf16 %v7380, %v7379
        %v7620 = vpack.c.bf16 %v7540, %v7539
        %v7621 = vpack.c.bf16 %v7382, %v7381
        %v7622 = vpack.c.bf16 %v7542, %v7541
        %v7623 = vpack.c.bf16 %v7384, %v7383
        %v7624 = vpack.c.bf16 %v7544, %v7543
        %v7625 = vpack.c.bf16 %v7386, %v7385
        %v7626 = vpack.c.bf16 %v7546, %v7545
        %v7627 = vpack.c.bf16 %v7388, %v7387
        %v7628 = vpack.c.bf16 %v7548, %v7547
        %v7629 = vpack.c.bf16 %v7390, %v7389
        %v7630 = vpack.c.bf16 %v7550, %v7549
        %v7631 = vpack.c.bf16 %v7392, %v7391
        %v7632 = vpack.c.bf16 %v7552, %v7551
        %v7633 = vpack.c.bf16 %v7394, %v7393
        %v7634 = vpack.c.bf16 %v7554, %v7553
        %v7635 = vpack.c.bf16 %v7396, %v7395
        %v7636 = vpack.c.bf16 %v7556, %v7555
        %v7637 = vpack.c.bf16 %v7558, %v7557
        %v7638 = vpack.c.bf16 %v7560, %v7559
        %v7639 = vpack.c.bf16 %v7562, %v7561
        %v7640 = vpack.c.bf16 %v7564, %v7563
        %v7641 = vpack.c.bf16 %v7566, %v7565
        %v7642 = vpack.c.bf16 %v7568, %v7567
        %v7643 = vpack.c.bf16 %v7570, %v7569
        %v7644 = vpack.c.bf16 %v7572, %v7571
        %v7645 = vpack.c.bf16 %v7574, %v7573
        %v7646 = vpack.c.bf16 %v7576, %v7575
        %v7647 = vpack.c.bf16 %v7578, %v7577
        %v7648 = vpack.c.bf16 %v7580, %v7579
        %v7649 = vpack.c.bf16 %v7582, %v7581
        %v7650 = vpack.c.bf16 %v7584, %v7583
        %v7651 = vpack.c.bf16 %v7586, %v7585
        %v7652 = vpack.c.bf16 %v7588, %v7587
        %v7653 = vpack.c.bf16 %v7590, %v7589
        %v7654 = vpack.c.bf16 %v7592, %v7591
        %v7655 = vpack.c.bf16 %v7594, %v7593
        %v7656 = vpack.c.bf16 %v7596, %v7595
        %v7657 = vpack.c.bf16 %v7598, %v7597
        %v7658 = vpack.c.bf16 %v7600, %v7599
        %v7659 = vpack.c.bf16 %v7602, %v7601
        %v7660 = vpack.c.bf16 %v7604, %v7603
        %7661 = vmatprep.subr.bf16.mxu0 0
        %7662 = vmatpush1.bf16.msra.mxu0 %v7637
        %7663 = vmatprep.subr.bf16.mxu0 0
        %7664 = vmatpush1.bf16.msra.mxu0 %v7638
        %7665 = vmatprep.subr.bf16.mxu0 0
        %7666 = vmatpush1.bf16.msra.mxu0 %v7639
        %7667 = vmatprep.subr.bf16.mxu0 0
        %7668 = vmatpush1.bf16.msra.mxu0 %v7640
        %7669 = vmatprep.subr.bf16.mxu0 0
        %7670 = vmatpush1.bf16.msra.mxu0 %v7641
        %7671 = vmatprep.subr.bf16.mxu0 0
        %7672 = vmatpush1.bf16.msra.mxu0 %v7642
        %7673 = vmatprep.subr.bf16.mxu0 0
        %7674 = vmatpush1.bf16.msra.mxu0 %v7643
        %7675 = vmatprep.subr.bf16.mxu0 0
        %7676 = vmatpush1.bf16.msra.mxu0 %v7644
        %7677 = vmatprep.subr.bf16.mxu0 0
        %7678 = vmatpush1.bf16.msra.mxu0 %v7645
        %7679 = vmatprep.subr.bf16.mxu0 0
        %7680 = vmatpush1.bf16.msra.mxu0 %v7646
        %7681 = vmatprep.subr.bf16.mxu0 0
        %7682 = vmatpush1.bf16.msra.mxu0 %v7647
        %7683 = vmatprep.subr.bf16.mxu0 0
        %7684 = vmatpush1.bf16.msra.mxu0 %v7648
        %7685 = vmatprep.subr.bf16.mxu0 0
        %7686 = vmatpush1.bf16.msra.mxu0 %v7649
        %7687 = vmatprep.subr.bf16.mxu0 0
        %7688 = vmatpush1.bf16.msra.mxu0 %v7650
        %7689 = vmatprep.subr.bf16.mxu0 0
        %7690 = vmatpush1.bf16.msra.mxu0 %v7651
        %7691 = vmatprep.subr.bf16.mxu0 0
        %7692 = vmatpush1.bf16.msra.mxu0 %v7652
        %7693 = vmatprep.mubr.bf16.mxu0 %v752
        %7694 = vmatmul.mubr.bf16.gmra.mrb[0].mxu0 %v7605
        %v7695 = vpop.f32.mrb[0].mxu0
        %v7696 = vadd.f32 0.0, %v7695
        %v7697 = vpop.f32.mrb[0].mxu0
        %v7698 = vpop.f32.mrb[0].mxu0
        %v7699 = vadd.f32 0.0, %v7698
        %v7700 = vpop.f32.mrb[0].mxu0
        %7701 = vmatprep.mubr.bf16.mxu0 %v753
        %7702 = vmatmul.mubr.bf16.gmra.mrb[0].mxu0 %v7607
        %v7703 = vpop.f32.mrb[0].mxu0
        %v7704 = vadd.f32 0.0, %v7703
        %v7705 = vpop.f32.mrb[0].mxu0
        %v7706 = vpop.f32.mrb[0].mxu0
        %v7707 = vadd.f32 0.0, %v7706
        %v7708 = vpop.f32.mrb[0].mxu0
        %7709 = vmatprep.mubr.bf16.mxu0 %v754
        %7710 = vmatmul.mubr.bf16.gmra.mrb[0].mxu0 %v7609
        %v7711 = vpop.f32.mrb[0].mxu0
        %v7712 = vadd.f32 0.0, %v7711
        %v7713 = vpop.f32.mrb[0].mxu0
        %v7714 = vpop.f32.mrb[0].mxu0
        %v7715 = vadd.f32 0.0, %v7714
        %v7716 = vpop.f32.mrb[0].mxu0
        %7717 = vmatprep.mubr.bf16.mxu0 %v755
        %7718 = vmatmul.mubr.bf16.gmra.mrb[0].mxu0 %v7611
        %v7719 = vpop.f32.mrb[0].mxu0
        %v7720 = vadd.f32 0.0, %v7719
        %v7721 = vpop.f32.mrb[0].mxu0
        %v7722 = vpop.f32.mrb[0].mxu0
        %v7723 = vadd.f32 0.0, %v7722
        %v7724 = vpop.f32.mrb[0].mxu0
        %7725 = vmatprep.mubr.bf16.mxu0 %v756
        %7726 = vmatmul.mubr.bf16.gmra.mrb[0].mxu0 %v7613
        %v7727 = vpop.f32.mrb[0].mxu0
        %v7728 = vadd.f32 0.0, %v7727
        %v7729 = vpop.f32.mrb[0].mxu0
        %v7730 = vpop.f32.mrb[0].mxu0
        %v7731 = vadd.f32 0.0, %v7730
        %v7732 = vpop.f32.mrb[0].mxu0
        %7733 = vmatprep.mubr.bf16.mxu0 %v757
        %7734 = vmatmul.mubr.bf16.gmra.mrb[0].mxu0 %v7615
        %v7735 = vpop.f32.mrb[0].mxu0
        %v7736 = vadd.f32 0.0, %v7735
        %v7737 = vpop.f32.mrb[0].mxu0
        %v7738 = vpop.f32.mrb[0].mxu0
        %v7739 = vadd.f32 0.0, %v7738
        %v7740 = vpop.f32.mrb[0].mxu0
        %7741 = vmatprep.mubr.bf16.mxu0 %v758
        %7742 = vmatmul.mubr.bf16.gmra.mrb[0].mxu0 %v7617
        %v7743 = vpop.f32.mrb[0].mxu0
        %v7744 = vadd.f32 0.0, %v7743
        %v7745 = vpop.f32.mrb[0].mxu0
        %v7746 = vpop.f32.mrb[0].mxu0
        %v7747 = vadd.f32 0.0, %v7746
        %v7748 = vpop.f32.mrb[0].mxu0
        %7749 = vmatprep.mubr.bf16.mxu0 %v759
        %7750 = vmatmul.mubr.bf16.gmra.mrb[0].mxu0 %v7619
        %v7751 = vpop.f32.mrb[0].mxu0
        %v7752 = vadd.f32 0.0, %v7751
        %v7753 = vpop.f32.mrb[0].mxu0
        %v7754 = vpop.f32.mrb[0].mxu0
        %v7755 = vadd.f32 0.0, %v7754
        %v7756 = vpop.f32.mrb[0].mxu0
        %7757 = vmatprep.mubr.bf16.mxu0 %v760
        %7758 = vmatmul.mubr.bf16.gmra.mrb[0].mxu0 %v7621
        %v7759 = vpop.f32.mrb[0].mxu0
        %v7760 = vadd.f32 0.0, %v7759
        %v7761 = vpop.f32.mrb[0].mxu0
        %v7762 = vpop.f32.mrb[0].mxu0
        %v7763 = vadd.f32 0.0, %v7762
        %v7764 = vpop.f32.mrb[0].mxu0
        %7765 = vmatprep.mubr.bf16.mxu0 %v761
        %7766 = vmatmul.mubr.bf16.gmra.mrb[0].mxu0 %v7623
        %v7767 = vpop.f32.mrb[0].mxu0
        %v7768 = vadd.f32 0.0, %v7767
        %v7769 = vpop.f32.mrb[0].mxu0
        %v7770 = vpop.f32.mrb[0].mxu0
        %v7771 = vadd.f32 0.0, %v7770
        %v7772 = vpop.f32.mrb[0].mxu0
        %7773 = vmatprep.mubr.bf16.mxu0 %v762
        %7774 = vmatmul.mubr.bf16.gmra.mrb[0].mxu0 %v7625
        %v7775 = vpop.f32.mrb[0].mxu0
        %v7776 = vadd.f32 0.0, %v7775
        %v7777 = vpop.f32.mrb[0].mxu0
        %v7778 = vpop.f32.mrb[0].mxu0
        %v7779 = vadd.f32 0.0, %v7778
        %v7780 = vpop.f32.mrb[0].mxu0
        %7781 = vmatprep.mubr.bf16.mxu0 %v763
        %7782 = vmatmul.mubr.bf16.gmra.mrb[0].mxu0 %v7627
        %v7783 = vpop.f32.mrb[0].mxu0
        %v7784 = vadd.f32 0.0, %v7783
        %v7785 = vpop.f32.mrb[0].mxu0
        %v7786 = vpop.f32.mrb[0].mxu0
        %v7787 = vadd.f32 0.0, %v7786
        %v7788 = vpop.f32.mrb[0].mxu0
        %7789 = vmatprep.mubr.bf16.mxu0 %v764
        %7790 = vmatmul.mubr.bf16.gmra.mrb[0].mxu0 %v7629
        %v7791 = vpop.f32.mrb[0].mxu0
        %v7792 = vadd.f32 0.0, %v7791
        %v7793 = vpop.f32.mrb[0].mxu0
        %v7794 = vpop.f32.mrb[0].mxu0
        %v7795 = vadd.f32 0.0, %v7794
        %v7796 = vpop.f32.mrb[0].mxu0
        %7797 = vmatprep.mubr.bf16.mxu0 %v765
        %7798 = vmatmul.mubr.bf16.gmra.mrb[0].mxu0 %v7631
        %v7799 = vpop.f32.mrb[0].mxu0
        %v7800 = vadd.f32 0.0, %v7799
        %v7801 = vpop.f32.mrb[0].mxu0
        %v7802 = vpop.f32.mrb[0].mxu0
        %v7803 = vadd.f32 0.0, %v7802
        %v7804 = vpop.f32.mrb[0].mxu0
        %7805 = vmatprep.mubr.bf16.mxu0 %v766
        %7806 = vmatmul.mubr.bf16.gmra.mrb[0].mxu0 %v7633
        %v7807 = vpop.f32.mrb[0].mxu0
        %v7808 = vadd.f32 0.0, %v7807
        %v7809 = vpop.f32.mrb[0].mxu0
        %v7810 = vpop.f32.mrb[0].mxu0
        %v7811 = vadd.f32 0.0, %v7810
        %v7812 = vpop.f32.mrb[0].mxu0
        %7813 = vmatprep.mubr.bf16.mxu0 %v767
        %7814 = vmatmul.mubr.bf16.gmra.mrb[0].mxu0 %v7635
        %v7815 = vpop.f32.mrb[0].mxu0
        %v7816 = vadd.f32 0.0, %v7815
        %v7817 = vpop.f32.mrb[0].mxu0
        %v7818 = vpop.f32.mrb[0].mxu0
        %v7819 = vadd.f32 0.0, %v7818
        %v7820 = vpop.f32.mrb[0].mxu0
        %7821 = vdwg.mxu0
        %7822 = vmatprep.subr.bf16.mxu0 0
        %7823 = vmatpush1.bf16.msra.mxu0 %v7653
        %7824 = vmatprep.subr.bf16.mxu0 0
        %7825 = vmatpush1.bf16.msra.mxu0 %v7654
        %7826 = vmatprep.subr.bf16.mxu0 0
        %7827 = vmatpush1.bf16.msra.mxu0 %v7655
        %7828 = vmatprep.subr.bf16.mxu0 0
        %7829 = vmatpush1.bf16.msra.mxu0 %v7656
        %7830 = vmatprep.subr.bf16.mxu0 0
        %7831 = vmatpush1.bf16.msra.mxu0 %v7657
        %7832 = vmatprep.subr.bf16.mxu0 0
        %7833 = vmatpush1.bf16.msra.mxu0 %v7658
        %7834 = vmatprep.subr.bf16.mxu0 0
        %7835 = vmatpush1.bf16.msra.mxu0 %v7659
        %7836 = vmatprep.subr.bf16.mxu0 0
        %7837 = vmatpush1.bf16.msra.mxu0 %v7660
        %7838 = vmatprep.subr.bf16.mxu0 0
        %7839 = vmatpush1.bf16.msra.mxu0 0
        %7840 = vmatprep.subr.bf16.mxu0 0
        %7841 = vmatpush1.bf16.msra.mxu0 0
        %7842 = vmatprep.subr.bf16.mxu0 0
        %7843 = vmatpush1.bf16.msra.mxu0 0
        %7844 = vmatprep.subr.bf16.mxu0 0
        %7845 = vmatpush1.bf16.msra.mxu0 0
        %7846 = vmatprep.subr.bf16.mxu0 0
        %7847 = vmatpush1.bf16.msra.mxu0 0
        %7848 = vmatprep.subr.bf16.mxu0 0
        %7849 = vmatpush1.bf16.msra.mxu0 0
        %7850 = vmatprep.subr.bf16.mxu0 0
        %7851 = vmatpush1.bf16.msra.mxu0 0
        %7852 = vmatprep.subr.bf16.mxu0 0
        %7853 = vmatpush1.bf16.msra.mxu0 0
        %7854 = vmatprep.mubr.bf16.mxu0 0
        %7855 = vmatmul.mubr.bf16.gmra.mrb[0].mxu0 %v7606
        %v7856 = vpop.f32.mrb[0].mxu0
        %v7857 = vadd.f32 %v7696, %v7856
        %v7858 = vpop.f32.mrb[0].mxu0
        %v7859 = vpop.f32.mrb[0].mxu0
        %v7860 = vadd.f32 %v7699, %v7859
        %v7861 = vpop.f32.mrb[0].mxu0
        %7862 = vmatprep.mubr.bf16.mxu0 0
        %7863 = vmatmul.mubr.bf16.gmra.mrb[0].mxu0 %v7608
        %v7864 = vpop.f32.mrb[0].mxu0
        %v7865 = vadd.f32 %v7704, %v7864
        %v7866 = vpop.f32.mrb[0].mxu0
        %v7867 = vpop.f32.mrb[0].mxu0
        %v7868 = vadd.f32 %v7707, %v7867
        %v7869 = vpop.f32.mrb[0].mxu0
        %7870 = vmatprep.mubr.bf16.mxu0 0
        %7871 = vmatmul.mubr.bf16.gmra.mrb[0].mxu0 %v7610
        %v7872 = vpop.f32.mrb[0].mxu0
        %v7873 = vadd.f32 %v7712, %v7872
        %v7874 = vpop.f32.mrb[0].mxu0
        %v7875 = vpop.f32.mrb[0].mxu0
        %v7876 = vadd.f32 %v7715, %v7875
        %v7877 = vpop.f32.mrb[0].mxu0
        %7878 = vmatprep.mubr.bf16.mxu0 0
        %7879 = vmatmul.mubr.bf16.gmra.mrb[0].mxu0 %v7612
        %v7880 = vpop.f32.mrb[0].mxu0
        %v7881 = vadd.f32 %v7720, %v7880
        %v7882 = vpop.f32.mrb[0].mxu0
        %v7883 = vpop.f32.mrb[0].mxu0
        %v7884 = vadd.f32 %v7723, %v7883
        %v7885 = vpop.f32.mrb[0].mxu0
        %7886 = vmatprep.mubr.bf16.mxu0 0
        %7887 = vmatmul.mubr.bf16.gmra.mrb[0].mxu0 %v7614
        %v7888 = vpop.f32.mrb[0].mxu0
        %v7889 = vadd.f32 %v7728, %v7888
        %v7890 = vpop.f32.mrb[0].mxu0
        %v7891 = vpop.f32.mrb[0].mxu0
        %v7892 = vadd.f32 %v7731, %v7891
        %v7893 = vpop.f32.mrb[0].mxu0
        %7894 = vmatprep.mubr.bf16.mxu0 0
        %7895 = vmatmul.mubr.bf16.gmra.mrb[0].mxu0 %v7616
        %v7896 = vpop.f32.mrb[0].mxu0
        %v7897 = vadd.f32 %v7736, %v7896
        %v7898 = vpop.f32.mrb[0].mxu0
        %v7899 = vpop.f32.mrb[0].mxu0
        %v7900 = vadd.f32 %v7739, %v7899
        %v7901 = vpop.f32.mrb[0].mxu0
        %7902 = vmatprep.mubr.bf16.mxu0 0
        %7903 = vmatmul.mubr.bf16.gmra.mrb[0].mxu0 %v7618
        %v7904 = vpop.f32.mrb[0].mxu0
        %v7905 = vadd.f32 %v7744, %v7904
        %v7906 = vpop.f32.mrb[0].mxu0
        %v7907 = vpop.f32.mrb[0].mxu0
        %v7908 = vadd.f32 %v7747, %v7907
        %v7909 = vpop.f32.mrb[0].mxu0
        %7910 = vmatprep.mubr.bf16.mxu0 0
        %7911 = vmatmul.mubr.bf16.gmra.mrb[0].mxu0 %v7620
        %v7912 = vpop.f32.mrb[0].mxu0
        %v7913 = vadd.f32 %v7752, %v7912
        %v7914 = vpop.f32.mrb[0].mxu0
        %v7915 = vpop.f32.mrb[0].mxu0
        %v7916 = vadd.f32 %v7755, %v7915
        %v7917 = vpop.f32.mrb[0].mxu0
        %7918 = vmatprep.mubr.bf16.mxu0 0
        %7919 = vmatmul.mubr.bf16.gmra.mrb[0].mxu0 %v7622
        %v7920 = vpop.f32.mrb[0].mxu0
        %v7921 = vadd.f32 %v7760, %v7920
        %v7922 = vpop.f32.mrb[0].mxu0
        %v7923 = vpop.f32.mrb[0].mxu0
        %v7924 = vadd.f32 %v7763, %v7923
        %v7925 = vpop.f32.mrb[0].mxu0
        %7926 = vmatprep.mubr.bf16.mxu0 0
        %7927 = vmatmul.mubr.bf16.gmra.mrb[0].mxu0 %v7624
        %v7928 = vpop.f32.mrb[0].mxu0
        %v7929 = vadd.f32 %v7768, %v7928
        %v7930 = vpop.f32.mrb[0].mxu0
        %v7931 = vpop.f32.mrb[0].mxu0
        %v7932 = vadd.f32 %v7771, %v7931
        %v7933 = vpop.f32.mrb[0].mxu0
        %7934 = vmatprep.mubr.bf16.mxu0 0
        %7935 = vmatmul.mubr.bf16.gmra.mrb[0].mxu0 %v7626
        %v7936 = vpop.f32.mrb[0].mxu0
        %v7937 = vadd.f32 %v7776, %v7936
        %v7938 = vpop.f32.mrb[0].mxu0
        %v7939 = vpop.f32.mrb[0].mxu0
        %v7940 = vadd.f32 %v7779, %v7939
        %v7941 = vpop.f32.mrb[0].mxu0
        %7942 = vmatprep.mubr.bf16.mxu0 0
        %7943 = vmatmul.mubr.bf16.gmra.mrb[0].mxu0 %v7628
        %v7944 = vpop.f32.mrb[0].mxu0
        %v7945 = vadd.f32 %v7784, %v7944
        %v7946 = vpop.f32.mrb[0].mxu0
        %v7947 = vpop.f32.mrb[0].mxu0
        %v7948 = vadd.f32 %v7787, %v7947
        %v7949 = vpop.f32.mrb[0].mxu0
        %7950 = vmatprep.mubr.bf16.mxu0 0
        %7951 = vmatmul.mubr.bf16.gmra.mrb[0].mxu0 %v7630
        %v7952 = vpop.f32.mrb[0].mxu0
        %v7953 = vadd.f32 %v7792, %v7952
        %v7954 = vpop.f32.mrb[0].mxu0
        %v7955 = vpop.f32.mrb[0].mxu0
        %v7956 = vadd.f32 %v7795, %v7955
        %v7957 = vpop.f32.mrb[0].mxu0
        %7958 = vmatprep.mubr.bf16.mxu0 0
        %7959 = vmatmul.mubr.bf16.gmra.mrb[0].mxu0 %v7632
        %v7960 = vpop.f32.mrb[0].mxu0
        %v7961 = vadd.f32 %v7800, %v7960
        %v7962 = vpop.f32.mrb[0].mxu0
        %v7963 = vpop.f32.mrb[0].mxu0
        %v7964 = vadd.f32 %v7803, %v7963
        %v7965 = vpop.f32.mrb[0].mxu0
        %7966 = vmatprep.mubr.bf16.mxu0 0
        %7967 = vmatmul.mubr.bf16.gmra.mrb[0].mxu0 %v7634
        %v7968 = vpop.f32.mrb[0].mxu0
        %v7969 = vadd.f32 %v7808, %v7968
        %v7970 = vpop.f32.mrb[0].mxu0
        %v7971 = vpop.f32.mrb[0].mxu0
        %v7972 = vadd.f32 %v7811, %v7971
        %v7973 = vpop.f32.mrb[0].mxu0
        %7974 = vmatprep.mubr.bf16.mxu0 0
        %7975 = vmatmul.mubr.bf16.gmra.mrb[0].mxu0 %v7636
        %v7976 = vpop.f32.mrb[0].mxu0
        %v7977 = vadd.f32 %v7816, %v7976
        %v7978 = vpop.f32.mrb[0].mxu0
        %v7979 = vpop.f32.mrb[0].mxu0
        %v7980 = vadd.f32 %v7819, %v7979
        %v7981 = vpop.f32.mrb[0].mxu0
        %7982 = vdwg.mxu0
        %7983 = vmatprep.subr.bf16.mxu0 0
        %7984 = vmatpush1.bf16.msra.mxu0 %v7213
        %7985 = vmatprep.subr.bf16.mxu0 0
        %7986 = vmatpush1.bf16.msra.mxu0 %v7214
        %7987 = vmatprep.subr.bf16.mxu0 0
        %7988 = vmatpush1.bf16.msra.mxu0 %v7215
        %7989 = vmatprep.subr.bf16.mxu0 0
        %7990 = vmatpush1.bf16.msra.mxu0 %v7216
        %7991 = vmatprep.subr.bf16.mxu0 0
        %7992 = vmatpush1.bf16.msra.mxu0 %v7217
        %7993 = vmatprep.subr.bf16.mxu0 0
        %7994 = vmatpush1.bf16.msra.mxu0 %v7218
        %7995 = vmatprep.subr.bf16.mxu0 0
        %7996 = vmatpush1.bf16.msra.mxu0 %v7219
        %7997 = vmatprep.subr.bf16.mxu0 0
        %7998 = vmatpush1.bf16.msra.mxu0 %v7220
        %7999 = vmatprep.subr.bf16.mxu0 0
        %8000 = vmatpush1.bf16.msra.mxu0 %v7221
        %8001 = vmatprep.subr.bf16.mxu0 0
        %8002 = vmatpush1.bf16.msra.mxu0 %v7222
        %8003 = vmatprep.subr.bf16.mxu0 0
        %8004 = vmatpush1.bf16.msra.mxu0 %v7223
        %8005 = vmatprep.subr.bf16.mxu0 0
        %8006 = vmatpush1.bf16.msra.mxu0 %v7224
        %8007 = vmatprep.subr.bf16.mxu0 0
        %8008 = vmatpush1.bf16.msra.mxu0 %v7225
        %8009 = vmatprep.subr.bf16.mxu0 0
        %8010 = vmatpush1.bf16.msra.mxu0 %v7226
        %8011 = vmatprep.subr.bf16.mxu0 0
        %8012 = vmatpush1.bf16.msra.mxu0 %v7227
        %8013 = vmatprep.subr.bf16.mxu0 0
        %8014 = vmatpush1.bf16.msra.mxu0 %v7228
        %8015 = vmatprep.mubr.bf16.mxu0 %v7166
        %8016 = vmatmul.mubr.bf16.gmra.mrb[0].mxu0 %v7165
        %v8017 = vpop.f32.mrb[0].mxu0
        %v8018 = vadd.f32 %v7857, %v8017
        %v8019 = vpop.f32.mrb[0].mxu0
        %v8020 = vpop.f32.mrb[0].mxu0
        %v8021 = vadd.f32 %v7860, %v8020
        %v8022 = vpop.f32.mrb[0].mxu0
        %8023 = vmatprep.mubr.bf16.mxu0 %v7169
        %8024 = vmatmul.mubr.bf16.gmra.mrb[0].mxu0 %v7168
        %v8025 = vpop.f32.mrb[0].mxu0
        %v8026 = vadd.f32 %v7865, %v8025
        %v8027 = vpop.f32.mrb[0].mxu0
        %v8028 = vpop.f32.mrb[0].mxu0
        %v8029 = vadd.f32 %v7868, %v8028
        %v8030 = vpop.f32.mrb[0].mxu0
        %8031 = vmatprep.mubr.bf16.mxu0 %v7172
        %8032 = vmatmul.mubr.bf16.gmra.mrb[0].mxu0 %v7171
        %v8033 = vpop.f32.mrb[0].mxu0
        %v8034 = vadd.f32 %v7873, %v8033
        %v8035 = vpop.f32.mrb[0].mxu0
        %v8036 = vpop.f32.mrb[0].mxu0
        %v8037 = vadd.f32 %v7876, %v8036
        %v8038 = vpop.f32.mrb[0].mxu0
        %8039 = vmatprep.mubr.bf16.mxu0 %v7175
        %8040 = vmatmul.mubr.bf16.gmra.mrb[0].mxu0 %v7174
        %v8041 = vpop.f32.mrb[0].mxu0
        %v8042 = vadd.f32 %v7881, %v8041
        %v8043 = vpop.f32.mrb[0].mxu0
        %v8044 = vpop.f32.mrb[0].mxu0
        %v8045 = vadd.f32 %v7884, %v8044
        %v8046 = vpop.f32.mrb[0].mxu0
        %8047 = vmatprep.mubr.bf16.mxu0 %v7178
        %8048 = vmatmul.mubr.bf16.gmra.mrb[0].mxu0 %v7177
        %v8049 = vpop.f32.mrb[0].mxu0
        %v8050 = vadd.f32 %v7889, %v8049
        %v8051 = vpop.f32.mrb[0].mxu0
        %v8052 = vpop.f32.mrb[0].mxu0
        %v8053 = vadd.f32 %v7892, %v8052
        %v8054 = vpop.f32.mrb[0].mxu0
        %8055 = vmatprep.mubr.bf16.mxu0 %v7181
        %8056 = vmatmul.mubr.bf16.gmra.mrb[0].mxu0 %v7180
        %v8057 = vpop.f32.mrb[0].mxu0
        %v8058 = vadd.f32 %v7897, %v8057
        %v8059 = vpop.f32.mrb[0].mxu0
        %v8060 = vpop.f32.mrb[0].mxu0
        %v8061 = vadd.f32 %v7900, %v8060
        %v8062 = vpop.f32.mrb[0].mxu0
        %8063 = vmatprep.mubr.bf16.mxu0 %v7184
        %8064 = vmatmul.mubr.bf16.gmra.mrb[0].mxu0 %v7183
        %v8065 = vpop.f32.mrb[0].mxu0
        %v8066 = vadd.f32 %v7905, %v8065
        %v8067 = vpop.f32.mrb[0].mxu0
        %v8068 = vpop.f32.mrb[0].mxu0
        %v8069 = vadd.f32 %v7908, %v8068
        %v8070 = vpop.f32.mrb[0].mxu0
        %8071 = vmatprep.mubr.bf16.mxu0 %v7187
        %8072 = vmatmul.mubr.bf16.gmra.mrb[0].mxu0 %v7186
        %v8073 = vpop.f32.mrb[0].mxu0
        %v8074 = vadd.f32 %v7913, %v8073
        %v8075 = vpop.f32.mrb[0].mxu0
        %v8076 = vpop.f32.mrb[0].mxu0
        %v8077 = vadd.f32 %v7916, %v8076
        %v8078 = vpop.f32.mrb[0].mxu0
        %8079 = vmatprep.mubr.bf16.mxu0 %v7190
        %8080 = vmatmul.mubr.bf16.gmra.mrb[0].mxu0 %v7189
        %v8081 = vpop.f32.mrb[0].mxu0
        %v8082 = vadd.f32 %v7921, %v8081
        %v8083 = vpop.f32.mrb[0].mxu0
        %v8084 = vpop.f32.mrb[0].mxu0
        %v8085 = vadd.f32 %v7924, %v8084
        %v8086 = vpop.f32.mrb[0].mxu0
        %8087 = vmatprep.mubr.bf16.mxu0 %v7193
        %8088 = vmatmul.mubr.bf16.gmra.mrb[0].mxu0 %v7192
        %v8089 = vpop.f32.mrb[0].mxu0
        %v8090 = vadd.f32 %v7929, %v8089
        %v8091 = vpop.f32.mrb[0].mxu0
        %v8092 = vpop.f32.mrb[0].mxu0
        %v8093 = vadd.f32 %v7932, %v8092
        %v8094 = vpop.f32.mrb[0].mxu0
        %8095 = vmatprep.mubr.bf16.mxu0 %v7196
        %8096 = vmatmul.mubr.bf16.gmra.mrb[0].mxu0 %v7195
        %v8097 = vpop.f32.mrb[0].mxu0
        %v8098 = vadd.f32 %v7937, %v8097
        %v8099 = vpop.f32.mrb[0].mxu0
        %v8100 = vpop.f32.mrb[0].mxu0
        %v8101 = vadd.f32 %v7940, %v8100
        %v8102 = vpop.f32.mrb[0].mxu0
        %8103 = vmatprep.mubr.bf16.mxu0 %v7199
        %8104 = vmatmul.mubr.bf16.gmra.mrb[0].mxu0 %v7198
        %v8105 = vpop.f32.mrb[0].mxu0
        %v8106 = vadd.f32 %v7945, %v8105
        %v8107 = vpop.f32.mrb[0].mxu0
        %v8108 = vpop.f32.mrb[0].mxu0
        %v8109 = vadd.f32 %v7948, %v8108
        %v8110 = vpop.f32.mrb[0].mxu0
        %8111 = vmatprep.mubr.bf16.mxu0 %v7202
        %8112 = vmatmul.mubr.bf16.gmra.mrb[0].mxu0 %v7201
        %v8113 = vpop.f32.mrb[0].mxu0
        %v8114 = vadd.f32 %v7953, %v8113
        %v8115 = vpop.f32.mrb[0].mxu0
        %v8116 = vpop.f32.mrb[0].mxu0
        %v8117 = vadd.f32 %v7956, %v8116
        %v8118 = vpop.f32.mrb[0].mxu0
        %8119 = vmatprep.mubr.bf16.mxu0 %v7205
        %8120 = vmatmul.mubr.bf16.gmra.mrb[0].mxu0 %v7204
        %v8121 = vpop.f32.mrb[0].mxu0
        %v8122 = vadd.f32 %v7961, %v8121
        %v8123 = vpop.f32.mrb[0].mxu0
        %v8124 = vpop.f32.mrb[0].mxu0
        %v8125 = vadd.f32 %v7964, %v8124
        %v8126 = vpop.f32.mrb[0].mxu0
        %8127 = vmatprep.mubr.bf16.mxu0 %v7208
        %8128 = vmatmul.mubr.bf16.gmra.mrb[0].mxu0 %v7207
        %v8129 = vpop.f32.mrb[0].mxu0
        %v8130 = vadd.f32 %v7969, %v8129
        %v8131 = vpop.f32.mrb[0].mxu0
        %v8132 = vpop.f32.mrb[0].mxu0
        %v8133 = vadd.f32 %v7972, %v8132
        %v8134 = vpop.f32.mrb[0].mxu0
        %8135 = vmatprep.mubr.bf16.mxu0 %v7211
        %8136 = vmatmul.mubr.bf16.gmra.mrb[0].mxu0 %v7210
        %v8137 = vpop.f32.mrb[0].mxu0
        %v8138 = vadd.f32 %v7977, %v8137
        %v8139 = vpop.f32.mrb[0].mxu0
        %v8140 = vpop.f32.mrb[0].mxu0
        %v8141 = vadd.f32 %v7980, %v8140
        %v8142 = vpop.f32.mrb[0].mxu0
        %8143 = vdwg.mxu0
        %8144 = vmatprep.subr.bf16.mxu0 0
        %8145 = vmatpush1.bf16.msra.mxu0 %v7229
        %8146 = vmatprep.subr.bf16.mxu0 0
        %8147 = vmatpush1.bf16.msra.mxu0 %v7230
        %8148 = vmatprep.subr.bf16.mxu0 0
        %8149 = vmatpush1.bf16.msra.mxu0 %v7231
        %8150 = vmatprep.subr.bf16.mxu0 0
        %8151 = vmatpush1.bf16.msra.mxu0 %v7232
        %8152 = vmatprep.subr.bf16.mxu0 0
        %8153 = vmatpush1.bf16.msra.mxu0 %v7233
        %8154 = vmatprep.subr.bf16.mxu0 0
        %8155 = vmatpush1.bf16.msra.mxu0 %v7234
        %8156 = vmatprep.subr.bf16.mxu0 0
        %8157 = vmatpush1.bf16.msra.mxu0 %v7235
        %8158 = vmatprep.subr.bf16.mxu0 0
        %8159 = vmatpush1.bf16.msra.mxu0 %v7236
        %8160 = vmatprep.subr.bf16.mxu0 0
        %8161 = vmatpush1.bf16.msra.mxu0 0
        %8162 = vmatprep.subr.bf16.mxu0 0
        %8163 = vmatpush1.bf16.msra.mxu0 0
        %8164 = vmatprep.subr.bf16.mxu0 0
        %8165 = vmatpush1.bf16.msra.mxu0 0
        %8166 = vmatprep.subr.bf16.mxu0 0
        %8167 = vmatpush1.bf16.msra.mxu0 0
        %8168 = vmatprep.subr.bf16.mxu0 0
        %8169 = vmatpush1.bf16.msra.mxu0 0
        %8170 = vmatprep.subr.bf16.mxu0 0
        %8171 = vmatpush1.bf16.msra.mxu0 0
        %8172 = vmatprep.subr.bf16.mxu0 0
        %8173 = vmatpush1.bf16.msra.mxu0 0
        %8174 = vmatprep.subr.bf16.mxu0 0
        %8175 = vmatpush1.bf16.msra.mxu0 0
        %8176 = vmatprep.mubr.bf16.mxu0 0
        %8177 = vmatmul.mubr.bf16.gmra.mrb[0].mxu0 %v7167
        %v8178 = vpop.f32.mrb[0].mxu0
        %v8179 = vadd.f32 %v8018, %v8178
        %v8180 = vpop.f32.mrb[0].mxu0
        %v8181 = vpop.f32.mrb[0].mxu0
        %v8182 = vadd.f32 %v8021, %v8181
        %v8183 = vpop.f32.mrb[0].mxu0
        %8184 = vmatprep.mubr.bf16.mxu0 0
        %8185 = vmatmul.mubr.bf16.gmra.mrb[0].mxu0 %v7170
        %v8186 = vpop.f32.mrb[0].mxu0
        %v8187 = vadd.f32 %v8026, %v8186
        %v8188 = vpop.f32.mrb[0].mxu0
        %v8189 = vpop.f32.mrb[0].mxu0
        %v8190 = vadd.f32 %v8029, %v8189
        %v8191 = vpop.f32.mrb[0].mxu0
        %8192 = vmatprep.mubr.bf16.mxu0 0
        %8193 = vmatmul.mubr.bf16.gmra.mrb[0].mxu0 %v7173
        %v8194 = vpop.f32.mrb[0].mxu0
        %v8195 = vadd.f32 %v8034, %v8194
        %v8196 = vpop.f32.mrb[0].mxu0
        %v8197 = vpop.f32.mrb[0].mxu0
        %v8198 = vadd.f32 %v8037, %v8197
        %v8199 = vpop.f32.mrb[0].mxu0
        %8200 = vmatprep.mubr.bf16.mxu0 0
        %8201 = vmatmul.mubr.bf16.gmra.mrb[0].mxu0 %v7176
        %v8202 = vpop.f32.mrb[0].mxu0
        %v8203 = vadd.f32 %v8042, %v8202
        %v8204 = vpop.f32.mrb[0].mxu0
        %v8205 = vpop.f32.mrb[0].mxu0
        %v8206 = vadd.f32 %v8045, %v8205
        %v8207 = vpop.f32.mrb[0].mxu0
        %8208 = vmatprep.mubr.bf16.mxu0 0
        %8209 = vmatmul.mubr.bf16.gmra.mrb[0].mxu0 %v7179
        %v8210 = vpop.f32.mrb[0].mxu0
        %v8211 = vadd.f32 %v8050, %v8210
        %v8212 = vpop.f32.mrb[0].mxu0
        %v8213 = vpop.f32.mrb[0].mxu0
        %v8214 = vadd.f32 %v8053, %v8213
        %v8215 = vpop.f32.mrb[0].mxu0
        %8216 = vmatprep.mubr.bf16.mxu0 0
        %8217 = vmatmul.mubr.bf16.gmra.mrb[0].mxu0 %v7182
        %v8218 = vpop.f32.mrb[0].mxu0
        %v8219 = vadd.f32 %v8058, %v8218
        %v8220 = vpop.f32.mrb[0].mxu0
        %v8221 = vpop.f32.mrb[0].mxu0
        %v8222 = vadd.f32 %v8061, %v8221
        %v8223 = vpop.f32.mrb[0].mxu0
        %8224 = vmatprep.mubr.bf16.mxu0 0
        %8225 = vmatmul.mubr.bf16.gmra.mrb[0].mxu0 %v7185
        %v8226 = vpop.f32.mrb[0].mxu0
        %v8227 = vadd.f32 %v8066, %v8226
        %v8228 = vpop.f32.mrb[0].mxu0
        %v8229 = vpop.f32.mrb[0].mxu0
        %v8230 = vadd.f32 %v8069, %v8229
        %v8231 = vpop.f32.mrb[0].mxu0
        %8232 = vmatprep.mubr.bf16.mxu0 0
        %8233 = vmatmul.mubr.bf16.gmra.mrb[0].mxu0 %v7188
        %v8234 = vpop.f32.mrb[0].mxu0
        %v8235 = vadd.f32 %v8074, %v8234
        %v8236 = vpop.f32.mrb[0].mxu0
        %v8237 = vpop.f32.mrb[0].mxu0
        %v8238 = vadd.f32 %v8077, %v8237
        %v8239 = vpop.f32.mrb[0].mxu0
        %8240 = vmatprep.mubr.bf16.mxu0 0
        %8241 = vmatmul.mubr.bf16.gmra.mrb[0].mxu0 %v7191
        %v8242 = vpop.f32.mrb[0].mxu0
        %v8243 = vadd.f32 %v8082, %v8242
        %v8244 = vpop.f32.mrb[0].mxu0
        %v8245 = vpop.f32.mrb[0].mxu0
        %v8246 = vadd.f32 %v8085, %v8245
        %v8247 = vpop.f32.mrb[0].mxu0
        %8248 = vmatprep.mubr.bf16.mxu0 0
        %8249 = vmatmul.mubr.bf16.gmra.mrb[0].mxu0 %v7194
        %v8250 = vpop.f32.mrb[0].mxu0
        %v8251 = vadd.f32 %v8090, %v8250
        %v8252 = vpop.f32.mrb[0].mxu0
        %v8253 = vpop.f32.mrb[0].mxu0
        %v8254 = vadd.f32 %v8093, %v8253
        %v8255 = vpop.f32.mrb[0].mxu0
        %8256 = vmatprep.mubr.bf16.mxu0 0
        %8257 = vmatmul.mubr.bf16.gmra.mrb[0].mxu0 %v7197
        %v8258 = vpop.f32.mrb[0].mxu0
        %v8259 = vadd.f32 %v8098, %v8258
        %v8260 = vpop.f32.mrb[0].mxu0
        %v8261 = vpop.f32.mrb[0].mxu0
        %v8262 = vadd.f32 %v8101, %v8261
        %v8263 = vpop.f32.mrb[0].mxu0
        %8264 = vmatprep.mubr.bf16.mxu0 0
        %8265 = vmatmul.mubr.bf16.gmra.mrb[0].mxu0 %v7200
        %v8266 = vpop.f32.mrb[0].mxu0
        %v8267 = vadd.f32 %v8106, %v8266
        %v8268 = vpop.f32.mrb[0].mxu0
        %v8269 = vpop.f32.mrb[0].mxu0
        %v8270 = vadd.f32 %v8109, %v8269
        %v8271 = vpop.f32.mrb[0].mxu0
        %8272 = vmatprep.mubr.bf16.mxu0 0
        %8273 = vmatmul.mubr.bf16.gmra.mrb[0].mxu0 %v7203
        %v8274 = vpop.f32.mrb[0].mxu0
        %v8275 = vadd.f32 %v8114, %v8274
        %v8276 = vpop.f32.mrb[0].mxu0
        %v8277 = vpop.f32.mrb[0].mxu0
        %v8278 = vadd.f32 %v8117, %v8277
        %v8279 = vpop.f32.mrb[0].mxu0
        %8280 = vmatprep.mubr.bf16.mxu0 0
        %8281 = vmatmul.mubr.bf16.gmra.mrb[0].mxu0 %v7206
        %v8282 = vpop.f32.mrb[0].mxu0
        %v8283 = vadd.f32 %v8122, %v8282
        %v8284 = vpop.f32.mrb[0].mxu0
        %v8285 = vpop.f32.mrb[0].mxu0
        %v8286 = vadd.f32 %v8125, %v8285
        %v8287 = vpop.f32.mrb[0].mxu0
        %8288 = vmatprep.mubr.bf16.mxu0 0
        %8289 = vmatmul.mubr.bf16.gmra.mrb[0].mxu0 %v7209
        %v8290 = vpop.f32.mrb[0].mxu0
        %v8291 = vadd.f32 %v8130, %v8290
        %v8292 = vpop.f32.mrb[0].mxu0
        %v8293 = vpop.f32.mrb[0].mxu0
        %v8294 = vadd.f32 %v8133, %v8293
        %v8295 = vpop.f32.mrb[0].mxu0
        %8296 = vmatprep.mubr.bf16.mxu0 0
        %8297 = vmatmul.mubr.bf16.gmra.mrb[0].mxu0 %v7212
        %v8298 = vpop.f32.mrb[0].mxu0
        %v8299 = vadd.f32 %v8138, %v8298
        %v8300 = vpop.f32.mrb[0].mxu0
        %v8301 = vpop.f32.mrb[0].mxu0
        %v8302 = vadd.f32 %v8141, %v8301
        %v8303 = vpop.f32.mrb[0].mxu0
        %8304 = vdwg.mxu0
        %8305 = vset.pattern.permute.xlu0 24
        %8306 = vperm.xlu0 %8305, %v1004
        %v8307 = vpop.permute.xlu0 %8306
        %8309 = vset.pattern.permute.xlu0 24
        %8310 = vperm.xlu0 %8309, %v1005
        %v8311 = vpop.permute.xlu0 %8310
        %8313 = vset.pattern.permute.xlu0 24
        %8314 = vperm.xlu0 %8313, %v1006
        %v8315 = vpop.permute.xlu0 %8314
        %8317 = vset.pattern.permute.xlu0 24
        %8318 = vperm.xlu0 %8317, %v1007
        %v8319 = vpop.permute.xlu0 %8318
        %8321 = vset.pattern.permute.xlu0 24
        %8322 = vperm.xlu0 %8321, %v1008
        %v8323 = vpop.permute.xlu0 %8322
        %8325 = vset.pattern.permute.xlu0 24
        %8326 = vperm.xlu0 %8325, %v1009
        %v8327 = vpop.permute.xlu0 %8326
        %8329 = vset.pattern.permute.xlu0 24
        %8330 = vperm.xlu0 %8329, %v1010
        %v8331 = vpop.permute.xlu0 %8330
        %8333 = vset.pattern.permute.xlu0 24
        %8334 = vperm.xlu0 %8333, %v1011
        %v8335 = vpop.permute.xlu0 %8334
        %8337 = vset.pattern.permute.xlu0 24
        %8338 = vperm.xlu0 %8337, %v1012
        %v8339 = vpop.permute.xlu0 %8338
        %8341 = vset.pattern.permute.xlu0 24
        %8342 = vperm.xlu0 %8341, %v1013
        %v8343 = vpop.permute.xlu0 %8342
        %8345 = vset.pattern.permute.xlu0 24
        %8346 = vperm.xlu0 %8345, %v1014
        %v8347 = vpop.permute.xlu0 %8346
        %8349 = vset.pattern.permute.xlu0 24
        %8350 = vperm.xlu0 %8349, %v1015
        %v8351 = vpop.permute.xlu0 %8350
        %8353 = vset.pattern.permute.xlu0 24
        %8354 = vperm.xlu0 %8353, %v1016
        %v8355 = vpop.permute.xlu0 %8354
        %8357 = vset.pattern.permute.xlu0 24
        %8358 = vperm.xlu0 %8357, %v1017
        %v8359 = vpop.permute.xlu0 %8358
        %8361 = vset.pattern.permute.xlu0 24
        %8362 = vperm.xlu0 %8361, %v1018
        %v8363 = vpop.permute.xlu0 %8362
        %8365 = vset.pattern.permute.xlu0 24
        %8366 = vperm.xlu0 %8365, %v1019
        %v8367 = vpop.permute.xlu0 %8366
        %8369 = vset.pattern.permute.xlu0 24
        %8370 = vperm.xlu0 %8369, %v1020
        %v8371 = vpop.permute.xlu0 %8370
        %8373 = vset.pattern.permute.xlu0 24
        %8374 = vperm.xlu0 %8373, %v1021
        %v8375 = vpop.permute.xlu0 %8374
        %8377 = vset.pattern.permute.xlu0 24
        %8378 = vperm.xlu0 %8377, %v1022
        %v8379 = vpop.permute.xlu0 %8378
        %8381 = vset.pattern.permute.xlu0 24
        %8382 = vperm.xlu0 %8381, %v1023
        %v8383 = vpop.permute.xlu0 %8382
        %8385 = vset.pattern.permute.xlu0 24
        %8386 = vperm.xlu0 %8385, %v1024
        %v8387 = vpop.permute.xlu0 %8386
        %8389 = vset.pattern.permute.xlu0 24
        %8390 = vperm.xlu0 %8389, %v1025
        %v8391 = vpop.permute.xlu0 %8390
        %8393 = vset.pattern.permute.xlu0 24
        %8394 = vperm.xlu0 %8393, %v1026
        %v8395 = vpop.permute.xlu0 %8394
        %8397 = vset.pattern.permute.xlu0 24
        %8398 = vperm.xlu0 %8397, %v1027
        %v8399 = vpop.permute.xlu0 %8398
        %8401 = vset.pattern.permute.xlu0 24
        %8402 = vperm.xlu0 %8401, %v1028
        %v8403 = vpop.permute.xlu0 %8402
        %8405 = vset.pattern.permute.xlu0 24
        %8406 = vperm.xlu0 %8405, %v1029
        %v8407 = vpop.permute.xlu0 %8406
        %8409 = vset.pattern.permute.xlu0 24
        %8410 = vperm.xlu0 %8409, %v1030
        %v8411 = vpop.permute.xlu0 %8410
        %8413 = vset.pattern.permute.xlu0 24
        %8414 = vperm.xlu0 %8413, %v1031
        %v8415 = vpop.permute.xlu0 %8414
        %8417 = vset.pattern.permute.xlu0 24
        %8418 = vperm.xlu0 %8417, %v1032
        %v8419 = vpop.permute.xlu0 %8418
        %8421 = vset.pattern.permute.xlu0 24
        %8422 = vperm.xlu0 %8421, %v1033
        %v8423 = vpop.permute.xlu0 %8422
        %8425 = vset.pattern.permute.xlu0 24
        %8426 = vperm.xlu0 %8425, %v1034
        %v8427 = vpop.permute.xlu0 %8426
        %8429 = vset.pattern.permute.xlu0 24
        %8430 = vperm.xlu0 %8429, %v1035
        %v8431 = vpop.permute.xlu0 %8430
        %v8433 = vmul.f32 %v6554, %v8307
        %v8434 = vmul.f32 %v6553, %v8311
        %v8435 = vmul.f32 %v6552, %v8315
        %v8436 = vmul.f32 %v6551, %v8319
        %v8437 = vmul.f32 %v6550, %v8323
        %v8438 = vmul.f32 %v6549, %v8327
        %v8439 = vmul.f32 %v6548, %v8331
        %v8440 = vmul.f32 %v6547, %v8335
        %v8441 = vmul.f32 %v6546, %v8339
        %v8442 = vmul.f32 %v6545, %v8343
        %v8443 = vmul.f32 %v6544, %v8347
        %v8444 = vmul.f32 %v6543, %v8351
        %v8445 = vmul.f32 %v6542, %v8355
        %v8446 = vmul.f32 %v6541, %v8359
        %v8447 = vmul.f32 %v6540, %v8363
        %v8448 = vmul.f32 %v6571, %v8367
        %v8449 = vmul.f32 %v6570, %v8371
        %v8450 = vmul.f32 %v6569, %v8375
        %v8451 = vmul.f32 %v6568, %v8379
        %v8452 = vmul.f32 %v6567, %v8383
        %v8453 = vmul.f32 %v6566, %v8387
        %v8454 = vmul.f32 %v6565, %v8391
        %v8455 = vmul.f32 %v6564, %v8395
        %v8456 = vmul.f32 %v6563, %v8399
        %v8457 = vmul.f32 %v6562, %v8403
        %v8458 = vmul.f32 %v6561, %v8407
        %v8459 = vmul.f32 %v6560, %v8411
        %v8460 = vmul.f32 %v6559, %v8415
        %v8461 = vmul.f32 %v6558, %v8419
        %v8462 = vmul.f32 %v6557, %v8423
        %v8463 = vmul.f32 %v6556, %v8427
        %v8464 = vmul.f32 %v6555, %v8431
        %8465 = vset.pattern.permute.xlu0 25
        %8466 = vperm.xlu0 %8465, %v1004
        %v8467 = vpop.permute.xlu0 %8466
        %8469 = vset.pattern.permute.xlu0 25
        %8470 = vperm.xlu0 %8469, %v1005
        %v8471 = vpop.permute.xlu0 %8470
        %8473 = vset.pattern.permute.xlu0 25
        %8474 = vperm.xlu0 %8473, %v1006
        %v8475 = vpop.permute.xlu0 %8474
        %8477 = vset.pattern.permute.xlu0 25
        %8478 = vperm.xlu0 %8477, %v1007
        %v8479 = vpop.permute.xlu0 %8478
        %8481 = vset.pattern.permute.xlu0 25
        %8482 = vperm.xlu0 %8481, %v1008
        %v8483 = vpop.permute.xlu0 %8482
        %8485 = vset.pattern.permute.xlu0 25
        %8486 = vperm.xlu0 %8485, %v1009
        %v8487 = vpop.permute.xlu0 %8486
        %8489 = vset.pattern.permute.xlu0 25
        %8490 = vperm.xlu0 %8489, %v1010
        %v8491 = vpop.permute.xlu0 %8490
        %8493 = vset.pattern.permute.xlu0 25
        %8494 = vperm.xlu0 %8493, %v1011
        %v8495 = vpop.permute.xlu0 %8494
        %8497 = vset.pattern.permute.xlu0 25
        %8498 = vperm.xlu0 %8497, %v1012
        %v8499 = vpop.permute.xlu0 %8498
        %8501 = vset.pattern.permute.xlu0 25
        %8502 = vperm.xlu0 %8501, %v1013
        %v8503 = vpop.permute.xlu0 %8502
        %8505 = vset.pattern.permute.xlu0 25
        %8506 = vperm.xlu0 %8505, %v1014
        %v8507 = vpop.permute.xlu0 %8506
        %8509 = vset.pattern.permute.xlu0 25
        %8510 = vperm.xlu0 %8509, %v1015
        %v8511 = vpop.permute.xlu0 %8510
        %8513 = vset.pattern.permute.xlu0 25
        %8514 = vperm.xlu0 %8513, %v1016
        %v8515 = vpop.permute.xlu0 %8514
        %8517 = vset.pattern.permute.xlu0 25
        %8518 = vperm.xlu0 %8517, %v1017
        %v8519 = vpop.permute.xlu0 %8518
        %8521 = vset.pattern.permute.xlu0 25
        %8522 = vperm.xlu0 %8521, %v1018
        %v8523 = vpop.permute.xlu0 %8522
        %8525 = vset.pattern.permute.xlu0 25
        %8526 = vperm.xlu0 %8525, %v1019
        %v8527 = vpop.permute.xlu0 %8526
        %8529 = vset.pattern.permute.xlu0 25
        %8530 = vperm.xlu0 %8529, %v1020
        %v8531 = vpop.permute.xlu0 %8530
        %8533 = vset.pattern.permute.xlu0 25
        %8534 = vperm.xlu0 %8533, %v1021
        %v8535 = vpop.permute.xlu0 %8534
        %8537 = vset.pattern.permute.xlu0 25
        %8538 = vperm.xlu0 %8537, %v1022
        %v8539 = vpop.permute.xlu0 %8538
        %8541 = vset.pattern.permute.xlu0 25
        %8542 = vperm.xlu0 %8541, %v1023
        %v8543 = vpop.permute.xlu0 %8542
        %8545 = vset.pattern.permute.xlu0 25
        %8546 = vperm.xlu0 %8545, %v1024
        %v8547 = vpop.permute.xlu0 %8546
        %8549 = vset.pattern.permute.xlu0 25
        %8550 = vperm.xlu0 %8549, %v1025
        %v8551 = vpop.permute.xlu0 %8550
        %8553 = vset.pattern.permute.xlu0 25
        %8554 = vperm.xlu0 %8553, %v1026
        %v8555 = vpop.permute.xlu0 %8554
        %8557 = vset.pattern.permute.xlu0 25
        %8558 = vperm.xlu0 %8557, %v1027
        %v8559 = vpop.permute.xlu0 %8558
        %8561 = vset.pattern.permute.xlu0 25
        %8562 = vperm.xlu0 %8561, %v1028
        %v8563 = vpop.permute.xlu0 %8562
        %8565 = vset.pattern.permute.xlu0 25
        %8566 = vperm.xlu0 %8565, %v1029
        %v8567 = vpop.permute.xlu0 %8566
        %8569 = vset.pattern.permute.xlu0 25
        %8570 = vperm.xlu0 %8569, %v1030
        %v8571 = vpop.permute.xlu0 %8570
        %8573 = vset.pattern.permute.xlu0 25
        %8574 = vperm.xlu0 %8573, %v1031
        %v8575 = vpop.permute.xlu0 %8574
        %8577 = vset.pattern.permute.xlu0 25
        %8578 = vperm.xlu0 %8577, %v1032
        %v8579 = vpop.permute.xlu0 %8578
        %8581 = vset.pattern.permute.xlu0 25
        %8582 = vperm.xlu0 %8581, %v1033
        %v8583 = vpop.permute.xlu0 %8582
        %8585 = vset.pattern.permute.xlu0 25
        %8586 = vperm.xlu0 %8585, %v1034
        %v8587 = vpop.permute.xlu0 %8586
        %8589 = vset.pattern.permute.xlu0 25
        %8590 = vperm.xlu0 %8589, %v1035
        %v8591 = vpop.permute.xlu0 %8590
        %v8593 = vmul.f32 %v682, %v8467
        %v8594 = vmul.f32 %v685, %v8471
        %v8595 = vmul.f32 %v690, %v8475
        %v8596 = vmul.f32 %v693, %v8479
        %v8597 = vmul.f32 %v698, %v8483
        %v8598 = vmul.f32 %v701, %v8487
        %v8599 = vmul.f32 %v706, %v8491
        %v8600 = vmul.f32 %v709, %v8495
        %v8601 = vmul.f32 %v714, %v8499
        %v8602 = vmul.f32 %v717, %v8503
        %v8603 = vmul.f32 %v722, %v8507
        %v8604 = vmul.f32 %v725, %v8511
        %v8605 = vmul.f32 %v730, %v8515
        %v8606 = vmul.f32 %v733, %v8519
        %v8607 = vmul.f32 %v610, %v8523
        %v8608 = vmul.f32 %v613, %v8527
        %v8609 = vmul.f32 %v618, %v8531
        %v8610 = vmul.f32 %v621, %v8535
        %v8611 = vmul.f32 %v626, %v8539
        %v8612 = vmul.f32 %v629, %v8543
        %v8613 = vmul.f32 %v634, %v8547
        %v8614 = vmul.f32 %v637, %v8551
        %v8615 = vmul.f32 %v642, %v8555
        %v8616 = vmul.f32 %v645, %v8559
        %v8617 = vmul.f32 %v650, %v8563
        %v8618 = vmul.f32 %v653, %v8567
        %v8619 = vmul.f32 %v658, %v8571
        %v8620 = vmul.f32 %v661, %v8575
        %v8621 = vmul.f32 %v666, %v8579
        %v8622 = vmul.f32 %v669, %v8583
        %v8623 = vmul.f32 %v674, %v8587
        %v8624 = vmul.f32 %v677, %v8591
        %8625 = vset.pattern.permute.xlu0 26
        %8626 = vperm.xlu0 %8625, %v1004
        %v8627 = vpop.permute.xlu0 %8626
        %8629 = vset.pattern.permute.xlu0 26
        %8630 = vperm.xlu0 %8629, %v1005
        %v8631 = vpop.permute.xlu0 %8630
        %8633 = vset.pattern.permute.xlu0 26
        %8634 = vperm.xlu0 %8633, %v1006
        %v8635 = vpop.permute.xlu0 %8634
        %8637 = vset.pattern.permute.xlu0 26
        %8638 = vperm.xlu0 %8637, %v1007
        %v8639 = vpop.permute.xlu0 %8638
        %8641 = vset.pattern.permute.xlu0 26
        %8642 = vperm.xlu0 %8641, %v1008
        %v8643 = vpop.permute.xlu0 %8642
        %8645 = vset.pattern.permute.xlu0 26
        %8646 = vperm.xlu0 %8645, %v1009
        %v8647 = vpop.permute.xlu0 %8646
        %8649 = vset.pattern.permute.xlu0 26
        %8650 = vperm.xlu0 %8649, %v1010
        %v8651 = vpop.permute.xlu0 %8650
        %8653 = vset.pattern.permute.xlu0 26
        %8654 = vperm.xlu0 %8653, %v1011
        %v8655 = vpop.permute.xlu0 %8654
        %8657 = vset.pattern.permute.xlu0 26
        %8658 = vperm.xlu0 %8657, %v1012
        %v8659 = vpop.permute.xlu0 %8658
        %8661 = vset.pattern.permute.xlu0 26
        %8662 = vperm.xlu0 %8661, %v1013
        %v8663 = vpop.permute.xlu0 %8662
        %8665 = vset.pattern.permute.xlu0 26
        %8666 = vperm.xlu0 %8665, %v1014
        %v8667 = vpop.permute.xlu0 %8666
        %8669 = vset.pattern.permute.xlu0 26
        %8670 = vperm.xlu0 %8669, %v1015
        %v8671 = vpop.permute.xlu0 %8670
        %8673 = vset.pattern.permute.xlu0 26
        %8674 = vperm.xlu0 %8673, %v1016
        %v8675 = vpop.permute.xlu0 %8674
        %8677 = vset.pattern.permute.xlu0 26
        %8678 = vperm.xlu0 %8677, %v1017
        %v8679 = vpop.permute.xlu0 %8678
        %8681 = vset.pattern.permute.xlu0 26
        %8682 = vperm.xlu0 %8681, %v1018
        %v8683 = vpop.permute.xlu0 %8682
        %8685 = vset.pattern.permute.xlu0 26
        %8686 = vperm.xlu0 %8685, %v1019
        %v8687 = vpop.permute.xlu0 %8686
        %8689 = vset.pattern.permute.xlu0 26
        %8690 = vperm.xlu0 %8689, %v1020
        %v8691 = vpop.permute.xlu0 %8690
        %8693 = vset.pattern.permute.xlu0 26
        %8694 = vperm.xlu0 %8693, %v1021
        %v8695 = vpop.permute.xlu0 %8694
        %8697 = vset.pattern.permute.xlu0 26
        %8698 = vperm.xlu0 %8697, %v1022
        %v8699 = vpop.permute.xlu0 %8698
        %8701 = vset.pattern.permute.xlu0 26
        %8702 = vperm.xlu0 %8701, %v1023
        %v8703 = vpop.permute.xlu0 %8702
        %8705 = vset.pattern.permute.xlu0 26
        %8706 = vperm.xlu0 %8705, %v1024
        %v8707 = vpop.permute.xlu0 %8706
        %8709 = vset.pattern.permute.xlu0 26
        %8710 = vperm.xlu0 %8709, %v1025
        %v8711 = vpop.permute.xlu0 %8710
        %8713 = vset.pattern.permute.xlu0 26
        %8714 = vperm.xlu0 %8713, %v1026
        %v8715 = vpop.permute.xlu0 %8714
        %8717 = vset.pattern.permute.xlu0 26
        %8718 = vperm.xlu0 %8717, %v1027
        %v8719 = vpop.permute.xlu0 %8718
        %8721 = vset.pattern.permute.xlu0 26
        %8722 = vperm.xlu0 %8721, %v1028
        %v8723 = vpop.permute.xlu0 %8722
        %8725 = vset.pattern.permute.xlu0 26
        %8726 = vperm.xlu0 %8725, %v1029
        %v8727 = vpop.permute.xlu0 %8726
        %8729 = vset.pattern.permute.xlu0 26
        %8730 = vperm.xlu0 %8729, %v1030
        %v8731 = vpop.permute.xlu0 %8730
        %8733 = vset.pattern.permute.xlu0 26
        %8734 = vperm.xlu0 %8733, %v1031
        %v8735 = vpop.permute.xlu0 %8734
        %8737 = vset.pattern.permute.xlu0 26
        %8738 = vperm.xlu0 %8737, %v1032
        %v8739 = vpop.permute.xlu0 %8738
        %8741 = vset.pattern.permute.xlu0 26
        %8742 = vperm.xlu0 %8741, %v1033
        %v8743 = vpop.permute.xlu0 %8742
        %8745 = vset.pattern.permute.xlu0 26
        %8746 = vperm.xlu0 %8745, %v1034
        %v8747 = vpop.permute.xlu0 %8746
        %8749 = vset.pattern.permute.xlu0 26
        %8750 = vperm.xlu0 %8749, %v1035
        %v8751 = vpop.permute.xlu0 %8750
        %v8753 = vmul.f32 %v6936, %v8627
        %v8754 = vmul.f32 %v6935, %v8631
        %v8755 = vmul.f32 %v6934, %v8635
        %v8756 = vmul.f32 %v6933, %v8639
        %v8757 = vmul.f32 %v6932, %v8643
        %v8758 = vmul.f32 %v6931, %v8647
        %v8759 = vmul.f32 %v6930, %v8651
        %v8760 = vmul.f32 %v6929, %v8655
        %v8761 = vmul.f32 %v6928, %v8659
        %v8762 = vmul.f32 %v6927, %v8663
        %v8763 = vmul.f32 %v6926, %v8667
        %v8764 = vmul.f32 %v6925, %v8671
        %v8765 = vmul.f32 %v6956, %v8675
        %v8766 = vmul.f32 %v6955, %v8679
        %v8767 = vmul.f32 %v6954, %v8683
        %v8768 = vmul.f32 %v6953, %v8687
        %v8769 = vmul.f32 %v6952, %v8691
        %v8770 = vmul.f32 %v6951, %v8695
        %v8771 = vmul.f32 %v6950, %v8699
        %v8772 = vmul.f32 %v6949, %v8703
        %v8773 = vmul.f32 %v6948, %v8707
        %v8774 = vmul.f32 %v6947, %v8711
        %v8775 = vmul.f32 %v6946, %v8715
        %v8776 = vmul.f32 %v6945, %v8719
        %v8777 = vmul.f32 %v6944, %v8723
        %v8778 = vmul.f32 %v6943, %v8727
        %v8779 = vmul.f32 %v6942, %v8731
        %v8780 = vmul.f32 %v6941, %v8735
        %v8781 = vmul.f32 %v6940, %v8739
        %v8782 = vmul.f32 %v6939, %v8743
        %v8783 = vmul.f32 %v6938, %v8747
        %v8784 = vmul.f32 %v6937, %v8751
        %v8785 = vld [vmem:[#allocation14 + $0x300] sm:$0xff]
        %v8786 = vld [vmem:[#allocation14 + $0x308] sm:$0xff]
        %v8787 = vld [vmem:[#allocation14 + $0x310] sm:$0xff]
        %v8788 = vld [vmem:[#allocation14 + $0x318] sm:$0xff]
        %v8789 = vld [vmem:[#allocation14 + $0x320] sm:$0xff]
        %v8790 = vld [vmem:[#allocation14 + $0x328] sm:$0xff]
        %v8791 = vld [vmem:[#allocation14 + $0x330] sm:$0xff]
        %v8792 = vld [vmem:[#allocation14 + $0x338] sm:$0xff]
        %v8793 = vld [vmem:[#allocation14 + $0x340] sm:$0xff]
        %v8794 = vld [vmem:[#allocation14 + $0x348] sm:$0xff]
        %v8795 = vld [vmem:[#allocation14 + $0x350] sm:$0xff]
        %v8796 = vld [vmem:[#allocation14 + $0x358] sm:$0xff]
        %v8797 = vld [vmem:[#allocation14 + $0x360] sm:$0xff]
        %v8798 = vld [vmem:[#allocation14 + $0x368] sm:$0xff]
        %v8799 = vld [vmem:[#allocation14 + $0x370] sm:$0xff]
        %v8800 = vld [vmem:[#allocation14 + $0x378] sm:$0xff]
        %v8801 = vld [vmem:[#allocation14 + $0x380] sm:$0xff]
        %v8802 = vld [vmem:[#allocation14 + $0x388] sm:$0xff]
        %v8803 = vld [vmem:[#allocation14 + $0x390] sm:$0xff]
        %v8804 = vld [vmem:[#allocation14 + $0x398] sm:$0xff]
        %v8805 = vld [vmem:[#allocation14 + $0x3a0] sm:$0xff]
        %v8806 = vld [vmem:[#allocation14 + $0x3a8] sm:$0xff]
        %v8807 = vld [vmem:[#allocation14 + $0x3b0] sm:$0xff]
        %v8808 = vld [vmem:[#allocation14 + $0x3b8] sm:$0xff]
        %v8809 = vld [vmem:[#allocation14 + $0x3c0] sm:$0xff]
        %v8810 = vld [vmem:[#allocation14 + $0x3c8] sm:$0xff]
        %v8811 = vld [vmem:[#allocation14 + $0x3d0] sm:$0xff]
        %v8812 = vld [vmem:[#allocation14 + $0x3d8] sm:$0xff]
        %v8813 = vld [vmem:[#allocation14 + $0x3e0] sm:$0xff]
        %v8814 = vld [vmem:[#allocation14 + $0x3e8] sm:$0xff]
        %v8815 = vld [vmem:[#allocation14 + $0x3f0] sm:$0xff]
        %v8816 = vld [vmem:[#allocation14 + $0x3f8] sm:$0xff]
        %v8817 = vld [vmem:[#allocation14 + $0x400] sm:$0xff]
        %v8818 = vld [vmem:[#allocation14 + $0x408] sm:$0xff]
        %v8819 = vld [vmem:[#allocation14 + $0x410] sm:$0xff]
        %v8820 = vld [vmem:[#allocation14 + $0x418] sm:$0xff]
        %v8821 = vld [vmem:[#allocation14 + $0x420] sm:$0xff]
        %v8822 = vld [vmem:[#allocation14 + $0x428] sm:$0xff]
        %v8823 = vld [vmem:[#allocation14 + $0x430] sm:$0xff]
        %v8824 = vld [vmem:[#allocation14 + $0x438] sm:$0xff]
        %v8825 = vld [vmem:[#allocation14 + $0x440] sm:$0xff]
        %v8826 = vld [vmem:[#allocation14 + $0x448] sm:$0xff]
        %v8827 = vld [vmem:[#allocation14 + $0x450] sm:$0xff]
        %v8828 = vld [vmem:[#allocation14 + $0x458] sm:$0xff]
        %v8829 = vld [vmem:[#allocation14 + $0x460] sm:$0xff]
        %v8830 = vld [vmem:[#allocation14 + $0x468] sm:$0xff]
        %v8831 = vld [vmem:[#allocation14 + $0x470] sm:$0xff]
        %v8832 = vld [vmem:[#allocation14 + $0x478] sm:$0xff]
        %v8833 = vpack.c.bf16 %v8434, %v8433
        %v8834 = vpack.c.bf16 %v8594, %v8593
        %v8835 = vpack.c.bf16 %v8754, %v8753
        %v8836 = vpack.c.bf16 %v8436, %v8435
        %v8837 = vpack.c.bf16 %v8596, %v8595
        %v8838 = vpack.c.bf16 %v8756, %v8755
        %v8839 = vpack.c.bf16 %v8438, %v8437
        %v8840 = vpack.c.bf16 %v8598, %v8597
        %v8841 = vpack.c.bf16 %v8758, %v8757
        %v8842 = vpack.c.bf16 %v8440, %v8439
        %v8843 = vpack.c.bf16 %v8600, %v8599
        %v8844 = vpack.c.bf16 %v8760, %v8759
        %v8845 = vpack.c.bf16 %v8442, %v8441
        %v8846 = vpack.c.bf16 %v8602, %v8601
        %v8847 = vpack.c.bf16 %v8762, %v8761
        %v8848 = vpack.c.bf16 %v8444, %v8443
        %v8849 = vpack.c.bf16 %v8604, %v8603
        %v8850 = vpack.c.bf16 %v8764, %v8763
        %v8851 = vpack.c.bf16 %v8446, %v8445
        %v8852 = vpack.c.bf16 %v8606, %v8605
        %v8853 = vpack.c.bf16 %v8766, %v8765
        %v8854 = vpack.c.bf16 %v8448, %v8447
        %v8855 = vpack.c.bf16 %v8608, %v8607
        %v8856 = vpack.c.bf16 %v8768, %v8767
        %v8857 = vpack.c.bf16 %v8450, %v8449
        %v8858 = vpack.c.bf16 %v8610, %v8609
        %v8859 = vpack.c.bf16 %v8770, %v8769
        %v8860 = vpack.c.bf16 %v8452, %v8451
        %v8861 = vpack.c.bf16 %v8612, %v8611
        %v8862 = vpack.c.bf16 %v8772, %v8771
        %v8863 = vpack.c.bf16 %v8454, %v8453
        %v8864 = vpack.c.bf16 %v8614, %v8613
        %v8865 = vpack.c.bf16 %v8774, %v8773
        %v8866 = vpack.c.bf16 %v8456, %v8455
        %v8867 = vpack.c.bf16 %v8616, %v8615
        %v8868 = vpack.c.bf16 %v8776, %v8775
        %v8869 = vpack.c.bf16 %v8458, %v8457
        %v8870 = vpack.c.bf16 %v8618, %v8617
        %v8871 = vpack.c.bf16 %v8778, %v8777
        %v8872 = vpack.c.bf16 %v8460, %v8459
        %v8873 = vpack.c.bf16 %v8620, %v8619
        %v8874 = vpack.c.bf16 %v8780, %v8779
        %v8875 = vpack.c.bf16 %v8462, %v8461
        %v8876 = vpack.c.bf16 %v8622, %v8621
        %v8877 = vpack.c.bf16 %v8782, %v8781
        %v8878 = vpack.c.bf16 %v8464, %v8463
        %v8879 = vpack.c.bf16 %v8624, %v8623
        %v8880 = vpack.c.bf16 %v8784, %v8783
        %v8881 = vpack.c.bf16 %v8786, %v8785
        %v8882 = vpack.c.bf16 %v8788, %v8787
        %v8883 = vpack.c.bf16 %v8790, %v8789
        %v8884 = vpack.c.bf16 %v8792, %v8791
        %v8885 = vpack.c.bf16 %v8794, %v8793
        %v8886 = vpack.c.bf16 %v8796, %v8795
        %v8887 = vpack.c.bf16 %v8798, %v8797
        %v8888 = vpack.c.bf16 %v8800, %v8799
        %v8889 = vpack.c.bf16 %v8802, %v8801
        %v8890 = vpack.c.bf16 %v8804, %v8803
        %v8891 = vpack.c.bf16 %v8806, %v8805
        %v8892 = vpack.c.bf16 %v8808, %v8807
        %v8893 = vpack.c.bf16 %v8810, %v8809
        %v8894 = vpack.c.bf16 %v8812, %v8811
        %v8895 = vpack.c.bf16 %v8814, %v8813
        %v8896 = vpack.c.bf16 %v8816, %v8815
        %v8897 = vpack.c.bf16 %v8818, %v8817
        %v8898 = vpack.c.bf16 %v8820, %v8819
        %v8899 = vpack.c.bf16 %v8822, %v8821
        %v8900 = vpack.c.bf16 %v8824, %v8823
        %v8901 = vpack.c.bf16 %v8826, %v8825
        %v8902 = vpack.c.bf16 %v8828, %v8827
        %v8903 = vpack.c.bf16 %v8830, %v8829
        %v8904 = vpack.c.bf16 %v8832, %v8831
        %8905 = vmatprep.subr.bf16.mxu0 0
        %8906 = vmatpush1.bf16.msra.mxu0 %v8881
        %8907 = vmatprep.subr.bf16.mxu0 0
        %8908 = vmatpush1.bf16.msra.mxu0 %v8882
        %8909 = vmatprep.subr.bf16.mxu0 0
        %8910 = vmatpush1.bf16.msra.mxu0 %v8883
        %8911 = vmatprep.subr.bf16.mxu0 0
        %8912 = vmatpush1.bf16.msra.mxu0 %v8884
        %8913 = vmatprep.subr.bf16.mxu0 0
        %8914 = vmatpush1.bf16.msra.mxu0 %v8885
        %8915 = vmatprep.subr.bf16.mxu0 0
        %8916 = vmatpush1.bf16.msra.mxu0 %v8886
        %8917 = vmatprep.subr.bf16.mxu0 0
        %8918 = vmatpush1.bf16.msra.mxu0 %v8887
        %8919 = vmatprep.subr.bf16.mxu0 0
        %8920 = vmatpush1.bf16.msra.mxu0 %v8888
        %8921 = vmatprep.subr.bf16.mxu0 0
        %8922 = vmatpush1.bf16.msra.mxu0 %v8889
        %8923 = vmatprep.subr.bf16.mxu0 0
        %8924 = vmatpush1.bf16.msra.mxu0 %v8890
        %8925 = vmatprep.subr.bf16.mxu0 0
        %8926 = vmatpush1.bf16.msra.mxu0 %v8891
        %8927 = vmatprep.subr.bf16.mxu0 0
        %8928 = vmatpush1.bf16.msra.mxu0 %v8892
        %8929 = vmatprep.subr.bf16.mxu0 0
        %8930 = vmatpush1.bf16.msra.mxu0 %v8893
        %8931 = vmatprep.subr.bf16.mxu0 0
        %8932 = vmatpush1.bf16.msra.mxu0 %v8894
        %8933 = vmatprep.subr.bf16.mxu0 0
        %8934 = vmatpush1.bf16.msra.mxu0 %v8895
        %8935 = vmatprep.subr.bf16.mxu0 0
        %8936 = vmatpush1.bf16.msra.mxu0 %v8896
        %8937 = vmatprep.mubr.bf16.mxu0 %v8834
        %8938 = vmatmul.mubr.bf16.gmra.mrb[0].mxu0 %v8833
        %v8939 = vpop.f32.mrb[0].mxu0
        %v8940 = vadd.f32 0.0, %v8939
        %v8941 = vpop.f32.mrb[0].mxu0
        %v8942 = vpop.f32.mrb[0].mxu0
        %v8943 = vadd.f32 0.0, %v8942
        %v8944 = vpop.f32.mrb[0].mxu0
        %8945 = vmatprep.mubr.bf16.mxu0 %v8837
        %8946 = vmatmul.mubr.bf16.gmra.mrb[0].mxu0 %v8836
        %v8947 = vpop.f32.mrb[0].mxu0
        %v8948 = vadd.f32 0.0, %v8947
        %v8949 = vpop.f32.mrb[0].mxu0
        %v8950 = vpop.f32.mrb[0].mxu0
        %v8951 = vadd.f32 0.0, %v8950
        %v8952 = vpop.f32.mrb[0].mxu0
        %8953 = vmatprep.mubr.bf16.mxu0 %v8840
        %8954 = vmatmul.mubr.bf16.gmra.mrb[0].mxu0 %v8839
        %v8955 = vpop.f32.mrb[0].mxu0
        %v8956 = vadd.f32 0.0, %v8955
        %v8957 = vpop.f32.mrb[0].mxu0
        %v8958 = vpop.f32.mrb[0].mxu0
        %v8959 = vadd.f32 0.0, %v8958
        %v8960 = vpop.f32.mrb[0].mxu0
        %8961 = vmatprep.mubr.bf16.mxu0 %v8843
        %8962 = vmatmul.mubr.bf16.gmra.mrb[0].mxu0 %v8842
        %v8963 = vpop.f32.mrb[0].mxu0
        %v8964 = vadd.f32 0.0, %v8963
        %v8965 = vpop.f32.mrb[0].mxu0
        %v8966 = vpop.f32.mrb[0].mxu0
        %v8967 = vadd.f32 0.0, %v8966
        %v8968 = vpop.f32.mrb[0].mxu0
        %8969 = vmatprep.mubr.bf16.mxu0 %v8846
        %8970 = vmatmul.mubr.bf16.gmra.mrb[0].mxu0 %v8845
        %v8971 = vpop.f32.mrb[0].mxu0
        %v8972 = vadd.f32 0.0, %v8971
        %v8973 = vpop.f32.mrb[0].mxu0
        %v8974 = vpop.f32.mrb[0].mxu0
        %v8975 = vadd.f32 0.0, %v8974
        %v8976 = vpop.f32.mrb[0].mxu0
        %8977 = vmatprep.mubr.bf16.mxu0 %v8849
        %8978 = vmatmul.mubr.bf16.gmra.mrb[0].mxu0 %v8848
        %v8979 = vpop.f32.mrb[0].mxu0
        %v8980 = vadd.f32 0.0, %v8979
        %v8981 = vpop.f32.mrb[0].mxu0
        %v8982 = vpop.f32.mrb[0].mxu0
        %v8983 = vadd.f32 0.0, %v8982
        %v8984 = vpop.f32.mrb[0].mxu0
        %8985 = vmatprep.mubr.bf16.mxu0 %v8852
        %8986 = vmatmul.mubr.bf16.gmra.mrb[0].mxu0 %v8851
        %v8987 = vpop.f32.mrb[0].mxu0
        %v8988 = vadd.f32 0.0, %v8987
        %v8989 = vpop.f32.mrb[0].mxu0
        %v8990 = vpop.f32.mrb[0].mxu0
        %v8991 = vadd.f32 0.0, %v8990
        %v8992 = vpop.f32.mrb[0].mxu0
        %8993 = vmatprep.mubr.bf16.mxu0 %v8855
        %8994 = vmatmul.mubr.bf16.gmra.mrb[0].mxu0 %v8854
        %v8995 = vpop.f32.mrb[0].mxu0
        %v8996 = vadd.f32 0.0, %v8995
        %v8997 = vpop.f32.mrb[0].mxu0
        %v8998 = vpop.f32.mrb[0].mxu0
        %v8999 = vadd.f32 0.0, %v8998
        %v9000 = vpop.f32.mrb[0].mxu0
        %9001 = vmatprep.mubr.bf16.mxu0 %v8858
        %9002 = vmatmul.mubr.bf16.gmra.mrb[0].mxu0 %v8857
        %v9003 = vpop.f32.mrb[0].mxu0
        %v9004 = vadd.f32 0.0, %v9003
        %v9005 = vpop.f32.mrb[0].mxu0
        %v9006 = vpop.f32.mrb[0].mxu0
        %v9007 = vadd.f32 0.0, %v9006
        %v9008 = vpop.f32.mrb[0].mxu0
        %9009 = vmatprep.mubr.bf16.mxu0 %v8861
        %9010 = vmatmul.mubr.bf16.gmra.mrb[0].mxu0 %v8860
        %v9011 = vpop.f32.mrb[0].mxu0
        %v9012 = vadd.f32 0.0, %v9011
        %v9013 = vpop.f32.mrb[0].mxu0
        %v9014 = vpop.f32.mrb[0].mxu0
        %v9015 = vadd.f32 0.0, %v9014
        %v9016 = vpop.f32.mrb[0].mxu0
        %9017 = vmatprep.mubr.bf16.mxu0 %v8864
        %9018 = vmatmul.mubr.bf16.gmra.mrb[0].mxu0 %v8863
        %v9019 = vpop.f32.mrb[0].mxu0
        %v9020 = vadd.f32 0.0, %v9019
        %v9021 = vpop.f32.mrb[0].mxu0
        %v9022 = vpop.f32.mrb[0].mxu0
        %v9023 = vadd.f32 0.0, %v9022
        %v9024 = vpop.f32.mrb[0].mxu0
        %9025 = vmatprep.mubr.bf16.mxu0 %v8867
        %9026 = vmatmul.mubr.bf16.gmra.mrb[0].mxu0 %v8866
        %v9027 = vpop.f32.mrb[0].mxu0
        %v9028 = vadd.f32 0.0, %v9027
        %v9029 = vpop.f32.mrb[0].mxu0
        %v9030 = vpop.f32.mrb[0].mxu0
        %v9031 = vadd.f32 0.0, %v9030
        %v9032 = vpop.f32.mrb[0].mxu0
        %9033 = vmatprep.mubr.bf16.mxu0 %v8870
        %9034 = vmatmul.mubr.bf16.gmra.mrb[0].mxu0 %v8869
        %v9035 = vpop.f32.mrb[0].mxu0
        %v9036 = vadd.f32 0.0, %v9035
        %v9037 = vpop.f32.mrb[0].mxu0
        %v9038 = vpop.f32.mrb[0].mxu0
        %v9039 = vadd.f32 0.0, %v9038
        %v9040 = vpop.f32.mrb[0].mxu0
        %9041 = vmatprep.mubr.bf16.mxu0 %v8873
        %9042 = vmatmul.mubr.bf16.gmra.mrb[0].mxu0 %v8872
        %v9043 = vpop.f32.mrb[0].mxu0
        %v9044 = vadd.f32 0.0, %v9043
        %v9045 = vpop.f32.mrb[0].mxu0
        %v9046 = vpop.f32.mrb[0].mxu0
        %v9047 = vadd.f32 0.0, %v9046
        %v9048 = vpop.f32.mrb[0].mxu0
        %9049 = vmatprep.mubr.bf16.mxu0 %v8876
        %9050 = vmatmul.mubr.bf16.gmra.mrb[0].mxu0 %v8875
        %v9051 = vpop.f32.mrb[0].mxu0
        %v9052 = vadd.f32 0.0, %v9051
        %v9053 = vpop.f32.mrb[0].mxu0
        %v9054 = vpop.f32.mrb[0].mxu0
        %v9055 = vadd.f32 0.0, %v9054
        %v9056 = vpop.f32.mrb[0].mxu0
        %9057 = vmatprep.mubr.bf16.mxu0 %v8879
        %9058 = vmatmul.mubr.bf16.gmra.mrb[0].mxu0 %v8878
        %v9059 = vpop.f32.mrb[0].mxu0
        %v9060 = vadd.f32 0.0, %v9059
        %v9061 = vpop.f32.mrb[0].mxu0
        %v9062 = vpop.f32.mrb[0].mxu0
        %v9063 = vadd.f32 0.0, %v9062
        %v9064 = vpop.f32.mrb[0].mxu0
        %9065 = vdwg.mxu0
        %9066 = vmatprep.subr.bf16.mxu0 0
        %9067 = vmatpush1.bf16.msra.mxu0 %v8897
        %9068 = vmatprep.subr.bf16.mxu0 0
        %9069 = vmatpush1.bf16.msra.mxu0 %v8898
        %9070 = vmatprep.subr.bf16.mxu0 0
        %9071 = vmatpush1.bf16.msra.mxu0 %v8899
        %9072 = vmatprep.subr.bf16.mxu0 0
        %9073 = vmatpush1.bf16.msra.mxu0 %v8900
        %9074 = vmatprep.subr.bf16.mxu0 0
        %9075 = vmatpush1.bf16.msra.mxu0 %v8901
        %9076 = vmatprep.subr.bf16.mxu0 0
        %9077 = vmatpush1.bf16.msra.mxu0 %v8902
        %9078 = vmatprep.subr.bf16.mxu0 0
        %9079 = vmatpush1.bf16.msra.mxu0 %v8903
        %9080 = vmatprep.subr.bf16.mxu0 0
        %9081 = vmatpush1.bf16.msra.mxu0 %v8904
        %9082 = vmatprep.subr.bf16.mxu0 0
        %9083 = vmatpush1.bf16.msra.mxu0 0
        %9084 = vmatprep.subr.bf16.mxu0 0
        %9085 = vmatpush1.bf16.msra.mxu0 0
        %9086 = vmatprep.subr.bf16.mxu0 0
        %9087 = vmatpush1.bf16.msra.mxu0 0
        %9088 = vmatprep.subr.bf16.mxu0 0
        %9089 = vmatpush1.bf16.msra.mxu0 0
        %9090 = vmatprep.subr.bf16.mxu0 0
        %9091 = vmatpush1.bf16.msra.mxu0 0
        %9092 = vmatprep.subr.bf16.mxu0 0
        %9093 = vmatpush1.bf16.msra.mxu0 0
        %9094 = vmatprep.subr.bf16.mxu0 0
        %9095 = vmatpush1.bf16.msra.mxu0 0
        %9096 = vmatprep.subr.bf16.mxu0 0
        %9097 = vmatpush1.bf16.msra.mxu0 0
        %9098 = vmatprep.mubr.bf16.mxu0 0
        %9099 = vmatmul.mubr.bf16.gmra.mrb[0].mxu0 %v8835
        %v9100 = vpop.f32.mrb[0].mxu0
        %v9101 = vadd.f32 %v8940, %v9100
        %v9102 = vpop.f32.mrb[0].mxu0
        %v9103 = vpop.f32.mrb[0].mxu0
        %v9104 = vadd.f32 %v8943, %v9103
        %v9105 = vpop.f32.mrb[0].mxu0
        %9106 = vmatprep.mubr.bf16.mxu0 0
        %9107 = vmatmul.mubr.bf16.gmra.mrb[0].mxu0 %v8838
        %v9108 = vpop.f32.mrb[0].mxu0
        %v9109 = vadd.f32 %v8948, %v9108
        %v9110 = vpop.f32.mrb[0].mxu0
        %v9111 = vpop.f32.mrb[0].mxu0
        %v9112 = vadd.f32 %v8951, %v9111
        %v9113 = vpop.f32.mrb[0].mxu0
        %9114 = vmatprep.mubr.bf16.mxu0 0
        %9115 = vmatmul.mubr.bf16.gmra.mrb[0].mxu0 %v8841
        %v9116 = vpop.f32.mrb[0].mxu0
        %v9117 = vadd.f32 %v8956, %v9116
        %v9118 = vpop.f32.mrb[0].mxu0
        %v9119 = vpop.f32.mrb[0].mxu0
        %v9120 = vadd.f32 %v8959, %v9119
        %v9121 = vpop.f32.mrb[0].mxu0
        %9122 = vmatprep.mubr.bf16.mxu0 0
        %9123 = vmatmul.mubr.bf16.gmra.mrb[0].mxu0 %v8844
        %v9124 = vpop.f32.mrb[0].mxu0
        %v9125 = vadd.f32 %v8964, %v9124
        %v9126 = vpop.f32.mrb[0].mxu0
        %v9127 = vpop.f32.mrb[0].mxu0
        %v9128 = vadd.f32 %v8967, %v9127
        %v9129 = vpop.f32.mrb[0].mxu0
        %9130 = vmatprep.mubr.bf16.mxu0 0
        %9131 = vmatmul.mubr.bf16.gmra.mrb[0].mxu0 %v8847
        %v9132 = vpop.f32.mrb[0].mxu0
        %v9133 = vadd.f32 %v8972, %v9132
        %v9134 = vpop.f32.mrb[0].mxu0
        %v9135 = vpop.f32.mrb[0].mxu0
        %v9136 = vadd.f32 %v8975, %v9135
        %v9137 = vpop.f32.mrb[0].mxu0
        %9138 = vmatprep.mubr.bf16.mxu0 0
        %9139 = vmatmul.mubr.bf16.gmra.mrb[0].mxu0 %v8850
        %v9140 = vpop.f32.mrb[0].mxu0
        %v9141 = vadd.f32 %v8980, %v9140
        %v9142 = vpop.f32.mrb[0].mxu0
        %v9143 = vpop.f32.mrb[0].mxu0
        %v9144 = vadd.f32 %v8983, %v9143
        %v9145 = vpop.f32.mrb[0].mxu0
        %9146 = vmatprep.mubr.bf16.mxu0 0
        %9147 = vmatmul.mubr.bf16.gmra.mrb[0].mxu0 %v8853
        %v9148 = vpop.f32.mrb[0].mxu0
        %v9149 = vadd.f32 %v8988, %v9148
        %v9150 = vpop.f32.mrb[0].mxu0
        %v9151 = vpop.f32.mrb[0].mxu0
        %v9152 = vadd.f32 %v8991, %v9151
        %v9153 = vpop.f32.mrb[0].mxu0
        %9154 = vmatprep.mubr.bf16.mxu0 0
        %9155 = vmatmul.mubr.bf16.gmra.mrb[0].mxu0 %v8856
        %v9156 = vpop.f32.mrb[0].mxu0
        %v9157 = vadd.f32 %v8996, %v9156
        %v9158 = vpop.f32.mrb[0].mxu0
        %v9159 = vpop.f32.mrb[0].mxu0
        %v9160 = vadd.f32 %v8999, %v9159
        %v9161 = vpop.f32.mrb[0].mxu0
        %9162 = vmatprep.mubr.bf16.mxu0 0
        %9163 = vmatmul.mubr.bf16.gmra.mrb[0].mxu0 %v8859
        %v9164 = vpop.f32.mrb[0].mxu0
        %v9165 = vadd.f32 %v9004, %v9164
        %v9166 = vpop.f32.mrb[0].mxu0
        %v9167 = vpop.f32.mrb[0].mxu0
        %v9168 = vadd.f32 %v9007, %v9167
        %v9169 = vpop.f32.mrb[0].mxu0
        %9170 = vmatprep.mubr.bf16.mxu0 0
        %9171 = vmatmul.mubr.bf16.gmra.mrb[0].mxu0 %v8862
        %v9172 = vpop.f32.mrb[0].mxu0
        %v9173 = vadd.f32 %v9012, %v9172
        %v9174 = vpop.f32.mrb[0].mxu0
        %v9175 = vpop.f32.mrb[0].mxu0
        %v9176 = vadd.f32 %v9015, %v9175
        %v9177 = vpop.f32.mrb[0].mxu0
        %9178 = vmatprep.mubr.bf16.mxu0 0
        %9179 = vmatmul.mubr.bf16.gmra.mrb[0].mxu0 %v8865
        %v9180 = vpop.f32.mrb[0].mxu0
        %v9181 = vadd.f32 %v9020, %v9180
        %v9182 = vpop.f32.mrb[0].mxu0
        %v9183 = vpop.f32.mrb[0].mxu0
        %v9184 = vadd.f32 %v9023, %v9183
        %v9185 = vpop.f32.mrb[0].mxu0
        %9186 = vmatprep.mubr.bf16.mxu0 0
        %9187 = vmatmul.mubr.bf16.gmra.mrb[0].mxu0 %v8868
        %v9188 = vpop.f32.mrb[0].mxu0
        %v9189 = vadd.f32 %v9028, %v9188
        %v9190 = vpop.f32.mrb[0].mxu0
        %v9191 = vpop.f32.mrb[0].mxu0
        %v9192 = vadd.f32 %v9031, %v9191
        %v9193 = vpop.f32.mrb[0].mxu0
        %9194 = vmatprep.mubr.bf16.mxu0 0
        %9195 = vmatmul.mubr.bf16.gmra.mrb[0].mxu0 %v8871
        %v9196 = vpop.f32.mrb[0].mxu0
        %v9197 = vadd.f32 %v9036, %v9196
        %v9198 = vpop.f32.mrb[0].mxu0
        %v9199 = vpop.f32.mrb[0].mxu0
        %v9200 = vadd.f32 %v9039, %v9199
        %v9201 = vpop.f32.mrb[0].mxu0
        %9202 = vmatprep.mubr.bf16.mxu0 0
        %9203 = vmatmul.mubr.bf16.gmra.mrb[0].mxu0 %v8874
        %v9204 = vpop.f32.mrb[0].mxu0
        %v9205 = vadd.f32 %v9044, %v9204
        %v9206 = vpop.f32.mrb[0].mxu0
        %v9207 = vpop.f32.mrb[0].mxu0
        %v9208 = vadd.f32 %v9047, %v9207
        %v9209 = vpop.f32.mrb[0].mxu0
        %9210 = vmatprep.mubr.bf16.mxu0 0
        %9211 = vmatmul.mubr.bf16.gmra.mrb[0].mxu0 %v8877
        %v9212 = vpop.f32.mrb[0].mxu0
        %v9213 = vadd.f32 %v9052, %v9212
        %v9214 = vpop.f32.mrb[0].mxu0
        %v9215 = vpop.f32.mrb[0].mxu0
        %v9216 = vadd.f32 %v9055, %v9215
        %v9217 = vpop.f32.mrb[0].mxu0
        %9218 = vmatprep.mubr.bf16.mxu0 0
        %9219 = vmatmul.mubr.bf16.gmra.mrb[0].mxu0 %v8880
        %v9220 = vpop.f32.mrb[0].mxu0
        %v9221 = vadd.f32 %v9060, %v9220
        %v9222 = vpop.f32.mrb[0].mxu0
        %v9223 = vpop.f32.mrb[0].mxu0
        %v9224 = vadd.f32 %v9063, %v9223
        %v9225 = vpop.f32.mrb[0].mxu0
        %9226 = vdwg.mxu0
        %v9227 = vadd.f32 %v8179, %v9101
        %v9228 = vadd.f32 %v8182, %v9104
        %v9229 = vadd.f32 %v8187, %v9109
        %v9230 = vadd.f32 %v8190, %v9112
        %v9231 = vadd.f32 %v8195, %v9117
        %v9232 = vadd.f32 %v8198, %v9120
        %v9233 = vadd.f32 %v8203, %v9125
        %v9234 = vadd.f32 %v8206, %v9128
        %v9235 = vadd.f32 %v8211, %v9133
        %v9236 = vadd.f32 %v8214, %v9136
        %v9237 = vadd.f32 %v8219, %v9141
        %v9238 = vadd.f32 %v8222, %v9144
        %v9239 = vadd.f32 %v8227, %v9149
        %v9240 = vadd.f32 %v8230, %v9152
        %v9241 = vadd.f32 %v8235, %v9157
        %v9242 = vadd.f32 %v8238, %v9160
        %v9243 = vadd.f32 %v8243, %v9165
        %v9244 = vadd.f32 %v8246, %v9168
        %v9245 = vadd.f32 %v8251, %v9173
        %v9246 = vadd.f32 %v8254, %v9176
        %v9247 = vadd.f32 %v8259, %v9181
        %v9248 = vadd.f32 %v8262, %v9184
        %v9249 = vadd.f32 %v8267, %v9189
        %v9250 = vadd.f32 %v8270, %v9192
        %v9251 = vadd.f32 %v8275, %v9197
        %v9252 = vadd.f32 %v8278, %v9200
        %v9253 = vadd.f32 %v8283, %v9205
        %v9254 = vadd.f32 %v8286, %v9208
        %v9255 = vadd.f32 %v8291, %v9213
        %v9256 = vadd.f32 %v8294, %v9216
        %v9257 = vadd.f32 %v8299, %v9221
        %v9258 = vadd.f32 %v8302, %v9224
        %v9259 = vpack.c.bf16 %v814, %v811
        %v9260 = vpack.c.bf16 %v3724, %v3723
        %v9261 = vpack.c.bf16 %v6476, %v6475
        %v9262 = vpack.c.bf16 %v9228, %v9227
        %v9263 = vpack.c.bf16 %v822, %v819
        %v9264 = vpack.c.bf16 %v3726, %v3725
        %v9265 = vpack.c.bf16 %v6478, %v6477
        %v9266 = vpack.c.bf16 %v9230, %v9229
        %v9267 = vpack.c.bf16 %v830, %v827
        %v9268 = vpack.c.bf16 %v3728, %v3727
        %v9269 = vpack.c.bf16 %v6480, %v6479
        %v9270 = vpack.c.bf16 %v9232, %v9231
        %v9271 = vpack.c.bf16 %v838, %v835
        %v9272 = vpack.c.bf16 %v3730, %v3729
        %v9273 = vpack.c.bf16 %v6482, %v6481
        %v9274 = vpack.c.bf16 %v9234, %v9233
        %v9275 = vpack.c.bf16 %v846, %v843
        %v9276 = vpack.c.bf16 %v3732, %v3731
        %v9277 = vpack.c.bf16 %v6484, %v6483
        %v9278 = vpack.c.bf16 %v9236, %v9235
        %v9279 = vpack.c.bf16 %v854, %v851
        %v9280 = vpack.c.bf16 %v3734, %v3733
        %v9281 = vpack.c.bf16 %v6486, %v6485
        %v9282 = vpack.c.bf16 %v9238, %v9237
        %v9283 = vpack.c.bf16 %v862, %v859
        %v9284 = vpack.c.bf16 %v3736, %v3735
        %v9285 = vpack.c.bf16 %v6488, %v6487
        %v9286 = vpack.c.bf16 %v9240, %v9239
        %v9287 = vpack.c.bf16 %v870, %v867
        %v9288 = vpack.c.bf16 %v3738, %v3737
        %v9289 = vpack.c.bf16 %v6490, %v6489
        %v9290 = vpack.c.bf16 %v9242, %v9241
        %v9291 = vpack.c.bf16 %v878, %v875
        %v9292 = vpack.c.bf16 %v3740, %v3739
        %v9293 = vpack.c.bf16 %v6492, %v6491
        %v9294 = vpack.c.bf16 %v9244, %v9243
        %v9295 = vpack.c.bf16 %v886, %v883
        %v9296 = vpack.c.bf16 %v3742, %v3741
        %v9297 = vpack.c.bf16 %v6494, %v6493
        %v9298 = vpack.c.bf16 %v9246, %v9245
        %v9299 = vpack.c.bf16 %v894, %v891
        %v9300 = vpack.c.bf16 %v3744, %v3743
        %v9301 = vpack.c.bf16 %v6496, %v6495
        %v9302 = vpack.c.bf16 %v9248, %v9247
        %v9303 = vpack.c.bf16 %v902, %v899
        %v9304 = vpack.c.bf16 %v3746, %v3745
        %v9305 = vpack.c.bf16 %v6498, %v6497
        %v9306 = vpack.c.bf16 %v9250, %v9249
        %v9307 = vpack.c.bf16 %v910, %v907
        %v9308 = vpack.c.bf16 %v3748, %v3747
        %v9309 = vpack.c.bf16 %v6500, %v6499
        %v9310 = vpack.c.bf16 %v9252, %v9251
        %v9311 = vpack.c.bf16 %v918, %v915
        %v9312 = vpack.c.bf16 %v3750, %v3749
        %v9313 = vpack.c.bf16 %v6502, %v6501
        %v9314 = vpack.c.bf16 %v9254, %v9253
        %v9315 = vpack.c.bf16 %v926, %v923
        %v9316 = vpack.c.bf16 %v3752, %v3751
        %v9317 = vpack.c.bf16 %v6504, %v6503
        %v9318 = vpack.c.bf16 %v9256, %v9255
        %v9319 = vpack.c.bf16 %v934, %v931
        %v9320 = vpack.c.bf16 %v3754, %v3753
        %v9321 = vpack.c.bf16 %v6506, %v6505
        %v9322 = vpack.c.bf16 %v9258, %v9257
        %v9387 = vunpack.c.l.b16 %v9259
        %v9388 = vunpack.c.l.b16 %v9260
        %v9389 = vunpack.c.l.b16 %v9261
        %v9390 = vunpack.c.l.b16 %v9262
        %v9391 = vunpack.c.h.b16 %v9259
        %v9392 = vunpack.c.h.b16 %v9260
        %v9393 = vunpack.c.h.b16 %v9261
        %v9394 = vunpack.c.h.b16 %v9262
        %v9395 = vunpack.c.l.b16 %v9263
        %v9396 = vunpack.c.l.b16 %v9264
        %v9397 = vunpack.c.l.b16 %v9265
        %v9398 = vunpack.c.l.b16 %v9266
        %v9399 = vunpack.c.h.b16 %v9263
        %v9400 = vunpack.c.h.b16 %v9264
        %v9401 = vunpack.c.h.b16 %v9265
        %v9402 = vunpack.c.h.b16 %v9266
        %v9403 = vunpack.c.l.b16 %v9267
        %v9404 = vunpack.c.l.b16 %v9268
        %v9405 = vunpack.c.l.b16 %v9269
        %v9406 = vunpack.c.l.b16 %v9270
        %v9407 = vunpack.c.h.b16 %v9267
        %v9408 = vunpack.c.h.b16 %v9268
        %v9409 = vunpack.c.h.b16 %v9269
        %v9410 = vunpack.c.h.b16 %v9270
        %v9411 = vunpack.c.l.b16 %v9271
        %v9412 = vunpack.c.l.b16 %v9272
        %v9413 = vunpack.c.l.b16 %v9273
        %v9414 = vunpack.c.l.b16 %v9274
        %v9415 = vunpack.c.h.b16 %v9271
        %v9416 = vunpack.c.h.b16 %v9272
        %v9417 = vunpack.c.h.b16 %v9273
        %v9418 = vunpack.c.h.b16 %v9274
        %v9419 = vunpack.c.l.b16 %v9275
        %v9420 = vunpack.c.l.b16 %v9276
        %v9421 = vunpack.c.l.b16 %v9277
        %v9422 = vunpack.c.l.b16 %v9278
        %v9423 = vunpack.c.h.b16 %v9275
        %v9424 = vunpack.c.h.b16 %v9276
        %v9425 = vunpack.c.h.b16 %v9277
        %v9426 = vunpack.c.h.b16 %v9278
        %v9427 = vunpack.c.l.b16 %v9279
        %v9428 = vunpack.c.l.b16 %v9280
        %v9429 = vunpack.c.l.b16 %v9281
        %v9430 = vunpack.c.l.b16 %v9282
        %v9431 = vunpack.c.h.b16 %v9279
        %v9432 = vunpack.c.h.b16 %v9280
        %v9433 = vunpack.c.h.b16 %v9281
        %v9434 = vunpack.c.h.b16 %v9282
        %v9435 = vunpack.c.l.b16 %v9283
        %v9436 = vunpack.c.l.b16 %v9284
        %v9437 = vunpack.c.l.b16 %v9285
        %v9438 = vunpack.c.l.b16 %v9286
        %v9439 = vunpack.c.h.b16 %v9283
        %v9440 = vunpack.c.h.b16 %v9284
        %v9441 = vunpack.c.h.b16 %v9285
        %v9442 = vunpack.c.h.b16 %v9286
        %v9443 = vunpack.c.l.b16 %v9287
        %v9444 = vunpack.c.l.b16 %v9288
        %v9445 = vunpack.c.l.b16 %v9289
        %v9446 = vunpack.c.l.b16 %v9290
        %v9447 = vunpack.c.h.b16 %v9287
        %v9448 = vunpack.c.h.b16 %v9288
        %v9449 = vunpack.c.h.b16 %v9289
        %v9450 = vunpack.c.h.b16 %v9290
        %v9451 = vunpack.c.l.b16 %v9291
        %v9452 = vunpack.c.l.b16 %v9292
        %v9453 = vunpack.c.l.b16 %v9293
        %v9454 = vunpack.c.l.b16 %v9294
        %v9455 = vunpack.c.h.b16 %v9291
        %v9456 = vunpack.c.h.b16 %v9292
        %v9457 = vunpack.c.h.b16 %v9293
        %v9458 = vunpack.c.h.b16 %v9294
        %v9459 = vunpack.c.l.b16 %v9295
        %v9460 = vunpack.c.l.b16 %v9296
        %v9461 = vunpack.c.l.b16 %v9297
        %v9462 = vunpack.c.l.b16 %v9298
        %v9463 = vunpack.c.h.b16 %v9295
        %v9464 = vunpack.c.h.b16 %v9296
        %v9465 = vunpack.c.h.b16 %v9297
        %v9466 = vunpack.c.h.b16 %v9298
        %v9467 = vunpack.c.l.b16 %v9299
        %v9468 = vunpack.c.l.b16 %v9300
        %v9469 = vunpack.c.l.b16 %v9301
        %v9470 = vunpack.c.l.b16 %v9302
        %v9471 = vunpack.c.h.b16 %v9299
        %v9472 = vunpack.c.h.b16 %v9300
        %v9473 = vunpack.c.h.b16 %v9301
        %v9474 = vunpack.c.h.b16 %v9302
        %v9475 = vunpack.c.l.b16 %v9303
        %v9476 = vunpack.c.l.b16 %v9304
        %v9477 = vunpack.c.l.b16 %v9305
        %v9478 = vunpack.c.l.b16 %v9306
        %v9479 = vunpack.c.h.b16 %v9303
        %v9480 = vunpack.c.h.b16 %v9304
        %v9481 = vunpack.c.h.b16 %v9305
        %v9482 = vunpack.c.h.b16 %v9306
        %v9483 = vunpack.c.l.b16 %v9307
        %v9484 = vunpack.c.l.b16 %v9308
        %v9485 = vunpack.c.l.b16 %v9309
        %v9486 = vunpack.c.l.b16 %v9310
        %v9487 = vunpack.c.h.b16 %v9307
        %v9488 = vunpack.c.h.b16 %v9308
        %v9489 = vunpack.c.h.b16 %v9309
        %v9490 = vunpack.c.h.b16 %v9310
        %v9491 = vunpack.c.l.b16 %v9311
        %v9492 = vunpack.c.l.b16 %v9312
        %v9493 = vunpack.c.l.b16 %v9313
        %v9494 = vunpack.c.l.b16 %v9314
        %v9495 = vunpack.c.h.b16 %v9311
        %v9496 = vunpack.c.h.b16 %v9312
        %v9497 = vunpack.c.h.b16 %v9313
        %v9498 = vunpack.c.h.b16 %v9314
        %v9499 = vunpack.c.l.b16 %v9315
        %v9500 = vunpack.c.l.b16 %v9316
        %v9501 = vunpack.c.l.b16 %v9317
        %v9502 = vunpack.c.l.b16 %v9318
        %v9503 = vunpack.c.h.b16 %v9315
        %v9504 = vunpack.c.h.b16 %v9316
        %v9505 = vunpack.c.h.b16 %v9317
        %v9506 = vunpack.c.h.b16 %v9318
        %v9507 = vunpack.c.l.b16 %v9319
        %v9508 = vunpack.c.l.b16 %v9320
        %v9509 = vunpack.c.l.b16 %v9321
        %v9510 = vunpack.c.l.b16 %v9322
        %v9511 = vunpack.c.h.b16 %v9319
        %v9512 = vunpack.c.h.b16 %v9320
        %v9513 = vunpack.c.h.b16 %v9321
        %v9514 = vunpack.c.h.b16 %v9322
        %v9515 = vpack.c.b16 %v9388, %v9387
        %v9516 = vpack.c.b16 %v9390, %v9389
        %v9517 = vpack.c.b16 %v9392, %v9391
        %v9518 = vpack.c.b16 %v9394, %v9393
        %v9519 = vpack.c.b16 %v9396, %v9395
        %v9520 = vpack.c.b16 %v9398, %v9397
        %v9521 = vpack.c.b16 %v9400, %v9399
        %v9522 = vpack.c.b16 %v9402, %v9401
        %v9523 = vpack.c.b16 %v9404, %v9403
        %v9524 = vpack.c.b16 %v9406, %v9405
        %v9525 = vpack.c.b16 %v9408, %v9407
        %v9526 = vpack.c.b16 %v9410, %v9409
        %v9527 = vpack.c.b16 %v9412, %v9411
        %v9528 = vpack.c.b16 %v9414, %v9413
        %v9529 = vpack.c.b16 %v9416, %v9415
        %v9530 = vpack.c.b16 %v9418, %v9417
        %v9531 = vpack.c.b16 %v9420, %v9419
        %v9532 = vpack.c.b16 %v9422, %v9421
        %v9533 = vpack.c.b16 %v9424, %v9423
        %v9534 = vpack.c.b16 %v9426, %v9425
        %v9535 = vpack.c.b16 %v9428, %v9427
        %v9536 = vpack.c.b16 %v9430, %v9429
        %v9537 = vpack.c.b16 %v9432, %v9431
        %v9538 = vpack.c.b16 %v9434, %v9433
        %v9539 = vpack.c.b16 %v9436, %v9435
        %v9540 = vpack.c.b16 %v9438, %v9437
        %v9541 = vpack.c.b16 %v9440, %v9439
        %v9542 = vpack.c.b16 %v9442, %v9441
        %v9543 = vpack.c.b16 %v9444, %v9443
        %v9544 = vpack.c.b16 %v9446, %v9445
        %v9545 = vpack.c.b16 %v9448, %v9447
        %v9546 = vpack.c.b16 %v9450, %v9449
        %v9547 = vpack.c.b16 %v9452, %v9451
        %v9548 = vpack.c.b16 %v9454, %v9453
        %v9549 = vpack.c.b16 %v9456, %v9455
        %v9550 = vpack.c.b16 %v9458, %v9457
        %v9551 = vpack.c.b16 %v9460, %v9459
        %v9552 = vpack.c.b16 %v9462, %v9461
        %v9553 = vpack.c.b16 %v9464, %v9463
        %v9554 = vpack.c.b16 %v9466, %v9465
        %v9555 = vpack.c.b16 %v9468, %v9467
        %v9556 = vpack.c.b16 %v9470, %v9469
        %v9557 = vpack.c.b16 %v9472, %v9471
        %v9558 = vpack.c.b16 %v9474, %v9473
        %v9559 = vpack.c.b16 %v9476, %v9475
        %v9560 = vpack.c.b16 %v9478, %v9477
        %v9561 = vpack.c.b16 %v9480, %v9479
        %v9562 = vpack.c.b16 %v9482, %v9481
        %v9563 = vpack.c.b16 %v9484, %v9483
        %v9564 = vpack.c.b16 %v9486, %v9485
        %v9565 = vpack.c.b16 %v9488, %v9487
        %v9566 = vpack.c.b16 %v9490, %v9489
        %v9567 = vpack.c.b16 %v9492, %v9491
        %v9568 = vpack.c.b16 %v9494, %v9493
        %v9569 = vpack.c.b16 %v9496, %v9495
        %v9570 = vpack.c.b16 %v9498, %v9497
        %v9571 = vpack.c.b16 %v9500, %v9499
        %v9572 = vpack.c.b16 %v9502, %v9501
        %v9573 = vpack.c.b16 %v9504, %v9503
        %v9574 = vpack.c.b16 %v9506, %v9505
        %v9575 = vpack.c.b16 %v9508, %v9507
        %v9576 = vpack.c.b16 %v9510, %v9509
        %v9577 = vpack.c.b16 %v9512, %v9511
        %v9578 = vpack.c.b16 %v9514, %v9513
        %9643 = vst [vmem:[%s481] sm:$0xff] %v9515
        %9644 = vst [vmem:[%s481 + $0x8] sm:$0xff] %v9516
        %9645 = vst [vmem:[%s481 + $0x10] sm:$0xff] %v9517
        %9646 = vst [vmem:[%s481 + $0x18] sm:$0xff] %v9518
        %9647 = vst [vmem:[%s481 + $0x20] sm:$0xff] %v9519
        %9648 = vst [vmem:[%s481 + $0x28] sm:$0xff] %v9520
        %9649 = vst [vmem:[%s481 + $0x30] sm:$0xff] %v9521
        %9650 = vst [vmem:[%s481 + $0x38] sm:$0xff] %v9522
        %9651 = vst [vmem:[%s481 + $0x40] sm:$0xff] %v9523
        %9652 = vst [vmem:[%s481 + $0x48] sm:$0xff] %v9524
        %9653 = vst [vmem:[%s481 + $0x50] sm:$0xff] %v9525
        %9654 = vst [vmem:[%s481 + $0x58] sm:$0xff] %v9526
        %9655 = vst [vmem:[%s481 + $0x60] sm:$0xff] %v9527
        %9656 = vst [vmem:[%s481 + $0x68] sm:$0xff] %v9528
        %9657 = vst [vmem:[%s481 + $0x70] sm:$0xff] %v9529
        %9658 = vst [vmem:[%s481 + $0x78] sm:$0xff] %v9530
        %9659 = vst [vmem:[%s481 + $0x80] sm:$0xff] %v9531
        %9660 = vst [vmem:[%s481 + $0x88] sm:$0xff] %v9532
        %9661 = vst [vmem:[%s481 + $0x90] sm:$0xff] %v9533
        %9662 = vst [vmem:[%s481 + $0x98] sm:$0xff] %v9534
        %9663 = vst [vmem:[%s481 + $0xa0] sm:$0xff] %v9535
        %9664 = vst [vmem:[%s481 + $0xa8] sm:$0xff] %v9536
        %9665 = vst [vmem:[%s481 + $0xb0] sm:$0xff] %v9537
        %9666 = vst [vmem:[%s481 + $0xb8] sm:$0xff] %v9538
        %9667 = vst [vmem:[%s481 + $0xc0] sm:$0xff] %v9539
        %9668 = vst [vmem:[%s481 + $0xc8] sm:$0xff] %v9540
        %9669 = vst [vmem:[%s481 + $0xd0] sm:$0xff] %v9541
        %9670 = vst [vmem:[%s481 + $0xd8] sm:$0xff] %v9542
        %9671 = vst [vmem:[%s481 + $0xe0] sm:$0xff] %v9543
        %9672 = vst [vmem:[%s481 + $0xe8] sm:$0xff] %v9544
        %9673 = vst [vmem:[%s481 + $0xf0] sm:$0xff] %v9545
        %9674 = vst [vmem:[%s481 + $0xf8] sm:$0xff] %v9546
        %9675 = vst [vmem:[%s481 + $0x100] sm:$0xff] %v9547
        %9676 = vst [vmem:[%s481 + $0x108] sm:$0xff] %v9548
        %9677 = vst [vmem:[%s481 + $0x110] sm:$0xff] %v9549
        %9678 = vst [vmem:[%s481 + $0x118] sm:$0xff] %v9550
        %9679 = vst [vmem:[%s481 + $0x120] sm:$0xff] %v9551
        %9680 = vst [vmem:[%s481 + $0x128] sm:$0xff] %v9552
        %9681 = vst [vmem:[%s481 + $0x130] sm:$0xff] %v9553
        %9682 = vst [vmem:[%s481 + $0x138] sm:$0xff] %v9554
        %9683 = vst [vmem:[%s481 + $0x140] sm:$0xff] %v9555
        %9684 = vst [vmem:[%s481 + $0x148] sm:$0xff] %v9556
        %9685 = vst [vmem:[%s481 + $0x150] sm:$0xff] %v9557
        %9686 = vst [vmem:[%s481 + $0x158] sm:$0xff] %v9558
        %9687 = vst [vmem:[%s481 + $0x160] sm:$0xff] %v9559
        %9688 = vst [vmem:[%s481 + $0x168] sm:$0xff] %v9560
        %9689 = vst [vmem:[%s481 + $0x170] sm:$0xff] %v9561
        %9690 = vst [vmem:[%s481 + $0x178] sm:$0xff] %v9562
        %9691 = vst [vmem:[%s481 + $0x180] sm:$0xff] %v9563
        %9692 = vst [vmem:[%s481 + $0x188] sm:$0xff] %v9564
        %9693 = vst [vmem:[%s481 + $0x190] sm:$0xff] %v9565
        %9694 = vst [vmem:[%s481 + $0x198] sm:$0xff] %v9566
        %9695 = vst [vmem:[%s481 + $0x1a0] sm:$0xff] %v9567
        %9696 = vst [vmem:[%s481 + $0x1a8] sm:$0xff] %v9568
        %9697 = vst [vmem:[%s481 + $0x1b0] sm:$0xff] %v9569
        %9698 = vst [vmem:[%s481 + $0x1b8] sm:$0xff] %v9570
        %9699 = vst [vmem:[%s481 + $0x1c0] sm:$0xff] %v9571
        %9700 = vst [vmem:[%s481 + $0x1c8] sm:$0xff] %v9572
        %9701 = vst [vmem:[%s481 + $0x1d0] sm:$0xff] %v9573
        %9702 = vst [vmem:[%s481 + $0x1d8] sm:$0xff] %v9574
        %9703 = vst [vmem:[%s481 + $0x1e0] sm:$0xff] %v9575
        %9704 = vst [vmem:[%s481 + $0x1e8] sm:$0xff] %v9576
        %9705 = vst [vmem:[%s481 + $0x1f0] sm:$0xff] %v9577
        %9706 = vst [vmem:[%s481 + $0x1f8] sm:$0xff] %v9578
        %v9707 = vadd.f32 %v811, %v814
        %v9708 = vadd.f32 %v9707, %v819
        %v9709 = vadd.f32 %v9708, %v822
        %v9710 = vadd.f32 %v9709, %v827
        %v9711 = vadd.f32 %v9710, %v830
        %v9712 = vadd.f32 %v9711, %v835
        %v9713 = vadd.f32 %v9712, %v838
        %v9714 = vadd.f32 %v9713, %v843
        %v9715 = vadd.f32 %v9714, %v846
        %v9716 = vadd.f32 %v9715, %v851
        %v9717 = vadd.f32 %v9716, %v854
        %v9718 = vadd.f32 %v9717, %v859
        %v9719 = vadd.f32 %v9718, %v862
        %v9720 = vadd.f32 %v9719, %v867
        %v9721 = vadd.f32 %v9720, %v870
        %v9722 = vadd.f32 %v9721, %v875
        %v9723 = vadd.f32 %v9722, %v878
        %v9724 = vadd.f32 %v9723, %v883
        %v9725 = vadd.f32 %v9724, %v886
        %v9726 = vadd.f32 %v9725, %v891
        %v9727 = vadd.f32 %v9726, %v894
        %v9728 = vadd.f32 %v9727, %v899
        %v9729 = vadd.f32 %v9728, %v902
        %v9730 = vadd.f32 %v9729, %v907
        %v9731 = vadd.f32 %v9730, %v910
        %v9732 = vadd.f32 %v9731, %v915
        %v9733 = vadd.f32 %v9732, %v918
        %v9734 = vadd.f32 %v9733, %v923
        %v9735 = vadd.f32 %v9734, %v926
        %v9736 = vadd.f32 %v9735, %v931
        %v9737 = vadd.f32 %v9736, %v934
        %v9738 = vrot.slane %v9737, 4
        %v9739 = vadd.f32 %v9737, %v9738
        %v9740 = vrot.slane %v9739, 2
        %v9741 = vadd.f32 %v9739, %v9740
        %v9742 = vrot.slane %v9741, 1
        %v9743 = vadd.f32 %v9741, %v9742
        %v9744 = vadd.f32 %v3723, %v3724
        %v9745 = vadd.f32 %v9744, %v3725
        %v9746 = vadd.f32 %v9745, %v3726
        %v9747 = vadd.f32 %v9746, %v3727
        %v9748 = vadd.f32 %v9747, %v3728
        %v9749 = vadd.f32 %v9748, %v3729
        %v9750 = vadd.f32 %v9749, %v3730
        %v9751 = vadd.f32 %v9750, %v3731
        %v9752 = vadd.f32 %v9751, %v3732
        %v9753 = vadd.f32 %v9752, %v3733
        %v9754 = vadd.f32 %v9753, %v3734
        %v9755 = vadd.f32 %v9754, %v3735
        %v9756 = vadd.f32 %v9755, %v3736
        %v9757 = vadd.f32 %v9756, %v3737
        %v9758 = vadd.f32 %v9757, %v3738
        %v9759 = vadd.f32 %v9758, %v3739
        %v9760 = vadd.f32 %v9759, %v3740
        %v9761 = vadd.f32 %v9760, %v3741
        %v9762 = vadd.f32 %v9761, %v3742
        %v9763 = vadd.f32 %v9762, %v3743
        %v9764 = vadd.f32 %v9763, %v3744
        %v9765 = vadd.f32 %v9764, %v3745
        %v9766 = vadd.f32 %v9765, %v3746
        %v9767 = vadd.f32 %v9766, %v3747
        %v9768 = vadd.f32 %v9767, %v3748
        %v9769 = vadd.f32 %v9768, %v3749
        %v9770 = vadd.f32 %v9769, %v3750
        %v9771 = vadd.f32 %v9770, %v3751
        %v9772 = vadd.f32 %v9771, %v3752
        %v9773 = vadd.f32 %v9772, %v3753
        %v9774 = vadd.f32 %v9773, %v3754
        %v9775 = vrot.slane %v9774, 4
        %v9776 = vadd.f32 %v9774, %v9775
        %v9777 = vrot.slane %v9776, 2
        %v9778 = vadd.f32 %v9776, %v9777
        %v9779 = vrot.slane %v9778, 1
        %v9780 = vadd.f32 %v9778, %v9779
        %v9781 = vadd.f32 %v6475, %v6476
        %v9782 = vadd.f32 %v9781, %v6477
        %v9783 = vadd.f32 %v9782, %v6478
        %v9784 = vadd.f32 %v9783, %v6479
        %v9785 = vadd.f32 %v9784, %v6480
        %v9786 = vadd.f32 %v9785, %v6481
        %v9787 = vadd.f32 %v9786, %v6482
        %v9788 = vadd.f32 %v9787, %v6483
        %v9789 = vadd.f32 %v9788, %v6484
        %v9790 = vadd.f32 %v9789, %v6485
        %v9791 = vadd.f32 %v9790, %v6486
        %v9792 = vadd.f32 %v9791, %v6487
        %v9793 = vadd.f32 %v9792, %v6488
        %v9794 = vadd.f32 %v9793, %v6489
        %v9795 = vadd.f32 %v9794, %v6490
        %v9796 = vadd.f32 %v9795, %v6491
        %v9797 = vadd.f32 %v9796, %v6492
        %v9798 = vadd.f32 %v9797, %v6493
        %v9799 = vadd.f32 %v9798, %v6494
        %v9800 = vadd.f32 %v9799, %v6495
        %v9801 = vadd.f32 %v9800, %v6496
        %v9802 = vadd.f32 %v9801, %v6497
        %v9803 = vadd.f32 %v9802, %v6498
        %v9804 = vadd.f32 %v9803, %v6499
        %v9805 = vadd.f32 %v9804, %v6500
        %v9806 = vadd.f32 %v9805, %v6501
        %v9807 = vadd.f32 %v9806, %v6502
        %v9808 = vadd.f32 %v9807, %v6503
        %v9809 = vadd.f32 %v9808, %v6504
        %v9810 = vadd.f32 %v9809, %v6505
        %v9811 = vadd.f32 %v9810, %v6506
        %v9812 = vrot.slane %v9811, 4
        %v9813 = vadd.f32 %v9811, %v9812
        %v9814 = vrot.slane %v9813, 2
        %v9815 = vadd.f32 %v9813, %v9814
        %v9816 = vrot.slane %v9815, 1
        %v9817 = vadd.f32 %v9815, %v9816
        %v9818 = vadd.f32 %v9227, %v9228
        %v9819 = vadd.f32 %v9818, %v9229
        %v9820 = vadd.f32 %v9819, %v9230
        %v9821 = vadd.f32 %v9820, %v9231
        %v9822 = vadd.f32 %v9821, %v9232
        %v9823 = vadd.f32 %v9822, %v9233
        %v9824 = vadd.f32 %v9823, %v9234
        %v9825 = vadd.f32 %v9824, %v9235
        %v9826 = vadd.f32 %v9825, %v9236
        %v9827 = vadd.f32 %v9826, %v9237
        %v9828 = vadd.f32 %v9827, %v9238
        %v9829 = vadd.f32 %v9828, %v9239
        %v9830 = vadd.f32 %v9829, %v9240
        %v9831 = vadd.f32 %v9830, %v9241
        %v9832 = vadd.f32 %v9831, %v9242
        %v9833 = vadd.f32 %v9832, %v9243
        %v9834 = vadd.f32 %v9833, %v9244
        %v9835 = vadd.f32 %v9834, %v9245
        %v9836 = vadd.f32 %v9835, %v9246
        %v9837 = vadd.f32 %v9836, %v9247
        %v9838 = vadd.f32 %v9837, %v9248
        %v9839 = vadd.f32 %v9838, %v9249
        %v9840 = vadd.f32 %v9839, %v9250
        %v9841 = vadd.f32 %v9840, %v9251
        %v9842 = vadd.f32 %v9841, %v9252
        %v9843 = vadd.f32 %v9842, %v9253
        %v9844 = vadd.f32 %v9843, %v9254
        %v9845 = vadd.f32 %v9844, %v9255
        %v9846 = vadd.f32 %v9845, %v9256
        %v9847 = vadd.f32 %v9846, %v9257
        %v9848 = vadd.f32 %v9847, %v9258
        %v9849 = vrot.slane %v9848, 4
        %v9850 = vadd.f32 %v9848, %v9849
        %v9851 = vrot.slane %v9850, 2
        %v9852 = vadd.f32 %v9850, %v9851
        %v9853 = vrot.slane %v9852, 1
        %v9854 = vadd.f32 %v9852, %v9853
        %v9855 = vmul.f32 %v811, %v811
        %v9856 = vmul.f32 %v814, %v814
        %v9857 = vmul.f32 %v819, %v819
        %v9858 = vmul.f32 %v822, %v822
        %v9859 = vmul.f32 %v827, %v827
        %v9860 = vmul.f32 %v830, %v830
        %v9861 = vmul.f32 %v835, %v835
        %v9862 = vmul.f32 %v838, %v838
        %v9863 = vmul.f32 %v843, %v843
        %v9864 = vmul.f32 %v846, %v846
        %v9865 = vmul.f32 %v851, %v851
        %v9866 = vmul.f32 %v854, %v854
        %v9867 = vmul.f32 %v859, %v859
        %v9868 = vmul.f32 %v862, %v862
        %v9869 = vmul.f32 %v867, %v867
        %v9870 = vmul.f32 %v870, %v870
        %v9871 = vmul.f32 %v875, %v875
        %v9872 = vmul.f32 %v878, %v878
        %v9873 = vmul.f32 %v883, %v883
        %v9874 = vmul.f32 %v886, %v886
        %v9875 = vmul.f32 %v891, %v891
        %v9876 = vmul.f32 %v894, %v894
        %v9877 = vmul.f32 %v899, %v899
        %v9878 = vmul.f32 %v902, %v902
        %v9879 = vmul.f32 %v907, %v907
        %v9880 = vmul.f32 %v910, %v910
        %v9881 = vmul.f32 %v915, %v915
        %v9882 = vmul.f32 %v918, %v918
        %v9883 = vmul.f32 %v923, %v923
        %v9884 = vmul.f32 %v926, %v926
        %v9885 = vmul.f32 %v931, %v931
        %v9886 = vmul.f32 %v934, %v934
        %v9887 = vadd.f32 %v9855, %v9856
        %v9888 = vadd.f32 %v9887, %v9857
        %v9889 = vadd.f32 %v9888, %v9858
        %v9890 = vadd.f32 %v9889, %v9859
        %v9891 = vadd.f32 %v9890, %v9860
        %v9892 = vadd.f32 %v9891, %v9861
        %v9893 = vadd.f32 %v9892, %v9862
        %v9894 = vadd.f32 %v9893, %v9863
        %v9895 = vadd.f32 %v9894, %v9864
        %v9896 = vadd.f32 %v9895, %v9865
        %v9897 = vadd.f32 %v9896, %v9866
        %v9898 = vadd.f32 %v9897, %v9867
        %v9899 = vadd.f32 %v9898, %v9868
        %v9900 = vadd.f32 %v9899, %v9869
        %v9901 = vadd.f32 %v9900, %v9870
        %v9902 = vadd.f32 %v9901, %v9871
        %v9903 = vadd.f32 %v9902, %v9872
        %v9904 = vadd.f32 %v9903, %v9873
        %v9905 = vadd.f32 %v9904, %v9874
        %v9906 = vadd.f32 %v9905, %v9875
        %v9907 = vadd.f32 %v9906, %v9876
        %v9908 = vadd.f32 %v9907, %v9877
        %v9909 = vadd.f32 %v9908, %v9878
        %v9910 = vadd.f32 %v9909, %v9879
        %v9911 = vadd.f32 %v9910, %v9880
        %v9912 = vadd.f32 %v9911, %v9881
        %v9913 = vadd.f32 %v9912, %v9882
        %v9914 = vadd.f32 %v9913, %v9883
        %v9915 = vadd.f32 %v9914, %v9884
        %v9916 = vadd.f32 %v9915, %v9885
        %v9917 = vadd.f32 %v9916, %v9886
        %v9918 = vrot.slane %v9917, 4
        %v9919 = vadd.f32 %v9917, %v9918
        %v9920 = vrot.slane %v9919, 2
        %v9921 = vadd.f32 %v9919, %v9920
        %v9922 = vrot.slane %v9921, 1
        %v9923 = vadd.f32 %v9921, %v9922
        %v9924 = vmul.f32 %v3723, %v3723
        %v9925 = vmul.f32 %v3724, %v3724
        %v9926 = vmul.f32 %v3725, %v3725
        %v9927 = vmul.f32 %v3726, %v3726
        %v9928 = vmul.f32 %v3727, %v3727
        %v9929 = vmul.f32 %v3728, %v3728
        %v9930 = vmul.f32 %v3729, %v3729
        %v9931 = vmul.f32 %v3730, %v3730
        %v9932 = vmul.f32 %v3731, %v3731
        %v9933 = vmul.f32 %v3732, %v3732
        %v9934 = vmul.f32 %v3733, %v3733
        %v9935 = vmul.f32 %v3734, %v3734
        %v9936 = vmul.f32 %v3735, %v3735
        %v9937 = vmul.f32 %v3736, %v3736
        %v9938 = vmul.f32 %v3737, %v3737
        %v9939 = vmul.f32 %v3738, %v3738
        %v9940 = vmul.f32 %v3739, %v3739
        %v9941 = vmul.f32 %v3740, %v3740
        %v9942 = vmul.f32 %v3741, %v3741
        %v9943 = vmul.f32 %v3742, %v3742
        %v9944 = vmul.f32 %v3743, %v3743
        %v9945 = vmul.f32 %v3744, %v3744
        %v9946 = vmul.f32 %v3745, %v3745
        %v9947 = vmul.f32 %v3746, %v3746
        %v9948 = vmul.f32 %v3747, %v3747
        %v9949 = vmul.f32 %v3748, %v3748
        %v9950 = vmul.f32 %v3749, %v3749
        %v9951 = vmul.f32 %v3750, %v3750
        %v9952 = vmul.f32 %v3751, %v3751
        %v9953 = vmul.f32 %v3752, %v3752
        %v9954 = vmul.f32 %v3753, %v3753
        %v9955 = vmul.f32 %v3754, %v3754
        %v9956 = vadd.f32 %v9924, %v9925
        %v9957 = vadd.f32 %v9956, %v9926
        %v9958 = vadd.f32 %v9957, %v9927
        %v9959 = vadd.f32 %v9958, %v9928
        %v9960 = vadd.f32 %v9959, %v9929
        %v9961 = vadd.f32 %v9960, %v9930
        %v9962 = vadd.f32 %v9961, %v9931
        %v9963 = vadd.f32 %v9962, %v9932
        %v9964 = vadd.f32 %v9963, %v9933
        %v9965 = vadd.f32 %v9964, %v9934
        %v9966 = vadd.f32 %v9965, %v9935
        %v9967 = vadd.f32 %v9966, %v9936
        %v9968 = vadd.f32 %v9967, %v9937
        %v9969 = vadd.f32 %v9968, %v9938
        %v9970 = vadd.f32 %v9969, %v9939
        %v9971 = vadd.f32 %v9970, %v9940
        %v9972 = vadd.f32 %v9971, %v9941
        %v9973 = vadd.f32 %v9972, %v9942
        %v9974 = vadd.f32 %v9973, %v9943
        %v9975 = vadd.f32 %v9974, %v9944
        %v9976 = vadd.f32 %v9975, %v9945
        %v9977 = vadd.f32 %v9976, %v9946
        %v9978 = vadd.f32 %v9977, %v9947
        %v9979 = vadd.f32 %v9978, %v9948
        %v9980 = vadd.f32 %v9979, %v9949
        %v9981 = vadd.f32 %v9980, %v9950
        %v9982 = vadd.f32 %v9981, %v9951
        %v9983 = vadd.f32 %v9982, %v9952
        %v9984 = vadd.f32 %v9983, %v9953
        %v9985 = vadd.f32 %v9984, %v9954
        %v9986 = vadd.f32 %v9985, %v9955
        %v9987 = vrot.slane %v9986, 4
        %v9988 = vadd.f32 %v9986, %v9987
        %v9989 = vrot.slane %v9988, 2
        %v9990 = vadd.f32 %v9988, %v9989
        %v9991 = vrot.slane %v9990, 1
        %v9992 = vadd.f32 %v9990, %v9991
        %v9993 = vmul.f32 %v6475, %v6475
        %v9994 = vmul.f32 %v6476, %v6476
        %v9995 = vmul.f32 %v6477, %v6477
        %v9996 = vmul.f32 %v6478, %v6478
        %v9997 = vmul.f32 %v6479, %v6479
        %v9998 = vmul.f32 %v6480, %v6480
        %v9999 = vmul.f32 %v6481, %v6481
        %v10000 = vmul.f32 %v6482, %v6482
        %v10001 = vmul.f32 %v6483, %v6483
        %v10002 = vmul.f32 %v6484, %v6484
        %v10003 = vmul.f32 %v6485, %v6485
        %v10004 = vmul.f32 %v6486, %v6486
        %v10005 = vmul.f32 %v6487, %v6487
        %v10006 = vmul.f32 %v6488, %v6488
        %v10007 = vmul.f32 %v6489, %v6489
        %v10008 = vmul.f32 %v6490, %v6490
        %v10009 = vmul.f32 %v6491, %v6491
        %v10010 = vmul.f32 %v6492, %v6492
        %v10011 = vmul.f32 %v6493, %v6493
        %v10012 = vmul.f32 %v6494, %v6494
        %v10013 = vmul.f32 %v6495, %v6495
        %v10014 = vmul.f32 %v6496, %v6496
        %v10015 = vmul.f32 %v6497, %v6497
        %v10016 = vmul.f32 %v6498, %v6498
        %v10017 = vmul.f32 %v6499, %v6499
        %v10018 = vmul.f32 %v6500, %v6500
        %v10019 = vmul.f32 %v6501, %v6501
        %v10020 = vmul.f32 %v6502, %v6502
        %v10021 = vmul.f32 %v6503, %v6503
        %v10022 = vmul.f32 %v6504, %v6504
        %v10023 = vmul.f32 %v6505, %v6505
        %v10024 = vmul.f32 %v6506, %v6506
        %v10025 = vadd.f32 %v9993, %v9994
        %v10026 = vadd.f32 %v10025, %v9995
        %v10027 = vadd.f32 %v10026, %v9996
        %v10028 = vadd.f32 %v10027, %v9997
        %v10029 = vadd.f32 %v10028, %v9998
        %v10030 = vadd.f32 %v10029, %v9999
        %v10031 = vadd.f32 %v10030, %v10000
        %v10032 = vadd.f32 %v10031, %v10001
        %v10033 = vadd.f32 %v10032, %v10002
        %v10034 = vadd.f32 %v10033, %v10003
        %v10035 = vadd.f32 %v10034, %v10004
        %v10036 = vadd.f32 %v10035, %v10005
        %v10037 = vadd.f32 %v10036, %v10006
        %v10038 = vadd.f32 %v10037, %v10007
        %v10039 = vadd.f32 %v10038, %v10008
        %v10040 = vadd.f32 %v10039, %v10009
        %v10041 = vadd.f32 %v10040, %v10010
        %v10042 = vadd.f32 %v10041, %v10011
        %v10043 = vadd.f32 %v10042, %v10012
        %v10044 = vadd.f32 %v10043, %v10013
        %v10045 = vadd.f32 %v10044, %v10014
        %v10046 = vadd.f32 %v10045, %v10015
        %v10047 = vadd.f32 %v10046, %v10016
        %v10048 = vadd.f32 %v10047, %v10017
        %v10049 = vadd.f32 %v10048, %v10018
        %v10050 = vadd.f32 %v10049, %v10019
        %v10051 = vadd.f32 %v10050, %v10020
        %v10052 = vadd.f32 %v10051, %v10021
        %v10053 = vadd.f32 %v10052, %v10022
        %v10054 = vadd.f32 %v10053, %v10023
        %v10055 = vadd.f32 %v10054, %v10024
        %v10056 = vrot.slane %v10055, 4
        %v10057 = vadd.f32 %v10055, %v10056
        %v10058 = vrot.slane %v10057, 2
        %v10059 = vadd.f32 %v10057, %v10058
        %v10060 = vrot.slane %v10059, 1
        %v10061 = vadd.f32 %v10059, %v10060
        %v10062 = vmul.f32 %v9227, %v9227
        %v10063 = vmul.f32 %v9228, %v9228
        %v10064 = vmul.f32 %v9229, %v9229
        %v10065 = vmul.f32 %v9230, %v9230
        %v10066 = vmul.f32 %v9231, %v9231
        %v10067 = vmul.f32 %v9232, %v9232
        %v10068 = vmul.f32 %v9233, %v9233
        %v10069 = vmul.f32 %v9234, %v9234
        %v10070 = vmul.f32 %v9235, %v9235
        %v10071 = vmul.f32 %v9236, %v9236
        %v10072 = vmul.f32 %v9237, %v9237
        %v10073 = vmul.f32 %v9238, %v9238
        %v10074 = vmul.f32 %v9239, %v9239
        %v10075 = vmul.f32 %v9240, %v9240
        %v10076 = vmul.f32 %v9241, %v9241
        %v10077 = vmul.f32 %v9242, %v9242
        %v10078 = vmul.f32 %v9243, %v9243
        %v10079 = vmul.f32 %v9244, %v9244
        %v10080 = vmul.f32 %v9245, %v9245
        %v10081 = vmul.f32 %v9246, %v9246
        %v10082 = vmul.f32 %v9247, %v9247
        %v10083 = vmul.f32 %v9248, %v9248
        %v10084 = vmul.f32 %v9249, %v9249
        %v10085 = vmul.f32 %v9250, %v9250
        %v10086 = vmul.f32 %v9251, %v9251
        %v10087 = vmul.f32 %v9252, %v9252
        %v10088 = vmul.f32 %v9253, %v9253
        %v10089 = vmul.f32 %v9254, %v9254
        %v10090 = vmul.f32 %v9255, %v9255
        %v10091 = vmul.f32 %v9256, %v9256
        %v10092 = vmul.f32 %v9257, %v9257
        %v10093 = vmul.f32 %v9258, %v9258
        %v10094 = vadd.f32 %v10062, %v10063
        %v10095 = vadd.f32 %v10094, %v10064
        %v10096 = vadd.f32 %v10095, %v10065
        %v10097 = vadd.f32 %v10096, %v10066
        %v10098 = vadd.f32 %v10097, %v10067
        %v10099 = vadd.f32 %v10098, %v10068
        %v10100 = vadd.f32 %v10099, %v10069
        %v10101 = vadd.f32 %v10100, %v10070
        %v10102 = vadd.f32 %v10101, %v10071
        %v10103 = vadd.f32 %v10102, %v10072
        %v10104 = vadd.f32 %v10103, %v10073
        %v10105 = vadd.f32 %v10104, %v10074
        %v10106 = vadd.f32 %v10105, %v10075
        %v10107 = vadd.f32 %v10106, %v10076
        %v10108 = vadd.f32 %v10107, %v10077
        %v10109 = vadd.f32 %v10108, %v10078
        %v10110 = vadd.f32 %v10109, %v10079
        %v10111 = vadd.f32 %v10110, %v10080
        %v10112 = vadd.f32 %v10111, %v10081
        %v10113 = vadd.f32 %v10112, %v10082
        %v10114 = vadd.f32 %v10113, %v10083
        %v10115 = vadd.f32 %v10114, %v10084
        %v10116 = vadd.f32 %v10115, %v10085
        %v10117 = vadd.f32 %v10116, %v10086
        %v10118 = vadd.f32 %v10117, %v10087
        %v10119 = vadd.f32 %v10118, %v10088
        %v10120 = vadd.f32 %v10119, %v10089
        %v10121 = vadd.f32 %v10120, %v10090
        %v10122 = vadd.f32 %v10121, %v10091
        %v10123 = vadd.f32 %v10122, %v10092
        %v10124 = vadd.f32 %v10123, %v10093
        %v10125 = vrot.slane %v10124, 4
        %v10126 = vadd.f32 %v10124, %v10125
        %v10127 = vrot.slane %v10126, 2
        %v10128 = vadd.f32 %v10126, %v10127
        %v10129 = vrot.slane %v10128, 1
        %v10130 = vadd.f32 %v10128, %v10129
        %vm10131 = vcmask 1040384
        %v10132 = vsel %vm10131, %v9743, %v9780
        %vm10133 = vcmask 1041408
        %v10134 = vsel %vm10133, %v10132, %v9817
        %vm10135 = vcmask 1042432
        %v10136 = vsel %vm10135, %v10134, %v9854
        %vm10137 = vcmask 1043456
        %v10138 = vsel %vm10137, %v10136, %v9923
        %vm10139 = vcmask 1044480
        %v10140 = vsel %vm10139, %v10138, %v9992
        %vm10141 = vcmask 1045504
        %v10142 = vsel %vm10141, %v10140, %v10061
        %vm10143 = vcmask 1046528
        %v10144 = vsel %vm10143, %v10142, %v10130
        %10145 = vst [vmem:[%s488] sm:$0xff] %v10144
        %v10146 = vadd.f32 %v610, %v613
        %v10147 = vadd.f32 %v10146, %v618
        %v10148 = vadd.f32 %v10147, %v621
        %v10149 = vadd.f32 %v10148, %v626
        %v10150 = vadd.f32 %v10149, %v629
        %v10151 = vadd.f32 %v10150, %v634
        %v10152 = vadd.f32 %v10151, %v637
        %v10153 = vadd.f32 %v10152, %v642
        %v10154 = vadd.f32 %v10153, %v645
        %v10155 = vadd.f32 %v10154, %v650
        %v10156 = vadd.f32 %v10155, %v653
        %v10157 = vadd.f32 %v10156, %v658
        %v10158 = vadd.f32 %v10157, %v661
        %v10159 = vadd.f32 %v10158, %v666
        %v10160 = vadd.f32 %v10159, %v669
        %v10161 = vadd.f32 %v10160, %v674
        %v10162 = vadd.f32 %v10161, %v677
        %v10163 = vadd.f32 %v10162, %v682
        %v10164 = vadd.f32 %v10163, %v685
        %v10165 = vadd.f32 %v10164, %v690
        %v10166 = vadd.f32 %v10165, %v693
        %v10167 = vadd.f32 %v10166, %v698
        %v10168 = vadd.f32 %v10167, %v701
        %v10169 = vadd.f32 %v10168, %v706
        %v10170 = vadd.f32 %v10169, %v709
        %v10171 = vadd.f32 %v10170, %v714
        %v10172 = vadd.f32 %v10171, %v717
        %v10173 = vadd.f32 %v10172, %v722
        %v10174 = vadd.f32 %v10173, %v725
        %v10175 = vadd.f32 %v10174, %v730
        %v10176 = vadd.f32 %v10175, %v733
        %v10177 = vrot.slane %v10176, 4
        %v10178 = vadd.f32 %v10176, %v10177
        %v10179 = vrot.slane %v10178, 2
        %v10180 = vadd.f32 %v10178, %v10179
        %v10181 = vrot.slane %v10180, 1
        %v10182 = vadd.f32 %v10180, %v10181
        %v10183 = vmul.f32 %v10182, 0.00390625
        %10184 = vst [vmem:[%s494] sm:$0x1] %v10183
        %s10185 = sand.u32 %s216, 1
        %s10186 = scalar_lea.sflag [#allocation4], %s10185
        %s10187 = sand.u32 %s216, 1
        %s10188 = smul.addr %s10187, 512
        %s10189 = scalar_lea.vmem [#allocation16], %s10188
        %s10190 = sand.u32 %s35, 1
        %s10191 = scalar_lea.sflag [#allocation18], %s10190
        %s10192 = sand.u32 %s242, 1
        %s10193 = smul.addr %s10192, 8
        %s10194 = scalar_lea.vmem [#allocation17], %s10193
        %s10195 = sand.u32 %s35, 1
        %s10196 = scalar_lea.sflag [#allocation18], %s10195
        %s10197 = sand.u32 %s268, 1
        %s10198 = scalar_lea.vmem [#allocation19], %s10197
        // Predicated region
        $region85: #{tpu_custom_call.1} parent=51 // pred_check
          %p10199 = pneg %p226
        $region86: #{tpu_custom_call.1} parent=51 // pred_check_branch
          %10201 = sbr.rel (%p10199) target = $region88
        $region87: #{tpu_custom_call.1} parent=51 // pred_region
          %s10203 = ssub.s32 8192, 8192
          %10204 = vsyncadd %s10186, %s10203
          %s10205 = smul.addr %s35, 128
          %s10206 = smul.addr %s10205, 64
          %s10207 = scalar_lea.hbm %s8, %s10206
          %s10208 = sshll.u32 %s10189, 4
          %s10209 = int_to_ptr.vmem [resolvable:$true] %s10208
          %10214 = dma.vmem_to_hbm [thread:$0]  %s10209, 8192, %s10207, %s10186, 256, 256, 16
        $region88: #{tpu_custom_call.1} parent=51 // pred_fallthru
          _
        // Predicated region
        $region89: #{tpu_custom_call.1} parent=51 // pred_check
          %p10215 = pneg %p252
        $region90: #{tpu_custom_call.1} parent=51 // pred_check_branch
          %10217 = sbr.rel (%p10215) target = $region92
        $region91: #{tpu_custom_call.1} parent=51 // pred_region
          %s10219 = ssub.s32 128, 128
          %10220 = vsyncadd %s10191, %s10219
          %s10221 = smul.addr %s35, 128
          %s10222 = scalar_lea.hbm %s9, %s10221
          %s10224 = sshll.u32 %s10194, 4
          %s10225 = int_to_ptr.vmem [resolvable:$true] %s10224
          %10227 = dma.vmem_to_hbm [thread:$0]  %s10225, 128, %s10222, %s10191
        $region92: #{tpu_custom_call.1} parent=51 // pred_fallthru
          _
        // Predicated region
        $region93: #{tpu_custom_call.1} parent=51 // pred_check
          %p10228 = pneg %p278
        $region94: #{tpu_custom_call.1} parent=51 // pred_check_branch
          %10230 = sbr.rel (%p10228) target = $region96
        $region95: #{tpu_custom_call.1} parent=51 // pred_region
          %s10232 = ssub.s32 16, 16
          %10233 = vsyncadd %s10196, %s10232
          %s10234 = smul.addr %s35, 16
          %s10235 = scalar_lea.hbm %s10, %s10234
          %s10237 = sshll.u32 %s10198, 4
          %s10238 = int_to_ptr.vmem [resolvable:$true] %s10237
          %10240 = dma.vmem_to_hbm [thread:$0]  %s10238, 16, %s10235, %s10196
        $region96: #{tpu_custom_call.1} parent=51 // pred_fallthru
          _
      $region52: #{tpu_custom_call.1} parent=5 // pred_fallthru
        _
      %p10241 = scmp.le.s32.totalorder 2, %s30
      // Predicated region
      $region97: #{tpu_custom_call.1} parent=5 // pred_check
        %p10242 = pneg %p10241
      $region98: #{tpu_custom_call.1} parent=5 // pred_check_branch
        %10244 = sbr.rel (%p10242) target = $region100
      $region99: #{tpu_custom_call.1} parent=5 // pred_region
        %s10245 = ssub.s32 %s30, 2
        // Predicated region
        $region101: #{tpu_custom_call.1} parent=99 // pred_check
          %p10246 = pneg %p232
        $region102: #{tpu_custom_call.1} parent=99 // pred_check_branch
          %10248 = sbr.rel (%p10246) target = $region104
        $region103: #{tpu_custom_call.1} parent=99 // pred_region
          %s10249 = sand.u32 %s217, 1
          %s10250 = scalar_lea.sflag [#allocation4], %s10249
          %s10251 = sand.u32 %s217, 1
          %s10252 = smul.addr %s10251, 512
          %s10253 = scalar_lea.vmem [#allocation16], %s10252
          %10254 = dma.done %s10250, 8192
        $region104: #{tpu_custom_call.1} parent=99 // pred_fallthru
          _
        // Predicated region
        $region105: #{tpu_custom_call.1} parent=99 // pred_check
          %p10255 = pneg %p258
        $region106: #{tpu_custom_call.1} parent=99 // pred_check_branch
          %10257 = sbr.rel (%p10255) target = $region108
        $region107: #{tpu_custom_call.1} parent=99 // pred_region
          %s10258 = sand.u32 %s36, 1
          %s10259 = scalar_lea.sflag [#allocation18], %s10258
          %s10260 = sand.u32 %s243, 1
          %s10261 = smul.addr %s10260, 8
          %s10262 = scalar_lea.vmem [#allocation17], %s10261
          %10263 = dma.done %s10259, 128
        $region108: #{tpu_custom_call.1} parent=99 // pred_fallthru
          _
        // Predicated region
        $region109: #{tpu_custom_call.1} parent=99 // pred_check
          %p10264 = pneg %p284
        $region110: #{tpu_custom_call.1} parent=99 // pred_check_branch
          %10266 = sbr.rel (%p10264) target = $region112
        $region111: #{tpu_custom_call.1} parent=99 // pred_region
          %s10267 = sand.u32 %s36, 1
          %s10268 = scalar_lea.sflag [#allocation18], %s10267
          %s10269 = sand.u32 %s269, 1
          %s10270 = scalar_lea.vmem [#allocation19], %s10269
          %10271 = dma.done %s10268, 16
        $region112: #{tpu_custom_call.1} parent=99 // pred_fallthru
          _
      $region100: #{tpu_custom_call.1} parent=5 // pred_fallthru
        _
    $region6: #{tpu_custom_call.1} parent=1 // loop_footer
      %s34 = sadd.s32 1, %s30
    $region7: #{tpu_custom_call.1} parent=1 // loop_footer_branch
      %29 = sbr.rel target = $region3
    $region8: #{tpu_custom_call.1} parent=1 // loop_exit
      _
    %10272 = vsyncpa [#allocation3], 1
    %s10273 = scalar_lea.sflag [#allocation3], 1
    %10274 = vsyncpa %s10273, 1
    %10275 = vsyncpa [#allocation6], 1
    %10276 = vsyncpa [#allocation9], 1
    %10277 = vsyncpa [#allocation12], 1
    %10278 = vsyncpa [#allocation15], 1
    %10279 = vsyncpa [#allocation4], 1
    %s10280 = scalar_lea.sflag [#allocation4], 1
    %10281 = vsyncpa %s10280, 1
    %10282 = vsyncpa [#allocation18], 1
    %s10283 = scalar_lea.sflag [#allocation18], 1
    %10284 = vsyncpa %s10283, 1

</llo_original>
